<compile_context>
chip_gen: v6e
topology: v6e:2x2x1
jax: 0.10.0
libtpu: 0.0.40
codegen_flags: <defaults>
</compile_context>

<pallas_src>
import numpy as np
import jax
import jax.numpy as jnp
from jax.experimental import pallas as pl
from jax.experimental.pallas import tpu as pltpu


# -------------------------------- kernel -----------------------------------

def encoder_block_kernel(x_ref, w1_ref, g1_ref, be1_ref, w2_ref, g2_ref, be2_ref,
                         x_out_ref, p_out_ref, pad_ref, hp_ref):
    N, H, W, Cp = x_ref.shape
    Hp, Wp = H + 2, W + 2
    eps = 1e-5
    inv_n = 1.0 / float(N * H * W)

    # ---- zero only the 1-pixel halo of the shared padded scratch (done once;
    #      both convs only ever overwrite the interior) ----
    zrow = jnp.zeros((N, 1, Wp, Cp), jnp.float32)
    zcol = jnp.zeros((N, Hp, 1, Cp), jnp.float32)
    pad_ref[:, pl.ds(0, 1), :, :] = zrow
    pad_ref[:, pl.ds(Hp - 1, 1), :, :] = zrow
    pad_ref[:, :, pl.ds(0, 1), :] = zcol
    pad_ref[:, :, pl.ds(Wp - 1, 1), :] = zcol

    def im2col():
        # (N*H*W, 9*Cp) slab; taps are lane-aligned 128-wide blocks so the
        # lane-axis concatenate is the cheap (tile-granular) case.
        taps = []
        for dy in range(3):
            for dx in range(3):
                taps.append(pad_ref[:, pl.ds(dy, H), pl.ds(dx, W), :]
                            .reshape(N * H * W, Cp))
        return jnp.concatenate(taps, axis=-1)

    def bn_relu(y, g, be):
        # Training-mode BN (biased batch variance) folded into one affine:
        # one-pass sum / sumsq -> scale = g*rsqrt(var+eps), shift = be - mean*scale.
        s = jnp.sum(y, axis=0, keepdims=True)
        sq = jnp.sum(y * y, axis=0, keepdims=True)
        mean = s * inv_n
        var = sq * inv_n - mean * mean
        scale = g * jax.lax.rsqrt(var + eps)
        shift = be - mean * scale
        return jnp.maximum(y * scale + shift, 0.0)

    # ---- ConvBlock 1: conv3x3 (single MXU matmul) + BN(batch stats) + ReLU ----
    pad_ref[:, pl.ds(1, H), pl.ds(1, W), :] = x_ref[...]
    y1 = jnp.dot(im2col(), w1_ref[...], preferred_element_type=jnp.float32)
    a1 = bn_relu(y1, g1_ref[...], be1_ref[...])

    # ---- ConvBlock 2 (reuse padded scratch; halo is still zero) ----
    pad_ref[:, pl.ds(1, H), pl.ds(1, W), :] = a1.reshape(N, H, W, Cp)
    y2 = jnp.dot(im2col(), w2_ref[...], preferred_element_type=jnp.float32)
    a2 = bn_relu(y2, g2_ref[...], be2_ref[...])
    x_out_ref[...] = a2.reshape(N, H, W, Cp)

    # ---- MaxPool2d(kernel=2, stride=2): two strided-max passes ----
    hp_ref[...] = jnp.maximum(x_out_ref[:, pl.ds(0, H // 2, 2), :, :],
                              x_out_ref[:, pl.ds(1, H // 2, 2), :, :])
    p_out_ref[...] = jnp.maximum(hp_ref[:, :, pl.ds(0, W // 2, 2), :],
                                 hp_ref[:, :, pl.ds(1, W // 2, 2), :])


# -------------------------------- wrapper -----------------------------------

def encoder_block(x_nchw, params):
    """NCHW in / (x, pooled) NCHW out, matching EncoderBlock.forward."""
    w1, b1, g1, be1, w2, b2, g2, be2 = params
    # Conv biases are an exact no-op under training-mode BatchNorm (cancelled
    # by the mean subtraction), so they are intentionally not passed in.
    del b1, b2

    N, Cin, H, W = x_nchw.shape
    Cout = w1.shape[-1]
    LANE = 128
    Cp = ((max(Cin, Cout) + LANE - 1) // LANE) * LANE

    def lane_pad(a, axis):
        widths = [(0, 0)] * a.ndim
        widths[axis] = (0, Cp - a.shape[axis])
        return jnp.pad(a.astype(jnp.float32), widths)

    # NCHW -> NHWC with channels padded to the lane width.
    x = lane_pad(jnp.transpose(x_nchw, (0, 2, 3, 1)), 3)            # (N,H,W,Cp)

    # HWIO weights -> padded -> (9*Cp, Cp) matching the im2col tap order.
    w1p = lane_pad(lane_pad(w1, 3), 2).reshape(9 * Cp, Cp)
    w2p = lane_pad(lane_pad(w2, 3), 2).reshape(9 * Cp, Cp)
    g1p, be1p = lane_pad(g1, 1), lane_pad(be1, 1)
    g2p, be2p = lane_pad(g2, 1), lane_pad(be2, 1)

    vmem = lambda: pl.BlockSpec(memory_space=pltpu.MemorySpace.VMEM)
    x_out, p_out = pl.pallas_call(
        encoder_block_kernel,
        out_shape=(jax.ShapeDtypeStruct((N, H, W, Cp), jnp.float32),
                   jax.ShapeDtypeStruct((N, H // 2, W // 2, Cp), jnp.float32)),
        in_specs=[vmem() for _ in range(7)],
        out_specs=(vmem(), vmem()),
        scratch_shapes=[pltpu.VMEM((N, H + 2, W + 2, Cp), jnp.float32),  # shared conv pad
                        pltpu.VMEM((N, H // 2, W, Cp), jnp.float32)],    # row-pooled temp
        compiler_params=pltpu.CompilerParams(vmem_limit_bytes=48 * 1024 * 1024),
    )(x, w1p, g1p, be1p, w2p, g2p, be2p)

    # Strip channel padding and return NCHW like the PyTorch module.
    x_out = jnp.transpose(x_out[..., :Cout], (0, 3, 1, 2))
    p_out = jnp.transpose(p_out[..., :Cout], (0, 3, 1, 2))
    return x_out, p_out


# ---------------------------- numpy reference --------------------------------

def _np_conv3x3(x_nchw, w_hwio, b_1c):
    N, C, H, W = x_nchw.shape
    Cout = w_hwio.shape[-1]
    xp = np.pad(x_nchw, ((0, 0), (0, 0), (1, 1), (1, 1)))
    y = np.zeros((N, Cout, H, W), np.float32)
    for dy in range(3):
        for dx in range(3):
            patch = xp[:, :, dy:dy + H, dx:dx + W]
            y += np.einsum('nchw,co->nohw', patch, w_hwio[dy, dx])
    return y + b_1c.reshape(1, -1, 1, 1)


def _np_bn_relu(y, g, be, eps=1e-5):
    mean = y.mean(axis=(0, 2, 3), keepdims=True)
    var = y.var(axis=(0, 2, 3), keepdims=True)       # biased, like torch BN fwd
    yhat = (y - mean) / np.sqrt(var + eps)
    return np.maximum(yhat * g.reshape(1, -1, 1, 1) + be.reshape(1, -1, 1, 1), 0.0)


def _np_ref(x, params):
    w1, b1, g1, be1, w2, b2, g2, be2 = [np.asarray(p, np.float32) for p in params]
    a1 = _np_bn_relu(_np_conv3x3(np.asarray(x, np.float32), w1, b1), g1, be1)
    a2 = _np_bn_relu(_np_conv3x3(a1, w2, b2), g2, be2)
    N, C, H, W = a2.shape
    p = a2.reshape(N, C, H // 2, 2, W // 2, 2).max(axis=(3, 5))
    return a2, p


# --------------------------------- main --------------------------------------

if __name__ == "__main__":
    N, Cin, Cout, H, W = 2, 4, 8, 16, 16
    ks = jax.random.split(jax.random.PRNGKey(0), 9)

    x = jax.random.normal(ks[0], (N, Cin, H, W), jnp.float32)

    # deterministic synthetic parameters (shapes from EncoderBlock.__init__)
    w1 = 0.3 * jax.random.normal(ks[1], (3, 3, Cin, Cout), jnp.float32)
    b1 = 0.1 * jax.random.normal(ks[2], (1, Cout), jnp.float32)
    g1 = 1.0 + 0.1 * jax.random.normal(ks[3], (1, Cout), jnp.float32)
    be1 = 0.1 * jax.random.normal(ks[4], (1, Cout), jnp.float32)
    w2 = 0.3 * jax.random.normal(ks[5], (3, 3, Cout, Cout), jnp.float32)
    b2 = 0.1 * jax.random.normal(ks[6], (1, Cout), jnp.float32)
    g2 = 1.0 + 0.1 * jax.random.normal(ks[7], (1, Cout), jnp.float32)
    be2 = 0.1 * jax.random.normal(ks[8], (1, Cout), jnp.float32)
    params = (w1, b1, g1, be1, w2, b2, g2, be2)

    x_out, p_out = jax.block_until_ready(encoder_block(x, params))

    assert x_out.shape == (N, Cout, H, W)
    assert p_out.shape == (N, Cout, H // 2, W // 2)

    ref_x, ref_p = _np_ref(np.asarray(x), params)   # reference keeps conv bias;
    # it is exactly cancelled by training-mode BN, so results must still match.
    np.testing.assert_allclose(np.asarray(x_out), ref_x, rtol=2e-2, atol=2e-2)
    np.testing.assert_allclose(np.asarray(p_out), ref_p, rtol=2e-2, atol=2e-2)

    # TODO(synk): BatchNorm running-stat buffer updates (momentum bookkeeping)
    # are in-place module state and do not affect the returned tensors; omitted.

    print("KERNEL_OK")
</pallas_src>

<mosaic_0001>
module attributes {stable_mosaic.version = 11 : i64} {
  func.func @encoder_block_kernel(%arg0: memref<2x16x16x128xf32, #tpu.memory_space<vmem>>, %arg1: memref<1152x128xf32, #tpu.memory_space<vmem>>, %arg2: memref<1x128xf32, #tpu.memory_space<vmem>>, %arg3: memref<1x128xf32, #tpu.memory_space<vmem>>, %arg4: memref<1152x128xf32, #tpu.memory_space<vmem>>, %arg5: memref<1x128xf32, #tpu.memory_space<vmem>>, %arg6: memref<1x128xf32, #tpu.memory_space<vmem>>, %arg7: memref<2x16x16x128xf32, #tpu.memory_space<vmem>>, %arg8: memref<2x8x8x128xf32, #tpu.memory_space<vmem>>, %arg9: memref<2x18x18x128xf32, #tpu.memory_space<vmem>>, %arg10: memref<2x8x16x128xf32, #tpu.memory_space<vmem>>) attributes {dimension_semantics = [], scalar_prefetch = 0 : i64, scratch_operands = 2 : i64, tpu.core_type = #tpu.core_type<tc>} {
    %cst = arith.constant 0.000000e+00 : f32
    %0 = vector.broadcast %cst : f32 to vector<2x1x18x128xf32>
    %cst_0 = arith.constant 0.000000e+00 : f32
    %1 = vector.broadcast %cst_0 : f32 to vector<2x18x1x128xf32>
    %c0 = arith.constant 0 : index
    %c0_1 = arith.constant 0 : index
    %c0_2 = arith.constant 0 : index
    %c0_3 = arith.constant 0 : index
    %2 = vector.load %arg9[%c0, %c0_1, %c0_2, %c0_3] : memref<2x18x18x128xf32, #tpu.memory_space<vmem>>, vector<2x1x18x128xf32>
    tpu.vector_store %arg9[%c0, %c0_1, %c0_2, %c0_3], %0 {strides = array<i32>} : memref<2x18x18x128xf32, #tpu.memory_space<vmem>>, vector<2x1x18x128xf32>,
    %c0_4 = arith.constant 0 : index
    %c17 = arith.constant 17 : index
    %c0_5 = arith.constant 0 : index
    %c0_6 = arith.constant 0 : index
    %3 = vector.load %arg9[%c0_4, %c17, %c0_5, %c0_6] : memref<2x18x18x128xf32, #tpu.memory_space<vmem>>, vector<2x1x18x128xf32>
    tpu.vector_store %arg9[%c0_4, %c17, %c0_5, %c0_6], %0 {strides = array<i32>} : memref<2x18x18x128xf32, #tpu.memory_space<vmem>>, vector<2x1x18x128xf32>,
    %c0_7 = arith.constant 0 : index
    %c0_8 = arith.constant 0 : index
    %c0_9 = arith.constant 0 : index
    %c0_10 = arith.constant 0 : index
    %4 = vector.load %arg9[%c0_7, %c0_8, %c0_9, %c0_10] : memref<2x18x18x128xf32, #tpu.memory_space<vmem>>, vector<2x18x1x128xf32>
    tpu.vector_store %arg9[%c0_7, %c0_8, %c0_9, %c0_10], %1 {strides = array<i32>} : memref<2x18x18x128xf32, #tpu.memory_space<vmem>>, vector<2x18x1x128xf32>,
    %c0_11 = arith.constant 0 : index
    %c0_12 = arith.constant 0 : index
    %c17_13 = arith.constant 17 : index
    %c0_14 = arith.constant 0 : index
    %5 = vector.load %arg9[%c0_11, %c0_12, %c17_13, %c0_14] : memref<2x18x18x128xf32, #tpu.memory_space<vmem>>, vector<2x18x1x128xf32>
    tpu.vector_store %arg9[%c0_11, %c0_12, %c17_13, %c0_14], %1 {strides = array<i32>} : memref<2x18x18x128xf32, #tpu.memory_space<vmem>>, vector<2x18x1x128xf32>,
    %c0_15 = arith.constant 0 : index
    %c0_16 = arith.constant 0 : index
    %c0_17 = arith.constant 0 : index
    %c0_18 = arith.constant 0 : index
    %6 = vector.load %arg0[%c0_15, %c0_16, %c0_17, %c0_18] : memref<2x16x16x128xf32, #tpu.memory_space<vmem>>, vector<2x16x16x128xf32>
    %c0_19 = arith.constant 0 : index
    %c1 = arith.constant 1 : index
    %c1_20 = arith.constant 1 : index
    %c0_21 = arith.constant 0 : index
    %7 = vector.load %arg9[%c0_19, %c1, %c1_20, %c0_21] : memref<2x18x18x128xf32, #tpu.memory_space<vmem>>, vector<2x16x16x128xf32>
    tpu.vector_store %arg9[%c0_19, %c1, %c1_20, %c0_21], %6 {strides = array<i32>} : memref<2x18x18x128xf32, #tpu.memory_space<vmem>>, vector<2x16x16x128xf32>,
    %c0_22 = arith.constant 0 : index
    %c0_23 = arith.constant 0 : index
    %c0_24 = arith.constant 0 : index
    %c0_25 = arith.constant 0 : index
    %8 = vector.load %arg9[%c0_22, %c0_23, %c0_24, %c0_25] : memref<2x18x18x128xf32, #tpu.memory_space<vmem>>, vector<2x16x16x128xf32>
    %9 = vector.shape_cast %8 : vector<2x16x16x128xf32> to vector<512x128xf32>
    %c0_26 = arith.constant 0 : index
    %c0_27 = arith.constant 0 : index
    %c1_28 = arith.constant 1 : index
    %c0_29 = arith.constant 0 : index
    %10 = vector.load %arg9[%c0_26, %c0_27, %c1_28, %c0_29] : memref<2x18x18x128xf32, #tpu.memory_space<vmem>>, vector<2x16x16x128xf32>
    %11 = vector.shape_cast %10 : vector<2x16x16x128xf32> to vector<512x128xf32>
    %c0_30 = arith.constant 0 : index
    %c0_31 = arith.constant 0 : index
    %c2 = arith.constant 2 : index
    %c0_32 = arith.constant 0 : index
    %12 = vector.load %arg9[%c0_30, %c0_31, %c2, %c0_32] : memref<2x18x18x128xf32, #tpu.memory_space<vmem>>, vector<2x16x16x128xf32>
    %13 = vector.shape_cast %12 : vector<2x16x16x128xf32> to vector<512x128xf32>
    %c0_33 = arith.constant 0 : index
    %c1_34 = arith.constant 1 : index
    %c0_35 = arith.constant 0 : index
    %c0_36 = arith.constant 0 : index
    %14 = vector.load %arg9[%c0_33, %c1_34, %c0_35, %c0_36] : memref<2x18x18x128xf32, #tpu.memory_space<vmem>>, vector<2x16x16x128xf32>
    %15 = vector.shape_cast %14 : vector<2x16x16x128xf32> to vector<512x128xf32>
    %c0_37 = arith.constant 0 : index
    %c1_38 = arith.constant 1 : index
    %c1_39 = arith.constant 1 : index
    %c0_40 = arith.constant 0 : index
    %16 = vector.load %arg9[%c0_37, %c1_38, %c1_39, %c0_40] : memref<2x18x18x128xf32, #tpu.memory_space<vmem>>, vector<2x16x16x128xf32>
    %17 = vector.shape_cast %16 : vector<2x16x16x128xf32> to vector<512x128xf32>
    %c0_41 = arith.constant 0 : index
    %c1_42 = arith.constant 1 : index
    %c2_43 = arith.constant 2 : index
    %c0_44 = arith.constant 0 : index
    %18 = vector.load %arg9[%c0_41, %c1_42, %c2_43, %c0_44] : memref<2x18x18x128xf32, #tpu.memory_space<vmem>>, vector<2x16x16x128xf32>
    %19 = vector.shape_cast %18 : vector<2x16x16x128xf32> to vector<512x128xf32>
    %c0_45 = arith.constant 0 : index
    %c2_46 = arith.constant 2 : index
    %c0_47 = arith.constant 0 : index
    %c0_48 = arith.constant 0 : index
    %20 = vector.load %arg9[%c0_45, %c2_46, %c0_47, %c0_48] : memref<2x18x18x128xf32, #tpu.memory_space<vmem>>, vector<2x16x16x128xf32>
    %21 = vector.shape_cast %20 : vector<2x16x16x128xf32> to vector<512x128xf32>
    %c0_49 = arith.constant 0 : index
    %c2_50 = arith.constant 2 : index
    %c1_51 = arith.constant 1 : index
    %c0_52 = arith.constant 0 : index
    %22 = vector.load %arg9[%c0_49, %c2_50, %c1_51, %c0_52] : memref<2x18x18x128xf32, #tpu.memory_space<vmem>>, vector<2x16x16x128xf32>
    %23 = vector.shape_cast %22 : vector<2x16x16x128xf32> to vector<512x128xf32>
    %c0_53 = arith.constant 0 : index
    %c2_54 = arith.constant 2 : index
    %c2_55 = arith.constant 2 : index
    %c0_56 = arith.constant 0 : index
    %24 = vector.load %arg9[%c0_53, %c2_54, %c2_55, %c0_56] : memref<2x18x18x128xf32, #tpu.memory_space<vmem>>, vector<2x16x16x128xf32>
    %25 = vector.shape_cast %24 : vector<2x16x16x128xf32> to vector<512x128xf32>
    %26 = tpu.concatenate %9, %11, %13, %15, %17, %19, %21, %23, %25 in 1 : vector<512x128xf32>, vector<512x128xf32>, vector<512x128xf32>, vector<512x128xf32>, vector<512x128xf32>, vector<512x128xf32>, vector<512x128xf32>, vector<512x128xf32>, vector<512x128xf32> -> vector<512x1152xf32>
    %c0_57 = arith.constant 0 : index
    %c0_58 = arith.constant 0 : index
    %27 = vector.load %arg1[%c0_57, %c0_58] : memref<1152x128xf32, #tpu.memory_space<vmem>>, vector<1152x128xf32>
    %cst_59 = arith.constant dense<0.000000e+00> : vector<512x128xf32>
    %28 = tpu.matmul %26, %27, %cst_59 {dimension_numbers = #tpu.dot_dimension_numbers<[1], [0], [0], [1], [0, 0, 1, 1], [], []>} : vector<512x1152xf32>, vector<1152x128xf32>, vector<512x128xf32> -> vector<512x128xf32>
    %c0_60 = arith.constant 0 : index
    %c0_61 = arith.constant 0 : index
    %29 = vector.load %arg2[%c0_60, %c0_61] : memref<1x128xf32, #tpu.memory_space<vmem>>, vector<1x128xf32>
    %c0_62 = arith.constant 0 : index
    %c0_63 = arith.constant 0 : index
    %30 = vector.load %arg3[%c0_62, %c0_63] : memref<1x128xf32, #tpu.memory_space<vmem>>, vector<1x128xf32>
    %cst_64 = arith.constant dense<0.000000e+00> : vector<128xf32>
    %31 = vector.multi_reduction <add>, %28, %cst_64 [0] : vector<512x128xf32> to vector<128xf32>
    %32 = vector.shape_cast %31 : vector<128xf32> to vector<1x128xf32>
    %33 = arith.mulf %28, %28 : vector<512x128xf32>
    %cst_65 = arith.constant dense<0.000000e+00> : vector<128xf32>
    %34 = vector.multi_reduction <add>, %33, %cst_65 [0] : vector<512x128xf32> to vector<128xf32>
    %35 = vector.shape_cast %34 : vector<128xf32> to vector<1x128xf32>
    %cst_66 = arith.constant 0.001953125 : f32
    %36 = vector.broadcast %cst_66 : f32 to vector<1x128xf32>
    %37 = arith.mulf %32, %36 : vector<1x128xf32>
    %cst_67 = arith.constant 0.001953125 : f32
    %38 = vector.broadcast %cst_67 : f32 to vector<1x128xf32>
    %39 = arith.mulf %35, %38 : vector<1x128xf32>
    %40 = arith.mulf %37, %37 : vector<1x128xf32>
    %41 = arith.subf %39, %40 : vector<1x128xf32>
    %cst_68 = arith.constant 9.99999974E-6 : f32
    %42 = vector.broadcast %cst_68 : f32 to vector<1x128xf32>
    %43 = arith.addf %41, %42 : vector<1x128xf32>
    %44 = math.rsqrt %43 : vector<1x128xf32>
    %45 = arith.mulf %29, %44 : vector<1x128xf32>
    %46 = arith.mulf %37, %45 : vector<1x128xf32>
    %47 = arith.subf %30, %46 : vector<1x128xf32>
    %48 = vector.broadcast %45 : vector<1x128xf32> to vector<512x128xf32>
    %49 = arith.mulf %28, %48 : vector<512x128xf32>
    %50 = vector.broadcast %47 : vector<1x128xf32> to vector<512x128xf32>
    %51 = arith.addf %49, %50 : vector<512x128xf32>
    %cst_69 = arith.constant 0.000000e+00 : f32
    %52 = vector.broadcast %cst_69 : f32 to vector<512x128xf32>
    %53 = arith.maximumf %51, %52 : vector<512x128xf32>
    %54 = vector.shape_cast %53 : vector<512x128xf32> to vector<2x16x16x128xf32>
    %c0_70 = arith.constant 0 : index
    %c1_71 = arith.constant 1 : index
    %c1_72 = arith.constant 1 : index
    %c0_73 = arith.constant 0 : index
    %55 = vector.load %arg9[%c0_70, %c1_71, %c1_72, %c0_73] : memref<2x18x18x128xf32, #tpu.memory_space<vmem>>, vector<2x16x16x128xf32>
    tpu.vector_store %arg9[%c0_70, %c1_71, %c1_72, %c0_73], %54 {strides = array<i32>} : memref<2x18x18x128xf32, #tpu.memory_space<vmem>>, vector<2x16x16x128xf32>,
    %c0_74 = arith.constant 0 : index
    %c0_75 = arith.constant 0 : index
    %c0_76 = arith.constant 0 : index
    %c0_77 = arith.constant 0 : index
    %56 = vector.load %arg9[%c0_74, %c0_75, %c0_76, %c0_77] : memref<2x18x18x128xf32, #tpu.memory_space<vmem>>, vector<2x16x16x128xf32>
    %57 = vector.shape_cast %56 : vector<2x16x16x128xf32> to vector<512x128xf32>
    %c0_78 = arith.constant 0 : index
    %c0_79 = arith.constant 0 : index
    %c1_80 = arith.constant 1 : index
    %c0_81 = arith.constant 0 : index
    %58 = vector.load %arg9[%c0_78, %c0_79, %c1_80, %c0_81] : memref<2x18x18x128xf32, #tpu.memory_space<vmem>>, vector<2x16x16x128xf32>
    %59 = vector.shape_cast %58 : vector<2x16x16x128xf32> to vector<512x128xf32>
    %c0_82 = arith.constant 0 : index
    %c0_83 = arith.constant 0 : index
    %c2_84 = arith.constant 2 : index
    %c0_85 = arith.constant 0 : index
    %60 = vector.load %arg9[%c0_82, %c0_83, %c2_84, %c0_85] : memref<2x18x18x128xf32, #tpu.memory_space<vmem>>, vector<2x16x16x128xf32>
    %61 = vector.shape_cast %60 : vector<2x16x16x128xf32> to vector<512x128xf32>
    %c0_86 = arith.constant 0 : index
    %c1_87 = arith.constant 1 : index
    %c0_88 = arith.constant 0 : index
    %c0_89 = arith.constant 0 : index
    %62 = vector.load %arg9[%c0_86, %c1_87, %c0_88, %c0_89] : memref<2x18x18x128xf32, #tpu.memory_space<vmem>>, vector<2x16x16x128xf32>
    %63 = vector.shape_cast %62 : vector<2x16x16x128xf32> to vector<512x128xf32>
    %c0_90 = arith.constant 0 : index
    %c1_91 = arith.constant 1 : index
    %c1_92 = arith.constant 1 : index
    %c0_93 = arith.constant 0 : index
    %64 = vector.load %arg9[%c0_90, %c1_91, %c1_92, %c0_93] : memref<2x18x18x128xf32, #tpu.memory_space<vmem>>, vector<2x16x16x128xf32>
    %65 = vector.shape_cast %64 : vector<2x16x16x128xf32> to vector<512x128xf32>
    %c0_94 = arith.constant 0 : index
    %c1_95 = arith.constant 1 : index
    %c2_96 = arith.constant 2 : index
    %c0_97 = arith.constant 0 : index
    %66 = vector.load %arg9[%c0_94, %c1_95, %c2_96, %c0_97] : memref<2x18x18x128xf32, #tpu.memory_space<vmem>>, vector<2x16x16x128xf32>
    %67 = vector.shape_cast %66 : vector<2x16x16x128xf32> to vector<512x128xf32>
    %c0_98 = arith.constant 0 : index
    %c2_99 = arith.constant 2 : index
    %c0_100 = arith.constant 0 : index
    %c0_101 = arith.constant 0 : index
    %68 = vector.load %arg9[%c0_98, %c2_99, %c0_100, %c0_101] : memref<2x18x18x128xf32, #tpu.memory_space<vmem>>, vector<2x16x16x128xf32>
    %69 = vector.shape_cast %68 : vector<2x16x16x128xf32> to vector<512x128xf32>
    %c0_102 = arith.constant 0 : index
    %c2_103 = arith.constant 2 : index
    %c1_104 = arith.constant 1 : index
    %c0_105 = arith.constant 0 : index
    %70 = vector.load %arg9[%c0_102, %c2_103, %c1_104, %c0_105] : memref<2x18x18x128xf32, #tpu.memory_space<vmem>>, vector<2x16x16x128xf32>
    %71 = vector.shape_cast %70 : vector<2x16x16x128xf32> to vector<512x128xf32>
    %c0_106 = arith.constant 0 : index
    %c2_107 = arith.constant 2 : index
    %c2_108 = arith.constant 2 : index
    %c0_109 = arith.constant 0 : index
    %72 = vector.load %arg9[%c0_106, %c2_107, %c2_108, %c0_109] : memref<2x18x18x128xf32, #tpu.memory_space<vmem>>, vector<2x16x16x128xf32>
    %73 = vector.shape_cast %72 : vector<2x16x16x128xf32> to vector<512x128xf32>
    %74 = tpu.concatenate %57, %59, %61, %63, %65, %67, %69, %71, %73 in 1 : vector<512x128xf32>, vector<512x128xf32>, vector<512x128xf32>, vector<512x128xf32>, vector<512x128xf32>, vector<512x128xf32>, vector<512x128xf32>, vector<512x128xf32>, vector<512x128xf32> -> vector<512x1152xf32>
    %c0_110 = arith.constant 0 : index
    %c0_111 = arith.constant 0 : index
    %75 = vector.load %arg4[%c0_110, %c0_111] : memref<1152x128xf32, #tpu.memory_space<vmem>>, vector<1152x128xf32>
    %cst_112 = arith.constant dense<0.000000e+00> : vector<512x128xf32>
    %76 = tpu.matmul %74, %75, %cst_112 {dimension_numbers = #tpu.dot_dimension_numbers<[1], [0], [0], [1], [0, 0, 1, 1], [], []>} : vector<512x1152xf32>, vector<1152x128xf32>, vector<512x128xf32> -> vector<512x128xf32>
    %c0_113 = arith.constant 0 : index
    %c0_114 = arith.constant 0 : index
    %77 = vector.load %arg5[%c0_113, %c0_114] : memref<1x128xf32, #tpu.memory_space<vmem>>, vector<1x128xf32>
    %c0_115 = arith.constant 0 : index
    %c0_116 = arith.constant 0 : index
    %78 = vector.load %arg6[%c0_115, %c0_116] : memref<1x128xf32, #tpu.memory_space<vmem>>, vector<1x128xf32>
    %cst_117 = arith.constant dense<0.000000e+00> : vector<128xf32>
    %79 = vector.multi_reduction <add>, %76, %cst_117 [0] : vector<512x128xf32> to vector<128xf32>
    %80 = vector.shape_cast %79 : vector<128xf32> to vector<1x128xf32>
    %81 = arith.mulf %76, %76 : vector<512x128xf32>
    %cst_118 = arith.constant dense<0.000000e+00> : vector<128xf32>
    %82 = vector.multi_reduction <add>, %81, %cst_118 [0] : vector<512x128xf32> to vector<128xf32>
    %83 = vector.shape_cast %82 : vector<128xf32> to vector<1x128xf32>
    %cst_119 = arith.constant 0.001953125 : f32
    %84 = vector.broadcast %cst_119 : f32 to vector<1x128xf32>
    %85 = arith.mulf %80, %84 : vector<1x128xf32>
    %cst_120 = arith.constant 0.001953125 : f32
    %86 = vector.broadcast %cst_120 : f32 to vector<1x128xf32>
    %87 = arith.mulf %83, %86 : vector<1x128xf32>
    %88 = arith.mulf %85, %85 : vector<1x128xf32>
    %89 = arith.subf %87, %88 : vector<1x128xf32>
    %cst_121 = arith.constant 9.99999974E-6 : f32
    %90 = vector.broadcast %cst_121 : f32 to vector<1x128xf32>
    %91 = arith.addf %89, %90 : vector<1x128xf32>
    %92 = math.rsqrt %91 : vector<1x128xf32>
    %93 = arith.mulf %77, %92 : vector<1x128xf32>
    %94 = arith.mulf %85, %93 : vector<1x128xf32>
    %95 = arith.subf %78, %94 : vector<1x128xf32>
    %96 = vector.broadcast %93 : vector<1x128xf32> to vector<512x128xf32>
    %97 = arith.mulf %76, %96 : vector<512x128xf32>
    %98 = vector.broadcast %95 : vector<1x128xf32> to vector<512x128xf32>
    %99 = arith.addf %97, %98 : vector<512x128xf32>
    %cst_122 = arith.constant 0.000000e+00 : f32
    %100 = vector.broadcast %cst_122 : f32 to vector<512x128xf32>
    %101 = arith.maximumf %99, %100 : vector<512x128xf32>
    %102 = vector.shape_cast %101 : vector<512x128xf32> to vector<2x16x16x128xf32>
    %c0_123 = arith.constant 0 : index
    %c0_124 = arith.constant 0 : index
    %c0_125 = arith.constant 0 : index
    %c0_126 = arith.constant 0 : index
    %103 = vector.load %arg7[%c0_123, %c0_124, %c0_125, %c0_126] : memref<2x16x16x128xf32, #tpu.memory_space<vmem>>, vector<2x16x16x128xf32>
    tpu.vector_store %arg7[%c0_123, %c0_124, %c0_125, %c0_126], %102 {strides = array<i32>} : memref<2x16x16x128xf32, #tpu.memory_space<vmem>>, vector<2x16x16x128xf32>,
    %c0_127 = arith.constant 0 : index
    %c0_128 = arith.constant 0 : index
    %c0_129 = arith.constant 0 : index
    %c0_130 = arith.constant 0 : index
    %104 = tpu.strided_load %arg7[%c0_127, %c0_128, %c0_129, %c0_130] {strides = array<i32: 1, 2, 1, 1>} : memref<2x16x16x128xf32, #tpu.memory_space<vmem>>, vector<2x8x16x128xf32>
    %c0_131 = arith.constant 0 : index
    %c1_132 = arith.constant 1 : index
    %c0_133 = arith.constant 0 : index
    %c0_134 = arith.constant 0 : index
    %105 = tpu.strided_load %arg7[%c0_131, %c1_132, %c0_133, %c0_134] {strides = array<i32: 1, 2, 1, 1>} : memref<2x16x16x128xf32, #tpu.memory_space<vmem>>, vector<2x8x16x128xf32>
    %106 = arith.maximumf %104, %105 : vector<2x8x16x128xf32>
    %c0_135 = arith.constant 0 : index
    %c0_136 = arith.constant 0 : index
    %c0_137 = arith.constant 0 : index
    %c0_138 = arith.constant 0 : index
    %107 = vector.load %arg10[%c0_135, %c0_136, %c0_137, %c0_138] : memref<2x8x16x128xf32, #tpu.memory_space<vmem>>, vector<2x8x16x128xf32>
    tpu.vector_store %arg10[%c0_135, %c0_136, %c0_137, %c0_138], %106 {strides = array<i32>} : memref<2x8x16x128xf32, #tpu.memory_space<vmem>>, vector<2x8x16x128xf32>,
    %c0_139 = arith.constant 0 : index
    %c0_140 = arith.constant 0 : index
    %c0_141 = arith.constant 0 : index
    %c0_142 = arith.constant 0 : index
    %108 = tpu.strided_load %arg10[%c0_139, %c0_140, %c0_141, %c0_142] {strides = array<i32: 1, 1, 2, 1>} : memref<2x8x16x128xf32, #tpu.memory_space<vmem>>, vector<2x8x8x128xf32>
    %c0_143 = arith.constant 0 : index
    %c0_144 = arith.constant 0 : index
    %c1_145 = arith.constant 1 : index
    %c0_146 = arith.constant 0 : index
    %109 = tpu.strided_load %arg10[%c0_143, %c0_144, %c1_145, %c0_146] {strides = array<i32: 1, 1, 2, 1>} : memref<2x8x16x128xf32, #tpu.memory_space<vmem>>, vector<2x8x8x128xf32>
    %110 = arith.maximumf %108, %109 : vector<2x8x8x128xf32>
    %c0_147 = arith.constant 0 : index
    %c0_148 = arith.constant 0 : index
    %c0_149 = arith.constant 0 : index
    %c0_150 = arith.constant 0 : index
    %111 = vector.load %arg8[%c0_147, %c0_148, %c0_149, %c0_150] : memref<2x8x8x128xf32, #tpu.memory_space<vmem>>, vector<2x8x8x128xf32>
    tpu.vector_store %arg8[%c0_147, %c0_148, %c0_149, %c0_150], %110 {strides = array<i32>} : memref<2x8x8x128xf32, #tpu.memory_space<vmem>>, vector<2x8x8x128xf32>,
    return
  }
}

</mosaic_0001>

<llo_original>
// kernel: tpu_custom_call.1
$region0: #{tpu_custom_call.1}
  #allocation0 [shape = 'u32[]', space=smem, size = 0x4, offset = 0x4, fixed_abs, tag = 'smem constant byte address 0x4 - core index']
  #allocation1 [shape = 'u32[144,128]{1,0:T(1,128)}', space=vmem, size = 0x12000, scoped, tag = 'internal scratch']
  #allocation2 [shape = 'f32[2,18,18,128]{3,2,1,0:T(8,128)}', space=vmem, size = 0x6c000, scoped, tag = 'scratch operand']
  #allocation3 [shape = 'f32[2,8,16,128]{3,2,1,0:T(8,128)}', space=vmem, size = 0x20000, scoped, tag = 'scratch operand']
  %s0 = inlined_call_operand.hbm [shape: f32[2,16,16,128], index: 0, kind: input, shape index: {}]
  %s1 = inlined_call_operand.hbm [shape: f32[1152,128], index: 1, kind: input, shape index: {}]
  %s2 = inlined_call_operand.vmem [shape: f32[1,128], index: 2, kind: input, shape index: {}]
  %s3 = inlined_call_operand.vmem [shape: f32[1,128], index: 3, kind: input, shape index: {}]
  %s4 = inlined_call_operand.hbm [shape: f32[1152,128], index: 4, kind: input, shape index: {}]
  %s5 = inlined_call_operand.vmem [shape: f32[1,128], index: 5, kind: input, shape index: {}]
  %s6 = inlined_call_operand.vmem [shape: f32[1,128], index: 6, kind: input, shape index: {}]
  %s7 = inlined_call_operand.hbm [shape: f32[2,16,16,128], index: 7, kind: output, shape index: {0}]
  %s8 = inlined_call_operand.hbm [shape: f32[2,8,8,128], index: 8, kind: output, shape index: {1}]
  %9 = xla_tuple %s7, %s8
  %s10 = sld [smem:[#allocation0]]
  $region58: #{tpu_custom_call.1} parent=0
    _
  %s12 = ssub.s32 1, %s10
  %s13 = scalar_select 0, %s12, %s10
  $region1: #{tpu_custom_call.1} parent=0
    #allocation4 [shape = 'u8[262144]{0}', space=vmem, size = 0x40000, scoped, tag = 'input window, operand 0, single buffered']
    #allocation5 [shape = 's32[1]{0}', space=sflag, size = 0x4, scoped, tag = 'scoped memory for tpu_custom_call.1']
    #allocation6 [shape = 's32[1]{0}', space=sflag, size = 0x4, scoped, tag = 'scoped memory for tpu_custom_call.1']
    #allocation7 [shape = 'u8[589824]{0}', space=vmem, size = 0x90000, scoped, tag = 'input window, operand 1, single buffered']
    #allocation8 [shape = 's32[1]{0}', space=sflag, size = 0x4, scoped, tag = 'scoped memory for tpu_custom_call.1']
    #allocation9 [shape = 'u8[589824]{0}', space=vmem, size = 0x90000, scoped, tag = 'input window, operand 4, single buffered']
    #allocation10 [shape = 'u8[262144]{0}', space=vmem, size = 0x40000, scoped, tag = 'output window, operand 0, single buffered']
    #allocation11 [shape = 'u8[65536]{0}', space=vmem, size = 0x10000, scoped, tag = 'output window, operand 1, single buffered']
    #allocation12 [shape = 's32[1]{0}', space=sflag, size = 0x4, scoped, tag = 'scoped memory for tpu_custom_call.1']
    %14 = vsyncpa [#allocation5], 0
    %15 = vsyncpa [#allocation8], 0
    %16 = vsyncpa [#allocation6], 0
    %17 = vsyncpa [#allocation12], 0
    // Predicated region
    $region2: #{tpu_custom_call.1} parent=1 // pred_check
      _
    $region3: #{tpu_custom_call.1} parent=1 // pred_check_branch
      %19 = sbr.rel (0) target = $region5
    $region4: #{tpu_custom_call.1} parent=1 // pred_region
      %s21 = ssub.s32 8192, 8192
      %22 = vsyncadd [#allocation5], %s21
      %s23 = sshll.u32 [#allocation4], 4
      %s24 = int_to_ptr.vmem [resolvable:$true] %s23
      %29 = dma.hbm_to_vmem [thread:$0]  %s0, 8192, %s24, [#allocation5], 128, 128, 8
    $region5: #{tpu_custom_call.1} parent=1 // pred_fallthru
      _
    // Predicated region
    $region6: #{tpu_custom_call.1} parent=1 // pred_check
      _
    $region7: #{tpu_custom_call.1} parent=1 // pred_check_branch
      %31 = sbr.rel (0) target = $region9
    $region8: #{tpu_custom_call.1} parent=1 // pred_region
      %s33 = ssub.s32 18432, 18432
      %34 = vsyncadd [#allocation8], %s33
      %s35 = sshll.u32 [#allocation7], 4
      %s36 = int_to_ptr.vmem [resolvable:$true] %s35
      %41 = dma.hbm_to_vmem [thread:$0]  %s1, 18432, %s36, [#allocation8], 128, 128, 8
    $region9: #{tpu_custom_call.1} parent=1 // pred_fallthru
      _
    // Predicated region
    $region10: #{tpu_custom_call.1} parent=1 // pred_check
      _
    $region11: #{tpu_custom_call.1} parent=1 // pred_check_branch
      %43 = sbr.rel (0) target = $region13
    $region12: #{tpu_custom_call.1} parent=1 // pred_region
      _
    $region13: #{tpu_custom_call.1} parent=1 // pred_fallthru
      _
    // Predicated region
    $region14: #{tpu_custom_call.1} parent=1 // pred_check
      _
    $region15: #{tpu_custom_call.1} parent=1 // pred_check_branch
      %45 = sbr.rel (0) target = $region17
    $region16: #{tpu_custom_call.1} parent=1 // pred_region
      _
    $region17: #{tpu_custom_call.1} parent=1 // pred_fallthru
      _
    // Predicated region
    $region18: #{tpu_custom_call.1} parent=1 // pred_check
      _
    $region19: #{tpu_custom_call.1} parent=1 // pred_check_branch
      %47 = sbr.rel (0) target = $region21
    $region20: #{tpu_custom_call.1} parent=1 // pred_region
      %s49 = ssub.s32 18432, 18432
      %50 = vsyncadd [#allocation8], %s49
      %s51 = sshll.u32 [#allocation9], 4
      %s52 = int_to_ptr.vmem [resolvable:$true] %s51
      %57 = dma.hbm_to_vmem [thread:$0]  %s4, 18432, %s52, [#allocation8], 128, 128, 8
    $region21: #{tpu_custom_call.1} parent=1 // pred_fallthru
      _
    // Predicated region
    $region22: #{tpu_custom_call.1} parent=1 // pred_check
      _
    $region23: #{tpu_custom_call.1} parent=1 // pred_check_branch
      %59 = sbr.rel (0) target = $region25
    $region24: #{tpu_custom_call.1} parent=1 // pred_region
      _
    $region25: #{tpu_custom_call.1} parent=1 // pred_fallthru
      _
    // Predicated region
    $region26: #{tpu_custom_call.1} parent=1 // pred_check
      _
    $region27: #{tpu_custom_call.1} parent=1 // pred_check_branch
      %61 = sbr.rel (0) target = $region29
    $region28: #{tpu_custom_call.1} parent=1 // pred_region
      _
    $region29: #{tpu_custom_call.1} parent=1 // pred_fallthru
      _
    // Predicated region
    $region30: #{tpu_custom_call.1} parent=1 // pred_check
      _
    $region31: #{tpu_custom_call.1} parent=1 // pred_check_branch
      %63 = sbr.rel (0) target = $region33
    $region32: #{tpu_custom_call.1} parent=1 // pred_region
      %64 = dma.done [#allocation5], 8192
    $region33: #{tpu_custom_call.1} parent=1 // pred_fallthru
      _
    // Predicated region
    $region34: #{tpu_custom_call.1} parent=1 // pred_check
      _
    $region35: #{tpu_custom_call.1} parent=1 // pred_check_branch
      %66 = sbr.rel (0) target = $region37
    $region36: #{tpu_custom_call.1} parent=1 // pred_region
      %67 = dma.done [#allocation8], 18432
    $region37: #{tpu_custom_call.1} parent=1 // pred_fallthru
      _
    // Predicated region
    $region38: #{tpu_custom_call.1} parent=1 // pred_check
      _
    $region39: #{tpu_custom_call.1} parent=1 // pred_check_branch
      %69 = sbr.rel (0) target = $region41
    $region40: #{tpu_custom_call.1} parent=1 // pred_region
      %70 = dma.done [#allocation8], 18432
    $region41: #{tpu_custom_call.1} parent=1 // pred_fallthru
      _
    %71 = vst [vmem:[#allocation2] sm:$0xff] 0.0
    %72 = vst [vmem:[#allocation2 + $0x8] sm:$0xff] 0.0
    %73 = vst [vmem:[#allocation2 + $0x10] sm:$0x3] 0.0
    %74 = vst [vmem:[#allocation2 + $0x1b0] sm:$0xff] 0.0
    %75 = vst [vmem:[#allocation2 + $0x1b8] sm:$0xff] 0.0
    %76 = vst [vmem:[#allocation2 + $0x1c0] sm:$0x3] 0.0
    %s77 = scalar_lea.vmem [#allocation2], 408
    %78 = vst [vmem:[%s77] sm:$0xff] 0.0
    %79 = vst [vmem:[%s77 + $0x8] sm:$0xff] 0.0
    %80 = vst [vmem:[%s77 + $0x10] sm:$0x3] 0.0
    %81 = vst [vmem:[%s77 + $0x1b0] sm:$0xff] 0.0
    %82 = vst [vmem:[%s77 + $0x1b8] sm:$0xff] 0.0
    %83 = vst [vmem:[%s77 + $0x1c0] sm:$0x3] 0.0
    %84 = vst [vmem:[#allocation2] sm:$0x1] 0.0
    %85 = vst [vmem:[#allocation2 + $0x18] sm:$0x1] 0.0
    %86 = vst [vmem:[#allocation2 + $0x30] sm:$0x1] 0.0
    %87 = vst [vmem:[#allocation2 + $0x48] sm:$0x1] 0.0
    %88 = vst [vmem:[#allocation2 + $0x60] sm:$0x1] 0.0
    %89 = vst [vmem:[#allocation2 + $0x78] sm:$0x1] 0.0
    %90 = vst [vmem:[#allocation2 + $0x90] sm:$0x1] 0.0
    %91 = vst [vmem:[#allocation2 + $0xa8] sm:$0x1] 0.0
    %92 = vst [vmem:[#allocation2 + $0xc0] sm:$0x1] 0.0
    %93 = vst [vmem:[#allocation2 + $0xd8] sm:$0x1] 0.0
    %94 = vst [vmem:[#allocation2 + $0xf0] sm:$0x1] 0.0
    %95 = vst [vmem:[#allocation2 + $0x108] sm:$0x1] 0.0
    %96 = vst [vmem:[#allocation2 + $0x120] sm:$0x1] 0.0
    %97 = vst [vmem:[#allocation2 + $0x138] sm:$0x1] 0.0
    %98 = vst [vmem:[#allocation2 + $0x150] sm:$0x1] 0.0
    %99 = vst [vmem:[#allocation2 + $0x168] sm:$0x1] 0.0
    %100 = vst [vmem:[#allocation2 + $0x180] sm:$0x1] 0.0
    %101 = vst [vmem:[#allocation2 + $0x198] sm:$0x1] 0.0
    %102 = vst [vmem:[#allocation2 + $0x1b0] sm:$0x1] 0.0
    %103 = vst [vmem:[#allocation2 + $0x1c8] sm:$0x1] 0.0
    %104 = vst [vmem:[#allocation2 + $0x1e0] sm:$0x1] 0.0
    %105 = vst [vmem:[#allocation2 + $0x1f8] sm:$0x1] 0.0
    %106 = vst [vmem:[#allocation2 + $0x210] sm:$0x1] 0.0
    %107 = vst [vmem:[#allocation2 + $0x228] sm:$0x1] 0.0
    %108 = vst [vmem:[#allocation2 + $0x240] sm:$0x1] 0.0
    %109 = vst [vmem:[#allocation2 + $0x258] sm:$0x1] 0.0
    %110 = vst [vmem:[#allocation2 + $0x270] sm:$0x1] 0.0
    %111 = vst [vmem:[#allocation2 + $0x288] sm:$0x1] 0.0
    %112 = vst [vmem:[#allocation2 + $0x2a0] sm:$0x1] 0.0
    %113 = vst [vmem:[#allocation2 + $0x2b8] sm:$0x1] 0.0
    %114 = vst [vmem:[#allocation2 + $0x2d0] sm:$0x1] 0.0
    %115 = vst [vmem:[#allocation2 + $0x2e8] sm:$0x1] 0.0
    %116 = vst [vmem:[#allocation2 + $0x300] sm:$0x1] 0.0
    %117 = vst [vmem:[#allocation2 + $0x318] sm:$0x1] 0.0
    %118 = vst [vmem:[#allocation2 + $0x330] sm:$0x1] 0.0
    %119 = vst [vmem:[#allocation2 + $0x348] sm:$0x1] 0.0
    %120 = vst [vmem:[#allocation2 + $0x11] sm:$0x1] 0.0
    %121 = vst [vmem:[#allocation2 + $0x29] sm:$0x1] 0.0
    %122 = vst [vmem:[#allocation2 + $0x41] sm:$0x1] 0.0
    %123 = vst [vmem:[#allocation2 + $0x59] sm:$0x1] 0.0
    %124 = vst [vmem:[#allocation2 + $0x71] sm:$0x1] 0.0
    %125 = vst [vmem:[#allocation2 + $0x89] sm:$0x1] 0.0
    %126 = vst [vmem:[#allocation2 + $0xa1] sm:$0x1] 0.0
    %127 = vst [vmem:[#allocation2 + $0xb9] sm:$0x1] 0.0
    %128 = vst [vmem:[#allocation2 + $0xd1] sm:$0x1] 0.0
    %129 = vst [vmem:[#allocation2 + $0xe9] sm:$0x1] 0.0
    %130 = vst [vmem:[#allocation2 + $0x101] sm:$0x1] 0.0
    %131 = vst [vmem:[#allocation2 + $0x119] sm:$0x1] 0.0
    %132 = vst [vmem:[#allocation2 + $0x131] sm:$0x1] 0.0
    %133 = vst [vmem:[#allocation2 + $0x149] sm:$0x1] 0.0
    %134 = vst [vmem:[#allocation2 + $0x161] sm:$0x1] 0.0
    %135 = vst [vmem:[#allocation2 + $0x179] sm:$0x1] 0.0
    %136 = vst [vmem:[#allocation2 + $0x191] sm:$0x1] 0.0
    %137 = vst [vmem:[#allocation2 + $0x1a9] sm:$0x1] 0.0
    %138 = vst [vmem:[#allocation2 + $0x1c1] sm:$0x1] 0.0
    %139 = vst [vmem:[#allocation2 + $0x1d9] sm:$0x1] 0.0
    %140 = vst [vmem:[#allocation2 + $0x1f1] sm:$0x1] 0.0
    %141 = vst [vmem:[#allocation2 + $0x209] sm:$0x1] 0.0
    %142 = vst [vmem:[#allocation2 + $0x221] sm:$0x1] 0.0
    %143 = vst [vmem:[#allocation2 + $0x239] sm:$0x1] 0.0
    %144 = vst [vmem:[#allocation2 + $0x251] sm:$0x1] 0.0
    %145 = vst [vmem:[#allocation2 + $0x269] sm:$0x1] 0.0
    %146 = vst [vmem:[#allocation2 + $0x281] sm:$0x1] 0.0
    %147 = vst [vmem:[#allocation2 + $0x299] sm:$0x1] 0.0
    %148 = vst [vmem:[#allocation2 + $0x2b1] sm:$0x1] 0.0
    %149 = vst [vmem:[#allocation2 + $0x2c9] sm:$0x1] 0.0
    %150 = vst [vmem:[#allocation2 + $0x2e1] sm:$0x1] 0.0
    %151 = vst [vmem:[#allocation2 + $0x2f9] sm:$0x1] 0.0
    %152 = vst [vmem:[#allocation2 + $0x311] sm:$0x1] 0.0
    %153 = vst [vmem:[#allocation2 + $0x329] sm:$0x1] 0.0
    %154 = vst [vmem:[#allocation2 + $0x341] sm:$0x1] 0.0
    %155 = vst [vmem:[#allocation2 + $0x359] sm:$0x1] 0.0
    %v156 = vld [vmem:[#allocation4] sm:$0xff]
    %v157 = vld [vmem:[#allocation4 + $0x8] sm:$0xff]
    %v158 = vld [vmem:[#allocation4 + $0x10] sm:$0xff]
    %v159 = vld [vmem:[#allocation4 + $0x18] sm:$0xff]
    %v160 = vld [vmem:[#allocation4 + $0x20] sm:$0xff]
    %v161 = vld [vmem:[#allocation4 + $0x28] sm:$0xff]
    %v162 = vld [vmem:[#allocation4 + $0x30] sm:$0xff]
    %v163 = vld [vmem:[#allocation4 + $0x38] sm:$0xff]
    %v164 = vld [vmem:[#allocation4 + $0x40] sm:$0xff]
    %v165 = vld [vmem:[#allocation4 + $0x48] sm:$0xff]
    %v166 = vld [vmem:[#allocation4 + $0x50] sm:$0xff]
    %v167 = vld [vmem:[#allocation4 + $0x58] sm:$0xff]
    %v168 = vld [vmem:[#allocation4 + $0x60] sm:$0xff]
    %v169 = vld [vmem:[#allocation4 + $0x68] sm:$0xff]
    %v170 = vld [vmem:[#allocation4 + $0x70] sm:$0xff]
    %v171 = vld [vmem:[#allocation4 + $0x78] sm:$0xff]
    %v172 = vld [vmem:[#allocation4 + $0x80] sm:$0xff]
    %v173 = vld [vmem:[#allocation4 + $0x88] sm:$0xff]
    %v174 = vld [vmem:[#allocation4 + $0x90] sm:$0xff]
    %v175 = vld [vmem:[#allocation4 + $0x98] sm:$0xff]
    %v176 = vld [vmem:[#allocation4 + $0xa0] sm:$0xff]
    %v177 = vld [vmem:[#allocation4 + $0xa8] sm:$0xff]
    %v178 = vld [vmem:[#allocation4 + $0xb0] sm:$0xff]
    %v179 = vld [vmem:[#allocation4 + $0xb8] sm:$0xff]
    %v180 = vld [vmem:[#allocation4 + $0xc0] sm:$0xff]
    %v181 = vld [vmem:[#allocation4 + $0xc8] sm:$0xff]
    %v182 = vld [vmem:[#allocation4 + $0xd0] sm:$0xff]
    %v183 = vld [vmem:[#allocation4 + $0xd8] sm:$0xff]
    %v184 = vld [vmem:[#allocation4 + $0xe0] sm:$0xff]
    %v185 = vld [vmem:[#allocation4 + $0xe8] sm:$0xff]
    %v186 = vld [vmem:[#allocation4 + $0xf0] sm:$0xff]
    %v187 = vld [vmem:[#allocation4 + $0xf8] sm:$0xff]
    %v188 = vld [vmem:[#allocation4 + $0x100] sm:$0xff]
    %v189 = vld [vmem:[#allocation4 + $0x108] sm:$0xff]
    %v190 = vld [vmem:[#allocation4 + $0x110] sm:$0xff]
    %v191 = vld [vmem:[#allocation4 + $0x118] sm:$0xff]
    %v192 = vld [vmem:[#allocation4 + $0x120] sm:$0xff]
    %v193 = vld [vmem:[#allocation4 + $0x128] sm:$0xff]
    %v194 = vld [vmem:[#allocation4 + $0x130] sm:$0xff]
    %v195 = vld [vmem:[#allocation4 + $0x138] sm:$0xff]
    %v196 = vld [vmem:[#allocation4 + $0x140] sm:$0xff]
    %v197 = vld [vmem:[#allocation4 + $0x148] sm:$0xff]
    %v198 = vld [vmem:[#allocation4 + $0x150] sm:$0xff]
    %v199 = vld [vmem:[#allocation4 + $0x158] sm:$0xff]
    %v200 = vld [vmem:[#allocation4 + $0x160] sm:$0xff]
    %v201 = vld [vmem:[#allocation4 + $0x168] sm:$0xff]
    %v202 = vld [vmem:[#allocation4 + $0x170] sm:$0xff]
    %v203 = vld [vmem:[#allocation4 + $0x178] sm:$0xff]
    %v204 = vld [vmem:[#allocation4 + $0x180] sm:$0xff]
    %v205 = vld [vmem:[#allocation4 + $0x188] sm:$0xff]
    %v206 = vld [vmem:[#allocation4 + $0x190] sm:$0xff]
    %v207 = vld [vmem:[#allocation4 + $0x198] sm:$0xff]
    %v208 = vld [vmem:[#allocation4 + $0x1a0] sm:$0xff]
    %v209 = vld [vmem:[#allocation4 + $0x1a8] sm:$0xff]
    %v210 = vld [vmem:[#allocation4 + $0x1b0] sm:$0xff]
    %v211 = vld [vmem:[#allocation4 + $0x1b8] sm:$0xff]
    %v212 = vld [vmem:[#allocation4 + $0x1c0] sm:$0xff]
    %v213 = vld [vmem:[#allocation4 + $0x1c8] sm:$0xff]
    %v214 = vld [vmem:[#allocation4 + $0x1d0] sm:$0xff]
    %v215 = vld [vmem:[#allocation4 + $0x1d8] sm:$0xff]
    %v216 = vld [vmem:[#allocation4 + $0x1e0] sm:$0xff]
    %v217 = vld [vmem:[#allocation4 + $0x1e8] sm:$0xff]
    %v218 = vld [vmem:[#allocation4 + $0x1f0] sm:$0xff]
    %v219 = vld [vmem:[#allocation4 + $0x1f8] sm:$0xff]
    %s220 = scalar_lea.vmem [#allocation2], 24
    %221 = vst [vmem:[%s220 + $0x1] sm:$0xff] %v156
    %222 = vst [vmem:[%s220 + $0x9] sm:$0xff] %v157
    %223 = vst [vmem:[%s220 + $0x19] sm:$0xff] %v158
    %224 = vst [vmem:[%s220 + $0x21] sm:$0xff] %v159
    %225 = vst [vmem:[%s220 + $0x31] sm:$0xff] %v160
    %226 = vst [vmem:[%s220 + $0x39] sm:$0xff] %v161
    %227 = vst [vmem:[%s220 + $0x49] sm:$0xff] %v162
    %228 = vst [vmem:[%s220 + $0x51] sm:$0xff] %v163
    %229 = vst [vmem:[%s220 + $0x61] sm:$0xff] %v164
    %230 = vst [vmem:[%s220 + $0x69] sm:$0xff] %v165
    %231 = vst [vmem:[%s220 + $0x79] sm:$0xff] %v166
    %232 = vst [vmem:[%s220 + $0x81] sm:$0xff] %v167
    %233 = vst [vmem:[%s220 + $0x91] sm:$0xff] %v168
    %234 = vst [vmem:[%s220 + $0x99] sm:$0xff] %v169
    %235 = vst [vmem:[%s220 + $0xa9] sm:$0xff] %v170
    %236 = vst [vmem:[%s220 + $0xb1] sm:$0xff] %v171
    %237 = vst [vmem:[%s220 + $0xc1] sm:$0xff] %v172
    %238 = vst [vmem:[%s220 + $0xc9] sm:$0xff] %v173
    %239 = vst [vmem:[%s220 + $0xd9] sm:$0xff] %v174
    %240 = vst [vmem:[%s220 + $0xe1] sm:$0xff] %v175
    %241 = vst [vmem:[%s220 + $0xf1] sm:$0xff] %v176
    %242 = vst [vmem:[%s220 + $0xf9] sm:$0xff] %v177
    %243 = vst [vmem:[%s220 + $0x109] sm:$0xff] %v178
    %244 = vst [vmem:[%s220 + $0x111] sm:$0xff] %v179
    %245 = vst [vmem:[%s220 + $0x121] sm:$0xff] %v180
    %246 = vst [vmem:[%s220 + $0x129] sm:$0xff] %v181
    %247 = vst [vmem:[%s220 + $0x139] sm:$0xff] %v182
    %248 = vst [vmem:[%s220 + $0x141] sm:$0xff] %v183
    %249 = vst [vmem:[%s220 + $0x151] sm:$0xff] %v184
    %250 = vst [vmem:[%s220 + $0x159] sm:$0xff] %v185
    %251 = vst [vmem:[%s220 + $0x169] sm:$0xff] %v186
    %252 = vst [vmem:[%s220 + $0x171] sm:$0xff] %v187
    %253 = vst [vmem:[%s220 + $0x1b1] sm:$0xff] %v188
    %254 = vst [vmem:[%s220 + $0x1b9] sm:$0xff] %v189
    %255 = vst [vmem:[%s220 + $0x1c9] sm:$0xff] %v190
    %256 = vst [vmem:[%s220 + $0x1d1] sm:$0xff] %v191
    %257 = vst [vmem:[%s220 + $0x1e1] sm:$0xff] %v192
    %258 = vst [vmem:[%s220 + $0x1e9] sm:$0xff] %v193
    %259 = vst [vmem:[%s220 + $0x1f9] sm:$0xff] %v194
    %260 = vst [vmem:[%s220 + $0x201] sm:$0xff] %v195
    %261 = vst [vmem:[%s220 + $0x211] sm:$0xff] %v196
    %262 = vst [vmem:[%s220 + $0x219] sm:$0xff] %v197
    %263 = vst [vmem:[%s220 + $0x229] sm:$0xff] %v198
    %264 = vst [vmem:[%s220 + $0x231] sm:$0xff] %v199
    %265 = vst [vmem:[%s220 + $0x241] sm:$0xff] %v200
    %266 = vst [vmem:[%s220 + $0x249] sm:$0xff] %v201
    %267 = vst [vmem:[%s220 + $0x259] sm:$0xff] %v202
    %268 = vst [vmem:[%s220 + $0x261] sm:$0xff] %v203
    %269 = vst [vmem:[%s220 + $0x271] sm:$0xff] %v204
    %270 = vst [vmem:[%s220 + $0x279] sm:$0xff] %v205
    %271 = vst [vmem:[%s220 + $0x289] sm:$0xff] %v206
    %272 = vst [vmem:[%s220 + $0x291] sm:$0xff] %v207
    %273 = vst [vmem:[%s220 + $0x2a1] sm:$0xff] %v208
    %274 = vst [vmem:[%s220 + $0x2a9] sm:$0xff] %v209
    %275 = vst [vmem:[%s220 + $0x2b9] sm:$0xff] %v210
    %276 = vst [vmem:[%s220 + $0x2c1] sm:$0xff] %v211
    %277 = vst [vmem:[%s220 + $0x2d1] sm:$0xff] %v212
    %278 = vst [vmem:[%s220 + $0x2d9] sm:$0xff] %v213
    %279 = vst [vmem:[%s220 + $0x2e9] sm:$0xff] %v214
    %280 = vst [vmem:[%s220 + $0x2f1] sm:$0xff] %v215
    %281 = vst [vmem:[%s220 + $0x301] sm:$0xff] %v216
    %282 = vst [vmem:[%s220 + $0x309] sm:$0xff] %v217
    %283 = vst [vmem:[%s220 + $0x319] sm:$0xff] %v218
    %284 = vst [vmem:[%s220 + $0x321] sm:$0xff] %v219
    %v285 = vld [vmem:[#allocation2] sm:$0xff]
    %v286 = vld [vmem:[#allocation2 + $0x8] sm:$0xff]
    %v287 = vld [vmem:[#allocation2 + $0x18] sm:$0xff]
    %v288 = vld [vmem:[#allocation2 + $0x20] sm:$0xff]
    %v289 = vld [vmem:[#allocation2 + $0x30] sm:$0xff]
    %v290 = vld [vmem:[#allocation2 + $0x38] sm:$0xff]
    %v291 = vld [vmem:[#allocation2 + $0x48] sm:$0xff]
    %v292 = vld [vmem:[#allocation2 + $0x50] sm:$0xff]
    %v293 = vld [vmem:[#allocation2 + $0x60] sm:$0xff]
    %v294 = vld [vmem:[#allocation2 + $0x68] sm:$0xff]
    %v295 = vld [vmem:[#allocation2 + $0x78] sm:$0xff]
    %v296 = vld [vmem:[#allocation2 + $0x80] sm:$0xff]
    %v297 = vld [vmem:[#allocation2 + $0x90] sm:$0xff]
    %v298 = vld [vmem:[#allocation2 + $0x98] sm:$0xff]
    %v299 = vld [vmem:[#allocation2 + $0xa8] sm:$0xff]
    %v300 = vld [vmem:[#allocation2 + $0xb0] sm:$0xff]
    %v301 = vld [vmem:[#allocation2 + $0xc0] sm:$0xff]
    %v302 = vld [vmem:[#allocation2 + $0xc8] sm:$0xff]
    %v303 = vld [vmem:[#allocation2 + $0xd8] sm:$0xff]
    %v304 = vld [vmem:[#allocation2 + $0xe0] sm:$0xff]
    %v305 = vld [vmem:[#allocation2 + $0xf0] sm:$0xff]
    %v306 = vld [vmem:[#allocation2 + $0xf8] sm:$0xff]
    %v307 = vld [vmem:[#allocation2 + $0x108] sm:$0xff]
    %v308 = vld [vmem:[#allocation2 + $0x110] sm:$0xff]
    %v309 = vld [vmem:[#allocation2 + $0x120] sm:$0xff]
    %v310 = vld [vmem:[#allocation2 + $0x128] sm:$0xff]
    %v311 = vld [vmem:[#allocation2 + $0x138] sm:$0xff]
    %v312 = vld [vmem:[#allocation2 + $0x140] sm:$0xff]
    %v313 = vld [vmem:[#allocation2 + $0x150] sm:$0xff]
    %v314 = vld [vmem:[#allocation2 + $0x158] sm:$0xff]
    %v315 = vld [vmem:[#allocation2 + $0x168] sm:$0xff]
    %v316 = vld [vmem:[#allocation2 + $0x170] sm:$0xff]
    %v317 = vld [vmem:[#allocation2 + $0x1b0] sm:$0xff]
    %v318 = vld [vmem:[#allocation2 + $0x1b8] sm:$0xff]
    %v319 = vld [vmem:[#allocation2 + $0x1c8] sm:$0xff]
    %v320 = vld [vmem:[#allocation2 + $0x1d0] sm:$0xff]
    %v321 = vld [vmem:[#allocation2 + $0x1e0] sm:$0xff]
    %v322 = vld [vmem:[#allocation2 + $0x1e8] sm:$0xff]
    %v323 = vld [vmem:[#allocation2 + $0x1f8] sm:$0xff]
    %v324 = vld [vmem:[#allocation2 + $0x200] sm:$0xff]
    %v325 = vld [vmem:[#allocation2 + $0x210] sm:$0xff]
    %v326 = vld [vmem:[#allocation2 + $0x218] sm:$0xff]
    %v327 = vld [vmem:[#allocation2 + $0x228] sm:$0xff]
    %v328 = vld [vmem:[#allocation2 + $0x230] sm:$0xff]
    %v329 = vld [vmem:[#allocation2 + $0x240] sm:$0xff]
    %v330 = vld [vmem:[#allocation2 + $0x248] sm:$0xff]
    %v331 = vld [vmem:[#allocation2 + $0x258] sm:$0xff]
    %v332 = vld [vmem:[#allocation2 + $0x260] sm:$0xff]
    %v333 = vld [vmem:[#allocation2 + $0x270] sm:$0xff]
    %v334 = vld [vmem:[#allocation2 + $0x278] sm:$0xff]
    %v335 = vld [vmem:[#allocation2 + $0x288] sm:$0xff]
    %v336 = vld [vmem:[#allocation2 + $0x290] sm:$0xff]
    %v337 = vld [vmem:[#allocation2 + $0x2a0] sm:$0xff]
    %v338 = vld [vmem:[#allocation2 + $0x2a8] sm:$0xff]
    %v339 = vld [vmem:[#allocation2 + $0x2b8] sm:$0xff]
    %v340 = vld [vmem:[#allocation2 + $0x2c0] sm:$0xff]
    %v341 = vld [vmem:[#allocation2 + $0x2d0] sm:$0xff]
    %v342 = vld [vmem:[#allocation2 + $0x2d8] sm:$0xff]
    %v343 = vld [vmem:[#allocation2 + $0x2e8] sm:$0xff]
    %v344 = vld [vmem:[#allocation2 + $0x2f0] sm:$0xff]
    %v345 = vld [vmem:[#allocation2 + $0x300] sm:$0xff]
    %v346 = vld [vmem:[#allocation2 + $0x308] sm:$0xff]
    %v347 = vld [vmem:[#allocation2 + $0x318] sm:$0xff]
    %v348 = vld [vmem:[#allocation2 + $0x320] sm:$0xff]
    %v349 = vld [vmem:[#allocation2 + $0x1] sm:$0xff]
    %v350 = vld [vmem:[#allocation2 + $0x9] sm:$0xff]
    %v351 = vld [vmem:[#allocation2 + $0x19] sm:$0xff]
    %v352 = vld [vmem:[#allocation2 + $0x21] sm:$0xff]
    %v353 = vld [vmem:[#allocation2 + $0x31] sm:$0xff]
    %v354 = vld [vmem:[#allocation2 + $0x39] sm:$0xff]
    %v355 = vld [vmem:[#allocation2 + $0x49] sm:$0xff]
    %v356 = vld [vmem:[#allocation2 + $0x51] sm:$0xff]
    %v357 = vld [vmem:[#allocation2 + $0x61] sm:$0xff]
    %v358 = vld [vmem:[#allocation2 + $0x69] sm:$0xff]
    %v359 = vld [vmem:[#allocation2 + $0x79] sm:$0xff]
    %v360 = vld [vmem:[#allocation2 + $0x81] sm:$0xff]
    %v361 = vld [vmem:[#allocation2 + $0x91] sm:$0xff]
    %v362 = vld [vmem:[#allocation2 + $0x99] sm:$0xff]
    %v363 = vld [vmem:[#allocation2 + $0xa9] sm:$0xff]
    %v364 = vld [vmem:[#allocation2 + $0xb1] sm:$0xff]
    %v365 = vld [vmem:[#allocation2 + $0xc1] sm:$0xff]
    %v366 = vld [vmem:[#allocation2 + $0xc9] sm:$0xff]
    %v367 = vld [vmem:[#allocation2 + $0xd9] sm:$0xff]
    %v368 = vld [vmem:[#allocation2 + $0xe1] sm:$0xff]
    %v369 = vld [vmem:[#allocation2 + $0xf1] sm:$0xff]
    %v370 = vld [vmem:[#allocation2 + $0xf9] sm:$0xff]
    %v371 = vld [vmem:[#allocation2 + $0x109] sm:$0xff]
    %v372 = vld [vmem:[#allocation2 + $0x111] sm:$0xff]
    %v373 = vld [vmem:[#allocation2 + $0x121] sm:$0xff]
    %v374 = vld [vmem:[#allocation2 + $0x129] sm:$0xff]
    %v375 = vld [vmem:[#allocation2 + $0x139] sm:$0xff]
    %v376 = vld [vmem:[#allocation2 + $0x141] sm:$0xff]
    %v377 = vld [vmem:[#allocation2 + $0x151] sm:$0xff]
    %v378 = vld [vmem:[#allocation2 + $0x159] sm:$0xff]
    %v379 = vld [vmem:[#allocation2 + $0x169] sm:$0xff]
    %v380 = vld [vmem:[#allocation2 + $0x171] sm:$0xff]
    %v381 = vld [vmem:[#allocation2 + $0x1b1] sm:$0xff]
    %v382 = vld [vmem:[#allocation2 + $0x1b9] sm:$0xff]
    %v383 = vld [vmem:[#allocation2 + $0x1c9] sm:$0xff]
    %v384 = vld [vmem:[#allocation2 + $0x1d1] sm:$0xff]
    %v385 = vld [vmem:[#allocation2 + $0x1e1] sm:$0xff]
    %v386 = vld [vmem:[#allocation2 + $0x1e9] sm:$0xff]
    %v387 = vld [vmem:[#allocation2 + $0x1f9] sm:$0xff]
    %v388 = vld [vmem:[#allocation2 + $0x201] sm:$0xff]
    %v389 = vld [vmem:[#allocation2 + $0x211] sm:$0xff]
    %v390 = vld [vmem:[#allocation2 + $0x219] sm:$0xff]
    %v391 = vld [vmem:[#allocation2 + $0x229] sm:$0xff]
    %v392 = vld [vmem:[#allocation2 + $0x231] sm:$0xff]
    %v393 = vld [vmem:[#allocation2 + $0x241] sm:$0xff]
    %v394 = vld [vmem:[#allocation2 + $0x249] sm:$0xff]
    %v395 = vld [vmem:[#allocation2 + $0x259] sm:$0xff]
    %v396 = vld [vmem:[#allocation2 + $0x261] sm:$0xff]
    %v397 = vld [vmem:[#allocation2 + $0x271] sm:$0xff]
    %v398 = vld [vmem:[#allocation2 + $0x279] sm:$0xff]
    %v399 = vld [vmem:[#allocation2 + $0x289] sm:$0xff]
    %v400 = vld [vmem:[#allocation2 + $0x291] sm:$0xff]
    %v401 = vld [vmem:[#allocation2 + $0x2a1] sm:$0xff]
    %v402 = vld [vmem:[#allocation2 + $0x2a9] sm:$0xff]
    %v403 = vld [vmem:[#allocation2 + $0x2b9] sm:$0xff]
    %v404 = vld [vmem:[#allocation2 + $0x2c1] sm:$0xff]
    %v405 = vld [vmem:[#allocation2 + $0x2d1] sm:$0xff]
    %v406 = vld [vmem:[#allocation2 + $0x2d9] sm:$0xff]
    %v407 = vld [vmem:[#allocation2 + $0x2e9] sm:$0xff]
    %v408 = vld [vmem:[#allocation2 + $0x2f1] sm:$0xff]
    %v409 = vld [vmem:[#allocation2 + $0x301] sm:$0xff]
    %v410 = vld [vmem:[#allocation2 + $0x309] sm:$0xff]
    %v411 = vld [vmem:[#allocation2 + $0x319] sm:$0xff]
    %v412 = vld [vmem:[#allocation2 + $0x321] sm:$0xff]
    %v413 = vld [vmem:[#allocation2 + $0x2] sm:$0xff]
    %v414 = vld [vmem:[#allocation2 + $0xa] sm:$0xff]
    %v415 = vld [vmem:[#allocation2 + $0x1a] sm:$0xff]
    %v416 = vld [vmem:[#allocation2 + $0x22] sm:$0xff]
    %v417 = vld [vmem:[#allocation2 + $0x32] sm:$0xff]
    %v418 = vld [vmem:[#allocation2 + $0x3a] sm:$0xff]
    %v419 = vld [vmem:[#allocation2 + $0x4a] sm:$0xff]
    %v420 = vld [vmem:[#allocation2 + $0x52] sm:$0xff]
    %v421 = vld [vmem:[#allocation2 + $0x62] sm:$0xff]
    %v422 = vld [vmem:[#allocation2 + $0x6a] sm:$0xff]
    %v423 = vld [vmem:[#allocation2 + $0x7a] sm:$0xff]
    %v424 = vld [vmem:[#allocation2 + $0x82] sm:$0xff]
    %v425 = vld [vmem:[#allocation2 + $0x92] sm:$0xff]
    %v426 = vld [vmem:[#allocation2 + $0x9a] sm:$0xff]
    %v427 = vld [vmem:[#allocation2 + $0xaa] sm:$0xff]
    %v428 = vld [vmem:[#allocation2 + $0xb2] sm:$0xff]
    %v429 = vld [vmem:[#allocation2 + $0xc2] sm:$0xff]
    %v430 = vld [vmem:[#allocation2 + $0xca] sm:$0xff]
    %v431 = vld [vmem:[#allocation2 + $0xda] sm:$0xff]
    %v432 = vld [vmem:[#allocation2 + $0xe2] sm:$0xff]
    %v433 = vld [vmem:[#allocation2 + $0xf2] sm:$0xff]
    %v434 = vld [vmem:[#allocation2 + $0xfa] sm:$0xff]
    %v435 = vld [vmem:[#allocation2 + $0x10a] sm:$0xff]
    %v436 = vld [vmem:[#allocation2 + $0x112] sm:$0xff]
    %v437 = vld [vmem:[#allocation2 + $0x122] sm:$0xff]
    %v438 = vld [vmem:[#allocation2 + $0x12a] sm:$0xff]
    %v439 = vld [vmem:[#allocation2 + $0x13a] sm:$0xff]
    %v440 = vld [vmem:[#allocation2 + $0x142] sm:$0xff]
    %v441 = vld [vmem:[#allocation2 + $0x152] sm:$0xff]
    %v442 = vld [vmem:[#allocation2 + $0x15a] sm:$0xff]
    %v443 = vld [vmem:[#allocation2 + $0x16a] sm:$0xff]
    %v444 = vld [vmem:[#allocation2 + $0x172] sm:$0xff]
    %v445 = vld [vmem:[#allocation2 + $0x1b2] sm:$0xff]
    %v446 = vld [vmem:[#allocation2 + $0x1ba] sm:$0xff]
    %v447 = vld [vmem:[#allocation2 + $0x1ca] sm:$0xff]
    %v448 = vld [vmem:[#allocation2 + $0x1d2] sm:$0xff]
    %v449 = vld [vmem:[#allocation2 + $0x1e2] sm:$0xff]
    %v450 = vld [vmem:[#allocation2 + $0x1ea] sm:$0xff]
    %v451 = vld [vmem:[#allocation2 + $0x1fa] sm:$0xff]
    %v452 = vld [vmem:[#allocation2 + $0x202] sm:$0xff]
    %v453 = vld [vmem:[#allocation2 + $0x212] sm:$0xff]
    %v454 = vld [vmem:[#allocation2 + $0x21a] sm:$0xff]
    %v455 = vld [vmem:[#allocation2 + $0x22a] sm:$0xff]
    %v456 = vld [vmem:[#allocation2 + $0x232] sm:$0xff]
    %v457 = vld [vmem:[#allocation2 + $0x242] sm:$0xff]
    %v458 = vld [vmem:[#allocation2 + $0x24a] sm:$0xff]
    %v459 = vld [vmem:[#allocation2 + $0x25a] sm:$0xff]
    %v460 = vld [vmem:[#allocation2 + $0x262] sm:$0xff]
    %v461 = vld [vmem:[#allocation2 + $0x272] sm:$0xff]
    %v462 = vld [vmem:[#allocation2 + $0x27a] sm:$0xff]
    %v463 = vld [vmem:[#allocation2 + $0x28a] sm:$0xff]
    %v464 = vld [vmem:[#allocation2 + $0x292] sm:$0xff]
    %v465 = vld [vmem:[#allocation2 + $0x2a2] sm:$0xff]
    %v466 = vld [vmem:[#allocation2 + $0x2aa] sm:$0xff]
    %v467 = vld [vmem:[#allocation2 + $0x2ba] sm:$0xff]
    %v468 = vld [vmem:[#allocation2 + $0x2c2] sm:$0xff]
    %v469 = vld [vmem:[#allocation2 + $0x2d2] sm:$0xff]
    %v470 = vld [vmem:[#allocation2 + $0x2da] sm:$0xff]
    %v471 = vld [vmem:[#allocation2 + $0x2ea] sm:$0xff]
    %v472 = vld [vmem:[#allocation2 + $0x2f2] sm:$0xff]
    %v473 = vld [vmem:[#allocation2 + $0x302] sm:$0xff]
    %v474 = vld [vmem:[#allocation2 + $0x30a] sm:$0xff]
    %v475 = vld [vmem:[#allocation2 + $0x31a] sm:$0xff]
    %v476 = vld [vmem:[#allocation2 + $0x322] sm:$0xff]
    %v477 = vld [vmem:[%s220] sm:$0xff]
    %v478 = vld [vmem:[%s220 + $0x8] sm:$0xff]
    %v479 = vld [vmem:[%s220 + $0x18] sm:$0xff]
    %v480 = vld [vmem:[%s220 + $0x20] sm:$0xff]
    %v481 = vld [vmem:[%s220 + $0x30] sm:$0xff]
    %v482 = vld [vmem:[%s220 + $0x38] sm:$0xff]
    %v483 = vld [vmem:[%s220 + $0x48] sm:$0xff]
    %v484 = vld [vmem:[%s220 + $0x50] sm:$0xff]
    %v485 = vld [vmem:[%s220 + $0x60] sm:$0xff]
    %v486 = vld [vmem:[%s220 + $0x68] sm:$0xff]
    %v487 = vld [vmem:[%s220 + $0x78] sm:$0xff]
    %v488 = vld [vmem:[%s220 + $0x80] sm:$0xff]
    %v489 = vld [vmem:[%s220 + $0x90] sm:$0xff]
    %v490 = vld [vmem:[%s220 + $0x98] sm:$0xff]
    %v491 = vld [vmem:[%s220 + $0xa8] sm:$0xff]
    %v492 = vld [vmem:[%s220 + $0xb0] sm:$0xff]
    %v493 = vld [vmem:[%s220 + $0xc0] sm:$0xff]
    %v494 = vld [vmem:[%s220 + $0xc8] sm:$0xff]
    %v495 = vld [vmem:[%s220 + $0xd8] sm:$0xff]
    %v496 = vld [vmem:[%s220 + $0xe0] sm:$0xff]
    %v497 = vld [vmem:[%s220 + $0xf0] sm:$0xff]
    %v498 = vld [vmem:[%s220 + $0xf8] sm:$0xff]
    %v499 = vld [vmem:[%s220 + $0x108] sm:$0xff]
    %v500 = vld [vmem:[%s220 + $0x110] sm:$0xff]
    %v501 = vld [vmem:[%s220 + $0x120] sm:$0xff]
    %v502 = vld [vmem:[%s220 + $0x128] sm:$0xff]
    %v503 = vld [vmem:[%s220 + $0x138] sm:$0xff]
    %v504 = vld [vmem:[%s220 + $0x140] sm:$0xff]
    %v505 = vld [vmem:[%s220 + $0x150] sm:$0xff]
    %v506 = vld [vmem:[%s220 + $0x158] sm:$0xff]
    %v507 = vld [vmem:[%s220 + $0x168] sm:$0xff]
    %v508 = vld [vmem:[%s220 + $0x170] sm:$0xff]
    %v509 = vld [vmem:[%s220 + $0x1b0] sm:$0xff]
    %v510 = vld [vmem:[%s220 + $0x1b8] sm:$0xff]
    %v511 = vld [vmem:[%s220 + $0x1c8] sm:$0xff]
    %v512 = vld [vmem:[%s220 + $0x1d0] sm:$0xff]
    %v513 = vld [vmem:[%s220 + $0x1e0] sm:$0xff]
    %v514 = vld [vmem:[%s220 + $0x1e8] sm:$0xff]
    %v515 = vld [vmem:[%s220 + $0x1f8] sm:$0xff]
    %v516 = vld [vmem:[%s220 + $0x200] sm:$0xff]
    %v517 = vld [vmem:[%s220 + $0x210] sm:$0xff]
    %v518 = vld [vmem:[%s220 + $0x218] sm:$0xff]
    %v519 = vld [vmem:[%s220 + $0x228] sm:$0xff]
    %v520 = vld [vmem:[%s220 + $0x230] sm:$0xff]
    %v521 = vld [vmem:[%s220 + $0x240] sm:$0xff]
    %v522 = vld [vmem:[%s220 + $0x248] sm:$0xff]
    %v523 = vld [vmem:[%s220 + $0x258] sm:$0xff]
    %v524 = vld [vmem:[%s220 + $0x260] sm:$0xff]
    %v525 = vld [vmem:[%s220 + $0x270] sm:$0xff]
    %v526 = vld [vmem:[%s220 + $0x278] sm:$0xff]
    %v527 = vld [vmem:[%s220 + $0x288] sm:$0xff]
    %v528 = vld [vmem:[%s220 + $0x290] sm:$0xff]
    %v529 = vld [vmem:[%s220 + $0x2a0] sm:$0xff]
    %v530 = vld [vmem:[%s220 + $0x2a8] sm:$0xff]
    %v531 = vld [vmem:[%s220 + $0x2b8] sm:$0xff]
    %v532 = vld [vmem:[%s220 + $0x2c0] sm:$0xff]
    %v533 = vld [vmem:[%s220 + $0x2d0] sm:$0xff]
    %v534 = vld [vmem:[%s220 + $0x2d8] sm:$0xff]
    %v535 = vld [vmem:[%s220 + $0x2e8] sm:$0xff]
    %v536 = vld [vmem:[%s220 + $0x2f0] sm:$0xff]
    %v537 = vld [vmem:[%s220 + $0x300] sm:$0xff]
    %v538 = vld [vmem:[%s220 + $0x308] sm:$0xff]
    %v539 = vld [vmem:[%s220 + $0x318] sm:$0xff]
    %v540 = vld [vmem:[%s220 + $0x320] sm:$0xff]
    %v541 = vld [vmem:[%s220 + $0x1] sm:$0xff]
    %v542 = vld [vmem:[%s220 + $0x9] sm:$0xff]
    %v543 = vld [vmem:[%s220 + $0x19] sm:$0xff]
    %v544 = vld [vmem:[%s220 + $0x21] sm:$0xff]
    %v545 = vld [vmem:[%s220 + $0x31] sm:$0xff]
    %v546 = vld [vmem:[%s220 + $0x39] sm:$0xff]
    %v547 = vld [vmem:[%s220 + $0x49] sm:$0xff]
    %v548 = vld [vmem:[%s220 + $0x51] sm:$0xff]
    %v549 = vld [vmem:[%s220 + $0x61] sm:$0xff]
    %v550 = vld [vmem:[%s220 + $0x69] sm:$0xff]
    %v551 = vld [vmem:[%s220 + $0x79] sm:$0xff]
    %v552 = vld [vmem:[%s220 + $0x81] sm:$0xff]
    %v553 = vld [vmem:[%s220 + $0x91] sm:$0xff]
    %v554 = vld [vmem:[%s220 + $0x99] sm:$0xff]
    %v555 = vld [vmem:[%s220 + $0xa9] sm:$0xff]
    %v556 = vld [vmem:[%s220 + $0xb1] sm:$0xff]
    %v557 = vld [vmem:[%s220 + $0xc1] sm:$0xff]
    %v558 = vld [vmem:[%s220 + $0xc9] sm:$0xff]
    %v559 = vld [vmem:[%s220 + $0xd9] sm:$0xff]
    %v560 = vld [vmem:[%s220 + $0xe1] sm:$0xff]
    %v561 = vld [vmem:[%s220 + $0xf1] sm:$0xff]
    %v562 = vld [vmem:[%s220 + $0xf9] sm:$0xff]
    %v563 = vld [vmem:[%s220 + $0x109] sm:$0xff]
    %v564 = vld [vmem:[%s220 + $0x111] sm:$0xff]
    %v565 = vld [vmem:[%s220 + $0x121] sm:$0xff]
    %v566 = vld [vmem:[%s220 + $0x129] sm:$0xff]
    %v567 = vld [vmem:[%s220 + $0x139] sm:$0xff]
    %v568 = vld [vmem:[%s220 + $0x141] sm:$0xff]
    %v569 = vld [vmem:[%s220 + $0x151] sm:$0xff]
    %v570 = vld [vmem:[%s220 + $0x159] sm:$0xff]
    %v571 = vld [vmem:[%s220 + $0x169] sm:$0xff]
    %v572 = vld [vmem:[%s220 + $0x171] sm:$0xff]
    %v573 = vld [vmem:[%s220 + $0x1b1] sm:$0xff]
    %v574 = vld [vmem:[%s220 + $0x1b9] sm:$0xff]
    %v575 = vld [vmem:[%s220 + $0x1c9] sm:$0xff]
    %v576 = vld [vmem:[%s220 + $0x1d1] sm:$0xff]
    %v577 = vld [vmem:[%s220 + $0x1e1] sm:$0xff]
    %v578 = vld [vmem:[%s220 + $0x1e9] sm:$0xff]
    %v579 = vld [vmem:[%s220 + $0x1f9] sm:$0xff]
    %v580 = vld [vmem:[%s220 + $0x201] sm:$0xff]
    %v581 = vld [vmem:[%s220 + $0x211] sm:$0xff]
    %v582 = vld [vmem:[%s220 + $0x219] sm:$0xff]
    %v583 = vld [vmem:[%s220 + $0x229] sm:$0xff]
    %v584 = vld [vmem:[%s220 + $0x231] sm:$0xff]
    %v585 = vld [vmem:[%s220 + $0x241] sm:$0xff]
    %v586 = vld [vmem:[%s220 + $0x249] sm:$0xff]
    %v587 = vld [vmem:[%s220 + $0x259] sm:$0xff]
    %v588 = vld [vmem:[%s220 + $0x261] sm:$0xff]
    %v589 = vld [vmem:[%s220 + $0x271] sm:$0xff]
    %v590 = vld [vmem:[%s220 + $0x279] sm:$0xff]
    %v591 = vld [vmem:[%s220 + $0x289] sm:$0xff]
    %v592 = vld [vmem:[%s220 + $0x291] sm:$0xff]
    %v593 = vld [vmem:[%s220 + $0x2a1] sm:$0xff]
    %v594 = vld [vmem:[%s220 + $0x2a9] sm:$0xff]
    %v595 = vld [vmem:[%s220 + $0x2b9] sm:$0xff]
    %v596 = vld [vmem:[%s220 + $0x2c1] sm:$0xff]
    %v597 = vld [vmem:[%s220 + $0x2d1] sm:$0xff]
    %v598 = vld [vmem:[%s220 + $0x2d9] sm:$0xff]
    %v599 = vld [vmem:[%s220 + $0x2e9] sm:$0xff]
    %v600 = vld [vmem:[%s220 + $0x2f1] sm:$0xff]
    %v601 = vld [vmem:[%s220 + $0x301] sm:$0xff]
    %v602 = vld [vmem:[%s220 + $0x309] sm:$0xff]
    %v603 = vld [vmem:[%s220 + $0x319] sm:$0xff]
    %v604 = vld [vmem:[%s220 + $0x321] sm:$0xff]
    %v605 = vld [vmem:[%s220 + $0x2] sm:$0xff]
    %v606 = vld [vmem:[%s220 + $0xa] sm:$0xff]
    %v607 = vld [vmem:[%s220 + $0x1a] sm:$0xff]
    %v608 = vld [vmem:[%s220 + $0x22] sm:$0xff]
    %v609 = vld [vmem:[%s220 + $0x32] sm:$0xff]
    %v610 = vld [vmem:[%s220 + $0x3a] sm:$0xff]
    %v611 = vld [vmem:[%s220 + $0x4a] sm:$0xff]
    %v612 = vld [vmem:[%s220 + $0x52] sm:$0xff]
    %v613 = vld [vmem:[%s220 + $0x62] sm:$0xff]
    %v614 = vld [vmem:[%s220 + $0x6a] sm:$0xff]
    %v615 = vld [vmem:[%s220 + $0x7a] sm:$0xff]
    %v616 = vld [vmem:[%s220 + $0x82] sm:$0xff]
    %v617 = vld [vmem:[%s220 + $0x92] sm:$0xff]
    %v618 = vld [vmem:[%s220 + $0x9a] sm:$0xff]
    %v619 = vld [vmem:[%s220 + $0xaa] sm:$0xff]
    %v620 = vld [vmem:[%s220 + $0xb2] sm:$0xff]
    %v621 = vld [vmem:[%s220 + $0xc2] sm:$0xff]
    %v622 = vld [vmem:[%s220 + $0xca] sm:$0xff]
    %v623 = vld [vmem:[%s220 + $0xda] sm:$0xff]
    %v624 = vld [vmem:[%s220 + $0xe2] sm:$0xff]
    %v625 = vld [vmem:[%s220 + $0xf2] sm:$0xff]
    %v626 = vld [vmem:[%s220 + $0xfa] sm:$0xff]
    %v627 = vld [vmem:[%s220 + $0x10a] sm:$0xff]
    %v628 = vld [vmem:[%s220 + $0x112] sm:$0xff]
    %v629 = vld [vmem:[%s220 + $0x122] sm:$0xff]
    %v630 = vld [vmem:[%s220 + $0x12a] sm:$0xff]
    %v631 = vld [vmem:[%s220 + $0x13a] sm:$0xff]
    %v632 = vld [vmem:[%s220 + $0x142] sm:$0xff]
    %v633 = vld [vmem:[%s220 + $0x152] sm:$0xff]
    %v634 = vld [vmem:[%s220 + $0x15a] sm:$0xff]
    %v635 = vld [vmem:[%s220 + $0x16a] sm:$0xff]
    %v636 = vld [vmem:[%s220 + $0x172] sm:$0xff]
    %v637 = vld [vmem:[%s220 + $0x1b2] sm:$0xff]
    %v638 = vld [vmem:[%s220 + $0x1ba] sm:$0xff]
    %v639 = vld [vmem:[%s220 + $0x1ca] sm:$0xff]
    %v640 = vld [vmem:[%s220 + $0x1d2] sm:$0xff]
    %v641 = vld [vmem:[%s220 + $0x1e2] sm:$0xff]
    %v642 = vld [vmem:[%s220 + $0x1ea] sm:$0xff]
    %v643 = vld [vmem:[%s220 + $0x1fa] sm:$0xff]
    %v644 = vld [vmem:[%s220 + $0x202] sm:$0xff]
    %v645 = vld [vmem:[%s220 + $0x212] sm:$0xff]
    %v646 = vld [vmem:[%s220 + $0x21a] sm:$0xff]
    %v647 = vld [vmem:[%s220 + $0x22a] sm:$0xff]
    %v648 = vld [vmem:[%s220 + $0x232] sm:$0xff]
    %v649 = vld [vmem:[%s220 + $0x242] sm:$0xff]
    %v650 = vld [vmem:[%s220 + $0x24a] sm:$0xff]
    %v651 = vld [vmem:[%s220 + $0x25a] sm:$0xff]
    %v652 = vld [vmem:[%s220 + $0x262] sm:$0xff]
    %v653 = vld [vmem:[%s220 + $0x272] sm:$0xff]
    %v654 = vld [vmem:[%s220 + $0x27a] sm:$0xff]
    %v655 = vld [vmem:[%s220 + $0x28a] sm:$0xff]
    %v656 = vld [vmem:[%s220 + $0x292] sm:$0xff]
    %v657 = vld [vmem:[%s220 + $0x2a2] sm:$0xff]
    %v658 = vld [vmem:[%s220 + $0x2aa] sm:$0xff]
    %v659 = vld [vmem:[%s220 + $0x2ba] sm:$0xff]
    %v660 = vld [vmem:[%s220 + $0x2c2] sm:$0xff]
    %v661 = vld [vmem:[%s220 + $0x2d2] sm:$0xff]
    %v662 = vld [vmem:[%s220 + $0x2da] sm:$0xff]
    %v663 = vld [vmem:[%s220 + $0x2ea] sm:$0xff]
    %v664 = vld [vmem:[%s220 + $0x2f2] sm:$0xff]
    %v665 = vld [vmem:[%s220 + $0x302] sm:$0xff]
    %v666 = vld [vmem:[%s220 + $0x30a] sm:$0xff]
    %v667 = vld [vmem:[%s220 + $0x31a] sm:$0xff]
    %v668 = vld [vmem:[%s220 + $0x322] sm:$0xff]
    %s669 = scalar_lea.vmem [#allocation2], 48
    %v670 = vld [vmem:[%s669] sm:$0xff]
    %v671 = vld [vmem:[%s669 + $0x8] sm:$0xff]
    %v672 = vld [vmem:[%s669 + $0x18] sm:$0xff]
    %v673 = vld [vmem:[%s669 + $0x20] sm:$0xff]
    %v674 = vld [vmem:[%s669 + $0x30] sm:$0xff]
    %v675 = vld [vmem:[%s669 + $0x38] sm:$0xff]
    %v676 = vld [vmem:[%s669 + $0x48] sm:$0xff]
    %v677 = vld [vmem:[%s669 + $0x50] sm:$0xff]
    %v678 = vld [vmem:[%s669 + $0x60] sm:$0xff]
    %v679 = vld [vmem:[%s669 + $0x68] sm:$0xff]
    %v680 = vld [vmem:[%s669 + $0x78] sm:$0xff]
    %v681 = vld [vmem:[%s669 + $0x80] sm:$0xff]
    %v682 = vld [vmem:[%s669 + $0x90] sm:$0xff]
    %v683 = vld [vmem:[%s669 + $0x98] sm:$0xff]
    %v684 = vld [vmem:[%s669 + $0xa8] sm:$0xff]
    %v685 = vld [vmem:[%s669 + $0xb0] sm:$0xff]
    %v686 = vld [vmem:[%s669 + $0xc0] sm:$0xff]
    %v687 = vld [vmem:[%s669 + $0xc8] sm:$0xff]
    %v688 = vld [vmem:[%s669 + $0xd8] sm:$0xff]
    %v689 = vld [vmem:[%s669 + $0xe0] sm:$0xff]
    %v690 = vld [vmem:[%s669 + $0xf0] sm:$0xff]
    %v691 = vld [vmem:[%s669 + $0xf8] sm:$0xff]
    %v692 = vld [vmem:[%s669 + $0x108] sm:$0xff]
    %v693 = vld [vmem:[%s669 + $0x110] sm:$0xff]
    %v694 = vld [vmem:[%s669 + $0x120] sm:$0xff]
    %v695 = vld [vmem:[%s669 + $0x128] sm:$0xff]
    %v696 = vld [vmem:[%s669 + $0x138] sm:$0xff]
    %v697 = vld [vmem:[%s669 + $0x140] sm:$0xff]
    %v698 = vld [vmem:[%s669 + $0x150] sm:$0xff]
    %v699 = vld [vmem:[%s669 + $0x158] sm:$0xff]
    %v700 = vld [vmem:[%s669 + $0x168] sm:$0xff]
    %v701 = vld [vmem:[%s669 + $0x170] sm:$0xff]
    %v702 = vld [vmem:[%s669 + $0x1b0] sm:$0xff]
    %v703 = vld [vmem:[%s669 + $0x1b8] sm:$0xff]
    %v704 = vld [vmem:[%s669 + $0x1c8] sm:$0xff]
    %v705 = vld [vmem:[%s669 + $0x1d0] sm:$0xff]
    %v706 = vld [vmem:[%s669 + $0x1e0] sm:$0xff]
    %v707 = vld [vmem:[%s669 + $0x1e8] sm:$0xff]
    %v708 = vld [vmem:[%s669 + $0x1f8] sm:$0xff]
    %v709 = vld [vmem:[%s669 + $0x200] sm:$0xff]
    %v710 = vld [vmem:[%s669 + $0x210] sm:$0xff]
    %v711 = vld [vmem:[%s669 + $0x218] sm:$0xff]
    %v712 = vld [vmem:[%s669 + $0x228] sm:$0xff]
    %v713 = vld [vmem:[%s669 + $0x230] sm:$0xff]
    %v714 = vld [vmem:[%s669 + $0x240] sm:$0xff]
    %v715 = vld [vmem:[%s669 + $0x248] sm:$0xff]
    %v716 = vld [vmem:[%s669 + $0x258] sm:$0xff]
    %v717 = vld [vmem:[%s669 + $0x260] sm:$0xff]
    %v718 = vld [vmem:[%s669 + $0x270] sm:$0xff]
    %v719 = vld [vmem:[%s669 + $0x278] sm:$0xff]
    %v720 = vld [vmem:[%s669 + $0x288] sm:$0xff]
    %v721 = vld [vmem:[%s669 + $0x290] sm:$0xff]
    %v722 = vld [vmem:[%s669 + $0x2a0] sm:$0xff]
    %v723 = vld [vmem:[%s669 + $0x2a8] sm:$0xff]
    %v724 = vld [vmem:[%s669 + $0x2b8] sm:$0xff]
    %v725 = vld [vmem:[%s669 + $0x2c0] sm:$0xff]
    %v726 = vld [vmem:[%s669 + $0x2d0] sm:$0xff]
    %v727 = vld [vmem:[%s669 + $0x2d8] sm:$0xff]
    %v728 = vld [vmem:[%s669 + $0x2e8] sm:$0xff]
    %v729 = vld [vmem:[%s669 + $0x2f0] sm:$0xff]
    %v730 = vld [vmem:[%s669 + $0x300] sm:$0xff]
    %v731 = vld [vmem:[%s669 + $0x308] sm:$0xff]
    %v732 = vld [vmem:[%s669 + $0x318] sm:$0xff]
    %v733 = vld [vmem:[%s669 + $0x320] sm:$0xff]
    %v734 = vld [vmem:[%s669 + $0x1] sm:$0xff]
    %v735 = vld [vmem:[%s669 + $0x9] sm:$0xff]
    %v736 = vld [vmem:[%s669 + $0x19] sm:$0xff]
    %v737 = vld [vmem:[%s669 + $0x21] sm:$0xff]
    %v738 = vld [vmem:[%s669 + $0x31] sm:$0xff]
    %v739 = vld [vmem:[%s669 + $0x39] sm:$0xff]
    %v740 = vld [vmem:[%s669 + $0x49] sm:$0xff]
    %v741 = vld [vmem:[%s669 + $0x51] sm:$0xff]
    %v742 = vld [vmem:[%s669 + $0x61] sm:$0xff]
    %v743 = vld [vmem:[%s669 + $0x69] sm:$0xff]
    %v744 = vld [vmem:[%s669 + $0x79] sm:$0xff]
    %v745 = vld [vmem:[%s669 + $0x81] sm:$0xff]
    %v746 = vld [vmem:[%s669 + $0x91] sm:$0xff]
    %v747 = vld [vmem:[%s669 + $0x99] sm:$0xff]
    %v748 = vld [vmem:[%s669 + $0xa9] sm:$0xff]
    %v749 = vld [vmem:[%s669 + $0xb1] sm:$0xff]
    %v750 = vld [vmem:[%s669 + $0xc1] sm:$0xff]
    %v751 = vld [vmem:[%s669 + $0xc9] sm:$0xff]
    %v752 = vld [vmem:[%s669 + $0xd9] sm:$0xff]
    %v753 = vld [vmem:[%s669 + $0xe1] sm:$0xff]
    %v754 = vld [vmem:[%s669 + $0xf1] sm:$0xff]
    %v755 = vld [vmem:[%s669 + $0xf9] sm:$0xff]
    %v756 = vld [vmem:[%s669 + $0x109] sm:$0xff]
    %v757 = vld [vmem:[%s669 + $0x111] sm:$0xff]
    %v758 = vld [vmem:[%s669 + $0x121] sm:$0xff]
    %v759 = vld [vmem:[%s669 + $0x129] sm:$0xff]
    %v760 = vld [vmem:[%s669 + $0x139] sm:$0xff]
    %v761 = vld [vmem:[%s669 + $0x141] sm:$0xff]
    %v762 = vld [vmem:[%s669 + $0x151] sm:$0xff]
    %v763 = vld [vmem:[%s669 + $0x159] sm:$0xff]
    %v764 = vld [vmem:[%s669 + $0x169] sm:$0xff]
    %v765 = vld [vmem:[%s669 + $0x171] sm:$0xff]
    %v766 = vld [vmem:[%s669 + $0x1b1] sm:$0xff]
    %v767 = vld [vmem:[%s669 + $0x1b9] sm:$0xff]
    %v768 = vld [vmem:[%s669 + $0x1c9] sm:$0xff]
    %v769 = vld [vmem:[%s669 + $0x1d1] sm:$0xff]
    %v770 = vld [vmem:[%s669 + $0x1e1] sm:$0xff]
    %v771 = vld [vmem:[%s669 + $0x1e9] sm:$0xff]
    %v772 = vld [vmem:[%s669 + $0x1f9] sm:$0xff]
    %v773 = vld [vmem:[%s669 + $0x201] sm:$0xff]
    %v774 = vld [vmem:[%s669 + $0x211] sm:$0xff]
    %v775 = vld [vmem:[%s669 + $0x219] sm:$0xff]
    %v776 = vld [vmem:[%s669 + $0x229] sm:$0xff]
    %v777 = vld [vmem:[%s669 + $0x231] sm:$0xff]
    %v778 = vld [vmem:[%s669 + $0x241] sm:$0xff]
    %v779 = vld [vmem:[%s669 + $0x249] sm:$0xff]
    %v780 = vld [vmem:[%s669 + $0x259] sm:$0xff]
    %v781 = vld [vmem:[%s669 + $0x261] sm:$0xff]
    %v782 = vld [vmem:[%s669 + $0x271] sm:$0xff]
    %v783 = vld [vmem:[%s669 + $0x279] sm:$0xff]
    %v784 = vld [vmem:[%s669 + $0x289] sm:$0xff]
    %v785 = vld [vmem:[%s669 + $0x291] sm:$0xff]
    %v786 = vld [vmem:[%s669 + $0x2a1] sm:$0xff]
    %v787 = vld [vmem:[%s669 + $0x2a9] sm:$0xff]
    %v788 = vld [vmem:[%s669 + $0x2b9] sm:$0xff]
    %v789 = vld [vmem:[%s669 + $0x2c1] sm:$0xff]
    %v790 = vld [vmem:[%s669 + $0x2d1] sm:$0xff]
    %v791 = vld [vmem:[%s669 + $0x2d9] sm:$0xff]
    %v792 = vld [vmem:[%s669 + $0x2e9] sm:$0xff]
    %v793 = vld [vmem:[%s669 + $0x2f1] sm:$0xff]
    %v794 = vld [vmem:[%s669 + $0x301] sm:$0xff]
    %v795 = vld [vmem:[%s669 + $0x309] sm:$0xff]
    %v796 = vld [vmem:[%s669 + $0x319] sm:$0xff]
    %v797 = vld [vmem:[%s669 + $0x321] sm:$0xff]
    %v798 = vld [vmem:[%s669 + $0x2] sm:$0xff]
    %v799 = vld [vmem:[%s669 + $0xa] sm:$0xff]
    %v800 = vld [vmem:[%s669 + $0x1a] sm:$0xff]
    %v801 = vld [vmem:[%s669 + $0x22] sm:$0xff]
    %v802 = vld [vmem:[%s669 + $0x32] sm:$0xff]
    %v803 = vld [vmem:[%s669 + $0x3a] sm:$0xff]
    %v804 = vld [vmem:[%s669 + $0x4a] sm:$0xff]
    %v805 = vld [vmem:[%s669 + $0x52] sm:$0xff]
    %v806 = vld [vmem:[%s669 + $0x62] sm:$0xff]
    %v807 = vld [vmem:[%s669 + $0x6a] sm:$0xff]
    %v808 = vld [vmem:[%s669 + $0x7a] sm:$0xff]
    %v809 = vld [vmem:[%s669 + $0x82] sm:$0xff]
    %v810 = vld [vmem:[%s669 + $0x92] sm:$0xff]
    %v811 = vld [vmem:[%s669 + $0x9a] sm:$0xff]
    %v812 = vld [vmem:[%s669 + $0xaa] sm:$0xff]
    %v813 = vld [vmem:[%s669 + $0xb2] sm:$0xff]
    %v814 = vld [vmem:[%s669 + $0xc2] sm:$0xff]
    %v815 = vld [vmem:[%s669 + $0xca] sm:$0xff]
    %v816 = vld [vmem:[%s669 + $0xda] sm:$0xff]
    %v817 = vld [vmem:[%s669 + $0xe2] sm:$0xff]
    %v818 = vld [vmem:[%s669 + $0xf2] sm:$0xff]
    %v819 = vld [vmem:[%s669 + $0xfa] sm:$0xff]
    %v820 = vld [vmem:[%s669 + $0x10a] sm:$0xff]
    %v821 = vld [vmem:[%s669 + $0x112] sm:$0xff]
    %v822 = vld [vmem:[%s669 + $0x122] sm:$0xff]
    %v823 = vld [vmem:[%s669 + $0x12a] sm:$0xff]
    %v824 = vld [vmem:[%s669 + $0x13a] sm:$0xff]
    %v825 = vld [vmem:[%s669 + $0x142] sm:$0xff]
    %v826 = vld [vmem:[%s669 + $0x152] sm:$0xff]
    %v827 = vld [vmem:[%s669 + $0x15a] sm:$0xff]
    %v828 = vld [vmem:[%s669 + $0x16a] sm:$0xff]
    %v829 = vld [vmem:[%s669 + $0x172] sm:$0xff]
    %v830 = vld [vmem:[%s669 + $0x1b2] sm:$0xff]
    %v831 = vld [vmem:[%s669 + $0x1ba] sm:$0xff]
    %v832 = vld [vmem:[%s669 + $0x1ca] sm:$0xff]
    %v833 = vld [vmem:[%s669 + $0x1d2] sm:$0xff]
    %v834 = vld [vmem:[%s669 + $0x1e2] sm:$0xff]
    %v835 = vld [vmem:[%s669 + $0x1ea] sm:$0xff]
    %v836 = vld [vmem:[%s669 + $0x1fa] sm:$0xff]
    %v837 = vld [vmem:[%s669 + $0x202] sm:$0xff]
    %v838 = vld [vmem:[%s669 + $0x212] sm:$0xff]
    %v839 = vld [vmem:[%s669 + $0x21a] sm:$0xff]
    %v840 = vld [vmem:[%s669 + $0x22a] sm:$0xff]
    %v841 = vld [vmem:[%s669 + $0x232] sm:$0xff]
    %v842 = vld [vmem:[%s669 + $0x242] sm:$0xff]
    %v843 = vld [vmem:[%s669 + $0x24a] sm:$0xff]
    %v844 = vld [vmem:[%s669 + $0x25a] sm:$0xff]
    %v845 = vld [vmem:[%s669 + $0x262] sm:$0xff]
    %v846 = vld [vmem:[%s669 + $0x272] sm:$0xff]
    %v847 = vld [vmem:[%s669 + $0x27a] sm:$0xff]
    %v848 = vld [vmem:[%s669 + $0x28a] sm:$0xff]
    %v849 = vld [vmem:[%s669 + $0x292] sm:$0xff]
    %v850 = vld [vmem:[%s669 + $0x2a2] sm:$0xff]
    %v851 = vld [vmem:[%s669 + $0x2aa] sm:$0xff]
    %v852 = vld [vmem:[%s669 + $0x2ba] sm:$0xff]
    %v853 = vld [vmem:[%s669 + $0x2c2] sm:$0xff]
    %v854 = vld [vmem:[%s669 + $0x2d2] sm:$0xff]
    %v855 = vld [vmem:[%s669 + $0x2da] sm:$0xff]
    %v856 = vld [vmem:[%s669 + $0x2ea] sm:$0xff]
    %v857 = vld [vmem:[%s669 + $0x2f2] sm:$0xff]
    %v858 = vld [vmem:[%s669 + $0x302] sm:$0xff]
    %v859 = vld [vmem:[%s669 + $0x30a] sm:$0xff]
    %v860 = vld [vmem:[%s669 + $0x31a] sm:$0xff]
    %v861 = vld [vmem:[%s669 + $0x322] sm:$0xff]
    %v862 = vld [vmem:[#allocation7] sm:$0xff]
    %v863 = vld [vmem:[#allocation7 + $0x8] sm:$0xff]
    %v864 = vld [vmem:[#allocation7 + $0x10] sm:$0xff]
    %v865 = vld [vmem:[#allocation7 + $0x18] sm:$0xff]
    %v866 = vld [vmem:[#allocation7 + $0x20] sm:$0xff]
    %v867 = vld [vmem:[#allocation7 + $0x28] sm:$0xff]
    %v868 = vld [vmem:[#allocation7 + $0x30] sm:$0xff]
    %v869 = vld [vmem:[#allocation7 + $0x38] sm:$0xff]
    %v870 = vld [vmem:[#allocation7 + $0x40] sm:$0xff]
    %v871 = vld [vmem:[#allocation7 + $0x48] sm:$0xff]
    %v872 = vld [vmem:[#allocation7 + $0x50] sm:$0xff]
    %v873 = vld [vmem:[#allocation7 + $0x58] sm:$0xff]
    %v874 = vld [vmem:[#allocation7 + $0x60] sm:$0xff]
    %v875 = vld [vmem:[#allocation7 + $0x68] sm:$0xff]
    %v876 = vld [vmem:[#allocation7 + $0x70] sm:$0xff]
    %v877 = vld [vmem:[#allocation7 + $0x78] sm:$0xff]
    %v878 = vld [vmem:[#allocation7 + $0x80] sm:$0xff]
    %v879 = vld [vmem:[#allocation7 + $0x88] sm:$0xff]
    %v880 = vld [vmem:[#allocation7 + $0x90] sm:$0xff]
    %v881 = vld [vmem:[#allocation7 + $0x98] sm:$0xff]
    %v882 = vld [vmem:[#allocation7 + $0xa0] sm:$0xff]
    %v883 = vld [vmem:[#allocation7 + $0xa8] sm:$0xff]
    %v884 = vld [vmem:[#allocation7 + $0xb0] sm:$0xff]
    %v885 = vld [vmem:[#allocation7 + $0xb8] sm:$0xff]
    %v886 = vld [vmem:[#allocation7 + $0xc0] sm:$0xff]
    %v887 = vld [vmem:[#allocation7 + $0xc8] sm:$0xff]
    %v888 = vld [vmem:[#allocation7 + $0xd0] sm:$0xff]
    %v889 = vld [vmem:[#allocation7 + $0xd8] sm:$0xff]
    %v890 = vld [vmem:[#allocation7 + $0xe0] sm:$0xff]
    %v891 = vld [vmem:[#allocation7 + $0xe8] sm:$0xff]
    %v892 = vld [vmem:[#allocation7 + $0xf0] sm:$0xff]
    %v893 = vld [vmem:[#allocation7 + $0xf8] sm:$0xff]
    %v894 = vld [vmem:[#allocation7 + $0x100] sm:$0xff]
    %v895 = vld [vmem:[#allocation7 + $0x108] sm:$0xff]
    %v896 = vld [vmem:[#allocation7 + $0x110] sm:$0xff]
    %v897 = vld [vmem:[#allocation7 + $0x118] sm:$0xff]
    %v898 = vld [vmem:[#allocation7 + $0x120] sm:$0xff]
    %v899 = vld [vmem:[#allocation7 + $0x128] sm:$0xff]
    %v900 = vld [vmem:[#allocation7 + $0x130] sm:$0xff]
    %v901 = vld [vmem:[#allocation7 + $0x138] sm:$0xff]
    %v902 = vld [vmem:[#allocation7 + $0x140] sm:$0xff]
    %v903 = vld [vmem:[#allocation7 + $0x148] sm:$0xff]
    %v904 = vld [vmem:[#allocation7 + $0x150] sm:$0xff]
    %v905 = vld [vmem:[#allocation7 + $0x158] sm:$0xff]
    %v906 = vld [vmem:[#allocation7 + $0x160] sm:$0xff]
    %v907 = vld [vmem:[#allocation7 + $0x168] sm:$0xff]
    %v908 = vld [vmem:[#allocation7 + $0x170] sm:$0xff]
    %v909 = vld [vmem:[#allocation7 + $0x178] sm:$0xff]
    %v910 = vld [vmem:[#allocation7 + $0x180] sm:$0xff]
    %v911 = vld [vmem:[#allocation7 + $0x188] sm:$0xff]
    %v912 = vld [vmem:[#allocation7 + $0x190] sm:$0xff]
    %v913 = vld [vmem:[#allocation7 + $0x198] sm:$0xff]
    %v914 = vld [vmem:[#allocation7 + $0x1a0] sm:$0xff]
    %v915 = vld [vmem:[#allocation7 + $0x1a8] sm:$0xff]
    %v916 = vld [vmem:[#allocation7 + $0x1b0] sm:$0xff]
    %v917 = vld [vmem:[#allocation7 + $0x1b8] sm:$0xff]
    %v918 = vld [vmem:[#allocation7 + $0x1c0] sm:$0xff]
    %v919 = vld [vmem:[#allocation7 + $0x1c8] sm:$0xff]
    %v920 = vld [vmem:[#allocation7 + $0x1d0] sm:$0xff]
    %v921 = vld [vmem:[#allocation7 + $0x1d8] sm:$0xff]
    %v922 = vld [vmem:[#allocation7 + $0x1e0] sm:$0xff]
    %v923 = vld [vmem:[#allocation7 + $0x1e8] sm:$0xff]
    %v924 = vld [vmem:[#allocation7 + $0x1f0] sm:$0xff]
    %v925 = vld [vmem:[#allocation7 + $0x1f8] sm:$0xff]
    %v926 = vld [vmem:[#allocation7 + $0x200] sm:$0xff]
    %v927 = vld [vmem:[#allocation7 + $0x208] sm:$0xff]
    %v928 = vld [vmem:[#allocation7 + $0x210] sm:$0xff]
    %v929 = vld [vmem:[#allocation7 + $0x218] sm:$0xff]
    %v930 = vld [vmem:[#allocation7 + $0x220] sm:$0xff]
    %v931 = vld [vmem:[#allocation7 + $0x228] sm:$0xff]
    %v932 = vld [vmem:[#allocation7 + $0x230] sm:$0xff]
    %v933 = vld [vmem:[#allocation7 + $0x238] sm:$0xff]
    %v934 = vld [vmem:[#allocation7 + $0x240] sm:$0xff]
    %v935 = vld [vmem:[#allocation7 + $0x248] sm:$0xff]
    %v936 = vld [vmem:[#allocation7 + $0x250] sm:$0xff]
    %v937 = vld [vmem:[#allocation7 + $0x258] sm:$0xff]
    %v938 = vld [vmem:[#allocation7 + $0x260] sm:$0xff]
    %v939 = vld [vmem:[#allocation7 + $0x268] sm:$0xff]
    %v940 = vld [vmem:[#allocation7 + $0x270] sm:$0xff]
    %v941 = vld [vmem:[#allocation7 + $0x278] sm:$0xff]
    %v942 = vld [vmem:[#allocation7 + $0x280] sm:$0xff]
    %v943 = vld [vmem:[#allocation7 + $0x288] sm:$0xff]
    %v944 = vld [vmem:[#allocation7 + $0x290] sm:$0xff]
    %v945 = vld [vmem:[#allocation7 + $0x298] sm:$0xff]
    %v946 = vld [vmem:[#allocation7 + $0x2a0] sm:$0xff]
    %v947 = vld [vmem:[#allocation7 + $0x2a8] sm:$0xff]
    %v948 = vld [vmem:[#allocation7 + $0x2b0] sm:$0xff]
    %v949 = vld [vmem:[#allocation7 + $0x2b8] sm:$0xff]
    %v950 = vld [vmem:[#allocation7 + $0x2c0] sm:$0xff]
    %v951 = vld [vmem:[#allocation7 + $0x2c8] sm:$0xff]
    %v952 = vld [vmem:[#allocation7 + $0x2d0] sm:$0xff]
    %v953 = vld [vmem:[#allocation7 + $0x2d8] sm:$0xff]
    %v954 = vld [vmem:[#allocation7 + $0x2e0] sm:$0xff]
    %v955 = vld [vmem:[#allocation7 + $0x2e8] sm:$0xff]
    %v956 = vld [vmem:[#allocation7 + $0x2f0] sm:$0xff]
    %v957 = vld [vmem:[#allocation7 + $0x2f8] sm:$0xff]
    %v958 = vld [vmem:[#allocation7 + $0x300] sm:$0xff]
    %v959 = vld [vmem:[#allocation7 + $0x308] sm:$0xff]
    %v960 = vld [vmem:[#allocation7 + $0x310] sm:$0xff]
    %v961 = vld [vmem:[#allocation7 + $0x318] sm:$0xff]
    %v962 = vld [vmem:[#allocation7 + $0x320] sm:$0xff]
    %v963 = vld [vmem:[#allocation7 + $0x328] sm:$0xff]
    %v964 = vld [vmem:[#allocation7 + $0x330] sm:$0xff]
    %v965 = vld [vmem:[#allocation7 + $0x338] sm:$0xff]
    %v966 = vld [vmem:[#allocation7 + $0x340] sm:$0xff]
    %v967 = vld [vmem:[#allocation7 + $0x348] sm:$0xff]
    %v968 = vld [vmem:[#allocation7 + $0x350] sm:$0xff]
    %v969 = vld [vmem:[#allocation7 + $0x358] sm:$0xff]
    %v970 = vld [vmem:[#allocation7 + $0x360] sm:$0xff]
    %v971 = vld [vmem:[#allocation7 + $0x368] sm:$0xff]
    %v972 = vld [vmem:[#allocation7 + $0x370] sm:$0xff]
    %v973 = vld [vmem:[#allocation7 + $0x378] sm:$0xff]
    %v974 = vld [vmem:[#allocation7 + $0x380] sm:$0xff]
    %v975 = vld [vmem:[#allocation7 + $0x388] sm:$0xff]
    %v976 = vld [vmem:[#allocation7 + $0x390] sm:$0xff]
    %v977 = vld [vmem:[#allocation7 + $0x398] sm:$0xff]
    %v978 = vld [vmem:[#allocation7 + $0x3a0] sm:$0xff]
    %v979 = vld [vmem:[#allocation7 + $0x3a8] sm:$0xff]
    %v980 = vld [vmem:[#allocation7 + $0x3b0] sm:$0xff]
    %v981 = vld [vmem:[#allocation7 + $0x3b8] sm:$0xff]
    %v982 = vld [vmem:[#allocation7 + $0x3c0] sm:$0xff]
    %v983 = vld [vmem:[#allocation7 + $0x3c8] sm:$0xff]
    %v984 = vld [vmem:[#allocation7 + $0x3d0] sm:$0xff]
    %v985 = vld [vmem:[#allocation7 + $0x3d8] sm:$0xff]
    %v986 = vld [vmem:[#allocation7 + $0x3e0] sm:$0xff]
    %v987 = vld [vmem:[#allocation7 + $0x3e8] sm:$0xff]
    %v988 = vld [vmem:[#allocation7 + $0x3f0] sm:$0xff]
    %v989 = vld [vmem:[#allocation7 + $0x3f8] sm:$0xff]
    %v990 = vld [vmem:[#allocation7 + $0x400] sm:$0xff]
    %v991 = vld [vmem:[#allocation7 + $0x408] sm:$0xff]
    %v992 = vld [vmem:[#allocation7 + $0x410] sm:$0xff]
    %v993 = vld [vmem:[#allocation7 + $0x418] sm:$0xff]
    %v994 = vld [vmem:[#allocation7 + $0x420] sm:$0xff]
    %v995 = vld [vmem:[#allocation7 + $0x428] sm:$0xff]
    %v996 = vld [vmem:[#allocation7 + $0x430] sm:$0xff]
    %v997 = vld [vmem:[#allocation7 + $0x438] sm:$0xff]
    %v998 = vld [vmem:[#allocation7 + $0x440] sm:$0xff]
    %v999 = vld [vmem:[#allocation7 + $0x448] sm:$0xff]
    %v1000 = vld [vmem:[#allocation7 + $0x450] sm:$0xff]
    %v1001 = vld [vmem:[#allocation7 + $0x458] sm:$0xff]
    %v1002 = vld [vmem:[#allocation7 + $0x460] sm:$0xff]
    %v1003 = vld [vmem:[#allocation7 + $0x468] sm:$0xff]
    %v1004 = vld [vmem:[#allocation7 + $0x470] sm:$0xff]
    %v1005 = vld [vmem:[#allocation7 + $0x478] sm:$0xff]
    %1006 = vmatprep.subr.mxu0 0.0
    %1007 = vmatpush1.msra.mxu0 %v877
    %1008 = vmatprep.subr.mxu0 0.0
    %1009 = vmatpush1.msra.mxu0 %v876
    %1010 = vmatprep.subr.mxu0 0.0
    %1011 = vmatpush1.msra.mxu0 %v875
    %1012 = vmatprep.subr.mxu0 0.0
    %1013 = vmatpush1.msra.mxu0 %v874
    %1014 = vmatprep.subr.mxu0 0.0
    %1015 = vmatpush1.msra.mxu0 %v873
    %1016 = vmatprep.subr.mxu0 0.0
    %1017 = vmatpush1.msra.mxu0 %v872
    %1018 = vmatprep.subr.mxu0 0.0
    %1019 = vmatpush1.msra.mxu0 %v871
    %1020 = vmatprep.subr.mxu0 0.0
    %1021 = vmatpush1.msra.mxu0 %v870
    %1022 = vmatprep.subr.mxu0 0.0
    %1023 = vmatpush1.msra.mxu0 %v869
    %1024 = vmatprep.subr.mxu0 0.0
    %1025 = vmatpush1.msra.mxu0 %v868
    %1026 = vmatprep.subr.mxu0 0.0
    %1027 = vmatpush1.msra.mxu0 %v867
    %1028 = vmatprep.subr.mxu0 0.0
    %1029 = vmatpush1.msra.mxu0 %v866
    %1030 = vmatprep.subr.mxu0 0.0
    %1031 = vmatpush1.msra.mxu0 %v865
    %1032 = vmatprep.subr.mxu0 0.0
    %1033 = vmatpush1.msra.mxu0 %v864
    %1034 = vmatprep.subr.mxu0 0.0
    %1035 = vmatpush1.msra.mxu0 %v863
    %1036 = vmatprep.subr.mxu0 0.0
    %1037 = vmatpush1.msra.mxu0 %v862
    %1038 = vmatprep.subr.mxu0 0.0
    %1039 = vmatpush2.msra.mxu0 %v893
    %1040 = vmatprep.subr.mxu0 0.0
    %1041 = vmatpush2.msra.mxu0 %v892
    %1042 = vmatprep.subr.mxu0 0.0
    %1043 = vmatpush2.msra.mxu0 %v891
    %1044 = vmatprep.subr.mxu0 0.0
    %1045 = vmatpush2.msra.mxu0 %v890
    %1046 = vmatprep.subr.mxu0 0.0
    %1047 = vmatpush2.msra.mxu0 %v889
    %1048 = vmatprep.subr.mxu0 0.0
    %1049 = vmatpush2.msra.mxu0 %v888
    %1050 = vmatprep.subr.mxu0 0.0
    %1051 = vmatpush2.msra.mxu0 %v887
    %1052 = vmatprep.subr.mxu0 0.0
    %1053 = vmatpush2.msra.mxu0 %v886
    %1054 = vmatprep.subr.mxu0 0.0
    %1055 = vmatpush2.msra.mxu0 %v885
    %1056 = vmatprep.subr.mxu0 0.0
    %1057 = vmatpush2.msra.mxu0 %v884
    %1058 = vmatprep.subr.mxu0 0.0
    %1059 = vmatpush2.msra.mxu0 %v883
    %1060 = vmatprep.subr.mxu0 0.0
    %1061 = vmatpush2.msra.mxu0 %v882
    %1062 = vmatprep.subr.mxu0 0.0
    %1063 = vmatpush2.msra.mxu0 %v881
    %1064 = vmatprep.subr.mxu0 0.0
    %1065 = vmatpush2.msra.mxu0 %v880
    %1066 = vmatprep.subr.mxu0 0.0
    %1067 = vmatpush2.msra.mxu0 %v879
    %1068 = vmatprep.subr.mxu0 0.0
    %1069 = vmatpush2.msra.mxu0 %v878
    %1070 = vmatprep.mubr.f32.mxu0 %v349
    %1071 = vmatmul.mubr.f32.gmra.mxu0 %v285
    %v1072 = vpop.f32.mrf.mxu0
    %v1073 = vadd.f32 0.0, %v1072
    %v1074 = vpop.f32.mrf.mxu0
    %1075 = vmatprep.mubr.f32.mxu0 %v350
    %1076 = vmatmul.mubr.f32.gmra.mxu0 %v286
    %v1077 = vpop.f32.mrf.mxu0
    %v1078 = vadd.f32 0.0, %v1077
    %v1079 = vpop.f32.mrf.mxu0
    %1080 = vmatprep.mubr.f32.mxu0 %v351
    %1081 = vmatmul.mubr.f32.gmra.mxu0 %v287
    %v1082 = vpop.f32.mrf.mxu0
    %v1083 = vadd.f32 0.0, %v1082
    %v1084 = vpop.f32.mrf.mxu0
    %1085 = vmatprep.mubr.f32.mxu0 %v352
    %1086 = vmatmul.mubr.f32.gmra.mxu0 %v288
    %v1087 = vpop.f32.mrf.mxu0
    %v1088 = vadd.f32 0.0, %v1087
    %v1089 = vpop.f32.mrf.mxu0
    %1090 = vmatprep.mubr.f32.mxu0 %v353
    %1091 = vmatmul.mubr.f32.gmra.mxu0 %v289
    %v1092 = vpop.f32.mrf.mxu0
    %v1093 = vadd.f32 0.0, %v1092
    %v1094 = vpop.f32.mrf.mxu0
    %1095 = vmatprep.mubr.f32.mxu0 %v354
    %1096 = vmatmul.mubr.f32.gmra.mxu0 %v290
    %v1097 = vpop.f32.mrf.mxu0
    %v1098 = vadd.f32 0.0, %v1097
    %v1099 = vpop.f32.mrf.mxu0
    %1100 = vmatprep.mubr.f32.mxu0 %v355
    %1101 = vmatmul.mubr.f32.gmra.mxu0 %v291
    %v1102 = vpop.f32.mrf.mxu0
    %v1103 = vadd.f32 0.0, %v1102
    %v1104 = vpop.f32.mrf.mxu0
    %1105 = vmatprep.mubr.f32.mxu0 %v356
    %1106 = vmatmul.mubr.f32.gmra.mxu0 %v292
    %v1107 = vpop.f32.mrf.mxu0
    %v1108 = vadd.f32 0.0, %v1107
    %v1109 = vpop.f32.mrf.mxu0
    %1110 = vmatprep.mubr.f32.mxu0 %v357
    %1111 = vmatmul.mubr.f32.gmra.mxu0 %v293
    %v1112 = vpop.f32.mrf.mxu0
    %v1113 = vadd.f32 0.0, %v1112
    %v1114 = vpop.f32.mrf.mxu0
    %1115 = vmatprep.mubr.f32.mxu0 %v358
    %1116 = vmatmul.mubr.f32.gmra.mxu0 %v294
    %v1117 = vpop.f32.mrf.mxu0
    %v1118 = vadd.f32 0.0, %v1117
    %v1119 = vpop.f32.mrf.mxu0
    %1120 = vmatprep.mubr.f32.mxu0 %v359
    %1121 = vmatmul.mubr.f32.gmra.mxu0 %v295
    %v1122 = vpop.f32.mrf.mxu0
    %v1123 = vadd.f32 0.0, %v1122
    %v1124 = vpop.f32.mrf.mxu0
    %1125 = vmatprep.mubr.f32.mxu0 %v360
    %1126 = vmatmul.mubr.f32.gmra.mxu0 %v296
    %v1127 = vpop.f32.mrf.mxu0
    %v1128 = vadd.f32 0.0, %v1127
    %v1129 = vpop.f32.mrf.mxu0
    %1130 = vmatprep.mubr.f32.mxu0 %v361
    %1131 = vmatmul.mubr.f32.gmra.mxu0 %v297
    %v1132 = vpop.f32.mrf.mxu0
    %v1133 = vadd.f32 0.0, %v1132
    %v1134 = vpop.f32.mrf.mxu0
    %1135 = vmatprep.mubr.f32.mxu0 %v362
    %1136 = vmatmul.mubr.f32.gmra.mxu0 %v298
    %v1137 = vpop.f32.mrf.mxu0
    %v1138 = vadd.f32 0.0, %v1137
    %v1139 = vpop.f32.mrf.mxu0
    %1140 = vmatprep.mubr.f32.mxu0 %v363
    %1141 = vmatmul.mubr.f32.gmra.mxu0 %v299
    %v1142 = vpop.f32.mrf.mxu0
    %v1143 = vadd.f32 0.0, %v1142
    %v1144 = vpop.f32.mrf.mxu0
    %1145 = vmatprep.mubr.f32.mxu0 %v364
    %1146 = vmatmul.mubr.f32.gmra.mxu0 %v300
    %v1147 = vpop.f32.mrf.mxu0
    %v1148 = vadd.f32 0.0, %v1147
    %v1149 = vpop.f32.mrf.mxu0
    %1150 = vmatprep.mubr.f32.mxu0 %v365
    %1151 = vmatmul.mubr.f32.gmra.mxu0 %v301
    %v1152 = vpop.f32.mrf.mxu0
    %v1153 = vadd.f32 0.0, %v1152
    %v1154 = vpop.f32.mrf.mxu0
    %1155 = vmatprep.mubr.f32.mxu0 %v366
    %1156 = vmatmul.mubr.f32.gmra.mxu0 %v302
    %v1157 = vpop.f32.mrf.mxu0
    %v1158 = vadd.f32 0.0, %v1157
    %v1159 = vpop.f32.mrf.mxu0
    %1160 = vmatprep.mubr.f32.mxu0 %v367
    %1161 = vmatmul.mubr.f32.gmra.mxu0 %v303
    %v1162 = vpop.f32.mrf.mxu0
    %v1163 = vadd.f32 0.0, %v1162
    %v1164 = vpop.f32.mrf.mxu0
    %1165 = vmatprep.mubr.f32.mxu0 %v368
    %1166 = vmatmul.mubr.f32.gmra.mxu0 %v304
    %v1167 = vpop.f32.mrf.mxu0
    %v1168 = vadd.f32 0.0, %v1167
    %v1169 = vpop.f32.mrf.mxu0
    %1170 = vmatprep.mubr.f32.mxu0 %v369
    %1171 = vmatmul.mubr.f32.gmra.mxu0 %v305
    %v1172 = vpop.f32.mrf.mxu0
    %v1173 = vadd.f32 0.0, %v1172
    %v1174 = vpop.f32.mrf.mxu0
    %1175 = vmatprep.mubr.f32.mxu0 %v370
    %1176 = vmatmul.mubr.f32.gmra.mxu0 %v306
    %v1177 = vpop.f32.mrf.mxu0
    %v1178 = vadd.f32 0.0, %v1177
    %v1179 = vpop.f32.mrf.mxu0
    %1180 = vmatprep.mubr.f32.mxu0 %v371
    %1181 = vmatmul.mubr.f32.gmra.mxu0 %v307
    %v1182 = vpop.f32.mrf.mxu0
    %v1183 = vadd.f32 0.0, %v1182
    %v1184 = vpop.f32.mrf.mxu0
    %1185 = vmatprep.mubr.f32.mxu0 %v372
    %1186 = vmatmul.mubr.f32.gmra.mxu0 %v308
    %v1187 = vpop.f32.mrf.mxu0
    %v1188 = vadd.f32 0.0, %v1187
    %v1189 = vpop.f32.mrf.mxu0
    %1190 = vmatprep.mubr.f32.mxu0 %v373
    %1191 = vmatmul.mubr.f32.gmra.mxu0 %v309
    %v1192 = vpop.f32.mrf.mxu0
    %v1193 = vadd.f32 0.0, %v1192
    %v1194 = vpop.f32.mrf.mxu0
    %1195 = vmatprep.mubr.f32.mxu0 %v374
    %1196 = vmatmul.mubr.f32.gmra.mxu0 %v310
    %v1197 = vpop.f32.mrf.mxu0
    %v1198 = vadd.f32 0.0, %v1197
    %v1199 = vpop.f32.mrf.mxu0
    %1200 = vmatprep.mubr.f32.mxu0 %v375
    %1201 = vmatmul.mubr.f32.gmra.mxu0 %v311
    %v1202 = vpop.f32.mrf.mxu0
    %v1203 = vadd.f32 0.0, %v1202
    %v1204 = vpop.f32.mrf.mxu0
    %1205 = vmatprep.mubr.f32.mxu0 %v376
    %1206 = vmatmul.mubr.f32.gmra.mxu0 %v312
    %v1207 = vpop.f32.mrf.mxu0
    %v1208 = vadd.f32 0.0, %v1207
    %v1209 = vpop.f32.mrf.mxu0
    %1210 = vmatprep.mubr.f32.mxu0 %v377
    %1211 = vmatmul.mubr.f32.gmra.mxu0 %v313
    %v1212 = vpop.f32.mrf.mxu0
    %v1213 = vadd.f32 0.0, %v1212
    %v1214 = vpop.f32.mrf.mxu0
    %1215 = vmatprep.mubr.f32.mxu0 %v378
    %1216 = vmatmul.mubr.f32.gmra.mxu0 %v314
    %v1217 = vpop.f32.mrf.mxu0
    %v1218 = vadd.f32 0.0, %v1217
    %v1219 = vpop.f32.mrf.mxu0
    %1220 = vmatprep.mubr.f32.mxu0 %v379
    %1221 = vmatmul.mubr.f32.gmra.mxu0 %v315
    %v1222 = vpop.f32.mrf.mxu0
    %v1223 = vadd.f32 0.0, %v1222
    %v1224 = vpop.f32.mrf.mxu0
    %1225 = vmatprep.mubr.f32.mxu0 %v380
    %1226 = vmatmul.mubr.f32.gmra.mxu0 %v316
    %v1227 = vpop.f32.mrf.mxu0
    %v1228 = vadd.f32 0.0, %v1227
    %v1229 = vpop.f32.mrf.mxu0
    %1230 = vmatprep.mubr.f32.mxu0 %v381
    %1231 = vmatmul.mubr.f32.gmra.mxu0 %v317
    %v1232 = vpop.f32.mrf.mxu0
    %v1233 = vadd.f32 0.0, %v1232
    %v1234 = vpop.f32.mrf.mxu0
    %1235 = vmatprep.mubr.f32.mxu0 %v382
    %1236 = vmatmul.mubr.f32.gmra.mxu0 %v318
    %v1237 = vpop.f32.mrf.mxu0
    %v1238 = vadd.f32 0.0, %v1237
    %v1239 = vpop.f32.mrf.mxu0
    %1240 = vmatprep.mubr.f32.mxu0 %v383
    %1241 = vmatmul.mubr.f32.gmra.mxu0 %v319
    %v1242 = vpop.f32.mrf.mxu0
    %v1243 = vadd.f32 0.0, %v1242
    %v1244 = vpop.f32.mrf.mxu0
    %1245 = vmatprep.mubr.f32.mxu0 %v384
    %1246 = vmatmul.mubr.f32.gmra.mxu0 %v320
    %v1247 = vpop.f32.mrf.mxu0
    %v1248 = vadd.f32 0.0, %v1247
    %v1249 = vpop.f32.mrf.mxu0
    %1250 = vmatprep.mubr.f32.mxu0 %v385
    %1251 = vmatmul.mubr.f32.gmra.mxu0 %v321
    %v1252 = vpop.f32.mrf.mxu0
    %v1253 = vadd.f32 0.0, %v1252
    %v1254 = vpop.f32.mrf.mxu0
    %1255 = vmatprep.mubr.f32.mxu0 %v386
    %1256 = vmatmul.mubr.f32.gmra.mxu0 %v322
    %v1257 = vpop.f32.mrf.mxu0
    %v1258 = vadd.f32 0.0, %v1257
    %v1259 = vpop.f32.mrf.mxu0
    %1260 = vmatprep.mubr.f32.mxu0 %v387
    %1261 = vmatmul.mubr.f32.gmra.mxu0 %v323
    %v1262 = vpop.f32.mrf.mxu0
    %v1263 = vadd.f32 0.0, %v1262
    %v1264 = vpop.f32.mrf.mxu0
    %1265 = vmatprep.mubr.f32.mxu0 %v388
    %1266 = vmatmul.mubr.f32.gmra.mxu0 %v324
    %v1267 = vpop.f32.mrf.mxu0
    %v1268 = vadd.f32 0.0, %v1267
    %v1269 = vpop.f32.mrf.mxu0
    %1270 = vmatprep.mubr.f32.mxu0 %v389
    %1271 = vmatmul.mubr.f32.gmra.mxu0 %v325
    %v1272 = vpop.f32.mrf.mxu0
    %v1273 = vadd.f32 0.0, %v1272
    %v1274 = vpop.f32.mrf.mxu0
    %1275 = vmatprep.mubr.f32.mxu0 %v390
    %1276 = vmatmul.mubr.f32.gmra.mxu0 %v326
    %v1277 = vpop.f32.mrf.mxu0
    %v1278 = vadd.f32 0.0, %v1277
    %v1279 = vpop.f32.mrf.mxu0
    %1280 = vmatprep.mubr.f32.mxu0 %v391
    %1281 = vmatmul.mubr.f32.gmra.mxu0 %v327
    %v1282 = vpop.f32.mrf.mxu0
    %v1283 = vadd.f32 0.0, %v1282
    %v1284 = vpop.f32.mrf.mxu0
    %1285 = vmatprep.mubr.f32.mxu0 %v392
    %1286 = vmatmul.mubr.f32.gmra.mxu0 %v328
    %v1287 = vpop.f32.mrf.mxu0
    %v1288 = vadd.f32 0.0, %v1287
    %v1289 = vpop.f32.mrf.mxu0
    %1290 = vmatprep.mubr.f32.mxu0 %v393
    %1291 = vmatmul.mubr.f32.gmra.mxu0 %v329
    %v1292 = vpop.f32.mrf.mxu0
    %v1293 = vadd.f32 0.0, %v1292
    %v1294 = vpop.f32.mrf.mxu0
    %1295 = vmatprep.mubr.f32.mxu0 %v394
    %1296 = vmatmul.mubr.f32.gmra.mxu0 %v330
    %v1297 = vpop.f32.mrf.mxu0
    %v1298 = vadd.f32 0.0, %v1297
    %v1299 = vpop.f32.mrf.mxu0
    %1300 = vmatprep.mubr.f32.mxu0 %v395
    %1301 = vmatmul.mubr.f32.gmra.mxu0 %v331
    %v1302 = vpop.f32.mrf.mxu0
    %v1303 = vadd.f32 0.0, %v1302
    %v1304 = vpop.f32.mrf.mxu0
    %1305 = vmatprep.mubr.f32.mxu0 %v396
    %1306 = vmatmul.mubr.f32.gmra.mxu0 %v332
    %v1307 = vpop.f32.mrf.mxu0
    %v1308 = vadd.f32 0.0, %v1307
    %v1309 = vpop.f32.mrf.mxu0
    %1310 = vmatprep.mubr.f32.mxu0 %v397
    %1311 = vmatmul.mubr.f32.gmra.mxu0 %v333
    %v1312 = vpop.f32.mrf.mxu0
    %v1313 = vadd.f32 0.0, %v1312
    %v1314 = vpop.f32.mrf.mxu0
    %1315 = vmatprep.mubr.f32.mxu0 %v398
    %1316 = vmatmul.mubr.f32.gmra.mxu0 %v334
    %v1317 = vpop.f32.mrf.mxu0
    %v1318 = vadd.f32 0.0, %v1317
    %v1319 = vpop.f32.mrf.mxu0
    %1320 = vmatprep.mubr.f32.mxu0 %v399
    %1321 = vmatmul.mubr.f32.gmra.mxu0 %v335
    %v1322 = vpop.f32.mrf.mxu0
    %v1323 = vadd.f32 0.0, %v1322
    %v1324 = vpop.f32.mrf.mxu0
    %1325 = vmatprep.mubr.f32.mxu0 %v400
    %1326 = vmatmul.mubr.f32.gmra.mxu0 %v336
    %v1327 = vpop.f32.mrf.mxu0
    %v1328 = vadd.f32 0.0, %v1327
    %v1329 = vpop.f32.mrf.mxu0
    %1330 = vmatprep.mubr.f32.mxu0 %v401
    %1331 = vmatmul.mubr.f32.gmra.mxu0 %v337
    %v1332 = vpop.f32.mrf.mxu0
    %v1333 = vadd.f32 0.0, %v1332
    %v1334 = vpop.f32.mrf.mxu0
    %1335 = vmatprep.mubr.f32.mxu0 %v402
    %1336 = vmatmul.mubr.f32.gmra.mxu0 %v338
    %v1337 = vpop.f32.mrf.mxu0
    %v1338 = vadd.f32 0.0, %v1337
    %v1339 = vpop.f32.mrf.mxu0
    %1340 = vmatprep.mubr.f32.mxu0 %v403
    %1341 = vmatmul.mubr.f32.gmra.mxu0 %v339
    %v1342 = vpop.f32.mrf.mxu0
    %v1343 = vadd.f32 0.0, %v1342
    %v1344 = vpop.f32.mrf.mxu0
    %1345 = vmatprep.mubr.f32.mxu0 %v404
    %1346 = vmatmul.mubr.f32.gmra.mxu0 %v340
    %v1347 = vpop.f32.mrf.mxu0
    %v1348 = vadd.f32 0.0, %v1347
    %v1349 = vpop.f32.mrf.mxu0
    %1350 = vmatprep.mubr.f32.mxu0 %v405
    %1351 = vmatmul.mubr.f32.gmra.mxu0 %v341
    %v1352 = vpop.f32.mrf.mxu0
    %v1353 = vadd.f32 0.0, %v1352
    %v1354 = vpop.f32.mrf.mxu0
    %1355 = vmatprep.mubr.f32.mxu0 %v406
    %1356 = vmatmul.mubr.f32.gmra.mxu0 %v342
    %v1357 = vpop.f32.mrf.mxu0
    %v1358 = vadd.f32 0.0, %v1357
    %v1359 = vpop.f32.mrf.mxu0
    %1360 = vmatprep.mubr.f32.mxu0 %v407
    %1361 = vmatmul.mubr.f32.gmra.mxu0 %v343
    %v1362 = vpop.f32.mrf.mxu0
    %v1363 = vadd.f32 0.0, %v1362
    %v1364 = vpop.f32.mrf.mxu0
    %1365 = vmatprep.mubr.f32.mxu0 %v408
    %1366 = vmatmul.mubr.f32.gmra.mxu0 %v344
    %v1367 = vpop.f32.mrf.mxu0
    %v1368 = vadd.f32 0.0, %v1367
    %v1369 = vpop.f32.mrf.mxu0
    %1370 = vmatprep.mubr.f32.mxu0 %v409
    %1371 = vmatmul.mubr.f32.gmra.mxu0 %v345
    %v1372 = vpop.f32.mrf.mxu0
    %v1373 = vadd.f32 0.0, %v1372
    %v1374 = vpop.f32.mrf.mxu0
    %1375 = vmatprep.mubr.f32.mxu0 %v410
    %1376 = vmatmul.mubr.f32.gmra.mxu0 %v346
    %v1377 = vpop.f32.mrf.mxu0
    %v1378 = vadd.f32 0.0, %v1377
    %v1379 = vpop.f32.mrf.mxu0
    %1380 = vmatprep.mubr.f32.mxu0 %v411
    %1381 = vmatmul.mubr.f32.gmra.mxu0 %v347
    %v1382 = vpop.f32.mrf.mxu0
    %v1383 = vadd.f32 0.0, %v1382
    %v1384 = vpop.f32.mrf.mxu0
    %1385 = vmatprep.mubr.f32.mxu0 %v412
    %1386 = vmatmul.mubr.f32.gmra.mxu0 %v348
    %v1387 = vpop.f32.mrf.mxu0
    %v1388 = vadd.f32 0.0, %v1387
    %v1389 = vpop.f32.mrf.mxu0
    %1390 = vdwg.mxu0
    %1391 = vmatprep.subr.mxu0 0.0
    %1392 = vmatpush1.msra.mxu0 %v909
    %1393 = vmatprep.subr.mxu0 0.0
    %1394 = vmatpush1.msra.mxu0 %v908
    %1395 = vmatprep.subr.mxu0 0.0
    %1396 = vmatpush1.msra.mxu0 %v907
    %1397 = vmatprep.subr.mxu0 0.0
    %1398 = vmatpush1.msra.mxu0 %v906
    %1399 = vmatprep.subr.mxu0 0.0
    %1400 = vmatpush1.msra.mxu0 %v905
    %1401 = vmatprep.subr.mxu0 0.0
    %1402 = vmatpush1.msra.mxu0 %v904
    %1403 = vmatprep.subr.mxu0 0.0
    %1404 = vmatpush1.msra.mxu0 %v903
    %1405 = vmatprep.subr.mxu0 0.0
    %1406 = vmatpush1.msra.mxu0 %v902
    %1407 = vmatprep.subr.mxu0 0.0
    %1408 = vmatpush1.msra.mxu0 %v901
    %1409 = vmatprep.subr.mxu0 0.0
    %1410 = vmatpush1.msra.mxu0 %v900
    %1411 = vmatprep.subr.mxu0 0.0
    %1412 = vmatpush1.msra.mxu0 %v899
    %1413 = vmatprep.subr.mxu0 0.0
    %1414 = vmatpush1.msra.mxu0 %v898
    %1415 = vmatprep.subr.mxu0 0.0
    %1416 = vmatpush1.msra.mxu0 %v897
    %1417 = vmatprep.subr.mxu0 0.0
    %1418 = vmatpush1.msra.mxu0 %v896
    %1419 = vmatprep.subr.mxu0 0.0
    %1420 = vmatpush1.msra.mxu0 %v895
    %1421 = vmatprep.subr.mxu0 0.0
    %1422 = vmatpush1.msra.mxu0 %v894
    %1423 = vmatprep.subr.mxu0 0.0
    %1424 = vmatpush2.msra.mxu0 %v925
    %1425 = vmatprep.subr.mxu0 0.0
    %1426 = vmatpush2.msra.mxu0 %v924
    %1427 = vmatprep.subr.mxu0 0.0
    %1428 = vmatpush2.msra.mxu0 %v923
    %1429 = vmatprep.subr.mxu0 0.0
    %1430 = vmatpush2.msra.mxu0 %v922
    %1431 = vmatprep.subr.mxu0 0.0
    %1432 = vmatpush2.msra.mxu0 %v921
    %1433 = vmatprep.subr.mxu0 0.0
    %1434 = vmatpush2.msra.mxu0 %v920
    %1435 = vmatprep.subr.mxu0 0.0
    %1436 = vmatpush2.msra.mxu0 %v919
    %1437 = vmatprep.subr.mxu0 0.0
    %1438 = vmatpush2.msra.mxu0 %v918
    %1439 = vmatprep.subr.mxu0 0.0
    %1440 = vmatpush2.msra.mxu0 %v917
    %1441 = vmatprep.subr.mxu0 0.0
    %1442 = vmatpush2.msra.mxu0 %v916
    %1443 = vmatprep.subr.mxu0 0.0
    %1444 = vmatpush2.msra.mxu0 %v915
    %1445 = vmatprep.subr.mxu0 0.0
    %1446 = vmatpush2.msra.mxu0 %v914
    %1447 = vmatprep.subr.mxu0 0.0
    %1448 = vmatpush2.msra.mxu0 %v913
    %1449 = vmatprep.subr.mxu0 0.0
    %1450 = vmatpush2.msra.mxu0 %v912
    %1451 = vmatprep.subr.mxu0 0.0
    %1452 = vmatpush2.msra.mxu0 %v911
    %1453 = vmatprep.subr.mxu0 0.0
    %1454 = vmatpush2.msra.mxu0 %v910
    %1455 = vmatprep.mubr.f32.mxu0 %v477
    %1456 = vmatmul.mubr.f32.gmra.mxu0 %v413
    %v1457 = vpop.f32.mrf.mxu0
    %v1458 = vadd.f32 %v1073, %v1457
    %v1459 = vpop.f32.mrf.mxu0
    %1460 = vmatprep.mubr.f32.mxu0 %v478
    %1461 = vmatmul.mubr.f32.gmra.mxu0 %v414
    %v1462 = vpop.f32.mrf.mxu0
    %v1463 = vadd.f32 %v1078, %v1462
    %v1464 = vpop.f32.mrf.mxu0
    %1465 = vmatprep.mubr.f32.mxu0 %v479
    %1466 = vmatmul.mubr.f32.gmra.mxu0 %v415
    %v1467 = vpop.f32.mrf.mxu0
    %v1468 = vadd.f32 %v1083, %v1467
    %v1469 = vpop.f32.mrf.mxu0
    %1470 = vmatprep.mubr.f32.mxu0 %v480
    %1471 = vmatmul.mubr.f32.gmra.mxu0 %v416
    %v1472 = vpop.f32.mrf.mxu0
    %v1473 = vadd.f32 %v1088, %v1472
    %v1474 = vpop.f32.mrf.mxu0
    %1475 = vmatprep.mubr.f32.mxu0 %v481
    %1476 = vmatmul.mubr.f32.gmra.mxu0 %v417
    %v1477 = vpop.f32.mrf.mxu0
    %v1478 = vadd.f32 %v1093, %v1477
    %v1479 = vpop.f32.mrf.mxu0
    %1480 = vmatprep.mubr.f32.mxu0 %v482
    %1481 = vmatmul.mubr.f32.gmra.mxu0 %v418
    %v1482 = vpop.f32.mrf.mxu0
    %v1483 = vadd.f32 %v1098, %v1482
    %v1484 = vpop.f32.mrf.mxu0
    %1485 = vmatprep.mubr.f32.mxu0 %v483
    %1486 = vmatmul.mubr.f32.gmra.mxu0 %v419
    %v1487 = vpop.f32.mrf.mxu0
    %v1488 = vadd.f32 %v1103, %v1487
    %v1489 = vpop.f32.mrf.mxu0
    %1490 = vmatprep.mubr.f32.mxu0 %v484
    %1491 = vmatmul.mubr.f32.gmra.mxu0 %v420
    %v1492 = vpop.f32.mrf.mxu0
    %v1493 = vadd.f32 %v1108, %v1492
    %v1494 = vpop.f32.mrf.mxu0
    %1495 = vmatprep.mubr.f32.mxu0 %v485
    %1496 = vmatmul.mubr.f32.gmra.mxu0 %v421
    %v1497 = vpop.f32.mrf.mxu0
    %v1498 = vadd.f32 %v1113, %v1497
    %v1499 = vpop.f32.mrf.mxu0
    %1500 = vmatprep.mubr.f32.mxu0 %v486
    %1501 = vmatmul.mubr.f32.gmra.mxu0 %v422
    %v1502 = vpop.f32.mrf.mxu0
    %v1503 = vadd.f32 %v1118, %v1502
    %v1504 = vpop.f32.mrf.mxu0
    %1505 = vmatprep.mubr.f32.mxu0 %v487
    %1506 = vmatmul.mubr.f32.gmra.mxu0 %v423
    %v1507 = vpop.f32.mrf.mxu0
    %v1508 = vadd.f32 %v1123, %v1507
    %v1509 = vpop.f32.mrf.mxu0
    %1510 = vmatprep.mubr.f32.mxu0 %v488
    %1511 = vmatmul.mubr.f32.gmra.mxu0 %v424
    %v1512 = vpop.f32.mrf.mxu0
    %v1513 = vadd.f32 %v1128, %v1512
    %v1514 = vpop.f32.mrf.mxu0
    %1515 = vmatprep.mubr.f32.mxu0 %v489
    %1516 = vmatmul.mubr.f32.gmra.mxu0 %v425
    %v1517 = vpop.f32.mrf.mxu0
    %v1518 = vadd.f32 %v1133, %v1517
    %v1519 = vpop.f32.mrf.mxu0
    %1520 = vmatprep.mubr.f32.mxu0 %v490
    %1521 = vmatmul.mubr.f32.gmra.mxu0 %v426
    %v1522 = vpop.f32.mrf.mxu0
    %v1523 = vadd.f32 %v1138, %v1522
    %v1524 = vpop.f32.mrf.mxu0
    %1525 = vmatprep.mubr.f32.mxu0 %v491
    %1526 = vmatmul.mubr.f32.gmra.mxu0 %v427
    %v1527 = vpop.f32.mrf.mxu0
    %v1528 = vadd.f32 %v1143, %v1527
    %v1529 = vpop.f32.mrf.mxu0
    %1530 = vmatprep.mubr.f32.mxu0 %v492
    %1531 = vmatmul.mubr.f32.gmra.mxu0 %v428
    %v1532 = vpop.f32.mrf.mxu0
    %v1533 = vadd.f32 %v1148, %v1532
    %v1534 = vpop.f32.mrf.mxu0
    %1535 = vmatprep.mubr.f32.mxu0 %v493
    %1536 = vmatmul.mubr.f32.gmra.mxu0 %v429
    %v1537 = vpop.f32.mrf.mxu0
    %v1538 = vadd.f32 %v1153, %v1537
    %v1539 = vpop.f32.mrf.mxu0
    %1540 = vmatprep.mubr.f32.mxu0 %v494
    %1541 = vmatmul.mubr.f32.gmra.mxu0 %v430
    %v1542 = vpop.f32.mrf.mxu0
    %v1543 = vadd.f32 %v1158, %v1542
    %v1544 = vpop.f32.mrf.mxu0
    %1545 = vmatprep.mubr.f32.mxu0 %v495
    %1546 = vmatmul.mubr.f32.gmra.mxu0 %v431
    %v1547 = vpop.f32.mrf.mxu0
    %v1548 = vadd.f32 %v1163, %v1547
    %v1549 = vpop.f32.mrf.mxu0
    %1550 = vmatprep.mubr.f32.mxu0 %v496
    %1551 = vmatmul.mubr.f32.gmra.mxu0 %v432
    %v1552 = vpop.f32.mrf.mxu0
    %v1553 = vadd.f32 %v1168, %v1552
    %v1554 = vpop.f32.mrf.mxu0
    %1555 = vmatprep.mubr.f32.mxu0 %v497
    %1556 = vmatmul.mubr.f32.gmra.mxu0 %v433
    %v1557 = vpop.f32.mrf.mxu0
    %v1558 = vadd.f32 %v1173, %v1557
    %v1559 = vpop.f32.mrf.mxu0
    %1560 = vmatprep.mubr.f32.mxu0 %v498
    %1561 = vmatmul.mubr.f32.gmra.mxu0 %v434
    %v1562 = vpop.f32.mrf.mxu0
    %v1563 = vadd.f32 %v1178, %v1562
    %v1564 = vpop.f32.mrf.mxu0
    %1565 = vmatprep.mubr.f32.mxu0 %v499
    %1566 = vmatmul.mubr.f32.gmra.mxu0 %v435
    %v1567 = vpop.f32.mrf.mxu0
    %v1568 = vadd.f32 %v1183, %v1567
    %v1569 = vpop.f32.mrf.mxu0
    %1570 = vmatprep.mubr.f32.mxu0 %v500
    %1571 = vmatmul.mubr.f32.gmra.mxu0 %v436
    %v1572 = vpop.f32.mrf.mxu0
    %v1573 = vadd.f32 %v1188, %v1572
    %v1574 = vpop.f32.mrf.mxu0
    %1575 = vmatprep.mubr.f32.mxu0 %v501
    %1576 = vmatmul.mubr.f32.gmra.mxu0 %v437
    %v1577 = vpop.f32.mrf.mxu0
    %v1578 = vadd.f32 %v1193, %v1577
    %v1579 = vpop.f32.mrf.mxu0
    %1580 = vmatprep.mubr.f32.mxu0 %v502
    %1581 = vmatmul.mubr.f32.gmra.mxu0 %v438
    %v1582 = vpop.f32.mrf.mxu0
    %v1583 = vadd.f32 %v1198, %v1582
    %v1584 = vpop.f32.mrf.mxu0
    %1585 = vmatprep.mubr.f32.mxu0 %v503
    %1586 = vmatmul.mubr.f32.gmra.mxu0 %v439
    %v1587 = vpop.f32.mrf.mxu0
    %v1588 = vadd.f32 %v1203, %v1587
    %v1589 = vpop.f32.mrf.mxu0
    %1590 = vmatprep.mubr.f32.mxu0 %v504
    %1591 = vmatmul.mubr.f32.gmra.mxu0 %v440
    %v1592 = vpop.f32.mrf.mxu0
    %v1593 = vadd.f32 %v1208, %v1592
    %v1594 = vpop.f32.mrf.mxu0
    %1595 = vmatprep.mubr.f32.mxu0 %v505
    %1596 = vmatmul.mubr.f32.gmra.mxu0 %v441
    %v1597 = vpop.f32.mrf.mxu0
    %v1598 = vadd.f32 %v1213, %v1597
    %v1599 = vpop.f32.mrf.mxu0
    %1600 = vmatprep.mubr.f32.mxu0 %v506
    %1601 = vmatmul.mubr.f32.gmra.mxu0 %v442
    %v1602 = vpop.f32.mrf.mxu0
    %v1603 = vadd.f32 %v1218, %v1602
    %v1604 = vpop.f32.mrf.mxu0
    %1605 = vmatprep.mubr.f32.mxu0 %v507
    %1606 = vmatmul.mubr.f32.gmra.mxu0 %v443
    %v1607 = vpop.f32.mrf.mxu0
    %v1608 = vadd.f32 %v1223, %v1607
    %v1609 = vpop.f32.mrf.mxu0
    %1610 = vmatprep.mubr.f32.mxu0 %v508
    %1611 = vmatmul.mubr.f32.gmra.mxu0 %v444
    %v1612 = vpop.f32.mrf.mxu0
    %v1613 = vadd.f32 %v1228, %v1612
    %v1614 = vpop.f32.mrf.mxu0
    %1615 = vmatprep.mubr.f32.mxu0 %v509
    %1616 = vmatmul.mubr.f32.gmra.mxu0 %v445
    %v1617 = vpop.f32.mrf.mxu0
    %v1618 = vadd.f32 %v1233, %v1617
    %v1619 = vpop.f32.mrf.mxu0
    %1620 = vmatprep.mubr.f32.mxu0 %v510
    %1621 = vmatmul.mubr.f32.gmra.mxu0 %v446
    %v1622 = vpop.f32.mrf.mxu0
    %v1623 = vadd.f32 %v1238, %v1622
    %v1624 = vpop.f32.mrf.mxu0
    %1625 = vmatprep.mubr.f32.mxu0 %v511
    %1626 = vmatmul.mubr.f32.gmra.mxu0 %v447
    %v1627 = vpop.f32.mrf.mxu0
    %v1628 = vadd.f32 %v1243, %v1627
    %v1629 = vpop.f32.mrf.mxu0
    %1630 = vmatprep.mubr.f32.mxu0 %v512
    %1631 = vmatmul.mubr.f32.gmra.mxu0 %v448
    %v1632 = vpop.f32.mrf.mxu0
    %v1633 = vadd.f32 %v1248, %v1632
    %v1634 = vpop.f32.mrf.mxu0
    %1635 = vmatprep.mubr.f32.mxu0 %v513
    %1636 = vmatmul.mubr.f32.gmra.mxu0 %v449
    %v1637 = vpop.f32.mrf.mxu0
    %v1638 = vadd.f32 %v1253, %v1637
    %v1639 = vpop.f32.mrf.mxu0
    %1640 = vmatprep.mubr.f32.mxu0 %v514
    %1641 = vmatmul.mubr.f32.gmra.mxu0 %v450
    %v1642 = vpop.f32.mrf.mxu0
    %v1643 = vadd.f32 %v1258, %v1642
    %v1644 = vpop.f32.mrf.mxu0
    %1645 = vmatprep.mubr.f32.mxu0 %v515
    %1646 = vmatmul.mubr.f32.gmra.mxu0 %v451
    %v1647 = vpop.f32.mrf.mxu0
    %v1648 = vadd.f32 %v1263, %v1647
    %v1649 = vpop.f32.mrf.mxu0
    %1650 = vmatprep.mubr.f32.mxu0 %v516
    %1651 = vmatmul.mubr.f32.gmra.mxu0 %v452
    %v1652 = vpop.f32.mrf.mxu0
    %v1653 = vadd.f32 %v1268, %v1652
    %v1654 = vpop.f32.mrf.mxu0
    %1655 = vmatprep.mubr.f32.mxu0 %v517
    %1656 = vmatmul.mubr.f32.gmra.mxu0 %v453
    %v1657 = vpop.f32.mrf.mxu0
    %v1658 = vadd.f32 %v1273, %v1657
    %v1659 = vpop.f32.mrf.mxu0
    %1660 = vmatprep.mubr.f32.mxu0 %v518
    %1661 = vmatmul.mubr.f32.gmra.mxu0 %v454
    %v1662 = vpop.f32.mrf.mxu0
    %v1663 = vadd.f32 %v1278, %v1662
    %v1664 = vpop.f32.mrf.mxu0
    %1665 = vmatprep.mubr.f32.mxu0 %v519
    %1666 = vmatmul.mubr.f32.gmra.mxu0 %v455
    %v1667 = vpop.f32.mrf.mxu0
    %v1668 = vadd.f32 %v1283, %v1667
    %v1669 = vpop.f32.mrf.mxu0
    %1670 = vmatprep.mubr.f32.mxu0 %v520
    %1671 = vmatmul.mubr.f32.gmra.mxu0 %v456
    %v1672 = vpop.f32.mrf.mxu0
    %v1673 = vadd.f32 %v1288, %v1672
    %v1674 = vpop.f32.mrf.mxu0
    %1675 = vmatprep.mubr.f32.mxu0 %v521
    %1676 = vmatmul.mubr.f32.gmra.mxu0 %v457
    %v1677 = vpop.f32.mrf.mxu0
    %v1678 = vadd.f32 %v1293, %v1677
    %v1679 = vpop.f32.mrf.mxu0
    %1680 = vmatprep.mubr.f32.mxu0 %v522
    %1681 = vmatmul.mubr.f32.gmra.mxu0 %v458
    %v1682 = vpop.f32.mrf.mxu0
    %v1683 = vadd.f32 %v1298, %v1682
    %v1684 = vpop.f32.mrf.mxu0
    %1685 = vmatprep.mubr.f32.mxu0 %v523
    %1686 = vmatmul.mubr.f32.gmra.mxu0 %v459
    %v1687 = vpop.f32.mrf.mxu0
    %v1688 = vadd.f32 %v1303, %v1687
    %v1689 = vpop.f32.mrf.mxu0
    %1690 = vmatprep.mubr.f32.mxu0 %v524
    %1691 = vmatmul.mubr.f32.gmra.mxu0 %v460
    %v1692 = vpop.f32.mrf.mxu0
    %v1693 = vadd.f32 %v1308, %v1692
    %v1694 = vpop.f32.mrf.mxu0
    %1695 = vmatprep.mubr.f32.mxu0 %v525
    %1696 = vmatmul.mubr.f32.gmra.mxu0 %v461
    %v1697 = vpop.f32.mrf.mxu0
    %v1698 = vadd.f32 %v1313, %v1697
    %v1699 = vpop.f32.mrf.mxu0
    %1700 = vmatprep.mubr.f32.mxu0 %v526
    %1701 = vmatmul.mubr.f32.gmra.mxu0 %v462
    %v1702 = vpop.f32.mrf.mxu0
    %v1703 = vadd.f32 %v1318, %v1702
    %v1704 = vpop.f32.mrf.mxu0
    %1705 = vmatprep.mubr.f32.mxu0 %v527
    %1706 = vmatmul.mubr.f32.gmra.mxu0 %v463
    %v1707 = vpop.f32.mrf.mxu0
    %v1708 = vadd.f32 %v1323, %v1707
    %v1709 = vpop.f32.mrf.mxu0
    %1710 = vmatprep.mubr.f32.mxu0 %v528
    %1711 = vmatmul.mubr.f32.gmra.mxu0 %v464
    %v1712 = vpop.f32.mrf.mxu0
    %v1713 = vadd.f32 %v1328, %v1712
    %v1714 = vpop.f32.mrf.mxu0
    %1715 = vmatprep.mubr.f32.mxu0 %v529
    %1716 = vmatmul.mubr.f32.gmra.mxu0 %v465
    %v1717 = vpop.f32.mrf.mxu0
    %v1718 = vadd.f32 %v1333, %v1717
    %v1719 = vpop.f32.mrf.mxu0
    %1720 = vmatprep.mubr.f32.mxu0 %v530
    %1721 = vmatmul.mubr.f32.gmra.mxu0 %v466
    %v1722 = vpop.f32.mrf.mxu0
    %v1723 = vadd.f32 %v1338, %v1722
    %v1724 = vpop.f32.mrf.mxu0
    %1725 = vmatprep.mubr.f32.mxu0 %v531
    %1726 = vmatmul.mubr.f32.gmra.mxu0 %v467
    %v1727 = vpop.f32.mrf.mxu0
    %v1728 = vadd.f32 %v1343, %v1727
    %v1729 = vpop.f32.mrf.mxu0
    %1730 = vmatprep.mubr.f32.mxu0 %v532
    %1731 = vmatmul.mubr.f32.gmra.mxu0 %v468
    %v1732 = vpop.f32.mrf.mxu0
    %v1733 = vadd.f32 %v1348, %v1732
    %v1734 = vpop.f32.mrf.mxu0
    %1735 = vmatprep.mubr.f32.mxu0 %v533
    %1736 = vmatmul.mubr.f32.gmra.mxu0 %v469
    %v1737 = vpop.f32.mrf.mxu0
    %v1738 = vadd.f32 %v1353, %v1737
    %v1739 = vpop.f32.mrf.mxu0
    %1740 = vmatprep.mubr.f32.mxu0 %v534
    %1741 = vmatmul.mubr.f32.gmra.mxu0 %v470
    %v1742 = vpop.f32.mrf.mxu0
    %v1743 = vadd.f32 %v1358, %v1742
    %v1744 = vpop.f32.mrf.mxu0
    %1745 = vmatprep.mubr.f32.mxu0 %v535
    %1746 = vmatmul.mubr.f32.gmra.mxu0 %v471
    %v1747 = vpop.f32.mrf.mxu0
    %v1748 = vadd.f32 %v1363, %v1747
    %v1749 = vpop.f32.mrf.mxu0
    %1750 = vmatprep.mubr.f32.mxu0 %v536
    %1751 = vmatmul.mubr.f32.gmra.mxu0 %v472
    %v1752 = vpop.f32.mrf.mxu0
    %v1753 = vadd.f32 %v1368, %v1752
    %v1754 = vpop.f32.mrf.mxu0
    %1755 = vmatprep.mubr.f32.mxu0 %v537
    %1756 = vmatmul.mubr.f32.gmra.mxu0 %v473
    %v1757 = vpop.f32.mrf.mxu0
    %v1758 = vadd.f32 %v1373, %v1757
    %v1759 = vpop.f32.mrf.mxu0
    %1760 = vmatprep.mubr.f32.mxu0 %v538
    %1761 = vmatmul.mubr.f32.gmra.mxu0 %v474
    %v1762 = vpop.f32.mrf.mxu0
    %v1763 = vadd.f32 %v1378, %v1762
    %v1764 = vpop.f32.mrf.mxu0
    %1765 = vmatprep.mubr.f32.mxu0 %v539
    %1766 = vmatmul.mubr.f32.gmra.mxu0 %v475
    %v1767 = vpop.f32.mrf.mxu0
    %v1768 = vadd.f32 %v1383, %v1767
    %v1769 = vpop.f32.mrf.mxu0
    %1770 = vmatprep.mubr.f32.mxu0 %v540
    %1771 = vmatmul.mubr.f32.gmra.mxu0 %v476
    %v1772 = vpop.f32.mrf.mxu0
    %v1773 = vadd.f32 %v1388, %v1772
    %v1774 = vpop.f32.mrf.mxu0
    %1775 = vdwg.mxu0
    %1776 = vmatprep.subr.mxu0 0.0
    %1777 = vmatpush1.msra.mxu0 %v941
    %1778 = vmatprep.subr.mxu0 0.0
    %1779 = vmatpush1.msra.mxu0 %v940
    %1780 = vmatprep.subr.mxu0 0.0
    %1781 = vmatpush1.msra.mxu0 %v939
    %1782 = vmatprep.subr.mxu0 0.0
    %1783 = vmatpush1.msra.mxu0 %v938
    %1784 = vmatprep.subr.mxu0 0.0
    %1785 = vmatpush1.msra.mxu0 %v937
    %1786 = vmatprep.subr.mxu0 0.0
    %1787 = vmatpush1.msra.mxu0 %v936
    %1788 = vmatprep.subr.mxu0 0.0
    %1789 = vmatpush1.msra.mxu0 %v935
    %1790 = vmatprep.subr.mxu0 0.0
    %1791 = vmatpush1.msra.mxu0 %v934
    %1792 = vmatprep.subr.mxu0 0.0
    %1793 = vmatpush1.msra.mxu0 %v933
    %1794 = vmatprep.subr.mxu0 0.0
    %1795 = vmatpush1.msra.mxu0 %v932
    %1796 = vmatprep.subr.mxu0 0.0
    %1797 = vmatpush1.msra.mxu0 %v931
    %1798 = vmatprep.subr.mxu0 0.0
    %1799 = vmatpush1.msra.mxu0 %v930
    %1800 = vmatprep.subr.mxu0 0.0
    %1801 = vmatpush1.msra.mxu0 %v929
    %1802 = vmatprep.subr.mxu0 0.0
    %1803 = vmatpush1.msra.mxu0 %v928
    %1804 = vmatprep.subr.mxu0 0.0
    %1805 = vmatpush1.msra.mxu0 %v927
    %1806 = vmatprep.subr.mxu0 0.0
    %1807 = vmatpush1.msra.mxu0 %v926
    %1808 = vmatprep.subr.mxu0 0.0
    %1809 = vmatpush2.msra.mxu0 %v957
    %1810 = vmatprep.subr.mxu0 0.0
    %1811 = vmatpush2.msra.mxu0 %v956
    %1812 = vmatprep.subr.mxu0 0.0
    %1813 = vmatpush2.msra.mxu0 %v955
    %1814 = vmatprep.subr.mxu0 0.0
    %1815 = vmatpush2.msra.mxu0 %v954
    %1816 = vmatprep.subr.mxu0 0.0
    %1817 = vmatpush2.msra.mxu0 %v953
    %1818 = vmatprep.subr.mxu0 0.0
    %1819 = vmatpush2.msra.mxu0 %v952
    %1820 = vmatprep.subr.mxu0 0.0
    %1821 = vmatpush2.msra.mxu0 %v951
    %1822 = vmatprep.subr.mxu0 0.0
    %1823 = vmatpush2.msra.mxu0 %v950
    %1824 = vmatprep.subr.mxu0 0.0
    %1825 = vmatpush2.msra.mxu0 %v949
    %1826 = vmatprep.subr.mxu0 0.0
    %1827 = vmatpush2.msra.mxu0 %v948
    %1828 = vmatprep.subr.mxu0 0.0
    %1829 = vmatpush2.msra.mxu0 %v947
    %1830 = vmatprep.subr.mxu0 0.0
    %1831 = vmatpush2.msra.mxu0 %v946
    %1832 = vmatprep.subr.mxu0 0.0
    %1833 = vmatpush2.msra.mxu0 %v945
    %1834 = vmatprep.subr.mxu0 0.0
    %1835 = vmatpush2.msra.mxu0 %v944
    %1836 = vmatprep.subr.mxu0 0.0
    %1837 = vmatpush2.msra.mxu0 %v943
    %1838 = vmatprep.subr.mxu0 0.0
    %1839 = vmatpush2.msra.mxu0 %v942
    %1840 = vmatprep.mubr.f32.mxu0 %v605
    %1841 = vmatmul.mubr.f32.gmra.mxu0 %v541
    %v1842 = vpop.f32.mrf.mxu0
    %v1843 = vadd.f32 %v1458, %v1842
    %v1844 = vpop.f32.mrf.mxu0
    %1845 = vmatprep.mubr.f32.mxu0 %v606
    %1846 = vmatmul.mubr.f32.gmra.mxu0 %v542
    %v1847 = vpop.f32.mrf.mxu0
    %v1848 = vadd.f32 %v1463, %v1847
    %v1849 = vpop.f32.mrf.mxu0
    %1850 = vmatprep.mubr.f32.mxu0 %v607
    %1851 = vmatmul.mubr.f32.gmra.mxu0 %v543
    %v1852 = vpop.f32.mrf.mxu0
    %v1853 = vadd.f32 %v1468, %v1852
    %v1854 = vpop.f32.mrf.mxu0
    %1855 = vmatprep.mubr.f32.mxu0 %v608
    %1856 = vmatmul.mubr.f32.gmra.mxu0 %v544
    %v1857 = vpop.f32.mrf.mxu0
    %v1858 = vadd.f32 %v1473, %v1857
    %v1859 = vpop.f32.mrf.mxu0
    %1860 = vmatprep.mubr.f32.mxu0 %v609
    %1861 = vmatmul.mubr.f32.gmra.mxu0 %v545
    %v1862 = vpop.f32.mrf.mxu0
    %v1863 = vadd.f32 %v1478, %v1862
    %v1864 = vpop.f32.mrf.mxu0
    %1865 = vmatprep.mubr.f32.mxu0 %v610
    %1866 = vmatmul.mubr.f32.gmra.mxu0 %v546
    %v1867 = vpop.f32.mrf.mxu0
    %v1868 = vadd.f32 %v1483, %v1867
    %v1869 = vpop.f32.mrf.mxu0
    %1870 = vmatprep.mubr.f32.mxu0 %v611
    %1871 = vmatmul.mubr.f32.gmra.mxu0 %v547
    %v1872 = vpop.f32.mrf.mxu0
    %v1873 = vadd.f32 %v1488, %v1872
    %v1874 = vpop.f32.mrf.mxu0
    %1875 = vmatprep.mubr.f32.mxu0 %v612
    %1876 = vmatmul.mubr.f32.gmra.mxu0 %v548
    %v1877 = vpop.f32.mrf.mxu0
    %v1878 = vadd.f32 %v1493, %v1877
    %v1879 = vpop.f32.mrf.mxu0
    %1880 = vmatprep.mubr.f32.mxu0 %v613
    %1881 = vmatmul.mubr.f32.gmra.mxu0 %v549
    %v1882 = vpop.f32.mrf.mxu0
    %v1883 = vadd.f32 %v1498, %v1882
    %v1884 = vpop.f32.mrf.mxu0
    %1885 = vmatprep.mubr.f32.mxu0 %v614
    %1886 = vmatmul.mubr.f32.gmra.mxu0 %v550
    %v1887 = vpop.f32.mrf.mxu0
    %v1888 = vadd.f32 %v1503, %v1887
    %v1889 = vpop.f32.mrf.mxu0
    %1890 = vmatprep.mubr.f32.mxu0 %v615
    %1891 = vmatmul.mubr.f32.gmra.mxu0 %v551
    %v1892 = vpop.f32.mrf.mxu0
    %v1893 = vadd.f32 %v1508, %v1892
    %v1894 = vpop.f32.mrf.mxu0
    %1895 = vmatprep.mubr.f32.mxu0 %v616
    %1896 = vmatmul.mubr.f32.gmra.mxu0 %v552
    %v1897 = vpop.f32.mrf.mxu0
    %v1898 = vadd.f32 %v1513, %v1897
    %v1899 = vpop.f32.mrf.mxu0
    %1900 = vmatprep.mubr.f32.mxu0 %v617
    %1901 = vmatmul.mubr.f32.gmra.mxu0 %v553
    %v1902 = vpop.f32.mrf.mxu0
    %v1903 = vadd.f32 %v1518, %v1902
    %v1904 = vpop.f32.mrf.mxu0
    %1905 = vmatprep.mubr.f32.mxu0 %v618
    %1906 = vmatmul.mubr.f32.gmra.mxu0 %v554
    %v1907 = vpop.f32.mrf.mxu0
    %v1908 = vadd.f32 %v1523, %v1907
    %v1909 = vpop.f32.mrf.mxu0
    %1910 = vmatprep.mubr.f32.mxu0 %v619
    %1911 = vmatmul.mubr.f32.gmra.mxu0 %v555
    %v1912 = vpop.f32.mrf.mxu0
    %v1913 = vadd.f32 %v1528, %v1912
    %v1914 = vpop.f32.mrf.mxu0
    %1915 = vmatprep.mubr.f32.mxu0 %v620
    %1916 = vmatmul.mubr.f32.gmra.mxu0 %v556
    %v1917 = vpop.f32.mrf.mxu0
    %v1918 = vadd.f32 %v1533, %v1917
    %v1919 = vpop.f32.mrf.mxu0
    %1920 = vmatprep.mubr.f32.mxu0 %v621
    %1921 = vmatmul.mubr.f32.gmra.mxu0 %v557
    %v1922 = vpop.f32.mrf.mxu0
    %v1923 = vadd.f32 %v1538, %v1922
    %v1924 = vpop.f32.mrf.mxu0
    %1925 = vmatprep.mubr.f32.mxu0 %v622
    %1926 = vmatmul.mubr.f32.gmra.mxu0 %v558
    %v1927 = vpop.f32.mrf.mxu0
    %v1928 = vadd.f32 %v1543, %v1927
    %v1929 = vpop.f32.mrf.mxu0
    %1930 = vmatprep.mubr.f32.mxu0 %v623
    %1931 = vmatmul.mubr.f32.gmra.mxu0 %v559
    %v1932 = vpop.f32.mrf.mxu0
    %v1933 = vadd.f32 %v1548, %v1932
    %v1934 = vpop.f32.mrf.mxu0
    %1935 = vmatprep.mubr.f32.mxu0 %v624
    %1936 = vmatmul.mubr.f32.gmra.mxu0 %v560
    %v1937 = vpop.f32.mrf.mxu0
    %v1938 = vadd.f32 %v1553, %v1937
    %v1939 = vpop.f32.mrf.mxu0
    %1940 = vmatprep.mubr.f32.mxu0 %v625
    %1941 = vmatmul.mubr.f32.gmra.mxu0 %v561
    %v1942 = vpop.f32.mrf.mxu0
    %v1943 = vadd.f32 %v1558, %v1942
    %v1944 = vpop.f32.mrf.mxu0
    %1945 = vmatprep.mubr.f32.mxu0 %v626
    %1946 = vmatmul.mubr.f32.gmra.mxu0 %v562
    %v1947 = vpop.f32.mrf.mxu0
    %v1948 = vadd.f32 %v1563, %v1947
    %v1949 = vpop.f32.mrf.mxu0
    %1950 = vmatprep.mubr.f32.mxu0 %v627
    %1951 = vmatmul.mubr.f32.gmra.mxu0 %v563
    %v1952 = vpop.f32.mrf.mxu0
    %v1953 = vadd.f32 %v1568, %v1952
    %v1954 = vpop.f32.mrf.mxu0
    %1955 = vmatprep.mubr.f32.mxu0 %v628
    %1956 = vmatmul.mubr.f32.gmra.mxu0 %v564
    %v1957 = vpop.f32.mrf.mxu0
    %v1958 = vadd.f32 %v1573, %v1957
    %v1959 = vpop.f32.mrf.mxu0
    %1960 = vmatprep.mubr.f32.mxu0 %v629
    %1961 = vmatmul.mubr.f32.gmra.mxu0 %v565
    %v1962 = vpop.f32.mrf.mxu0
    %v1963 = vadd.f32 %v1578, %v1962
    %v1964 = vpop.f32.mrf.mxu0
    %1965 = vmatprep.mubr.f32.mxu0 %v630
    %1966 = vmatmul.mubr.f32.gmra.mxu0 %v566
    %v1967 = vpop.f32.mrf.mxu0
    %v1968 = vadd.f32 %v1583, %v1967
    %v1969 = vpop.f32.mrf.mxu0
    %1970 = vmatprep.mubr.f32.mxu0 %v631
    %1971 = vmatmul.mubr.f32.gmra.mxu0 %v567
    %v1972 = vpop.f32.mrf.mxu0
    %v1973 = vadd.f32 %v1588, %v1972
    %v1974 = vpop.f32.mrf.mxu0
    %1975 = vmatprep.mubr.f32.mxu0 %v632
    %1976 = vmatmul.mubr.f32.gmra.mxu0 %v568
    %v1977 = vpop.f32.mrf.mxu0
    %v1978 = vadd.f32 %v1593, %v1977
    %v1979 = vpop.f32.mrf.mxu0
    %1980 = vmatprep.mubr.f32.mxu0 %v633
    %1981 = vmatmul.mubr.f32.gmra.mxu0 %v569
    %v1982 = vpop.f32.mrf.mxu0
    %v1983 = vadd.f32 %v1598, %v1982
    %v1984 = vpop.f32.mrf.mxu0
    %1985 = vmatprep.mubr.f32.mxu0 %v634
    %1986 = vmatmul.mubr.f32.gmra.mxu0 %v570
    %v1987 = vpop.f32.mrf.mxu0
    %v1988 = vadd.f32 %v1603, %v1987
    %v1989 = vpop.f32.mrf.mxu0
    %1990 = vmatprep.mubr.f32.mxu0 %v635
    %1991 = vmatmul.mubr.f32.gmra.mxu0 %v571
    %v1992 = vpop.f32.mrf.mxu0
    %v1993 = vadd.f32 %v1608, %v1992
    %v1994 = vpop.f32.mrf.mxu0
    %1995 = vmatprep.mubr.f32.mxu0 %v636
    %1996 = vmatmul.mubr.f32.gmra.mxu0 %v572
    %v1997 = vpop.f32.mrf.mxu0
    %v1998 = vadd.f32 %v1613, %v1997
    %v1999 = vpop.f32.mrf.mxu0
    %2000 = vmatprep.mubr.f32.mxu0 %v637
    %2001 = vmatmul.mubr.f32.gmra.mxu0 %v573
    %v2002 = vpop.f32.mrf.mxu0
    %v2003 = vadd.f32 %v1618, %v2002
    %v2004 = vpop.f32.mrf.mxu0
    %2005 = vmatprep.mubr.f32.mxu0 %v638
    %2006 = vmatmul.mubr.f32.gmra.mxu0 %v574
    %v2007 = vpop.f32.mrf.mxu0
    %v2008 = vadd.f32 %v1623, %v2007
    %v2009 = vpop.f32.mrf.mxu0
    %2010 = vmatprep.mubr.f32.mxu0 %v639
    %2011 = vmatmul.mubr.f32.gmra.mxu0 %v575
    %v2012 = vpop.f32.mrf.mxu0
    %v2013 = vadd.f32 %v1628, %v2012
    %v2014 = vpop.f32.mrf.mxu0
    %2015 = vmatprep.mubr.f32.mxu0 %v640
    %2016 = vmatmul.mubr.f32.gmra.mxu0 %v576
    %v2017 = vpop.f32.mrf.mxu0
    %v2018 = vadd.f32 %v1633, %v2017
    %v2019 = vpop.f32.mrf.mxu0
    %2020 = vmatprep.mubr.f32.mxu0 %v641
    %2021 = vmatmul.mubr.f32.gmra.mxu0 %v577
    %v2022 = vpop.f32.mrf.mxu0
    %v2023 = vadd.f32 %v1638, %v2022
    %v2024 = vpop.f32.mrf.mxu0
    %2025 = vmatprep.mubr.f32.mxu0 %v642
    %2026 = vmatmul.mubr.f32.gmra.mxu0 %v578
    %v2027 = vpop.f32.mrf.mxu0
    %v2028 = vadd.f32 %v1643, %v2027
    %v2029 = vpop.f32.mrf.mxu0
    %2030 = vmatprep.mubr.f32.mxu0 %v643
    %2031 = vmatmul.mubr.f32.gmra.mxu0 %v579
    %v2032 = vpop.f32.mrf.mxu0
    %v2033 = vadd.f32 %v1648, %v2032
    %v2034 = vpop.f32.mrf.mxu0
    %2035 = vmatprep.mubr.f32.mxu0 %v644
    %2036 = vmatmul.mubr.f32.gmra.mxu0 %v580
    %v2037 = vpop.f32.mrf.mxu0
    %v2038 = vadd.f32 %v1653, %v2037
    %v2039 = vpop.f32.mrf.mxu0
    %2040 = vmatprep.mubr.f32.mxu0 %v645
    %2041 = vmatmul.mubr.f32.gmra.mxu0 %v581
    %v2042 = vpop.f32.mrf.mxu0
    %v2043 = vadd.f32 %v1658, %v2042
    %v2044 = vpop.f32.mrf.mxu0
    %2045 = vmatprep.mubr.f32.mxu0 %v646
    %2046 = vmatmul.mubr.f32.gmra.mxu0 %v582
    %v2047 = vpop.f32.mrf.mxu0
    %v2048 = vadd.f32 %v1663, %v2047
    %v2049 = vpop.f32.mrf.mxu0
    %2050 = vmatprep.mubr.f32.mxu0 %v647
    %2051 = vmatmul.mubr.f32.gmra.mxu0 %v583
    %v2052 = vpop.f32.mrf.mxu0
    %v2053 = vadd.f32 %v1668, %v2052
    %v2054 = vpop.f32.mrf.mxu0
    %2055 = vmatprep.mubr.f32.mxu0 %v648
    %2056 = vmatmul.mubr.f32.gmra.mxu0 %v584
    %v2057 = vpop.f32.mrf.mxu0
    %v2058 = vadd.f32 %v1673, %v2057
    %v2059 = vpop.f32.mrf.mxu0
    %2060 = vmatprep.mubr.f32.mxu0 %v649
    %2061 = vmatmul.mubr.f32.gmra.mxu0 %v585
    %v2062 = vpop.f32.mrf.mxu0
    %v2063 = vadd.f32 %v1678, %v2062
    %v2064 = vpop.f32.mrf.mxu0
    %2065 = vmatprep.mubr.f32.mxu0 %v650
    %2066 = vmatmul.mubr.f32.gmra.mxu0 %v586
    %v2067 = vpop.f32.mrf.mxu0
    %v2068 = vadd.f32 %v1683, %v2067
    %v2069 = vpop.f32.mrf.mxu0
    %2070 = vmatprep.mubr.f32.mxu0 %v651
    %2071 = vmatmul.mubr.f32.gmra.mxu0 %v587
    %v2072 = vpop.f32.mrf.mxu0
    %v2073 = vadd.f32 %v1688, %v2072
    %v2074 = vpop.f32.mrf.mxu0
    %2075 = vmatprep.mubr.f32.mxu0 %v652
    %2076 = vmatmul.mubr.f32.gmra.mxu0 %v588
    %v2077 = vpop.f32.mrf.mxu0
    %v2078 = vadd.f32 %v1693, %v2077
    %v2079 = vpop.f32.mrf.mxu0
    %2080 = vmatprep.mubr.f32.mxu0 %v653
    %2081 = vmatmul.mubr.f32.gmra.mxu0 %v589
    %v2082 = vpop.f32.mrf.mxu0
    %v2083 = vadd.f32 %v1698, %v2082
    %v2084 = vpop.f32.mrf.mxu0
    %2085 = vmatprep.mubr.f32.mxu0 %v654
    %2086 = vmatmul.mubr.f32.gmra.mxu0 %v590
    %v2087 = vpop.f32.mrf.mxu0
    %v2088 = vadd.f32 %v1703, %v2087
    %v2089 = vpop.f32.mrf.mxu0
    %2090 = vmatprep.mubr.f32.mxu0 %v655
    %2091 = vmatmul.mubr.f32.gmra.mxu0 %v591
    %v2092 = vpop.f32.mrf.mxu0
    %v2093 = vadd.f32 %v1708, %v2092
    %v2094 = vpop.f32.mrf.mxu0
    %2095 = vmatprep.mubr.f32.mxu0 %v656
    %2096 = vmatmul.mubr.f32.gmra.mxu0 %v592
    %v2097 = vpop.f32.mrf.mxu0
    %v2098 = vadd.f32 %v1713, %v2097
    %v2099 = vpop.f32.mrf.mxu0
    %2100 = vmatprep.mubr.f32.mxu0 %v657
    %2101 = vmatmul.mubr.f32.gmra.mxu0 %v593
    %v2102 = vpop.f32.mrf.mxu0
    %v2103 = vadd.f32 %v1718, %v2102
    %v2104 = vpop.f32.mrf.mxu0
    %2105 = vmatprep.mubr.f32.mxu0 %v658
    %2106 = vmatmul.mubr.f32.gmra.mxu0 %v594
    %v2107 = vpop.f32.mrf.mxu0
    %v2108 = vadd.f32 %v1723, %v2107
    %v2109 = vpop.f32.mrf.mxu0
    %2110 = vmatprep.mubr.f32.mxu0 %v659
    %2111 = vmatmul.mubr.f32.gmra.mxu0 %v595
    %v2112 = vpop.f32.mrf.mxu0
    %v2113 = vadd.f32 %v1728, %v2112
    %v2114 = vpop.f32.mrf.mxu0
    %2115 = vmatprep.mubr.f32.mxu0 %v660
    %2116 = vmatmul.mubr.f32.gmra.mxu0 %v596
    %v2117 = vpop.f32.mrf.mxu0
    %v2118 = vadd.f32 %v1733, %v2117
    %v2119 = vpop.f32.mrf.mxu0
    %2120 = vmatprep.mubr.f32.mxu0 %v661
    %2121 = vmatmul.mubr.f32.gmra.mxu0 %v597
    %v2122 = vpop.f32.mrf.mxu0
    %v2123 = vadd.f32 %v1738, %v2122
    %v2124 = vpop.f32.mrf.mxu0
    %2125 = vmatprep.mubr.f32.mxu0 %v662
    %2126 = vmatmul.mubr.f32.gmra.mxu0 %v598
    %v2127 = vpop.f32.mrf.mxu0
    %v2128 = vadd.f32 %v1743, %v2127
    %v2129 = vpop.f32.mrf.mxu0
    %2130 = vmatprep.mubr.f32.mxu0 %v663
    %2131 = vmatmul.mubr.f32.gmra.mxu0 %v599
    %v2132 = vpop.f32.mrf.mxu0
    %v2133 = vadd.f32 %v1748, %v2132
    %v2134 = vpop.f32.mrf.mxu0
    %2135 = vmatprep.mubr.f32.mxu0 %v664
    %2136 = vmatmul.mubr.f32.gmra.mxu0 %v600
    %v2137 = vpop.f32.mrf.mxu0
    %v2138 = vadd.f32 %v1753, %v2137
    %v2139 = vpop.f32.mrf.mxu0
    %2140 = vmatprep.mubr.f32.mxu0 %v665
    %2141 = vmatmul.mubr.f32.gmra.mxu0 %v601
    %v2142 = vpop.f32.mrf.mxu0
    %v2143 = vadd.f32 %v1758, %v2142
    %v2144 = vpop.f32.mrf.mxu0
    %2145 = vmatprep.mubr.f32.mxu0 %v666
    %2146 = vmatmul.mubr.f32.gmra.mxu0 %v602
    %v2147 = vpop.f32.mrf.mxu0
    %v2148 = vadd.f32 %v1763, %v2147
    %v2149 = vpop.f32.mrf.mxu0
    %2150 = vmatprep.mubr.f32.mxu0 %v667
    %2151 = vmatmul.mubr.f32.gmra.mxu0 %v603
    %v2152 = vpop.f32.mrf.mxu0
    %v2153 = vadd.f32 %v1768, %v2152
    %v2154 = vpop.f32.mrf.mxu0
    %2155 = vmatprep.mubr.f32.mxu0 %v668
    %2156 = vmatmul.mubr.f32.gmra.mxu0 %v604
    %v2157 = vpop.f32.mrf.mxu0
    %v2158 = vadd.f32 %v1773, %v2157
    %v2159 = vpop.f32.mrf.mxu0
    %2160 = vdwg.mxu0
    %2161 = vmatprep.subr.mxu0 0.0
    %2162 = vmatpush1.msra.mxu0 %v973
    %2163 = vmatprep.subr.mxu0 0.0
    %2164 = vmatpush1.msra.mxu0 %v972
    %2165 = vmatprep.subr.mxu0 0.0
    %2166 = vmatpush1.msra.mxu0 %v971
    %2167 = vmatprep.subr.mxu0 0.0
    %2168 = vmatpush1.msra.mxu0 %v970
    %2169 = vmatprep.subr.mxu0 0.0
    %2170 = vmatpush1.msra.mxu0 %v969
    %2171 = vmatprep.subr.mxu0 0.0
    %2172 = vmatpush1.msra.mxu0 %v968
    %2173 = vmatprep.subr.mxu0 0.0
    %2174 = vmatpush1.msra.mxu0 %v967
    %2175 = vmatprep.subr.mxu0 0.0
    %2176 = vmatpush1.msra.mxu0 %v966
    %2177 = vmatprep.subr.mxu0 0.0
    %2178 = vmatpush1.msra.mxu0 %v965
    %2179 = vmatprep.subr.mxu0 0.0
    %2180 = vmatpush1.msra.mxu0 %v964
    %2181 = vmatprep.subr.mxu0 0.0
    %2182 = vmatpush1.msra.mxu0 %v963
    %2183 = vmatprep.subr.mxu0 0.0
    %2184 = vmatpush1.msra.mxu0 %v962
    %2185 = vmatprep.subr.mxu0 0.0
    %2186 = vmatpush1.msra.mxu0 %v961
    %2187 = vmatprep.subr.mxu0 0.0
    %2188 = vmatpush1.msra.mxu0 %v960
    %2189 = vmatprep.subr.mxu0 0.0
    %2190 = vmatpush1.msra.mxu0 %v959
    %2191 = vmatprep.subr.mxu0 0.0
    %2192 = vmatpush1.msra.mxu0 %v958
    %2193 = vmatprep.subr.mxu0 0.0
    %2194 = vmatpush2.msra.mxu0 %v989
    %2195 = vmatprep.subr.mxu0 0.0
    %2196 = vmatpush2.msra.mxu0 %v988
    %2197 = vmatprep.subr.mxu0 0.0
    %2198 = vmatpush2.msra.mxu0 %v987
    %2199 = vmatprep.subr.mxu0 0.0
    %2200 = vmatpush2.msra.mxu0 %v986
    %2201 = vmatprep.subr.mxu0 0.0
    %2202 = vmatpush2.msra.mxu0 %v985
    %2203 = vmatprep.subr.mxu0 0.0
    %2204 = vmatpush2.msra.mxu0 %v984
    %2205 = vmatprep.subr.mxu0 0.0
    %2206 = vmatpush2.msra.mxu0 %v983
    %2207 = vmatprep.subr.mxu0 0.0
    %2208 = vmatpush2.msra.mxu0 %v982
    %2209 = vmatprep.subr.mxu0 0.0
    %2210 = vmatpush2.msra.mxu0 %v981
    %2211 = vmatprep.subr.mxu0 0.0
    %2212 = vmatpush2.msra.mxu0 %v980
    %2213 = vmatprep.subr.mxu0 0.0
    %2214 = vmatpush2.msra.mxu0 %v979
    %2215 = vmatprep.subr.mxu0 0.0
    %2216 = vmatpush2.msra.mxu0 %v978
    %2217 = vmatprep.subr.mxu0 0.0
    %2218 = vmatpush2.msra.mxu0 %v977
    %2219 = vmatprep.subr.mxu0 0.0
    %2220 = vmatpush2.msra.mxu0 %v976
    %2221 = vmatprep.subr.mxu0 0.0
    %2222 = vmatpush2.msra.mxu0 %v975
    %2223 = vmatprep.subr.mxu0 0.0
    %2224 = vmatpush2.msra.mxu0 %v974
    %2225 = vmatprep.mubr.f32.mxu0 %v734
    %2226 = vmatmul.mubr.f32.gmra.mxu0 %v670
    %v2227 = vpop.f32.mrf.mxu0
    %v2228 = vadd.f32 %v1843, %v2227
    %v2229 = vpop.f32.mrf.mxu0
    %2230 = vmatprep.mubr.f32.mxu0 %v735
    %2231 = vmatmul.mubr.f32.gmra.mxu0 %v671
    %v2232 = vpop.f32.mrf.mxu0
    %v2233 = vadd.f32 %v1848, %v2232
    %v2234 = vpop.f32.mrf.mxu0
    %2235 = vmatprep.mubr.f32.mxu0 %v736
    %2236 = vmatmul.mubr.f32.gmra.mxu0 %v672
    %v2237 = vpop.f32.mrf.mxu0
    %v2238 = vadd.f32 %v1853, %v2237
    %v2239 = vpop.f32.mrf.mxu0
    %2240 = vmatprep.mubr.f32.mxu0 %v737
    %2241 = vmatmul.mubr.f32.gmra.mxu0 %v673
    %v2242 = vpop.f32.mrf.mxu0
    %v2243 = vadd.f32 %v1858, %v2242
    %v2244 = vpop.f32.mrf.mxu0
    %2245 = vmatprep.mubr.f32.mxu0 %v738
    %2246 = vmatmul.mubr.f32.gmra.mxu0 %v674
    %v2247 = vpop.f32.mrf.mxu0
    %v2248 = vadd.f32 %v1863, %v2247
    %v2249 = vpop.f32.mrf.mxu0
    %2250 = vmatprep.mubr.f32.mxu0 %v739
    %2251 = vmatmul.mubr.f32.gmra.mxu0 %v675
    %v2252 = vpop.f32.mrf.mxu0
    %v2253 = vadd.f32 %v1868, %v2252
    %v2254 = vpop.f32.mrf.mxu0
    %2255 = vmatprep.mubr.f32.mxu0 %v740
    %2256 = vmatmul.mubr.f32.gmra.mxu0 %v676
    %v2257 = vpop.f32.mrf.mxu0
    %v2258 = vadd.f32 %v1873, %v2257
    %v2259 = vpop.f32.mrf.mxu0
    %2260 = vmatprep.mubr.f32.mxu0 %v741
    %2261 = vmatmul.mubr.f32.gmra.mxu0 %v677
    %v2262 = vpop.f32.mrf.mxu0
    %v2263 = vadd.f32 %v1878, %v2262
    %v2264 = vpop.f32.mrf.mxu0
    %2265 = vmatprep.mubr.f32.mxu0 %v742
    %2266 = vmatmul.mubr.f32.gmra.mxu0 %v678
    %v2267 = vpop.f32.mrf.mxu0
    %v2268 = vadd.f32 %v1883, %v2267
    %v2269 = vpop.f32.mrf.mxu0
    %2270 = vmatprep.mubr.f32.mxu0 %v743
    %2271 = vmatmul.mubr.f32.gmra.mxu0 %v679
    %v2272 = vpop.f32.mrf.mxu0
    %v2273 = vadd.f32 %v1888, %v2272
    %v2274 = vpop.f32.mrf.mxu0
    %2275 = vmatprep.mubr.f32.mxu0 %v744
    %2276 = vmatmul.mubr.f32.gmra.mxu0 %v680
    %v2277 = vpop.f32.mrf.mxu0
    %v2278 = vadd.f32 %v1893, %v2277
    %v2279 = vpop.f32.mrf.mxu0
    %2280 = vmatprep.mubr.f32.mxu0 %v745
    %2281 = vmatmul.mubr.f32.gmra.mxu0 %v681
    %v2282 = vpop.f32.mrf.mxu0
    %v2283 = vadd.f32 %v1898, %v2282
    %v2284 = vpop.f32.mrf.mxu0
    %2285 = vmatprep.mubr.f32.mxu0 %v746
    %2286 = vmatmul.mubr.f32.gmra.mxu0 %v682
    %v2287 = vpop.f32.mrf.mxu0
    %v2288 = vadd.f32 %v1903, %v2287
    %v2289 = vpop.f32.mrf.mxu0
    %2290 = vmatprep.mubr.f32.mxu0 %v747
    %2291 = vmatmul.mubr.f32.gmra.mxu0 %v683
    %v2292 = vpop.f32.mrf.mxu0
    %v2293 = vadd.f32 %v1908, %v2292
    %v2294 = vpop.f32.mrf.mxu0
    %2295 = vmatprep.mubr.f32.mxu0 %v748
    %2296 = vmatmul.mubr.f32.gmra.mxu0 %v684
    %v2297 = vpop.f32.mrf.mxu0
    %v2298 = vadd.f32 %v1913, %v2297
    %v2299 = vpop.f32.mrf.mxu0
    %2300 = vmatprep.mubr.f32.mxu0 %v749
    %2301 = vmatmul.mubr.f32.gmra.mxu0 %v685
    %v2302 = vpop.f32.mrf.mxu0
    %v2303 = vadd.f32 %v1918, %v2302
    %v2304 = vpop.f32.mrf.mxu0
    %2305 = vmatprep.mubr.f32.mxu0 %v750
    %2306 = vmatmul.mubr.f32.gmra.mxu0 %v686
    %v2307 = vpop.f32.mrf.mxu0
    %v2308 = vadd.f32 %v1923, %v2307
    %v2309 = vpop.f32.mrf.mxu0
    %2310 = vmatprep.mubr.f32.mxu0 %v751
    %2311 = vmatmul.mubr.f32.gmra.mxu0 %v687
    %v2312 = vpop.f32.mrf.mxu0
    %v2313 = vadd.f32 %v1928, %v2312
    %v2314 = vpop.f32.mrf.mxu0
    %2315 = vmatprep.mubr.f32.mxu0 %v752
    %2316 = vmatmul.mubr.f32.gmra.mxu0 %v688
    %v2317 = vpop.f32.mrf.mxu0
    %v2318 = vadd.f32 %v1933, %v2317
    %v2319 = vpop.f32.mrf.mxu0
    %2320 = vmatprep.mubr.f32.mxu0 %v753
    %2321 = vmatmul.mubr.f32.gmra.mxu0 %v689
    %v2322 = vpop.f32.mrf.mxu0
    %v2323 = vadd.f32 %v1938, %v2322
    %v2324 = vpop.f32.mrf.mxu0
    %2325 = vmatprep.mubr.f32.mxu0 %v754
    %2326 = vmatmul.mubr.f32.gmra.mxu0 %v690
    %v2327 = vpop.f32.mrf.mxu0
    %v2328 = vadd.f32 %v1943, %v2327
    %v2329 = vpop.f32.mrf.mxu0
    %2330 = vmatprep.mubr.f32.mxu0 %v755
    %2331 = vmatmul.mubr.f32.gmra.mxu0 %v691
    %v2332 = vpop.f32.mrf.mxu0
    %v2333 = vadd.f32 %v1948, %v2332
    %v2334 = vpop.f32.mrf.mxu0
    %2335 = vmatprep.mubr.f32.mxu0 %v756
    %2336 = vmatmul.mubr.f32.gmra.mxu0 %v692
    %v2337 = vpop.f32.mrf.mxu0
    %v2338 = vadd.f32 %v1953, %v2337
    %v2339 = vpop.f32.mrf.mxu0
    %2340 = vmatprep.mubr.f32.mxu0 %v757
    %2341 = vmatmul.mubr.f32.gmra.mxu0 %v693
    %v2342 = vpop.f32.mrf.mxu0
    %v2343 = vadd.f32 %v1958, %v2342
    %v2344 = vpop.f32.mrf.mxu0
    %2345 = vmatprep.mubr.f32.mxu0 %v758
    %2346 = vmatmul.mubr.f32.gmra.mxu0 %v694
    %v2347 = vpop.f32.mrf.mxu0
    %v2348 = vadd.f32 %v1963, %v2347
    %v2349 = vpop.f32.mrf.mxu0
    %2350 = vmatprep.mubr.f32.mxu0 %v759
    %2351 = vmatmul.mubr.f32.gmra.mxu0 %v695
    %v2352 = vpop.f32.mrf.mxu0
    %v2353 = vadd.f32 %v1968, %v2352
    %v2354 = vpop.f32.mrf.mxu0
    %2355 = vmatprep.mubr.f32.mxu0 %v760
    %2356 = vmatmul.mubr.f32.gmra.mxu0 %v696
    %v2357 = vpop.f32.mrf.mxu0
    %v2358 = vadd.f32 %v1973, %v2357
    %v2359 = vpop.f32.mrf.mxu0
    %2360 = vmatprep.mubr.f32.mxu0 %v761
    %2361 = vmatmul.mubr.f32.gmra.mxu0 %v697
    %v2362 = vpop.f32.mrf.mxu0
    %v2363 = vadd.f32 %v1978, %v2362
    %v2364 = vpop.f32.mrf.mxu0
    %2365 = vmatprep.mubr.f32.mxu0 %v762
    %2366 = vmatmul.mubr.f32.gmra.mxu0 %v698
    %v2367 = vpop.f32.mrf.mxu0
    %v2368 = vadd.f32 %v1983, %v2367
    %v2369 = vpop.f32.mrf.mxu0
    %2370 = vmatprep.mubr.f32.mxu0 %v763
    %2371 = vmatmul.mubr.f32.gmra.mxu0 %v699
    %v2372 = vpop.f32.mrf.mxu0
    %v2373 = vadd.f32 %v1988, %v2372
    %v2374 = vpop.f32.mrf.mxu0
    %2375 = vmatprep.mubr.f32.mxu0 %v764
    %2376 = vmatmul.mubr.f32.gmra.mxu0 %v700
    %v2377 = vpop.f32.mrf.mxu0
    %v2378 = vadd.f32 %v1993, %v2377
    %v2379 = vpop.f32.mrf.mxu0
    %2380 = vmatprep.mubr.f32.mxu0 %v765
    %2381 = vmatmul.mubr.f32.gmra.mxu0 %v701
    %v2382 = vpop.f32.mrf.mxu0
    %v2383 = vadd.f32 %v1998, %v2382
    %v2384 = vpop.f32.mrf.mxu0
    %2385 = vmatprep.mubr.f32.mxu0 %v766
    %2386 = vmatmul.mubr.f32.gmra.mxu0 %v702
    %v2387 = vpop.f32.mrf.mxu0
    %v2388 = vadd.f32 %v2003, %v2387
    %v2389 = vpop.f32.mrf.mxu0
    %2390 = vmatprep.mubr.f32.mxu0 %v767
    %2391 = vmatmul.mubr.f32.gmra.mxu0 %v703
    %v2392 = vpop.f32.mrf.mxu0
    %v2393 = vadd.f32 %v2008, %v2392
    %v2394 = vpop.f32.mrf.mxu0
    %2395 = vmatprep.mubr.f32.mxu0 %v768
    %2396 = vmatmul.mubr.f32.gmra.mxu0 %v704
    %v2397 = vpop.f32.mrf.mxu0
    %v2398 = vadd.f32 %v2013, %v2397
    %v2399 = vpop.f32.mrf.mxu0
    %2400 = vmatprep.mubr.f32.mxu0 %v769
    %2401 = vmatmul.mubr.f32.gmra.mxu0 %v705
    %v2402 = vpop.f32.mrf.mxu0
    %v2403 = vadd.f32 %v2018, %v2402
    %v2404 = vpop.f32.mrf.mxu0
    %2405 = vmatprep.mubr.f32.mxu0 %v770
    %2406 = vmatmul.mubr.f32.gmra.mxu0 %v706
    %v2407 = vpop.f32.mrf.mxu0
    %v2408 = vadd.f32 %v2023, %v2407
    %v2409 = vpop.f32.mrf.mxu0
    %2410 = vmatprep.mubr.f32.mxu0 %v771
    %2411 = vmatmul.mubr.f32.gmra.mxu0 %v707
    %v2412 = vpop.f32.mrf.mxu0
    %v2413 = vadd.f32 %v2028, %v2412
    %v2414 = vpop.f32.mrf.mxu0
    %2415 = vmatprep.mubr.f32.mxu0 %v772
    %2416 = vmatmul.mubr.f32.gmra.mxu0 %v708
    %v2417 = vpop.f32.mrf.mxu0
    %v2418 = vadd.f32 %v2033, %v2417
    %v2419 = vpop.f32.mrf.mxu0
    %2420 = vmatprep.mubr.f32.mxu0 %v773
    %2421 = vmatmul.mubr.f32.gmra.mxu0 %v709
    %v2422 = vpop.f32.mrf.mxu0
    %v2423 = vadd.f32 %v2038, %v2422
    %v2424 = vpop.f32.mrf.mxu0
    %2425 = vmatprep.mubr.f32.mxu0 %v774
    %2426 = vmatmul.mubr.f32.gmra.mxu0 %v710
    %v2427 = vpop.f32.mrf.mxu0
    %v2428 = vadd.f32 %v2043, %v2427
    %v2429 = vpop.f32.mrf.mxu0
    %2430 = vmatprep.mubr.f32.mxu0 %v775
    %2431 = vmatmul.mubr.f32.gmra.mxu0 %v711
    %v2432 = vpop.f32.mrf.mxu0
    %v2433 = vadd.f32 %v2048, %v2432
    %v2434 = vpop.f32.mrf.mxu0
    %2435 = vmatprep.mubr.f32.mxu0 %v776
    %2436 = vmatmul.mubr.f32.gmra.mxu0 %v712
    %v2437 = vpop.f32.mrf.mxu0
    %v2438 = vadd.f32 %v2053, %v2437
    %v2439 = vpop.f32.mrf.mxu0
    %2440 = vmatprep.mubr.f32.mxu0 %v777
    %2441 = vmatmul.mubr.f32.gmra.mxu0 %v713
    %v2442 = vpop.f32.mrf.mxu0
    %v2443 = vadd.f32 %v2058, %v2442
    %v2444 = vpop.f32.mrf.mxu0
    %2445 = vmatprep.mubr.f32.mxu0 %v778
    %2446 = vmatmul.mubr.f32.gmra.mxu0 %v714
    %v2447 = vpop.f32.mrf.mxu0
    %v2448 = vadd.f32 %v2063, %v2447
    %v2449 = vpop.f32.mrf.mxu0
    %2450 = vmatprep.mubr.f32.mxu0 %v779
    %2451 = vmatmul.mubr.f32.gmra.mxu0 %v715
    %v2452 = vpop.f32.mrf.mxu0
    %v2453 = vadd.f32 %v2068, %v2452
    %v2454 = vpop.f32.mrf.mxu0
    %2455 = vmatprep.mubr.f32.mxu0 %v780
    %2456 = vmatmul.mubr.f32.gmra.mxu0 %v716
    %v2457 = vpop.f32.mrf.mxu0
    %v2458 = vadd.f32 %v2073, %v2457
    %v2459 = vpop.f32.mrf.mxu0
    %2460 = vmatprep.mubr.f32.mxu0 %v781
    %2461 = vmatmul.mubr.f32.gmra.mxu0 %v717
    %v2462 = vpop.f32.mrf.mxu0
    %v2463 = vadd.f32 %v2078, %v2462
    %v2464 = vpop.f32.mrf.mxu0
    %2465 = vmatprep.mubr.f32.mxu0 %v782
    %2466 = vmatmul.mubr.f32.gmra.mxu0 %v718
    %v2467 = vpop.f32.mrf.mxu0
    %v2468 = vadd.f32 %v2083, %v2467
    %v2469 = vpop.f32.mrf.mxu0
    %2470 = vmatprep.mubr.f32.mxu0 %v783
    %2471 = vmatmul.mubr.f32.gmra.mxu0 %v719
    %v2472 = vpop.f32.mrf.mxu0
    %v2473 = vadd.f32 %v2088, %v2472
    %v2474 = vpop.f32.mrf.mxu0
    %2475 = vmatprep.mubr.f32.mxu0 %v784
    %2476 = vmatmul.mubr.f32.gmra.mxu0 %v720
    %v2477 = vpop.f32.mrf.mxu0
    %v2478 = vadd.f32 %v2093, %v2477
    %v2479 = vpop.f32.mrf.mxu0
    %2480 = vmatprep.mubr.f32.mxu0 %v785
    %2481 = vmatmul.mubr.f32.gmra.mxu0 %v721
    %v2482 = vpop.f32.mrf.mxu0
    %v2483 = vadd.f32 %v2098, %v2482
    %v2484 = vpop.f32.mrf.mxu0
    %2485 = vmatprep.mubr.f32.mxu0 %v786
    %2486 = vmatmul.mubr.f32.gmra.mxu0 %v722
    %v2487 = vpop.f32.mrf.mxu0
    %v2488 = vadd.f32 %v2103, %v2487
    %v2489 = vpop.f32.mrf.mxu0
    %2490 = vmatprep.mubr.f32.mxu0 %v787
    %2491 = vmatmul.mubr.f32.gmra.mxu0 %v723
    %v2492 = vpop.f32.mrf.mxu0
    %v2493 = vadd.f32 %v2108, %v2492
    %v2494 = vpop.f32.mrf.mxu0
    %2495 = vmatprep.mubr.f32.mxu0 %v788
    %2496 = vmatmul.mubr.f32.gmra.mxu0 %v724
    %v2497 = vpop.f32.mrf.mxu0
    %v2498 = vadd.f32 %v2113, %v2497
    %v2499 = vpop.f32.mrf.mxu0
    %2500 = vmatprep.mubr.f32.mxu0 %v789
    %2501 = vmatmul.mubr.f32.gmra.mxu0 %v725
    %v2502 = vpop.f32.mrf.mxu0
    %v2503 = vadd.f32 %v2118, %v2502
    %v2504 = vpop.f32.mrf.mxu0
    %2505 = vmatprep.mubr.f32.mxu0 %v790
    %2506 = vmatmul.mubr.f32.gmra.mxu0 %v726
    %v2507 = vpop.f32.mrf.mxu0
    %v2508 = vadd.f32 %v2123, %v2507
    %v2509 = vpop.f32.mrf.mxu0
    %2510 = vmatprep.mubr.f32.mxu0 %v791
    %2511 = vmatmul.mubr.f32.gmra.mxu0 %v727
    %v2512 = vpop.f32.mrf.mxu0
    %v2513 = vadd.f32 %v2128, %v2512
    %v2514 = vpop.f32.mrf.mxu0
    %2515 = vmatprep.mubr.f32.mxu0 %v792
    %2516 = vmatmul.mubr.f32.gmra.mxu0 %v728
    %v2517 = vpop.f32.mrf.mxu0
    %v2518 = vadd.f32 %v2133, %v2517
    %v2519 = vpop.f32.mrf.mxu0
    %2520 = vmatprep.mubr.f32.mxu0 %v793
    %2521 = vmatmul.mubr.f32.gmra.mxu0 %v729
    %v2522 = vpop.f32.mrf.mxu0
    %v2523 = vadd.f32 %v2138, %v2522
    %v2524 = vpop.f32.mrf.mxu0
    %2525 = vmatprep.mubr.f32.mxu0 %v794
    %2526 = vmatmul.mubr.f32.gmra.mxu0 %v730
    %v2527 = vpop.f32.mrf.mxu0
    %v2528 = vadd.f32 %v2143, %v2527
    %v2529 = vpop.f32.mrf.mxu0
    %2530 = vmatprep.mubr.f32.mxu0 %v795
    %2531 = vmatmul.mubr.f32.gmra.mxu0 %v731
    %v2532 = vpop.f32.mrf.mxu0
    %v2533 = vadd.f32 %v2148, %v2532
    %v2534 = vpop.f32.mrf.mxu0
    %2535 = vmatprep.mubr.f32.mxu0 %v796
    %2536 = vmatmul.mubr.f32.gmra.mxu0 %v732
    %v2537 = vpop.f32.mrf.mxu0
    %v2538 = vadd.f32 %v2153, %v2537
    %v2539 = vpop.f32.mrf.mxu0
    %2540 = vmatprep.mubr.f32.mxu0 %v797
    %2541 = vmatmul.mubr.f32.gmra.mxu0 %v733
    %v2542 = vpop.f32.mrf.mxu0
    %v2543 = vadd.f32 %v2158, %v2542
    %v2544 = vpop.f32.mrf.mxu0
    %2545 = vdwg.mxu0
    %2546 = vmatprep.subr.mxu0 0.0
    %2547 = vmatpush1.msra.mxu0 %v1005
    %2548 = vmatprep.subr.mxu0 0.0
    %2549 = vmatpush1.msra.mxu0 %v1004
    %2550 = vmatprep.subr.mxu0 0.0
    %2551 = vmatpush1.msra.mxu0 %v1003
    %2552 = vmatprep.subr.mxu0 0.0
    %2553 = vmatpush1.msra.mxu0 %v1002
    %2554 = vmatprep.subr.mxu0 0.0
    %2555 = vmatpush1.msra.mxu0 %v1001
    %2556 = vmatprep.subr.mxu0 0.0
    %2557 = vmatpush1.msra.mxu0 %v1000
    %2558 = vmatprep.subr.mxu0 0.0
    %2559 = vmatpush1.msra.mxu0 %v999
    %2560 = vmatprep.subr.mxu0 0.0
    %2561 = vmatpush1.msra.mxu0 %v998
    %2562 = vmatprep.subr.mxu0 0.0
    %2563 = vmatpush1.msra.mxu0 %v997
    %2564 = vmatprep.subr.mxu0 0.0
    %2565 = vmatpush1.msra.mxu0 %v996
    %2566 = vmatprep.subr.mxu0 0.0
    %2567 = vmatpush1.msra.mxu0 %v995
    %2568 = vmatprep.subr.mxu0 0.0
    %2569 = vmatpush1.msra.mxu0 %v994
    %2570 = vmatprep.subr.mxu0 0.0
    %2571 = vmatpush1.msra.mxu0 %v993
    %2572 = vmatprep.subr.mxu0 0.0
    %2573 = vmatpush1.msra.mxu0 %v992
    %2574 = vmatprep.subr.mxu0 0.0
    %2575 = vmatpush1.msra.mxu0 %v991
    %2576 = vmatprep.subr.mxu0 0.0
    %2577 = vmatpush1.msra.mxu0 %v990
    %2578 = vmatprep.subr.mxu0 0.0
    %2579 = vmatpush2.msra.mxu0 0.0
    %2580 = vmatprep.subr.mxu0 0.0
    %2581 = vmatpush2.msra.mxu0 0.0
    %2582 = vmatprep.subr.mxu0 0.0
    %2583 = vmatpush2.msra.mxu0 0.0
    %2584 = vmatprep.subr.mxu0 0.0
    %2585 = vmatpush2.msra.mxu0 0.0
    %2586 = vmatprep.subr.mxu0 0.0
    %2587 = vmatpush2.msra.mxu0 0.0
    %2588 = vmatprep.subr.mxu0 0.0
    %2589 = vmatpush2.msra.mxu0 0.0
    %2590 = vmatprep.subr.mxu0 0.0
    %2591 = vmatpush2.msra.mxu0 0.0
    %2592 = vmatprep.subr.mxu0 0.0
    %2593 = vmatpush2.msra.mxu0 0.0
    %2594 = vmatprep.subr.mxu0 0.0
    %2595 = vmatpush2.msra.mxu0 0.0
    %2596 = vmatprep.subr.mxu0 0.0
    %2597 = vmatpush2.msra.mxu0 0.0
    %2598 = vmatprep.subr.mxu0 0.0
    %2599 = vmatpush2.msra.mxu0 0.0
    %2600 = vmatprep.subr.mxu0 0.0
    %2601 = vmatpush2.msra.mxu0 0.0
    %2602 = vmatprep.subr.mxu0 0.0
    %2603 = vmatpush2.msra.mxu0 0.0
    %2604 = vmatprep.subr.mxu0 0.0
    %2605 = vmatpush2.msra.mxu0 0.0
    %2606 = vmatprep.subr.mxu0 0.0
    %2607 = vmatpush2.msra.mxu0 0.0
    %2608 = vmatprep.subr.mxu0 0.0
    %2609 = vmatpush2.msra.mxu0 0.0
    %2610 = vmatprep.mubr.f32.mxu0 0.0
    %2611 = vmatmul.mubr.f32.gmra.mxu0 %v798
    %v2612 = vpop.f32.mrf.mxu0
    %v2613 = vadd.f32 %v2228, %v2612
    %v2614 = vpop.f32.mrf.mxu0
    %2615 = vmatprep.mubr.f32.mxu0 0.0
    %2616 = vmatmul.mubr.f32.gmra.mxu0 %v799
    %v2617 = vpop.f32.mrf.mxu0
    %v2618 = vadd.f32 %v2233, %v2617
    %v2619 = vpop.f32.mrf.mxu0
    %2620 = vmatprep.mubr.f32.mxu0 0.0
    %2621 = vmatmul.mubr.f32.gmra.mxu0 %v800
    %v2622 = vpop.f32.mrf.mxu0
    %v2623 = vadd.f32 %v2238, %v2622
    %v2624 = vpop.f32.mrf.mxu0
    %2625 = vmatprep.mubr.f32.mxu0 0.0
    %2626 = vmatmul.mubr.f32.gmra.mxu0 %v801
    %v2627 = vpop.f32.mrf.mxu0
    %v2628 = vadd.f32 %v2243, %v2627
    %v2629 = vpop.f32.mrf.mxu0
    %2630 = vmatprep.mubr.f32.mxu0 0.0
    %2631 = vmatmul.mubr.f32.gmra.mxu0 %v802
    %v2632 = vpop.f32.mrf.mxu0
    %v2633 = vadd.f32 %v2248, %v2632
    %v2634 = vpop.f32.mrf.mxu0
    %2635 = vmatprep.mubr.f32.mxu0 0.0
    %2636 = vmatmul.mubr.f32.gmra.mxu0 %v803
    %v2637 = vpop.f32.mrf.mxu0
    %v2638 = vadd.f32 %v2253, %v2637
    %v2639 = vpop.f32.mrf.mxu0
    %2640 = vmatprep.mubr.f32.mxu0 0.0
    %2641 = vmatmul.mubr.f32.gmra.mxu0 %v804
    %v2642 = vpop.f32.mrf.mxu0
    %v2643 = vadd.f32 %v2258, %v2642
    %v2644 = vpop.f32.mrf.mxu0
    %2645 = vmatprep.mubr.f32.mxu0 0.0
    %2646 = vmatmul.mubr.f32.gmra.mxu0 %v805
    %v2647 = vpop.f32.mrf.mxu0
    %v2648 = vadd.f32 %v2263, %v2647
    %v2649 = vpop.f32.mrf.mxu0
    %2650 = vmatprep.mubr.f32.mxu0 0.0
    %2651 = vmatmul.mubr.f32.gmra.mxu0 %v806
    %v2652 = vpop.f32.mrf.mxu0
    %v2653 = vadd.f32 %v2268, %v2652
    %v2654 = vpop.f32.mrf.mxu0
    %2655 = vmatprep.mubr.f32.mxu0 0.0
    %2656 = vmatmul.mubr.f32.gmra.mxu0 %v807
    %v2657 = vpop.f32.mrf.mxu0
    %v2658 = vadd.f32 %v2273, %v2657
    %v2659 = vpop.f32.mrf.mxu0
    %2660 = vmatprep.mubr.f32.mxu0 0.0
    %2661 = vmatmul.mubr.f32.gmra.mxu0 %v808
    %v2662 = vpop.f32.mrf.mxu0
    %v2663 = vadd.f32 %v2278, %v2662
    %v2664 = vpop.f32.mrf.mxu0
    %2665 = vmatprep.mubr.f32.mxu0 0.0
    %2666 = vmatmul.mubr.f32.gmra.mxu0 %v809
    %v2667 = vpop.f32.mrf.mxu0
    %v2668 = vadd.f32 %v2283, %v2667
    %v2669 = vpop.f32.mrf.mxu0
    %2670 = vmatprep.mubr.f32.mxu0 0.0
    %2671 = vmatmul.mubr.f32.gmra.mxu0 %v810
    %v2672 = vpop.f32.mrf.mxu0
    %v2673 = vadd.f32 %v2288, %v2672
    %v2674 = vpop.f32.mrf.mxu0
    %2675 = vmatprep.mubr.f32.mxu0 0.0
    %2676 = vmatmul.mubr.f32.gmra.mxu0 %v811
    %v2677 = vpop.f32.mrf.mxu0
    %v2678 = vadd.f32 %v2293, %v2677
    %v2679 = vpop.f32.mrf.mxu0
    %2680 = vmatprep.mubr.f32.mxu0 0.0
    %2681 = vmatmul.mubr.f32.gmra.mxu0 %v812
    %v2682 = vpop.f32.mrf.mxu0
    %v2683 = vadd.f32 %v2298, %v2682
    %v2684 = vpop.f32.mrf.mxu0
    %2685 = vmatprep.mubr.f32.mxu0 0.0
    %2686 = vmatmul.mubr.f32.gmra.mxu0 %v813
    %v2687 = vpop.f32.mrf.mxu0
    %v2688 = vadd.f32 %v2303, %v2687
    %v2689 = vpop.f32.mrf.mxu0
    %2690 = vmatprep.mubr.f32.mxu0 0.0
    %2691 = vmatmul.mubr.f32.gmra.mxu0 %v814
    %v2692 = vpop.f32.mrf.mxu0
    %v2693 = vadd.f32 %v2308, %v2692
    %v2694 = vpop.f32.mrf.mxu0
    %2695 = vmatprep.mubr.f32.mxu0 0.0
    %2696 = vmatmul.mubr.f32.gmra.mxu0 %v815
    %v2697 = vpop.f32.mrf.mxu0
    %v2698 = vadd.f32 %v2313, %v2697
    %v2699 = vpop.f32.mrf.mxu0
    %2700 = vmatprep.mubr.f32.mxu0 0.0
    %2701 = vmatmul.mubr.f32.gmra.mxu0 %v816
    %v2702 = vpop.f32.mrf.mxu0
    %v2703 = vadd.f32 %v2318, %v2702
    %v2704 = vpop.f32.mrf.mxu0
    %2705 = vmatprep.mubr.f32.mxu0 0.0
    %2706 = vmatmul.mubr.f32.gmra.mxu0 %v817
    %v2707 = vpop.f32.mrf.mxu0
    %v2708 = vadd.f32 %v2323, %v2707
    %v2709 = vpop.f32.mrf.mxu0
    %2710 = vmatprep.mubr.f32.mxu0 0.0
    %2711 = vmatmul.mubr.f32.gmra.mxu0 %v818
    %v2712 = vpop.f32.mrf.mxu0
    %v2713 = vadd.f32 %v2328, %v2712
    %v2714 = vpop.f32.mrf.mxu0
    %2715 = vmatprep.mubr.f32.mxu0 0.0
    %2716 = vmatmul.mubr.f32.gmra.mxu0 %v819
    %v2717 = vpop.f32.mrf.mxu0
    %v2718 = vadd.f32 %v2333, %v2717
    %v2719 = vpop.f32.mrf.mxu0
    %2720 = vmatprep.mubr.f32.mxu0 0.0
    %2721 = vmatmul.mubr.f32.gmra.mxu0 %v820
    %v2722 = vpop.f32.mrf.mxu0
    %v2723 = vadd.f32 %v2338, %v2722
    %v2724 = vpop.f32.mrf.mxu0
    %2725 = vmatprep.mubr.f32.mxu0 0.0
    %2726 = vmatmul.mubr.f32.gmra.mxu0 %v821
    %v2727 = vpop.f32.mrf.mxu0
    %v2728 = vadd.f32 %v2343, %v2727
    %v2729 = vpop.f32.mrf.mxu0
    %2730 = vmatprep.mubr.f32.mxu0 0.0
    %2731 = vmatmul.mubr.f32.gmra.mxu0 %v822
    %v2732 = vpop.f32.mrf.mxu0
    %v2733 = vadd.f32 %v2348, %v2732
    %v2734 = vpop.f32.mrf.mxu0
    %2735 = vmatprep.mubr.f32.mxu0 0.0
    %2736 = vmatmul.mubr.f32.gmra.mxu0 %v823
    %v2737 = vpop.f32.mrf.mxu0
    %v2738 = vadd.f32 %v2353, %v2737
    %v2739 = vpop.f32.mrf.mxu0
    %2740 = vmatprep.mubr.f32.mxu0 0.0
    %2741 = vmatmul.mubr.f32.gmra.mxu0 %v824
    %v2742 = vpop.f32.mrf.mxu0
    %v2743 = vadd.f32 %v2358, %v2742
    %v2744 = vpop.f32.mrf.mxu0
    %2745 = vmatprep.mubr.f32.mxu0 0.0
    %2746 = vmatmul.mubr.f32.gmra.mxu0 %v825
    %v2747 = vpop.f32.mrf.mxu0
    %v2748 = vadd.f32 %v2363, %v2747
    %v2749 = vpop.f32.mrf.mxu0
    %2750 = vmatprep.mubr.f32.mxu0 0.0
    %2751 = vmatmul.mubr.f32.gmra.mxu0 %v826
    %v2752 = vpop.f32.mrf.mxu0
    %v2753 = vadd.f32 %v2368, %v2752
    %v2754 = vpop.f32.mrf.mxu0
    %2755 = vmatprep.mubr.f32.mxu0 0.0
    %2756 = vmatmul.mubr.f32.gmra.mxu0 %v827
    %v2757 = vpop.f32.mrf.mxu0
    %v2758 = vadd.f32 %v2373, %v2757
    %v2759 = vpop.f32.mrf.mxu0
    %2760 = vmatprep.mubr.f32.mxu0 0.0
    %2761 = vmatmul.mubr.f32.gmra.mxu0 %v828
    %v2762 = vpop.f32.mrf.mxu0
    %v2763 = vadd.f32 %v2378, %v2762
    %v2764 = vpop.f32.mrf.mxu0
    %2765 = vmatprep.mubr.f32.mxu0 0.0
    %2766 = vmatmul.mubr.f32.gmra.mxu0 %v829
    %v2767 = vpop.f32.mrf.mxu0
    %v2768 = vadd.f32 %v2383, %v2767
    %v2769 = vpop.f32.mrf.mxu0
    %2770 = vmatprep.mubr.f32.mxu0 0.0
    %2771 = vmatmul.mubr.f32.gmra.mxu0 %v830
    %v2772 = vpop.f32.mrf.mxu0
    %v2773 = vadd.f32 %v2388, %v2772
    %v2774 = vpop.f32.mrf.mxu0
    %2775 = vmatprep.mubr.f32.mxu0 0.0
    %2776 = vmatmul.mubr.f32.gmra.mxu0 %v831
    %v2777 = vpop.f32.mrf.mxu0
    %v2778 = vadd.f32 %v2393, %v2777
    %v2779 = vpop.f32.mrf.mxu0
    %2780 = vmatprep.mubr.f32.mxu0 0.0
    %2781 = vmatmul.mubr.f32.gmra.mxu0 %v832
    %v2782 = vpop.f32.mrf.mxu0
    %v2783 = vadd.f32 %v2398, %v2782
    %v2784 = vpop.f32.mrf.mxu0
    %2785 = vmatprep.mubr.f32.mxu0 0.0
    %2786 = vmatmul.mubr.f32.gmra.mxu0 %v833
    %v2787 = vpop.f32.mrf.mxu0
    %v2788 = vadd.f32 %v2403, %v2787
    %v2789 = vpop.f32.mrf.mxu0
    %2790 = vmatprep.mubr.f32.mxu0 0.0
    %2791 = vmatmul.mubr.f32.gmra.mxu0 %v834
    %v2792 = vpop.f32.mrf.mxu0
    %v2793 = vadd.f32 %v2408, %v2792
    %v2794 = vpop.f32.mrf.mxu0
    %2795 = vmatprep.mubr.f32.mxu0 0.0
    %2796 = vmatmul.mubr.f32.gmra.mxu0 %v835
    %v2797 = vpop.f32.mrf.mxu0
    %v2798 = vadd.f32 %v2413, %v2797
    %v2799 = vpop.f32.mrf.mxu0
    %2800 = vmatprep.mubr.f32.mxu0 0.0
    %2801 = vmatmul.mubr.f32.gmra.mxu0 %v836
    %v2802 = vpop.f32.mrf.mxu0
    %v2803 = vadd.f32 %v2418, %v2802
    %v2804 = vpop.f32.mrf.mxu0
    %2805 = vmatprep.mubr.f32.mxu0 0.0
    %2806 = vmatmul.mubr.f32.gmra.mxu0 %v837
    %v2807 = vpop.f32.mrf.mxu0
    %v2808 = vadd.f32 %v2423, %v2807
    %v2809 = vpop.f32.mrf.mxu0
    %2810 = vmatprep.mubr.f32.mxu0 0.0
    %2811 = vmatmul.mubr.f32.gmra.mxu0 %v838
    %v2812 = vpop.f32.mrf.mxu0
    %v2813 = vadd.f32 %v2428, %v2812
    %v2814 = vpop.f32.mrf.mxu0
    %2815 = vmatprep.mubr.f32.mxu0 0.0
    %2816 = vmatmul.mubr.f32.gmra.mxu0 %v839
    %v2817 = vpop.f32.mrf.mxu0
    %v2818 = vadd.f32 %v2433, %v2817
    %v2819 = vpop.f32.mrf.mxu0
    %2820 = vmatprep.mubr.f32.mxu0 0.0
    %2821 = vmatmul.mubr.f32.gmra.mxu0 %v840
    %v2822 = vpop.f32.mrf.mxu0
    %v2823 = vadd.f32 %v2438, %v2822
    %v2824 = vpop.f32.mrf.mxu0
    %2825 = vmatprep.mubr.f32.mxu0 0.0
    %2826 = vmatmul.mubr.f32.gmra.mxu0 %v841
    %v2827 = vpop.f32.mrf.mxu0
    %v2828 = vadd.f32 %v2443, %v2827
    %v2829 = vpop.f32.mrf.mxu0
    %2830 = vmatprep.mubr.f32.mxu0 0.0
    %2831 = vmatmul.mubr.f32.gmra.mxu0 %v842
    %v2832 = vpop.f32.mrf.mxu0
    %v2833 = vadd.f32 %v2448, %v2832
    %v2834 = vpop.f32.mrf.mxu0
    %2835 = vmatprep.mubr.f32.mxu0 0.0
    %2836 = vmatmul.mubr.f32.gmra.mxu0 %v843
    %v2837 = vpop.f32.mrf.mxu0
    %v2838 = vadd.f32 %v2453, %v2837
    %v2839 = vpop.f32.mrf.mxu0
    %2840 = vmatprep.mubr.f32.mxu0 0.0
    %2841 = vmatmul.mubr.f32.gmra.mxu0 %v844
    %v2842 = vpop.f32.mrf.mxu0
    %v2843 = vadd.f32 %v2458, %v2842
    %v2844 = vpop.f32.mrf.mxu0
    %2845 = vmatprep.mubr.f32.mxu0 0.0
    %2846 = vmatmul.mubr.f32.gmra.mxu0 %v845
    %v2847 = vpop.f32.mrf.mxu0
    %v2848 = vadd.f32 %v2463, %v2847
    %v2849 = vpop.f32.mrf.mxu0
    %2850 = vmatprep.mubr.f32.mxu0 0.0
    %2851 = vmatmul.mubr.f32.gmra.mxu0 %v846
    %v2852 = vpop.f32.mrf.mxu0
    %v2853 = vadd.f32 %v2468, %v2852
    %v2854 = vpop.f32.mrf.mxu0
    %2855 = vmatprep.mubr.f32.mxu0 0.0
    %2856 = vmatmul.mubr.f32.gmra.mxu0 %v847
    %v2857 = vpop.f32.mrf.mxu0
    %v2858 = vadd.f32 %v2473, %v2857
    %v2859 = vpop.f32.mrf.mxu0
    %2860 = vmatprep.mubr.f32.mxu0 0.0
    %2861 = vmatmul.mubr.f32.gmra.mxu0 %v848
    %v2862 = vpop.f32.mrf.mxu0
    %v2863 = vadd.f32 %v2478, %v2862
    %v2864 = vpop.f32.mrf.mxu0
    %2865 = vmatprep.mubr.f32.mxu0 0.0
    %2866 = vmatmul.mubr.f32.gmra.mxu0 %v849
    %v2867 = vpop.f32.mrf.mxu0
    %v2868 = vadd.f32 %v2483, %v2867
    %v2869 = vpop.f32.mrf.mxu0
    %2870 = vmatprep.mubr.f32.mxu0 0.0
    %2871 = vmatmul.mubr.f32.gmra.mxu0 %v850
    %v2872 = vpop.f32.mrf.mxu0
    %v2873 = vadd.f32 %v2488, %v2872
    %v2874 = vpop.f32.mrf.mxu0
    %2875 = vmatprep.mubr.f32.mxu0 0.0
    %2876 = vmatmul.mubr.f32.gmra.mxu0 %v851
    %v2877 = vpop.f32.mrf.mxu0
    %v2878 = vadd.f32 %v2493, %v2877
    %v2879 = vpop.f32.mrf.mxu0
    %2880 = vmatprep.mubr.f32.mxu0 0.0
    %2881 = vmatmul.mubr.f32.gmra.mxu0 %v852
    %v2882 = vpop.f32.mrf.mxu0
    %v2883 = vadd.f32 %v2498, %v2882
    %v2884 = vpop.f32.mrf.mxu0
    %2885 = vmatprep.mubr.f32.mxu0 0.0
    %2886 = vmatmul.mubr.f32.gmra.mxu0 %v853
    %v2887 = vpop.f32.mrf.mxu0
    %v2888 = vadd.f32 %v2503, %v2887
    %v2889 = vpop.f32.mrf.mxu0
    %2890 = vmatprep.mubr.f32.mxu0 0.0
    %2891 = vmatmul.mubr.f32.gmra.mxu0 %v854
    %v2892 = vpop.f32.mrf.mxu0
    %v2893 = vadd.f32 %v2508, %v2892
    %v2894 = vpop.f32.mrf.mxu0
    %2895 = vmatprep.mubr.f32.mxu0 0.0
    %2896 = vmatmul.mubr.f32.gmra.mxu0 %v855
    %v2897 = vpop.f32.mrf.mxu0
    %v2898 = vadd.f32 %v2513, %v2897
    %v2899 = vpop.f32.mrf.mxu0
    %2900 = vmatprep.mubr.f32.mxu0 0.0
    %2901 = vmatmul.mubr.f32.gmra.mxu0 %v856
    %v2902 = vpop.f32.mrf.mxu0
    %v2903 = vadd.f32 %v2518, %v2902
    %v2904 = vpop.f32.mrf.mxu0
    %2905 = vmatprep.mubr.f32.mxu0 0.0
    %2906 = vmatmul.mubr.f32.gmra.mxu0 %v857
    %v2907 = vpop.f32.mrf.mxu0
    %v2908 = vadd.f32 %v2523, %v2907
    %v2909 = vpop.f32.mrf.mxu0
    %2910 = vmatprep.mubr.f32.mxu0 0.0
    %2911 = vmatmul.mubr.f32.gmra.mxu0 %v858
    %v2912 = vpop.f32.mrf.mxu0
    %v2913 = vadd.f32 %v2528, %v2912
    %v2914 = vpop.f32.mrf.mxu0
    %2915 = vmatprep.mubr.f32.mxu0 0.0
    %2916 = vmatmul.mubr.f32.gmra.mxu0 %v859
    %v2917 = vpop.f32.mrf.mxu0
    %v2918 = vadd.f32 %v2533, %v2917
    %v2919 = vpop.f32.mrf.mxu0
    %2920 = vmatprep.mubr.f32.mxu0 0.0
    %2921 = vmatmul.mubr.f32.gmra.mxu0 %v860
    %v2922 = vpop.f32.mrf.mxu0
    %v2923 = vadd.f32 %v2538, %v2922
    %v2924 = vpop.f32.mrf.mxu0
    %2925 = vmatprep.mubr.f32.mxu0 0.0
    %2926 = vmatmul.mubr.f32.gmra.mxu0 %v861
    %v2927 = vpop.f32.mrf.mxu0
    %v2928 = vadd.f32 %v2543, %v2927
    %v2929 = vpop.f32.mrf.mxu0
    %2930 = vdwg.mxu0
    %v2931 = vld [vmem:[%s2] sm:$0x1]
    %v2932 = vld [vmem:[%s3] sm:$0x1]
    %v2933 = vadd.f32 %v2613, %v2618
    %v2934 = vadd.f32 %v2933, %v2623
    %v2935 = vadd.f32 %v2934, %v2628
    %v2936 = vadd.f32 %v2935, %v2633
    %v2937 = vadd.f32 %v2936, %v2638
    %v2938 = vadd.f32 %v2937, %v2643
    %v2939 = vadd.f32 %v2938, %v2648
    %v2940 = vadd.f32 %v2939, %v2653
    %v2941 = vadd.f32 %v2940, %v2658
    %v2942 = vadd.f32 %v2941, %v2663
    %v2943 = vadd.f32 %v2942, %v2668
    %v2944 = vadd.f32 %v2943, %v2673
    %v2945 = vadd.f32 %v2944, %v2678
    %v2946 = vadd.f32 %v2945, %v2683
    %v2947 = vadd.f32 %v2946, %v2688
    %v2948 = vadd.f32 %v2947, %v2693
    %v2949 = vadd.f32 %v2948, %v2698
    %v2950 = vadd.f32 %v2949, %v2703
    %v2951 = vadd.f32 %v2950, %v2708
    %v2952 = vadd.f32 %v2951, %v2713
    %v2953 = vadd.f32 %v2952, %v2718
    %v2954 = vadd.f32 %v2953, %v2723
    %v2955 = vadd.f32 %v2954, %v2728
    %v2956 = vadd.f32 %v2955, %v2733
    %v2957 = vadd.f32 %v2956, %v2738
    %v2958 = vadd.f32 %v2957, %v2743
    %v2959 = vadd.f32 %v2958, %v2748
    %v2960 = vadd.f32 %v2959, %v2753
    %v2961 = vadd.f32 %v2960, %v2758
    %v2962 = vadd.f32 %v2961, %v2763
    %v2963 = vadd.f32 %v2962, %v2768
    %v2964 = vadd.f32 %v2963, %v2773
    %v2965 = vadd.f32 %v2964, %v2778
    %v2966 = vadd.f32 %v2965, %v2783
    %v2967 = vadd.f32 %v2966, %v2788
    %v2968 = vadd.f32 %v2967, %v2793
    %v2969 = vadd.f32 %v2968, %v2798
    %v2970 = vadd.f32 %v2969, %v2803
    %v2971 = vadd.f32 %v2970, %v2808
    %v2972 = vadd.f32 %v2971, %v2813
    %v2973 = vadd.f32 %v2972, %v2818
    %v2974 = vadd.f32 %v2973, %v2823
    %v2975 = vadd.f32 %v2974, %v2828
    %v2976 = vadd.f32 %v2975, %v2833
    %v2977 = vadd.f32 %v2976, %v2838
    %v2978 = vadd.f32 %v2977, %v2843
    %v2979 = vadd.f32 %v2978, %v2848
    %v2980 = vadd.f32 %v2979, %v2853
    %v2981 = vadd.f32 %v2980, %v2858
    %v2982 = vadd.f32 %v2981, %v2863
    %v2983 = vadd.f32 %v2982, %v2868
    %v2984 = vadd.f32 %v2983, %v2873
    %v2985 = vadd.f32 %v2984, %v2878
    %v2986 = vadd.f32 %v2985, %v2883
    %v2987 = vadd.f32 %v2986, %v2888
    %v2988 = vadd.f32 %v2987, %v2893
    %v2989 = vadd.f32 %v2988, %v2898
    %v2990 = vadd.f32 %v2989, %v2903
    %v2991 = vadd.f32 %v2990, %v2908
    %v2992 = vadd.f32 %v2991, %v2913
    %v2993 = vadd.f32 %v2992, %v2918
    %v2994 = vadd.f32 %v2993, %v2923
    %v2995 = vadd.f32 %v2994, %v2928
    %v2996 = vrot.slane %v2995, 4
    %v2997 = vadd.f32 %v2995, %v2996
    %v2998 = vrot.slane %v2997, 2
    %v2999 = vadd.f32 %v2997, %v2998
    %v3000 = vrot.slane %v2999, 1
    %v3001 = vadd.f32 %v2999, %v3000
    %v3002 = vmul.f32 %v2613, %v2613
    %v3003 = vmul.f32 %v2618, %v2618
    %v3004 = vmul.f32 %v2623, %v2623
    %v3005 = vmul.f32 %v2628, %v2628
    %v3006 = vmul.f32 %v2633, %v2633
    %v3007 = vmul.f32 %v2638, %v2638
    %v3008 = vmul.f32 %v2643, %v2643
    %v3009 = vmul.f32 %v2648, %v2648
    %v3010 = vmul.f32 %v2653, %v2653
    %v3011 = vmul.f32 %v2658, %v2658
    %v3012 = vmul.f32 %v2663, %v2663
    %v3013 = vmul.f32 %v2668, %v2668
    %v3014 = vmul.f32 %v2673, %v2673
    %v3015 = vmul.f32 %v2678, %v2678
    %v3016 = vmul.f32 %v2683, %v2683
    %v3017 = vmul.f32 %v2688, %v2688
    %v3018 = vmul.f32 %v2693, %v2693
    %v3019 = vmul.f32 %v2698, %v2698
    %v3020 = vmul.f32 %v2703, %v2703
    %v3021 = vmul.f32 %v2708, %v2708
    %v3022 = vmul.f32 %v2713, %v2713
    %v3023 = vmul.f32 %v2718, %v2718
    %v3024 = vmul.f32 %v2723, %v2723
    %v3025 = vmul.f32 %v2728, %v2728
    %v3026 = vmul.f32 %v2733, %v2733
    %v3027 = vmul.f32 %v2738, %v2738
    %v3028 = vmul.f32 %v2743, %v2743
    %v3029 = vmul.f32 %v2748, %v2748
    %v3030 = vmul.f32 %v2753, %v2753
    %v3031 = vmul.f32 %v2758, %v2758
    %v3032 = vmul.f32 %v2763, %v2763
    %v3033 = vmul.f32 %v2768, %v2768
    %v3034 = vmul.f32 %v2773, %v2773
    %v3035 = vmul.f32 %v2778, %v2778
    %v3036 = vmul.f32 %v2783, %v2783
    %v3037 = vmul.f32 %v2788, %v2788
    %v3038 = vmul.f32 %v2793, %v2793
    %v3039 = vmul.f32 %v2798, %v2798
    %v3040 = vmul.f32 %v2803, %v2803
    %v3041 = vmul.f32 %v2808, %v2808
    %v3042 = vmul.f32 %v2813, %v2813
    %v3043 = vmul.f32 %v2818, %v2818
    %v3044 = vmul.f32 %v2823, %v2823
    %v3045 = vmul.f32 %v2828, %v2828
    %v3046 = vmul.f32 %v2833, %v2833
    %v3047 = vmul.f32 %v2838, %v2838
    %v3048 = vmul.f32 %v2843, %v2843
    %v3049 = vmul.f32 %v2848, %v2848
    %v3050 = vmul.f32 %v2853, %v2853
    %v3051 = vmul.f32 %v2858, %v2858
    %v3052 = vmul.f32 %v2863, %v2863
    %v3053 = vmul.f32 %v2868, %v2868
    %v3054 = vmul.f32 %v2873, %v2873
    %v3055 = vmul.f32 %v2878, %v2878
    %v3056 = vmul.f32 %v2883, %v2883
    %v3057 = vmul.f32 %v2888, %v2888
    %v3058 = vmul.f32 %v2893, %v2893
    %v3059 = vmul.f32 %v2898, %v2898
    %v3060 = vmul.f32 %v2903, %v2903
    %v3061 = vmul.f32 %v2908, %v2908
    %v3062 = vmul.f32 %v2913, %v2913
    %v3063 = vmul.f32 %v2918, %v2918
    %v3064 = vmul.f32 %v2923, %v2923
    %v3065 = vmul.f32 %v2928, %v2928
    %v3066 = vadd.f32 %v3002, %v3003
    %v3067 = vadd.f32 %v3066, %v3004
    %v3068 = vadd.f32 %v3067, %v3005
    %v3069 = vadd.f32 %v3068, %v3006
    %v3070 = vadd.f32 %v3069, %v3007
    %v3071 = vadd.f32 %v3070, %v3008
    %v3072 = vadd.f32 %v3071, %v3009
    %v3073 = vadd.f32 %v3072, %v3010
    %v3074 = vadd.f32 %v3073, %v3011
    %v3075 = vadd.f32 %v3074, %v3012
    %v3076 = vadd.f32 %v3075, %v3013
    %v3077 = vadd.f32 %v3076, %v3014
    %v3078 = vadd.f32 %v3077, %v3015
    %v3079 = vadd.f32 %v3078, %v3016
    %v3080 = vadd.f32 %v3079, %v3017
    %v3081 = vadd.f32 %v3080, %v3018
    %v3082 = vadd.f32 %v3081, %v3019
    %v3083 = vadd.f32 %v3082, %v3020
    %v3084 = vadd.f32 %v3083, %v3021
    %v3085 = vadd.f32 %v3084, %v3022
    %v3086 = vadd.f32 %v3085, %v3023
    %v3087 = vadd.f32 %v3086, %v3024
    %v3088 = vadd.f32 %v3087, %v3025
    %v3089 = vadd.f32 %v3088, %v3026
    %v3090 = vadd.f32 %v3089, %v3027
    %v3091 = vadd.f32 %v3090, %v3028
    %v3092 = vadd.f32 %v3091, %v3029
    %v3093 = vadd.f32 %v3092, %v3030
    %v3094 = vadd.f32 %v3093, %v3031
    %v3095 = vadd.f32 %v3094, %v3032
    %v3096 = vadd.f32 %v3095, %v3033
    %v3097 = vadd.f32 %v3096, %v3034
    %v3098 = vadd.f32 %v3097, %v3035
    %v3099 = vadd.f32 %v3098, %v3036
    %v3100 = vadd.f32 %v3099, %v3037
    %v3101 = vadd.f32 %v3100, %v3038
    %v3102 = vadd.f32 %v3101, %v3039
    %v3103 = vadd.f32 %v3102, %v3040
    %v3104 = vadd.f32 %v3103, %v3041
    %v3105 = vadd.f32 %v3104, %v3042
    %v3106 = vadd.f32 %v3105, %v3043
    %v3107 = vadd.f32 %v3106, %v3044
    %v3108 = vadd.f32 %v3107, %v3045
    %v3109 = vadd.f32 %v3108, %v3046
    %v3110 = vadd.f32 %v3109, %v3047
    %v3111 = vadd.f32 %v3110, %v3048
    %v3112 = vadd.f32 %v3111, %v3049
    %v3113 = vadd.f32 %v3112, %v3050
    %v3114 = vadd.f32 %v3113, %v3051
    %v3115 = vadd.f32 %v3114, %v3052
    %v3116 = vadd.f32 %v3115, %v3053
    %v3117 = vadd.f32 %v3116, %v3054
    %v3118 = vadd.f32 %v3117, %v3055
    %v3119 = vadd.f32 %v3118, %v3056
    %v3120 = vadd.f32 %v3119, %v3057
    %v3121 = vadd.f32 %v3120, %v3058
    %v3122 = vadd.f32 %v3121, %v3059
    %v3123 = vadd.f32 %v3122, %v3060
    %v3124 = vadd.f32 %v3123, %v3061
    %v3125 = vadd.f32 %v3124, %v3062
    %v3126 = vadd.f32 %v3125, %v3063
    %v3127 = vadd.f32 %v3126, %v3064
    %v3128 = vadd.f32 %v3127, %v3065
    %v3129 = vrot.slane %v3128, 4
    %v3130 = vadd.f32 %v3128, %v3129
    %v3131 = vrot.slane %v3130, 2
    %v3132 = vadd.f32 %v3130, %v3131
    %v3133 = vrot.slane %v3132, 1
    %v3134 = vadd.f32 %v3132, %v3133
    %v3135 = vmul.f32 %v3001, 0.001953125
    %v3136 = vmul.f32 %v3134, 0.001953125
    %v3137 = vmul.f32 %v3135, %v3135
    %v3138 = vsub.f32 %v3136, %v3137
    %v3139 = vadd.f32 %v3138, 1e-05
    %v3140 = vrsqrt.pop %v3139
    %v3141 = vmul.f32 %v2931, %v3140
    %v3142 = vmul.f32 %v3135, %v3141
    %v3143 = vsub.f32 %v2932, %v3142
    %v3145 = vlaneseq
    %v3146 = vshrl.u32 %v3145, 7
    %v3147 = vsub.s32 0, %v3146
    %v3148 = vrot.slane %v3141, %v3147
    %v3150 = vmul.f32 %v2613, %v3148
    %v3151 = vmul.f32 %v2618, %v3148
    %v3152 = vmul.f32 %v2623, %v3148
    %v3153 = vmul.f32 %v2628, %v3148
    %v3154 = vmul.f32 %v2633, %v3148
    %v3155 = vmul.f32 %v2638, %v3148
    %v3156 = vmul.f32 %v2643, %v3148
    %v3157 = vmul.f32 %v2648, %v3148
    %v3158 = vmul.f32 %v2653, %v3148
    %v3159 = vmul.f32 %v2658, %v3148
    %v3160 = vmul.f32 %v2663, %v3148
    %v3161 = vmul.f32 %v2668, %v3148
    %v3162 = vmul.f32 %v2673, %v3148
    %v3163 = vmul.f32 %v2678, %v3148
    %v3164 = vmul.f32 %v2683, %v3148
    %v3165 = vmul.f32 %v2688, %v3148
    %v3166 = vmul.f32 %v2693, %v3148
    %v3167 = vmul.f32 %v2698, %v3148
    %v3168 = vmul.f32 %v2703, %v3148
    %v3169 = vmul.f32 %v2708, %v3148
    %v3170 = vmul.f32 %v2713, %v3148
    %v3171 = vmul.f32 %v2718, %v3148
    %v3172 = vmul.f32 %v2723, %v3148
    %v3173 = vmul.f32 %v2728, %v3148
    %v3174 = vmul.f32 %v2733, %v3148
    %v3175 = vmul.f32 %v2738, %v3148
    %v3176 = vmul.f32 %v2743, %v3148
    %v3177 = vmul.f32 %v2748, %v3148
    %v3178 = vmul.f32 %v2753, %v3148
    %v3179 = vmul.f32 %v2758, %v3148
    %v3180 = vmul.f32 %v2763, %v3148
    %v3181 = vmul.f32 %v2768, %v3148
    %v3182 = vmul.f32 %v2773, %v3148
    %v3183 = vmul.f32 %v2778, %v3148
    %v3184 = vmul.f32 %v2783, %v3148
    %v3185 = vmul.f32 %v2788, %v3148
    %v3186 = vmul.f32 %v2793, %v3148
    %v3187 = vmul.f32 %v2798, %v3148
    %v3188 = vmul.f32 %v2803, %v3148
    %v3189 = vmul.f32 %v2808, %v3148
    %v3190 = vmul.f32 %v2813, %v3148
    %v3191 = vmul.f32 %v2818, %v3148
    %v3192 = vmul.f32 %v2823, %v3148
    %v3193 = vmul.f32 %v2828, %v3148
    %v3194 = vmul.f32 %v2833, %v3148
    %v3195 = vmul.f32 %v2838, %v3148
    %v3196 = vmul.f32 %v2843, %v3148
    %v3197 = vmul.f32 %v2848, %v3148
    %v3198 = vmul.f32 %v2853, %v3148
    %v3199 = vmul.f32 %v2858, %v3148
    %v3200 = vmul.f32 %v2863, %v3148
    %v3201 = vmul.f32 %v2868, %v3148
    %v3202 = vmul.f32 %v2873, %v3148
    %v3203 = vmul.f32 %v2878, %v3148
    %v3204 = vmul.f32 %v2883, %v3148
    %v3205 = vmul.f32 %v2888, %v3148
    %v3206 = vmul.f32 %v2893, %v3148
    %v3207 = vmul.f32 %v2898, %v3148
    %v3208 = vmul.f32 %v2903, %v3148
    %v3209 = vmul.f32 %v2908, %v3148
    %v3210 = vmul.f32 %v2913, %v3148
    %v3211 = vmul.f32 %v2918, %v3148
    %v3212 = vmul.f32 %v2923, %v3148
    %v3213 = vmul.f32 %v2928, %v3148
    %v3215 = vlaneseq
    %v3216 = vshrl.u32 %v3215, 7
    %v3217 = vsub.s32 0, %v3216
    %v3218 = vrot.slane %v3143, %v3217
    %v3220 = vadd.f32 %v3150, %v3218
    %v3221 = vadd.f32 %v3151, %v3218
    %v3222 = vadd.f32 %v3152, %v3218
    %v3223 = vadd.f32 %v3153, %v3218
    %v3224 = vadd.f32 %v3154, %v3218
    %v3225 = vadd.f32 %v3155, %v3218
    %v3226 = vadd.f32 %v3156, %v3218
    %v3227 = vadd.f32 %v3157, %v3218
    %v3228 = vadd.f32 %v3158, %v3218
    %v3229 = vadd.f32 %v3159, %v3218
    %v3230 = vadd.f32 %v3160, %v3218
    %v3231 = vadd.f32 %v3161, %v3218
    %v3232 = vadd.f32 %v3162, %v3218
    %v3233 = vadd.f32 %v3163, %v3218
    %v3234 = vadd.f32 %v3164, %v3218
    %v3235 = vadd.f32 %v3165, %v3218
    %v3236 = vadd.f32 %v3166, %v3218
    %v3237 = vadd.f32 %v3167, %v3218
    %v3238 = vadd.f32 %v3168, %v3218
    %v3239 = vadd.f32 %v3169, %v3218
    %v3240 = vadd.f32 %v3170, %v3218
    %v3241 = vadd.f32 %v3171, %v3218
    %v3242 = vadd.f32 %v3172, %v3218
    %v3243 = vadd.f32 %v3173, %v3218
    %v3244 = vadd.f32 %v3174, %v3218
    %v3245 = vadd.f32 %v3175, %v3218
    %v3246 = vadd.f32 %v3176, %v3218
    %v3247 = vadd.f32 %v3177, %v3218
    %v3248 = vadd.f32 %v3178, %v3218
    %v3249 = vadd.f32 %v3179, %v3218
    %v3250 = vadd.f32 %v3180, %v3218
    %v3251 = vadd.f32 %v3181, %v3218
    %v3252 = vadd.f32 %v3182, %v3218
    %v3253 = vadd.f32 %v3183, %v3218
    %v3254 = vadd.f32 %v3184, %v3218
    %v3255 = vadd.f32 %v3185, %v3218
    %v3256 = vadd.f32 %v3186, %v3218
    %v3257 = vadd.f32 %v3187, %v3218
    %v3258 = vadd.f32 %v3188, %v3218
    %v3259 = vadd.f32 %v3189, %v3218
    %v3260 = vadd.f32 %v3190, %v3218
    %v3261 = vadd.f32 %v3191, %v3218
    %v3262 = vadd.f32 %v3192, %v3218
    %v3263 = vadd.f32 %v3193, %v3218
    %v3264 = vadd.f32 %v3194, %v3218
    %v3265 = vadd.f32 %v3195, %v3218
    %v3266 = vadd.f32 %v3196, %v3218
    %v3267 = vadd.f32 %v3197, %v3218
    %v3268 = vadd.f32 %v3198, %v3218
    %v3269 = vadd.f32 %v3199, %v3218
    %v3270 = vadd.f32 %v3200, %v3218
    %v3271 = vadd.f32 %v3201, %v3218
    %v3272 = vadd.f32 %v3202, %v3218
    %v3273 = vadd.f32 %v3203, %v3218
    %v3274 = vadd.f32 %v3204, %v3218
    %v3275 = vadd.f32 %v3205, %v3218
    %v3276 = vadd.f32 %v3206, %v3218
    %v3277 = vadd.f32 %v3207, %v3218
    %v3278 = vadd.f32 %v3208, %v3218
    %v3279 = vadd.f32 %v3209, %v3218
    %v3280 = vadd.f32 %v3210, %v3218
    %v3281 = vadd.f32 %v3211, %v3218
    %v3282 = vadd.f32 %v3212, %v3218
    %v3283 = vadd.f32 %v3213, %v3218
    %v3284 = vmax.f32 %v3220, 0.0
    %v3285 = vmax.f32 %v3221, 0.0
    %v3286 = vmax.f32 %v3222, 0.0
    %v3287 = vmax.f32 %v3223, 0.0
    %v3288 = vmax.f32 %v3224, 0.0
    %v3289 = vmax.f32 %v3225, 0.0
    %v3290 = vmax.f32 %v3226, 0.0
    %v3291 = vmax.f32 %v3227, 0.0
    %v3292 = vmax.f32 %v3228, 0.0
    %v3293 = vmax.f32 %v3229, 0.0
    %v3294 = vmax.f32 %v3230, 0.0
    %v3295 = vmax.f32 %v3231, 0.0
    %v3296 = vmax.f32 %v3232, 0.0
    %v3297 = vmax.f32 %v3233, 0.0
    %v3298 = vmax.f32 %v3234, 0.0
    %v3299 = vmax.f32 %v3235, 0.0
    %v3300 = vmax.f32 %v3236, 0.0
    %v3301 = vmax.f32 %v3237, 0.0
    %v3302 = vmax.f32 %v3238, 0.0
    %v3303 = vmax.f32 %v3239, 0.0
    %v3304 = vmax.f32 %v3240, 0.0
    %v3305 = vmax.f32 %v3241, 0.0
    %v3306 = vmax.f32 %v3242, 0.0
    %v3307 = vmax.f32 %v3243, 0.0
    %v3308 = vmax.f32 %v3244, 0.0
    %v3309 = vmax.f32 %v3245, 0.0
    %v3310 = vmax.f32 %v3246, 0.0
    %v3311 = vmax.f32 %v3247, 0.0
    %v3312 = vmax.f32 %v3248, 0.0
    %v3313 = vmax.f32 %v3249, 0.0
    %v3314 = vmax.f32 %v3250, 0.0
    %v3315 = vmax.f32 %v3251, 0.0
    %v3316 = vmax.f32 %v3252, 0.0
    %v3317 = vmax.f32 %v3253, 0.0
    %v3318 = vmax.f32 %v3254, 0.0
    %v3319 = vmax.f32 %v3255, 0.0
    %v3320 = vmax.f32 %v3256, 0.0
    %v3321 = vmax.f32 %v3257, 0.0
    %v3322 = vmax.f32 %v3258, 0.0
    %v3323 = vmax.f32 %v3259, 0.0
    %v3324 = vmax.f32 %v3260, 0.0
    %v3325 = vmax.f32 %v3261, 0.0
    %v3326 = vmax.f32 %v3262, 0.0
    %v3327 = vmax.f32 %v3263, 0.0
    %v3328 = vmax.f32 %v3264, 0.0
    %v3329 = vmax.f32 %v3265, 0.0
    %v3330 = vmax.f32 %v3266, 0.0
    %v3331 = vmax.f32 %v3267, 0.0
    %v3332 = vmax.f32 %v3268, 0.0
    %v3333 = vmax.f32 %v3269, 0.0
    %v3334 = vmax.f32 %v3270, 0.0
    %v3335 = vmax.f32 %v3271, 0.0
    %v3336 = vmax.f32 %v3272, 0.0
    %v3337 = vmax.f32 %v3273, 0.0
    %v3338 = vmax.f32 %v3274, 0.0
    %v3339 = vmax.f32 %v3275, 0.0
    %v3340 = vmax.f32 %v3276, 0.0
    %v3341 = vmax.f32 %v3277, 0.0
    %v3342 = vmax.f32 %v3278, 0.0
    %v3343 = vmax.f32 %v3279, 0.0
    %v3344 = vmax.f32 %v3280, 0.0
    %v3345 = vmax.f32 %v3281, 0.0
    %v3346 = vmax.f32 %v3282, 0.0
    %v3347 = vmax.f32 %v3283, 0.0
    %3348 = vst [vmem:[%s220 + $0x1] sm:$0xff] %v3284
    %3349 = vst [vmem:[%s220 + $0x9] sm:$0xff] %v3285
    %3350 = vst [vmem:[%s220 + $0x19] sm:$0xff] %v3286
    %3351 = vst [vmem:[%s220 + $0x21] sm:$0xff] %v3287
    %3352 = vst [vmem:[%s220 + $0x31] sm:$0xff] %v3288
    %3353 = vst [vmem:[%s220 + $0x39] sm:$0xff] %v3289
    %3354 = vst [vmem:[%s220 + $0x49] sm:$0xff] %v3290
    %3355 = vst [vmem:[%s220 + $0x51] sm:$0xff] %v3291
    %3356 = vst [vmem:[%s220 + $0x61] sm:$0xff] %v3292
    %3357 = vst [vmem:[%s220 + $0x69] sm:$0xff] %v3293
    %3358 = vst [vmem:[%s220 + $0x79] sm:$0xff] %v3294
    %3359 = vst [vmem:[%s220 + $0x81] sm:$0xff] %v3295
    %3360 = vst [vmem:[%s220 + $0x91] sm:$0xff] %v3296
    %3361 = vst [vmem:[%s220 + $0x99] sm:$0xff] %v3297
    %3362 = vst [vmem:[%s220 + $0xa9] sm:$0xff] %v3298
    %3363 = vst [vmem:[%s220 + $0xb1] sm:$0xff] %v3299
    %3364 = vst [vmem:[%s220 + $0xc1] sm:$0xff] %v3300
    %3365 = vst [vmem:[%s220 + $0xc9] sm:$0xff] %v3301
    %3366 = vst [vmem:[%s220 + $0xd9] sm:$0xff] %v3302
    %3367 = vst [vmem:[%s220 + $0xe1] sm:$0xff] %v3303
    %3368 = vst [vmem:[%s220 + $0xf1] sm:$0xff] %v3304
    %3369 = vst [vmem:[%s220 + $0xf9] sm:$0xff] %v3305
    %3370 = vst [vmem:[%s220 + $0x109] sm:$0xff] %v3306
    %3371 = vst [vmem:[%s220 + $0x111] sm:$0xff] %v3307
    %3372 = vst [vmem:[%s220 + $0x121] sm:$0xff] %v3308
    %3373 = vst [vmem:[%s220 + $0x129] sm:$0xff] %v3309
    %3374 = vst [vmem:[%s220 + $0x139] sm:$0xff] %v3310
    %3375 = vst [vmem:[%s220 + $0x141] sm:$0xff] %v3311
    %3376 = vst [vmem:[%s220 + $0x151] sm:$0xff] %v3312
    %3377 = vst [vmem:[%s220 + $0x159] sm:$0xff] %v3313
    %3378 = vst [vmem:[%s220 + $0x169] sm:$0xff] %v3314
    %3379 = vst [vmem:[%s220 + $0x171] sm:$0xff] %v3315
    %3380 = vst [vmem:[%s220 + $0x1b1] sm:$0xff] %v3316
    %3381 = vst [vmem:[%s220 + $0x1b9] sm:$0xff] %v3317
    %3382 = vst [vmem:[%s220 + $0x1c9] sm:$0xff] %v3318
    %3383 = vst [vmem:[%s220 + $0x1d1] sm:$0xff] %v3319
    %3384 = vst [vmem:[%s220 + $0x1e1] sm:$0xff] %v3320
    %3385 = vst [vmem:[%s220 + $0x1e9] sm:$0xff] %v3321
    %3386 = vst [vmem:[%s220 + $0x1f9] sm:$0xff] %v3322
    %3387 = vst [vmem:[%s220 + $0x201] sm:$0xff] %v3323
    %3388 = vst [vmem:[%s220 + $0x211] sm:$0xff] %v3324
    %3389 = vst [vmem:[%s220 + $0x219] sm:$0xff] %v3325
    %3390 = vst [vmem:[%s220 + $0x229] sm:$0xff] %v3326
    %3391 = vst [vmem:[%s220 + $0x231] sm:$0xff] %v3327
    %3392 = vst [vmem:[%s220 + $0x241] sm:$0xff] %v3328
    %3393 = vst [vmem:[%s220 + $0x249] sm:$0xff] %v3329
    %3394 = vst [vmem:[%s220 + $0x259] sm:$0xff] %v3330
    %3395 = vst [vmem:[%s220 + $0x261] sm:$0xff] %v3331
    %3396 = vst [vmem:[%s220 + $0x271] sm:$0xff] %v3332
    %3397 = vst [vmem:[%s220 + $0x279] sm:$0xff] %v3333
    %3398 = vst [vmem:[%s220 + $0x289] sm:$0xff] %v3334
    %3399 = vst [vmem:[%s220 + $0x291] sm:$0xff] %v3335
    %3400 = vst [vmem:[%s220 + $0x2a1] sm:$0xff] %v3336
    %3401 = vst [vmem:[%s220 + $0x2a9] sm:$0xff] %v3337
    %3402 = vst [vmem:[%s220 + $0x2b9] sm:$0xff] %v3338
    %3403 = vst [vmem:[%s220 + $0x2c1] sm:$0xff] %v3339
    %3404 = vst [vmem:[%s220 + $0x2d1] sm:$0xff] %v3340
    %3405 = vst [vmem:[%s220 + $0x2d9] sm:$0xff] %v3341
    %3406 = vst [vmem:[%s220 + $0x2e9] sm:$0xff] %v3342
    %3407 = vst [vmem:[%s220 + $0x2f1] sm:$0xff] %v3343
    %3408 = vst [vmem:[%s220 + $0x301] sm:$0xff] %v3344
    %3409 = vst [vmem:[%s220 + $0x309] sm:$0xff] %v3345
    %3410 = vst [vmem:[%s220 + $0x319] sm:$0xff] %v3346
    %3411 = vst [vmem:[%s220 + $0x321] sm:$0xff] %v3347
    %v3412 = vld [vmem:[#allocation2] sm:$0xff]
    %v3413 = vld [vmem:[#allocation2 + $0x8] sm:$0xff]
    %v3414 = vld [vmem:[#allocation2 + $0x18] sm:$0xff]
    %v3415 = vld [vmem:[#allocation2 + $0x20] sm:$0xff]
    %v3416 = vld [vmem:[#allocation2 + $0x30] sm:$0xff]
    %v3417 = vld [vmem:[#allocation2 + $0x38] sm:$0xff]
    %v3418 = vld [vmem:[#allocation2 + $0x48] sm:$0xff]
    %v3419 = vld [vmem:[#allocation2 + $0x50] sm:$0xff]
    %v3420 = vld [vmem:[#allocation2 + $0x60] sm:$0xff]
    %v3421 = vld [vmem:[#allocation2 + $0x68] sm:$0xff]
    %v3422 = vld [vmem:[#allocation2 + $0x78] sm:$0xff]
    %v3423 = vld [vmem:[#allocation2 + $0x80] sm:$0xff]
    %v3424 = vld [vmem:[#allocation2 + $0x90] sm:$0xff]
    %v3425 = vld [vmem:[#allocation2 + $0x98] sm:$0xff]
    %v3426 = vld [vmem:[#allocation2 + $0xa8] sm:$0xff]
    %v3427 = vld [vmem:[#allocation2 + $0xb0] sm:$0xff]
    %v3428 = vld [vmem:[#allocation2 + $0xc0] sm:$0xff]
    %v3429 = vld [vmem:[#allocation2 + $0xc8] sm:$0xff]
    %v3430 = vld [vmem:[#allocation2 + $0xd8] sm:$0xff]
    %v3431 = vld [vmem:[#allocation2 + $0xe0] sm:$0xff]
    %v3432 = vld [vmem:[#allocation2 + $0xf0] sm:$0xff]
    %v3433 = vld [vmem:[#allocation2 + $0xf8] sm:$0xff]
    %v3434 = vld [vmem:[#allocation2 + $0x108] sm:$0xff]
    %v3435 = vld [vmem:[#allocation2 + $0x110] sm:$0xff]
    %v3436 = vld [vmem:[#allocation2 + $0x120] sm:$0xff]
    %v3437 = vld [vmem:[#allocation2 + $0x128] sm:$0xff]
    %v3438 = vld [vmem:[#allocation2 + $0x138] sm:$0xff]
    %v3439 = vld [vmem:[#allocation2 + $0x140] sm:$0xff]
    %v3440 = vld [vmem:[#allocation2 + $0x150] sm:$0xff]
    %v3441 = vld [vmem:[#allocation2 + $0x158] sm:$0xff]
    %v3442 = vld [vmem:[#allocation2 + $0x168] sm:$0xff]
    %v3443 = vld [vmem:[#allocation2 + $0x170] sm:$0xff]
    %v3444 = vld [vmem:[#allocation2 + $0x1b0] sm:$0xff]
    %v3445 = vld [vmem:[#allocation2 + $0x1b8] sm:$0xff]
    %v3446 = vld [vmem:[#allocation2 + $0x1c8] sm:$0xff]
    %v3447 = vld [vmem:[#allocation2 + $0x1d0] sm:$0xff]
    %v3448 = vld [vmem:[#allocation2 + $0x1e0] sm:$0xff]
    %v3449 = vld [vmem:[#allocation2 + $0x1e8] sm:$0xff]
    %v3450 = vld [vmem:[#allocation2 + $0x1f8] sm:$0xff]
    %v3451 = vld [vmem:[#allocation2 + $0x200] sm:$0xff]
    %v3452 = vld [vmem:[#allocation2 + $0x210] sm:$0xff]
    %v3453 = vld [vmem:[#allocation2 + $0x218] sm:$0xff]
    %v3454 = vld [vmem:[#allocation2 + $0x228] sm:$0xff]
    %v3455 = vld [vmem:[#allocation2 + $0x230] sm:$0xff]
    %v3456 = vld [vmem:[#allocation2 + $0x240] sm:$0xff]
    %v3457 = vld [vmem:[#allocation2 + $0x248] sm:$0xff]
    %v3458 = vld [vmem:[#allocation2 + $0x258] sm:$0xff]
    %v3459 = vld [vmem:[#allocation2 + $0x260] sm:$0xff]
    %v3460 = vld [vmem:[#allocation2 + $0x270] sm:$0xff]
    %v3461 = vld [vmem:[#allocation2 + $0x278] sm:$0xff]
    %v3462 = vld [vmem:[#allocation2 + $0x288] sm:$0xff]
    %v3463 = vld [vmem:[#allocation2 + $0x290] sm:$0xff]
    %v3464 = vld [vmem:[#allocation2 + $0x2a0] sm:$0xff]
    %v3465 = vld [vmem:[#allocation2 + $0x2a8] sm:$0xff]
    %v3466 = vld [vmem:[#allocation2 + $0x2b8] sm:$0xff]
    %v3467 = vld [vmem:[#allocation2 + $0x2c0] sm:$0xff]
    %v3468 = vld [vmem:[#allocation2 + $0x2d0] sm:$0xff]
    %v3469 = vld [vmem:[#allocation2 + $0x2d8] sm:$0xff]
    %v3470 = vld [vmem:[#allocation2 + $0x2e8] sm:$0xff]
    %v3471 = vld [vmem:[#allocation2 + $0x2f0] sm:$0xff]
    %v3472 = vld [vmem:[#allocation2 + $0x300] sm:$0xff]
    %v3473 = vld [vmem:[#allocation2 + $0x308] sm:$0xff]
    %v3474 = vld [vmem:[#allocation2 + $0x318] sm:$0xff]
    %v3475 = vld [vmem:[#allocation2 + $0x320] sm:$0xff]
    %v3476 = vld [vmem:[#allocation2 + $0x1] sm:$0xff]
    %v3477 = vld [vmem:[#allocation2 + $0x9] sm:$0xff]
    %v3478 = vld [vmem:[#allocation2 + $0x19] sm:$0xff]
    %v3479 = vld [vmem:[#allocation2 + $0x21] sm:$0xff]
    %v3480 = vld [vmem:[#allocation2 + $0x31] sm:$0xff]
    %v3481 = vld [vmem:[#allocation2 + $0x39] sm:$0xff]
    %v3482 = vld [vmem:[#allocation2 + $0x49] sm:$0xff]
    %v3483 = vld [vmem:[#allocation2 + $0x51] sm:$0xff]
    %v3484 = vld [vmem:[#allocation2 + $0x61] sm:$0xff]
    %v3485 = vld [vmem:[#allocation2 + $0x69] sm:$0xff]
    %v3486 = vld [vmem:[#allocation2 + $0x79] sm:$0xff]
    %v3487 = vld [vmem:[#allocation2 + $0x81] sm:$0xff]
    %v3488 = vld [vmem:[#allocation2 + $0x91] sm:$0xff]
    %v3489 = vld [vmem:[#allocation2 + $0x99] sm:$0xff]
    %v3490 = vld [vmem:[#allocation2 + $0xa9] sm:$0xff]
    %v3491 = vld [vmem:[#allocation2 + $0xb1] sm:$0xff]
    %v3492 = vld [vmem:[#allocation2 + $0xc1] sm:$0xff]
    %v3493 = vld [vmem:[#allocation2 + $0xc9] sm:$0xff]
    %v3494 = vld [vmem:[#allocation2 + $0xd9] sm:$0xff]
    %v3495 = vld [vmem:[#allocation2 + $0xe1] sm:$0xff]
    %v3496 = vld [vmem:[#allocation2 + $0xf1] sm:$0xff]
    %v3497 = vld [vmem:[#allocation2 + $0xf9] sm:$0xff]
    %v3498 = vld [vmem:[#allocation2 + $0x109] sm:$0xff]
    %v3499 = vld [vmem:[#allocation2 + $0x111] sm:$0xff]
    %v3500 = vld [vmem:[#allocation2 + $0x121] sm:$0xff]
    %v3501 = vld [vmem:[#allocation2 + $0x129] sm:$0xff]
    %v3502 = vld [vmem:[#allocation2 + $0x139] sm:$0xff]
    %v3503 = vld [vmem:[#allocation2 + $0x141] sm:$0xff]
    %v3504 = vld [vmem:[#allocation2 + $0x151] sm:$0xff]
    %v3505 = vld [vmem:[#allocation2 + $0x159] sm:$0xff]
    %v3506 = vld [vmem:[#allocation2 + $0x169] sm:$0xff]
    %v3507 = vld [vmem:[#allocation2 + $0x171] sm:$0xff]
    %v3508 = vld [vmem:[#allocation2 + $0x1b1] sm:$0xff]
    %v3509 = vld [vmem:[#allocation2 + $0x1b9] sm:$0xff]
    %v3510 = vld [vmem:[#allocation2 + $0x1c9] sm:$0xff]
    %v3511 = vld [vmem:[#allocation2 + $0x1d1] sm:$0xff]
    %v3512 = vld [vmem:[#allocation2 + $0x1e1] sm:$0xff]
    %v3513 = vld [vmem:[#allocation2 + $0x1e9] sm:$0xff]
    %v3514 = vld [vmem:[#allocation2 + $0x1f9] sm:$0xff]
    %v3515 = vld [vmem:[#allocation2 + $0x201] sm:$0xff]
    %v3516 = vld [vmem:[#allocation2 + $0x211] sm:$0xff]
    %v3517 = vld [vmem:[#allocation2 + $0x219] sm:$0xff]
    %v3518 = vld [vmem:[#allocation2 + $0x229] sm:$0xff]
    %v3519 = vld [vmem:[#allocation2 + $0x231] sm:$0xff]
    %v3520 = vld [vmem:[#allocation2 + $0x241] sm:$0xff]
    %v3521 = vld [vmem:[#allocation2 + $0x249] sm:$0xff]
    %v3522 = vld [vmem:[#allocation2 + $0x259] sm:$0xff]
    %v3523 = vld [vmem:[#allocation2 + $0x261] sm:$0xff]
    %v3524 = vld [vmem:[#allocation2 + $0x271] sm:$0xff]
    %v3525 = vld [vmem:[#allocation2 + $0x279] sm:$0xff]
    %v3526 = vld [vmem:[#allocation2 + $0x289] sm:$0xff]
    %v3527 = vld [vmem:[#allocation2 + $0x291] sm:$0xff]
    %v3528 = vld [vmem:[#allocation2 + $0x2a1] sm:$0xff]
    %v3529 = vld [vmem:[#allocation2 + $0x2a9] sm:$0xff]
    %v3530 = vld [vmem:[#allocation2 + $0x2b9] sm:$0xff]
    %v3531 = vld [vmem:[#allocation2 + $0x2c1] sm:$0xff]
    %v3532 = vld [vmem:[#allocation2 + $0x2d1] sm:$0xff]
    %v3533 = vld [vmem:[#allocation2 + $0x2d9] sm:$0xff]
    %v3534 = vld [vmem:[#allocation2 + $0x2e9] sm:$0xff]
    %v3535 = vld [vmem:[#allocation2 + $0x2f1] sm:$0xff]
    %v3536 = vld [vmem:[#allocation2 + $0x301] sm:$0xff]
    %v3537 = vld [vmem:[#allocation2 + $0x309] sm:$0xff]
    %v3538 = vld [vmem:[#allocation2 + $0x319] sm:$0xff]
    %v3539 = vld [vmem:[#allocation2 + $0x321] sm:$0xff]
    %v3540 = vld [vmem:[#allocation2 + $0x2] sm:$0xff]
    %v3541 = vld [vmem:[#allocation2 + $0xa] sm:$0xff]
    %v3542 = vld [vmem:[#allocation2 + $0x1a] sm:$0xff]
    %v3543 = vld [vmem:[#allocation2 + $0x22] sm:$0xff]
    %v3544 = vld [vmem:[#allocation2 + $0x32] sm:$0xff]
    %v3545 = vld [vmem:[#allocation2 + $0x3a] sm:$0xff]
    %v3546 = vld [vmem:[#allocation2 + $0x4a] sm:$0xff]
    %v3547 = vld [vmem:[#allocation2 + $0x52] sm:$0xff]
    %v3548 = vld [vmem:[#allocation2 + $0x62] sm:$0xff]
    %v3549 = vld [vmem:[#allocation2 + $0x6a] sm:$0xff]
    %v3550 = vld [vmem:[#allocation2 + $0x7a] sm:$0xff]
    %v3551 = vld [vmem:[#allocation2 + $0x82] sm:$0xff]
    %v3552 = vld [vmem:[#allocation2 + $0x92] sm:$0xff]
    %v3553 = vld [vmem:[#allocation2 + $0x9a] sm:$0xff]
    %v3554 = vld [vmem:[#allocation2 + $0xaa] sm:$0xff]
    %v3555 = vld [vmem:[#allocation2 + $0xb2] sm:$0xff]
    %v3556 = vld [vmem:[#allocation2 + $0xc2] sm:$0xff]
    %v3557 = vld [vmem:[#allocation2 + $0xca] sm:$0xff]
    %v3558 = vld [vmem:[#allocation2 + $0xda] sm:$0xff]
    %v3559 = vld [vmem:[#allocation2 + $0xe2] sm:$0xff]
    %v3560 = vld [vmem:[#allocation2 + $0xf2] sm:$0xff]
    %v3561 = vld [vmem:[#allocation2 + $0xfa] sm:$0xff]
    %v3562 = vld [vmem:[#allocation2 + $0x10a] sm:$0xff]
    %v3563 = vld [vmem:[#allocation2 + $0x112] sm:$0xff]
    %v3564 = vld [vmem:[#allocation2 + $0x122] sm:$0xff]
    %v3565 = vld [vmem:[#allocation2 + $0x12a] sm:$0xff]
    %v3566 = vld [vmem:[#allocation2 + $0x13a] sm:$0xff]
    %v3567 = vld [vmem:[#allocation2 + $0x142] sm:$0xff]
    %v3568 = vld [vmem:[#allocation2 + $0x152] sm:$0xff]
    %v3569 = vld [vmem:[#allocation2 + $0x15a] sm:$0xff]
    %v3570 = vld [vmem:[#allocation2 + $0x16a] sm:$0xff]
    %v3571 = vld [vmem:[#allocation2 + $0x172] sm:$0xff]
    %v3572 = vld [vmem:[#allocation2 + $0x1b2] sm:$0xff]
    %v3573 = vld [vmem:[#allocation2 + $0x1ba] sm:$0xff]
    %v3574 = vld [vmem:[#allocation2 + $0x1ca] sm:$0xff]
    %v3575 = vld [vmem:[#allocation2 + $0x1d2] sm:$0xff]
    %v3576 = vld [vmem:[#allocation2 + $0x1e2] sm:$0xff]
    %v3577 = vld [vmem:[#allocation2 + $0x1ea] sm:$0xff]
    %v3578 = vld [vmem:[#allocation2 + $0x1fa] sm:$0xff]
    %v3579 = vld [vmem:[#allocation2 + $0x202] sm:$0xff]
    %v3580 = vld [vmem:[#allocation2 + $0x212] sm:$0xff]
    %v3581 = vld [vmem:[#allocation2 + $0x21a] sm:$0xff]
    %v3582 = vld [vmem:[#allocation2 + $0x22a] sm:$0xff]
    %v3583 = vld [vmem:[#allocation2 + $0x232] sm:$0xff]
    %v3584 = vld [vmem:[#allocation2 + $0x242] sm:$0xff]
    %v3585 = vld [vmem:[#allocation2 + $0x24a] sm:$0xff]
    %v3586 = vld [vmem:[#allocation2 + $0x25a] sm:$0xff]
    %v3587 = vld [vmem:[#allocation2 + $0x262] sm:$0xff]
    %v3588 = vld [vmem:[#allocation2 + $0x272] sm:$0xff]
    %v3589 = vld [vmem:[#allocation2 + $0x27a] sm:$0xff]
    %v3590 = vld [vmem:[#allocation2 + $0x28a] sm:$0xff]
    %v3591 = vld [vmem:[#allocation2 + $0x292] sm:$0xff]
    %v3592 = vld [vmem:[#allocation2 + $0x2a2] sm:$0xff]
    %v3593 = vld [vmem:[#allocation2 + $0x2aa] sm:$0xff]
    %v3594 = vld [vmem:[#allocation2 + $0x2ba] sm:$0xff]
    %v3595 = vld [vmem:[#allocation2 + $0x2c2] sm:$0xff]
    %v3596 = vld [vmem:[#allocation2 + $0x2d2] sm:$0xff]
    %v3597 = vld [vmem:[#allocation2 + $0x2da] sm:$0xff]
    %v3598 = vld [vmem:[#allocation2 + $0x2ea] sm:$0xff]
    %v3599 = vld [vmem:[#allocation2 + $0x2f2] sm:$0xff]
    %v3600 = vld [vmem:[#allocation2 + $0x302] sm:$0xff]
    %v3601 = vld [vmem:[#allocation2 + $0x30a] sm:$0xff]
    %v3602 = vld [vmem:[#allocation2 + $0x31a] sm:$0xff]
    %v3603 = vld [vmem:[#allocation2 + $0x322] sm:$0xff]
    %v3604 = vld [vmem:[%s220] sm:$0xff]
    %v3605 = vld [vmem:[%s220 + $0x8] sm:$0xff]
    %v3606 = vld [vmem:[%s220 + $0x18] sm:$0xff]
    %v3607 = vld [vmem:[%s220 + $0x20] sm:$0xff]
    %v3608 = vld [vmem:[%s220 + $0x30] sm:$0xff]
    %v3609 = vld [vmem:[%s220 + $0x38] sm:$0xff]
    %v3610 = vld [vmem:[%s220 + $0x48] sm:$0xff]
    %v3611 = vld [vmem:[%s220 + $0x50] sm:$0xff]
    %v3612 = vld [vmem:[%s220 + $0x60] sm:$0xff]
    %v3613 = vld [vmem:[%s220 + $0x68] sm:$0xff]
    %v3614 = vld [vmem:[%s220 + $0x78] sm:$0xff]
    %v3615 = vld [vmem:[%s220 + $0x80] sm:$0xff]
    %v3616 = vld [vmem:[%s220 + $0x90] sm:$0xff]
    %v3617 = vld [vmem:[%s220 + $0x98] sm:$0xff]
    %v3618 = vld [vmem:[%s220 + $0xa8] sm:$0xff]
    %v3619 = vld [vmem:[%s220 + $0xb0] sm:$0xff]
    %v3620 = vld [vmem:[%s220 + $0xc0] sm:$0xff]
    %v3621 = vld [vmem:[%s220 + $0xc8] sm:$0xff]
    %v3622 = vld [vmem:[%s220 + $0xd8] sm:$0xff]
    %v3623 = vld [vmem:[%s220 + $0xe0] sm:$0xff]
    %v3624 = vld [vmem:[%s220 + $0xf0] sm:$0xff]
    %v3625 = vld [vmem:[%s220 + $0xf8] sm:$0xff]
    %v3626 = vld [vmem:[%s220 + $0x108] sm:$0xff]
    %v3627 = vld [vmem:[%s220 + $0x110] sm:$0xff]
    %v3628 = vld [vmem:[%s220 + $0x120] sm:$0xff]
    %v3629 = vld [vmem:[%s220 + $0x128] sm:$0xff]
    %v3630 = vld [vmem:[%s220 + $0x138] sm:$0xff]
    %v3631 = vld [vmem:[%s220 + $0x140] sm:$0xff]
    %v3632 = vld [vmem:[%s220 + $0x150] sm:$0xff]
    %v3633 = vld [vmem:[%s220 + $0x158] sm:$0xff]
    %v3634 = vld [vmem:[%s220 + $0x168] sm:$0xff]
    %v3635 = vld [vmem:[%s220 + $0x170] sm:$0xff]
    %v3636 = vld [vmem:[%s220 + $0x1b0] sm:$0xff]
    %v3637 = vld [vmem:[%s220 + $0x1b8] sm:$0xff]
    %v3638 = vld [vmem:[%s220 + $0x1c8] sm:$0xff]
    %v3639 = vld [vmem:[%s220 + $0x1d0] sm:$0xff]
    %v3640 = vld [vmem:[%s220 + $0x1e0] sm:$0xff]
    %v3641 = vld [vmem:[%s220 + $0x1e8] sm:$0xff]
    %v3642 = vld [vmem:[%s220 + $0x1f8] sm:$0xff]
    %v3643 = vld [vmem:[%s220 + $0x200] sm:$0xff]
    %v3644 = vld [vmem:[%s220 + $0x210] sm:$0xff]
    %v3645 = vld [vmem:[%s220 + $0x218] sm:$0xff]
    %v3646 = vld [vmem:[%s220 + $0x228] sm:$0xff]
    %v3647 = vld [vmem:[%s220 + $0x230] sm:$0xff]
    %v3648 = vld [vmem:[%s220 + $0x240] sm:$0xff]
    %v3649 = vld [vmem:[%s220 + $0x248] sm:$0xff]
    %v3650 = vld [vmem:[%s220 + $0x258] sm:$0xff]
    %v3651 = vld [vmem:[%s220 + $0x260] sm:$0xff]
    %v3652 = vld [vmem:[%s220 + $0x270] sm:$0xff]
    %v3653 = vld [vmem:[%s220 + $0x278] sm:$0xff]
    %v3654 = vld [vmem:[%s220 + $0x288] sm:$0xff]
    %v3655 = vld [vmem:[%s220 + $0x290] sm:$0xff]
    %v3656 = vld [vmem:[%s220 + $0x2a0] sm:$0xff]
    %v3657 = vld [vmem:[%s220 + $0x2a8] sm:$0xff]
    %v3658 = vld [vmem:[%s220 + $0x2b8] sm:$0xff]
    %v3659 = vld [vmem:[%s220 + $0x2c0] sm:$0xff]
    %v3660 = vld [vmem:[%s220 + $0x2d0] sm:$0xff]
    %v3661 = vld [vmem:[%s220 + $0x2d8] sm:$0xff]
    %v3662 = vld [vmem:[%s220 + $0x2e8] sm:$0xff]
    %v3663 = vld [vmem:[%s220 + $0x2f0] sm:$0xff]
    %v3664 = vld [vmem:[%s220 + $0x300] sm:$0xff]
    %v3665 = vld [vmem:[%s220 + $0x308] sm:$0xff]
    %v3666 = vld [vmem:[%s220 + $0x318] sm:$0xff]
    %v3667 = vld [vmem:[%s220 + $0x320] sm:$0xff]
    %v3668 = vld [vmem:[%s220 + $0x1] sm:$0xff]
    %v3669 = vld [vmem:[%s220 + $0x9] sm:$0xff]
    %v3670 = vld [vmem:[%s220 + $0x19] sm:$0xff]
    %v3671 = vld [vmem:[%s220 + $0x21] sm:$0xff]
    %v3672 = vld [vmem:[%s220 + $0x31] sm:$0xff]
    %v3673 = vld [vmem:[%s220 + $0x39] sm:$0xff]
    %v3674 = vld [vmem:[%s220 + $0x49] sm:$0xff]
    %v3675 = vld [vmem:[%s220 + $0x51] sm:$0xff]
    %v3676 = vld [vmem:[%s220 + $0x61] sm:$0xff]
    %v3677 = vld [vmem:[%s220 + $0x69] sm:$0xff]
    %v3678 = vld [vmem:[%s220 + $0x79] sm:$0xff]
    %v3679 = vld [vmem:[%s220 + $0x81] sm:$0xff]
    %v3680 = vld [vmem:[%s220 + $0x91] sm:$0xff]
    %v3681 = vld [vmem:[%s220 + $0x99] sm:$0xff]
    %v3682 = vld [vmem:[%s220 + $0xa9] sm:$0xff]
    %v3683 = vld [vmem:[%s220 + $0xb1] sm:$0xff]
    %v3684 = vld [vmem:[%s220 + $0xc1] sm:$0xff]
    %v3685 = vld [vmem:[%s220 + $0xc9] sm:$0xff]
    %v3686 = vld [vmem:[%s220 + $0xd9] sm:$0xff]
    %v3687 = vld [vmem:[%s220 + $0xe1] sm:$0xff]
    %v3688 = vld [vmem:[%s220 + $0xf1] sm:$0xff]
    %v3689 = vld [vmem:[%s220 + $0xf9] sm:$0xff]
    %v3690 = vld [vmem:[%s220 + $0x109] sm:$0xff]
    %v3691 = vld [vmem:[%s220 + $0x111] sm:$0xff]
    %v3692 = vld [vmem:[%s220 + $0x121] sm:$0xff]
    %v3693 = vld [vmem:[%s220 + $0x129] sm:$0xff]
    %v3694 = vld [vmem:[%s220 + $0x139] sm:$0xff]
    %v3695 = vld [vmem:[%s220 + $0x141] sm:$0xff]
    %v3696 = vld [vmem:[%s220 + $0x151] sm:$0xff]
    %v3697 = vld [vmem:[%s220 + $0x159] sm:$0xff]
    %v3698 = vld [vmem:[%s220 + $0x169] sm:$0xff]
    %v3699 = vld [vmem:[%s220 + $0x171] sm:$0xff]
    %v3700 = vld [vmem:[%s220 + $0x1b1] sm:$0xff]
    %v3701 = vld [vmem:[%s220 + $0x1b9] sm:$0xff]
    %v3702 = vld [vmem:[%s220 + $0x1c9] sm:$0xff]
    %v3703 = vld [vmem:[%s220 + $0x1d1] sm:$0xff]
    %v3704 = vld [vmem:[%s220 + $0x1e1] sm:$0xff]
    %v3705 = vld [vmem:[%s220 + $0x1e9] sm:$0xff]
    %v3706 = vld [vmem:[%s220 + $0x1f9] sm:$0xff]
    %v3707 = vld [vmem:[%s220 + $0x201] sm:$0xff]
    %v3708 = vld [vmem:[%s220 + $0x211] sm:$0xff]
    %v3709 = vld [vmem:[%s220 + $0x219] sm:$0xff]
    %v3710 = vld [vmem:[%s220 + $0x229] sm:$0xff]
    %v3711 = vld [vmem:[%s220 + $0x231] sm:$0xff]
    %v3712 = vld [vmem:[%s220 + $0x241] sm:$0xff]
    %v3713 = vld [vmem:[%s220 + $0x249] sm:$0xff]
    %v3714 = vld [vmem:[%s220 + $0x259] sm:$0xff]
    %v3715 = vld [vmem:[%s220 + $0x261] sm:$0xff]
    %v3716 = vld [vmem:[%s220 + $0x271] sm:$0xff]
    %v3717 = vld [vmem:[%s220 + $0x279] sm:$0xff]
    %v3718 = vld [vmem:[%s220 + $0x289] sm:$0xff]
    %v3719 = vld [vmem:[%s220 + $0x291] sm:$0xff]
    %v3720 = vld [vmem:[%s220 + $0x2a1] sm:$0xff]
    %v3721 = vld [vmem:[%s220 + $0x2a9] sm:$0xff]
    %v3722 = vld [vmem:[%s220 + $0x2b9] sm:$0xff]
    %v3723 = vld [vmem:[%s220 + $0x2c1] sm:$0xff]
    %v3724 = vld [vmem:[%s220 + $0x2d1] sm:$0xff]
    %v3725 = vld [vmem:[%s220 + $0x2d9] sm:$0xff]
    %v3726 = vld [vmem:[%s220 + $0x2e9] sm:$0xff]
    %v3727 = vld [vmem:[%s220 + $0x2f1] sm:$0xff]
    %v3728 = vld [vmem:[%s220 + $0x301] sm:$0xff]
    %v3729 = vld [vmem:[%s220 + $0x309] sm:$0xff]
    %v3730 = vld [vmem:[%s220 + $0x319] sm:$0xff]
    %v3731 = vld [vmem:[%s220 + $0x321] sm:$0xff]
    %v3732 = vld [vmem:[%s220 + $0x2] sm:$0xff]
    %v3733 = vld [vmem:[%s220 + $0xa] sm:$0xff]
    %v3734 = vld [vmem:[%s220 + $0x1a] sm:$0xff]
    %v3735 = vld [vmem:[%s220 + $0x22] sm:$0xff]
    %v3736 = vld [vmem:[%s220 + $0x32] sm:$0xff]
    %v3737 = vld [vmem:[%s220 + $0x3a] sm:$0xff]
    %v3738 = vld [vmem:[%s220 + $0x4a] sm:$0xff]
    %v3739 = vld [vmem:[%s220 + $0x52] sm:$0xff]
    %v3740 = vld [vmem:[%s220 + $0x62] sm:$0xff]
    %v3741 = vld [vmem:[%s220 + $0x6a] sm:$0xff]
    %v3742 = vld [vmem:[%s220 + $0x7a] sm:$0xff]
    %v3743 = vld [vmem:[%s220 + $0x82] sm:$0xff]
    %v3744 = vld [vmem:[%s220 + $0x92] sm:$0xff]
    %v3745 = vld [vmem:[%s220 + $0x9a] sm:$0xff]
    %v3746 = vld [vmem:[%s220 + $0xaa] sm:$0xff]
    %v3747 = vld [vmem:[%s220 + $0xb2] sm:$0xff]
    %v3748 = vld [vmem:[%s220 + $0xc2] sm:$0xff]
    %v3749 = vld [vmem:[%s220 + $0xca] sm:$0xff]
    %v3750 = vld [vmem:[%s220 + $0xda] sm:$0xff]
    %v3751 = vld [vmem:[%s220 + $0xe2] sm:$0xff]
    %v3752 = vld [vmem:[%s220 + $0xf2] sm:$0xff]
    %v3753 = vld [vmem:[%s220 + $0xfa] sm:$0xff]
    %v3754 = vld [vmem:[%s220 + $0x10a] sm:$0xff]
    %v3755 = vld [vmem:[%s220 + $0x112] sm:$0xff]
    %v3756 = vld [vmem:[%s220 + $0x122] sm:$0xff]
    %v3757 = vld [vmem:[%s220 + $0x12a] sm:$0xff]
    %v3758 = vld [vmem:[%s220 + $0x13a] sm:$0xff]
    %v3759 = vld [vmem:[%s220 + $0x142] sm:$0xff]
    %v3760 = vld [vmem:[%s220 + $0x152] sm:$0xff]
    %v3761 = vld [vmem:[%s220 + $0x15a] sm:$0xff]
    %v3762 = vld [vmem:[%s220 + $0x16a] sm:$0xff]
    %v3763 = vld [vmem:[%s220 + $0x172] sm:$0xff]
    %v3764 = vld [vmem:[%s220 + $0x1b2] sm:$0xff]
    %v3765 = vld [vmem:[%s220 + $0x1ba] sm:$0xff]
    %v3766 = vld [vmem:[%s220 + $0x1ca] sm:$0xff]
    %v3767 = vld [vmem:[%s220 + $0x1d2] sm:$0xff]
    %v3768 = vld [vmem:[%s220 + $0x1e2] sm:$0xff]
    %v3769 = vld [vmem:[%s220 + $0x1ea] sm:$0xff]
    %v3770 = vld [vmem:[%s220 + $0x1fa] sm:$0xff]
    %v3771 = vld [vmem:[%s220 + $0x202] sm:$0xff]
    %v3772 = vld [vmem:[%s220 + $0x212] sm:$0xff]
    %v3773 = vld [vmem:[%s220 + $0x21a] sm:$0xff]
    %v3774 = vld [vmem:[%s220 + $0x22a] sm:$0xff]
    %v3775 = vld [vmem:[%s220 + $0x232] sm:$0xff]
    %v3776 = vld [vmem:[%s220 + $0x242] sm:$0xff]
    %v3777 = vld [vmem:[%s220 + $0x24a] sm:$0xff]
    %v3778 = vld [vmem:[%s220 + $0x25a] sm:$0xff]
    %v3779 = vld [vmem:[%s220 + $0x262] sm:$0xff]
    %v3780 = vld [vmem:[%s220 + $0x272] sm:$0xff]
    %v3781 = vld [vmem:[%s220 + $0x27a] sm:$0xff]
    %v3782 = vld [vmem:[%s220 + $0x28a] sm:$0xff]
    %v3783 = vld [vmem:[%s220 + $0x292] sm:$0xff]
    %v3784 = vld [vmem:[%s220 + $0x2a2] sm:$0xff]
    %v3785 = vld [vmem:[%s220 + $0x2aa] sm:$0xff]
    %v3786 = vld [vmem:[%s220 + $0x2ba] sm:$0xff]
    %v3787 = vld [vmem:[%s220 + $0x2c2] sm:$0xff]
    %v3788 = vld [vmem:[%s220 + $0x2d2] sm:$0xff]
    %v3789 = vld [vmem:[%s220 + $0x2da] sm:$0xff]
    %v3790 = vld [vmem:[%s220 + $0x2ea] sm:$0xff]
    %v3791 = vld [vmem:[%s220 + $0x2f2] sm:$0xff]
    %v3792 = vld [vmem:[%s220 + $0x302] sm:$0xff]
    %v3793 = vld [vmem:[%s220 + $0x30a] sm:$0xff]
    %v3794 = vld [vmem:[%s220 + $0x31a] sm:$0xff]
    %v3795 = vld [vmem:[%s220 + $0x322] sm:$0xff]
    %v3796 = vld [vmem:[%s669] sm:$0xff]
    %v3797 = vld [vmem:[%s669 + $0x8] sm:$0xff]
    %v3798 = vld [vmem:[%s669 + $0x18] sm:$0xff]
    %v3799 = vld [vmem:[%s669 + $0x20] sm:$0xff]
    %v3800 = vld [vmem:[%s669 + $0x30] sm:$0xff]
    %v3801 = vld [vmem:[%s669 + $0x38] sm:$0xff]
    %v3802 = vld [vmem:[%s669 + $0x48] sm:$0xff]
    %v3803 = vld [vmem:[%s669 + $0x50] sm:$0xff]
    %v3804 = vld [vmem:[%s669 + $0x60] sm:$0xff]
    %v3805 = vld [vmem:[%s669 + $0x68] sm:$0xff]
    %v3806 = vld [vmem:[%s669 + $0x78] sm:$0xff]
    %v3807 = vld [vmem:[%s669 + $0x80] sm:$0xff]
    %v3808 = vld [vmem:[%s669 + $0x90] sm:$0xff]
    %v3809 = vld [vmem:[%s669 + $0x98] sm:$0xff]
    %v3810 = vld [vmem:[%s669 + $0xa8] sm:$0xff]
    %v3811 = vld [vmem:[%s669 + $0xb0] sm:$0xff]
    %v3812 = vld [vmem:[%s669 + $0xc0] sm:$0xff]
    %v3813 = vld [vmem:[%s669 + $0xc8] sm:$0xff]
    %v3814 = vld [vmem:[%s669 + $0xd8] sm:$0xff]
    %v3815 = vld [vmem:[%s669 + $0xe0] sm:$0xff]
    %v3816 = vld [vmem:[%s669 + $0xf0] sm:$0xff]
    %v3817 = vld [vmem:[%s669 + $0xf8] sm:$0xff]
    %v3818 = vld [vmem:[%s669 + $0x108] sm:$0xff]
    %v3819 = vld [vmem:[%s669 + $0x110] sm:$0xff]
    %v3820 = vld [vmem:[%s669 + $0x120] sm:$0xff]
    %v3821 = vld [vmem:[%s669 + $0x128] sm:$0xff]
    %v3822 = vld [vmem:[%s669 + $0x138] sm:$0xff]
    %v3823 = vld [vmem:[%s669 + $0x140] sm:$0xff]
    %v3824 = vld [vmem:[%s669 + $0x150] sm:$0xff]
    %v3825 = vld [vmem:[%s669 + $0x158] sm:$0xff]
    %v3826 = vld [vmem:[%s669 + $0x168] sm:$0xff]
    %v3827 = vld [vmem:[%s669 + $0x170] sm:$0xff]
    %v3828 = vld [vmem:[%s669 + $0x1b0] sm:$0xff]
    %v3829 = vld [vmem:[%s669 + $0x1b8] sm:$0xff]
    %v3830 = vld [vmem:[%s669 + $0x1c8] sm:$0xff]
    %v3831 = vld [vmem:[%s669 + $0x1d0] sm:$0xff]
    %v3832 = vld [vmem:[%s669 + $0x1e0] sm:$0xff]
    %v3833 = vld [vmem:[%s669 + $0x1e8] sm:$0xff]
    %v3834 = vld [vmem:[%s669 + $0x1f8] sm:$0xff]
    %v3835 = vld [vmem:[%s669 + $0x200] sm:$0xff]
    %v3836 = vld [vmem:[%s669 + $0x210] sm:$0xff]
    %v3837 = vld [vmem:[%s669 + $0x218] sm:$0xff]
    %v3838 = vld [vmem:[%s669 + $0x228] sm:$0xff]
    %v3839 = vld [vmem:[%s669 + $0x230] sm:$0xff]
    %v3840 = vld [vmem:[%s669 + $0x240] sm:$0xff]
    %v3841 = vld [vmem:[%s669 + $0x248] sm:$0xff]
    %v3842 = vld [vmem:[%s669 + $0x258] sm:$0xff]
    %v3843 = vld [vmem:[%s669 + $0x260] sm:$0xff]
    %v3844 = vld [vmem:[%s669 + $0x270] sm:$0xff]
    %v3845 = vld [vmem:[%s669 + $0x278] sm:$0xff]
    %v3846 = vld [vmem:[%s669 + $0x288] sm:$0xff]
    %v3847 = vld [vmem:[%s669 + $0x290] sm:$0xff]
    %v3848 = vld [vmem:[%s669 + $0x2a0] sm:$0xff]
    %v3849 = vld [vmem:[%s669 + $0x2a8] sm:$0xff]
    %v3850 = vld [vmem:[%s669 + $0x2b8] sm:$0xff]
    %v3851 = vld [vmem:[%s669 + $0x2c0] sm:$0xff]
    %v3852 = vld [vmem:[%s669 + $0x2d0] sm:$0xff]
    %v3853 = vld [vmem:[%s669 + $0x2d8] sm:$0xff]
    %v3854 = vld [vmem:[%s669 + $0x2e8] sm:$0xff]
    %v3855 = vld [vmem:[%s669 + $0x2f0] sm:$0xff]
    %v3856 = vld [vmem:[%s669 + $0x300] sm:$0xff]
    %v3857 = vld [vmem:[%s669 + $0x308] sm:$0xff]
    %v3858 = vld [vmem:[%s669 + $0x318] sm:$0xff]
    %v3859 = vld [vmem:[%s669 + $0x320] sm:$0xff]
    %v3860 = vld [vmem:[%s669 + $0x1] sm:$0xff]
    %v3861 = vld [vmem:[%s669 + $0x9] sm:$0xff]
    %v3862 = vld [vmem:[%s669 + $0x19] sm:$0xff]
    %v3863 = vld [vmem:[%s669 + $0x21] sm:$0xff]
    %v3864 = vld [vmem:[%s669 + $0x31] sm:$0xff]
    %v3865 = vld [vmem:[%s669 + $0x39] sm:$0xff]
    %v3866 = vld [vmem:[%s669 + $0x49] sm:$0xff]
    %v3867 = vld [vmem:[%s669 + $0x51] sm:$0xff]
    %v3868 = vld [vmem:[%s669 + $0x61] sm:$0xff]
    %v3869 = vld [vmem:[%s669 + $0x69] sm:$0xff]
    %v3870 = vld [vmem:[%s669 + $0x79] sm:$0xff]
    %v3871 = vld [vmem:[%s669 + $0x81] sm:$0xff]
    %v3872 = vld [vmem:[%s669 + $0x91] sm:$0xff]
    %v3873 = vld [vmem:[%s669 + $0x99] sm:$0xff]
    %v3874 = vld [vmem:[%s669 + $0xa9] sm:$0xff]
    %v3875 = vld [vmem:[%s669 + $0xb1] sm:$0xff]
    %v3876 = vld [vmem:[%s669 + $0xc1] sm:$0xff]
    %v3877 = vld [vmem:[%s669 + $0xc9] sm:$0xff]
    %v3878 = vld [vmem:[%s669 + $0xd9] sm:$0xff]
    %v3879 = vld [vmem:[%s669 + $0xe1] sm:$0xff]
    %v3880 = vld [vmem:[%s669 + $0xf1] sm:$0xff]
    %v3881 = vld [vmem:[%s669 + $0xf9] sm:$0xff]
    %v3882 = vld [vmem:[%s669 + $0x109] sm:$0xff]
    %v3883 = vld [vmem:[%s669 + $0x111] sm:$0xff]
    %v3884 = vld [vmem:[%s669 + $0x121] sm:$0xff]
    %v3885 = vld [vmem:[%s669 + $0x129] sm:$0xff]
    %v3886 = vld [vmem:[%s669 + $0x139] sm:$0xff]
    %v3887 = vld [vmem:[%s669 + $0x141] sm:$0xff]
    %v3888 = vld [vmem:[%s669 + $0x151] sm:$0xff]
    %v3889 = vld [vmem:[%s669 + $0x159] sm:$0xff]
    %v3890 = vld [vmem:[%s669 + $0x169] sm:$0xff]
    %v3891 = vld [vmem:[%s669 + $0x171] sm:$0xff]
    %v3892 = vld [vmem:[%s669 + $0x1b1] sm:$0xff]
    %v3893 = vld [vmem:[%s669 + $0x1b9] sm:$0xff]
    %v3894 = vld [vmem:[%s669 + $0x1c9] sm:$0xff]
    %v3895 = vld [vmem:[%s669 + $0x1d1] sm:$0xff]
    %v3896 = vld [vmem:[%s669 + $0x1e1] sm:$0xff]
    %v3897 = vld [vmem:[%s669 + $0x1e9] sm:$0xff]
    %v3898 = vld [vmem:[%s669 + $0x1f9] sm:$0xff]
    %v3899 = vld [vmem:[%s669 + $0x201] sm:$0xff]
    %v3900 = vld [vmem:[%s669 + $0x211] sm:$0xff]
    %v3901 = vld [vmem:[%s669 + $0x219] sm:$0xff]
    %v3902 = vld [vmem:[%s669 + $0x229] sm:$0xff]
    %v3903 = vld [vmem:[%s669 + $0x231] sm:$0xff]
    %v3904 = vld [vmem:[%s669 + $0x241] sm:$0xff]
    %v3905 = vld [vmem:[%s669 + $0x249] sm:$0xff]
    %v3906 = vld [vmem:[%s669 + $0x259] sm:$0xff]
    %v3907 = vld [vmem:[%s669 + $0x261] sm:$0xff]
    %v3908 = vld [vmem:[%s669 + $0x271] sm:$0xff]
    %v3909 = vld [vmem:[%s669 + $0x279] sm:$0xff]
    %v3910 = vld [vmem:[%s669 + $0x289] sm:$0xff]
    %v3911 = vld [vmem:[%s669 + $0x291] sm:$0xff]
    %v3912 = vld [vmem:[%s669 + $0x2a1] sm:$0xff]
    %v3913 = vld [vmem:[%s669 + $0x2a9] sm:$0xff]
    %v3914 = vld [vmem:[%s669 + $0x2b9] sm:$0xff]
    %v3915 = vld [vmem:[%s669 + $0x2c1] sm:$0xff]
    %v3916 = vld [vmem:[%s669 + $0x2d1] sm:$0xff]
    %v3917 = vld [vmem:[%s669 + $0x2d9] sm:$0xff]
    %v3918 = vld [vmem:[%s669 + $0x2e9] sm:$0xff]
    %v3919 = vld [vmem:[%s669 + $0x2f1] sm:$0xff]
    %v3920 = vld [vmem:[%s669 + $0x301] sm:$0xff]
    %v3921 = vld [vmem:[%s669 + $0x309] sm:$0xff]
    %v3922 = vld [vmem:[%s669 + $0x319] sm:$0xff]
    %v3923 = vld [vmem:[%s669 + $0x321] sm:$0xff]
    %v3924 = vld [vmem:[%s669 + $0x2] sm:$0xff]
    %v3925 = vld [vmem:[%s669 + $0xa] sm:$0xff]
    %v3926 = vld [vmem:[%s669 + $0x1a] sm:$0xff]
    %v3927 = vld [vmem:[%s669 + $0x22] sm:$0xff]
    %v3928 = vld [vmem:[%s669 + $0x32] sm:$0xff]
    %v3929 = vld [vmem:[%s669 + $0x3a] sm:$0xff]
    %v3930 = vld [vmem:[%s669 + $0x4a] sm:$0xff]
    %v3931 = vld [vmem:[%s669 + $0x52] sm:$0xff]
    %v3932 = vld [vmem:[%s669 + $0x62] sm:$0xff]
    %v3933 = vld [vmem:[%s669 + $0x6a] sm:$0xff]
    %v3934 = vld [vmem:[%s669 + $0x7a] sm:$0xff]
    %v3935 = vld [vmem:[%s669 + $0x82] sm:$0xff]
    %v3936 = vld [vmem:[%s669 + $0x92] sm:$0xff]
    %v3937 = vld [vmem:[%s669 + $0x9a] sm:$0xff]
    %v3938 = vld [vmem:[%s669 + $0xaa] sm:$0xff]
    %v3939 = vld [vmem:[%s669 + $0xb2] sm:$0xff]
    %v3940 = vld [vmem:[%s669 + $0xc2] sm:$0xff]
    %v3941 = vld [vmem:[%s669 + $0xca] sm:$0xff]
    %v3942 = vld [vmem:[%s669 + $0xda] sm:$0xff]
    %v3943 = vld [vmem:[%s669 + $0xe2] sm:$0xff]
    %v3944 = vld [vmem:[%s669 + $0xf2] sm:$0xff]
    %v3945 = vld [vmem:[%s669 + $0xfa] sm:$0xff]
    %v3946 = vld [vmem:[%s669 + $0x10a] sm:$0xff]
    %v3947 = vld [vmem:[%s669 + $0x112] sm:$0xff]
    %v3948 = vld [vmem:[%s669 + $0x122] sm:$0xff]
    %v3949 = vld [vmem:[%s669 + $0x12a] sm:$0xff]
    %v3950 = vld [vmem:[%s669 + $0x13a] sm:$0xff]
    %v3951 = vld [vmem:[%s669 + $0x142] sm:$0xff]
    %v3952 = vld [vmem:[%s669 + $0x152] sm:$0xff]
    %v3953 = vld [vmem:[%s669 + $0x15a] sm:$0xff]
    %v3954 = vld [vmem:[%s669 + $0x16a] sm:$0xff]
    %v3955 = vld [vmem:[%s669 + $0x172] sm:$0xff]
    %v3956 = vld [vmem:[%s669 + $0x1b2] sm:$0xff]
    %v3957 = vld [vmem:[%s669 + $0x1ba] sm:$0xff]
    %v3958 = vld [vmem:[%s669 + $0x1ca] sm:$0xff]
    %v3959 = vld [vmem:[%s669 + $0x1d2] sm:$0xff]
    %v3960 = vld [vmem:[%s669 + $0x1e2] sm:$0xff]
    %v3961 = vld [vmem:[%s669 + $0x1ea] sm:$0xff]
    %v3962 = vld [vmem:[%s669 + $0x1fa] sm:$0xff]
    %v3963 = vld [vmem:[%s669 + $0x202] sm:$0xff]
    %v3964 = vld [vmem:[%s669 + $0x212] sm:$0xff]
    %v3965 = vld [vmem:[%s669 + $0x21a] sm:$0xff]
    %v3966 = vld [vmem:[%s669 + $0x22a] sm:$0xff]
    %v3967 = vld [vmem:[%s669 + $0x232] sm:$0xff]
    %v3968 = vld [vmem:[%s669 + $0x242] sm:$0xff]
    %v3969 = vld [vmem:[%s669 + $0x24a] sm:$0xff]
    %v3970 = vld [vmem:[%s669 + $0x25a] sm:$0xff]
    %v3971 = vld [vmem:[%s669 + $0x262] sm:$0xff]
    %v3972 = vld [vmem:[%s669 + $0x272] sm:$0xff]
    %v3973 = vld [vmem:[%s669 + $0x27a] sm:$0xff]
    %v3974 = vld [vmem:[%s669 + $0x28a] sm:$0xff]
    %v3975 = vld [vmem:[%s669 + $0x292] sm:$0xff]
    %v3976 = vld [vmem:[%s669 + $0x2a2] sm:$0xff]
    %v3977 = vld [vmem:[%s669 + $0x2aa] sm:$0xff]
    %v3978 = vld [vmem:[%s669 + $0x2ba] sm:$0xff]
    %v3979 = vld [vmem:[%s669 + $0x2c2] sm:$0xff]
    %v3980 = vld [vmem:[%s669 + $0x2d2] sm:$0xff]
    %v3981 = vld [vmem:[%s669 + $0x2da] sm:$0xff]
    %v3982 = vld [vmem:[%s669 + $0x2ea] sm:$0xff]
    %v3983 = vld [vmem:[%s669 + $0x2f2] sm:$0xff]
    %v3984 = vld [vmem:[%s669 + $0x302] sm:$0xff]
    %v3985 = vld [vmem:[%s669 + $0x30a] sm:$0xff]
    %v3986 = vld [vmem:[%s669 + $0x31a] sm:$0xff]
    %v3987 = vld [vmem:[%s669 + $0x322] sm:$0xff]
    %v3988 = vld [vmem:[#allocation9] sm:$0xff]
    %v3989 = vld [vmem:[#allocation9 + $0x8] sm:$0xff]
    %v3990 = vld [vmem:[#allocation9 + $0x10] sm:$0xff]
    %v3991 = vld [vmem:[#allocation9 + $0x18] sm:$0xff]
    %v3992 = vld [vmem:[#allocation9 + $0x20] sm:$0xff]
    %v3993 = vld [vmem:[#allocation9 + $0x28] sm:$0xff]
    %v3994 = vld [vmem:[#allocation9 + $0x30] sm:$0xff]
    %v3995 = vld [vmem:[#allocation9 + $0x38] sm:$0xff]
    %v3996 = vld [vmem:[#allocation9 + $0x40] sm:$0xff]
    %v3997 = vld [vmem:[#allocation9 + $0x48] sm:$0xff]
    %v3998 = vld [vmem:[#allocation9 + $0x50] sm:$0xff]
    %v3999 = vld [vmem:[#allocation9 + $0x58] sm:$0xff]
    %v4000 = vld [vmem:[#allocation9 + $0x60] sm:$0xff]
    %v4001 = vld [vmem:[#allocation9 + $0x68] sm:$0xff]
    %v4002 = vld [vmem:[#allocation9 + $0x70] sm:$0xff]
    %v4003 = vld [vmem:[#allocation9 + $0x78] sm:$0xff]
    %v4004 = vld [vmem:[#allocation9 + $0x80] sm:$0xff]
    %v4005 = vld [vmem:[#allocation9 + $0x88] sm:$0xff]
    %v4006 = vld [vmem:[#allocation9 + $0x90] sm:$0xff]
    %v4007 = vld [vmem:[#allocation9 + $0x98] sm:$0xff]
    %v4008 = vld [vmem:[#allocation9 + $0xa0] sm:$0xff]
    %v4009 = vld [vmem:[#allocation9 + $0xa8] sm:$0xff]
    %v4010 = vld [vmem:[#allocation9 + $0xb0] sm:$0xff]
    %v4011 = vld [vmem:[#allocation9 + $0xb8] sm:$0xff]
    %v4012 = vld [vmem:[#allocation9 + $0xc0] sm:$0xff]
    %v4013 = vld [vmem:[#allocation9 + $0xc8] sm:$0xff]
    %v4014 = vld [vmem:[#allocation9 + $0xd0] sm:$0xff]
    %v4015 = vld [vmem:[#allocation9 + $0xd8] sm:$0xff]
    %v4016 = vld [vmem:[#allocation9 + $0xe0] sm:$0xff]
    %v4017 = vld [vmem:[#allocation9 + $0xe8] sm:$0xff]
    %v4018 = vld [vmem:[#allocation9 + $0xf0] sm:$0xff]
    %v4019 = vld [vmem:[#allocation9 + $0xf8] sm:$0xff]
    %v4020 = vld [vmem:[#allocation9 + $0x100] sm:$0xff]
    %v4021 = vld [vmem:[#allocation9 + $0x108] sm:$0xff]
    %v4022 = vld [vmem:[#allocation9 + $0x110] sm:$0xff]
    %v4023 = vld [vmem:[#allocation9 + $0x118] sm:$0xff]
    %v4024 = vld [vmem:[#allocation9 + $0x120] sm:$0xff]
    %v4025 = vld [vmem:[#allocation9 + $0x128] sm:$0xff]
    %v4026 = vld [vmem:[#allocation9 + $0x130] sm:$0xff]
    %v4027 = vld [vmem:[#allocation9 + $0x138] sm:$0xff]
    %v4028 = vld [vmem:[#allocation9 + $0x140] sm:$0xff]
    %v4029 = vld [vmem:[#allocation9 + $0x148] sm:$0xff]
    %v4030 = vld [vmem:[#allocation9 + $0x150] sm:$0xff]
    %v4031 = vld [vmem:[#allocation9 + $0x158] sm:$0xff]
    %v4032 = vld [vmem:[#allocation9 + $0x160] sm:$0xff]
    %v4033 = vld [vmem:[#allocation9 + $0x168] sm:$0xff]
    %v4034 = vld [vmem:[#allocation9 + $0x170] sm:$0xff]
    %v4035 = vld [vmem:[#allocation9 + $0x178] sm:$0xff]
    %v4036 = vld [vmem:[#allocation9 + $0x180] sm:$0xff]
    %v4037 = vld [vmem:[#allocation9 + $0x188] sm:$0xff]
    %v4038 = vld [vmem:[#allocation9 + $0x190] sm:$0xff]
    %v4039 = vld [vmem:[#allocation9 + $0x198] sm:$0xff]
    %v4040 = vld [vmem:[#allocation9 + $0x1a0] sm:$0xff]
    %v4041 = vld [vmem:[#allocation9 + $0x1a8] sm:$0xff]
    %v4042 = vld [vmem:[#allocation9 + $0x1b0] sm:$0xff]
    %v4043 = vld [vmem:[#allocation9 + $0x1b8] sm:$0xff]
    %v4044 = vld [vmem:[#allocation9 + $0x1c0] sm:$0xff]
    %v4045 = vld [vmem:[#allocation9 + $0x1c8] sm:$0xff]
    %v4046 = vld [vmem:[#allocation9 + $0x1d0] sm:$0xff]
    %v4047 = vld [vmem:[#allocation9 + $0x1d8] sm:$0xff]
    %v4048 = vld [vmem:[#allocation9 + $0x1e0] sm:$0xff]
    %v4049 = vld [vmem:[#allocation9 + $0x1e8] sm:$0xff]
    %v4050 = vld [vmem:[#allocation9 + $0x1f0] sm:$0xff]
    %v4051 = vld [vmem:[#allocation9 + $0x1f8] sm:$0xff]
    %v4052 = vld [vmem:[#allocation9 + $0x200] sm:$0xff]
    %v4053 = vld [vmem:[#allocation9 + $0x208] sm:$0xff]
    %v4054 = vld [vmem:[#allocation9 + $0x210] sm:$0xff]
    %v4055 = vld [vmem:[#allocation9 + $0x218] sm:$0xff]
    %v4056 = vld [vmem:[#allocation9 + $0x220] sm:$0xff]
    %v4057 = vld [vmem:[#allocation9 + $0x228] sm:$0xff]
    %v4058 = vld [vmem:[#allocation9 + $0x230] sm:$0xff]
    %v4059 = vld [vmem:[#allocation9 + $0x238] sm:$0xff]
    %v4060 = vld [vmem:[#allocation9 + $0x240] sm:$0xff]
    %v4061 = vld [vmem:[#allocation9 + $0x248] sm:$0xff]
    %v4062 = vld [vmem:[#allocation9 + $0x250] sm:$0xff]
    %v4063 = vld [vmem:[#allocation9 + $0x258] sm:$0xff]
    %v4064 = vld [vmem:[#allocation9 + $0x260] sm:$0xff]
    %v4065 = vld [vmem:[#allocation9 + $0x268] sm:$0xff]
    %v4066 = vld [vmem:[#allocation9 + $0x270] sm:$0xff]
    %v4067 = vld [vmem:[#allocation9 + $0x278] sm:$0xff]
    %v4068 = vld [vmem:[#allocation9 + $0x280] sm:$0xff]
    %v4069 = vld [vmem:[#allocation9 + $0x288] sm:$0xff]
    %v4070 = vld [vmem:[#allocation9 + $0x290] sm:$0xff]
    %v4071 = vld [vmem:[#allocation9 + $0x298] sm:$0xff]
    %v4072 = vld [vmem:[#allocation9 + $0x2a0] sm:$0xff]
    %v4073 = vld [vmem:[#allocation9 + $0x2a8] sm:$0xff]
    %v4074 = vld [vmem:[#allocation9 + $0x2b0] sm:$0xff]
    %v4075 = vld [vmem:[#allocation9 + $0x2b8] sm:$0xff]
    %v4076 = vld [vmem:[#allocation9 + $0x2c0] sm:$0xff]
    %v4077 = vld [vmem:[#allocation9 + $0x2c8] sm:$0xff]
    %v4078 = vld [vmem:[#allocation9 + $0x2d0] sm:$0xff]
    %v4079 = vld [vmem:[#allocation9 + $0x2d8] sm:$0xff]
    %v4080 = vld [vmem:[#allocation9 + $0x2e0] sm:$0xff]
    %v4081 = vld [vmem:[#allocation9 + $0x2e8] sm:$0xff]
    %v4082 = vld [vmem:[#allocation9 + $0x2f0] sm:$0xff]
    %v4083 = vld [vmem:[#allocation9 + $0x2f8] sm:$0xff]
    %v4084 = vld [vmem:[#allocation9 + $0x300] sm:$0xff]
    %v4085 = vld [vmem:[#allocation9 + $0x308] sm:$0xff]
    %v4086 = vld [vmem:[#allocation9 + $0x310] sm:$0xff]
    %v4087 = vld [vmem:[#allocation9 + $0x318] sm:$0xff]
    %v4088 = vld [vmem:[#allocation9 + $0x320] sm:$0xff]
    %v4089 = vld [vmem:[#allocation9 + $0x328] sm:$0xff]
    %v4090 = vld [vmem:[#allocation9 + $0x330] sm:$0xff]
    %v4091 = vld [vmem:[#allocation9 + $0x338] sm:$0xff]
    %v4092 = vld [vmem:[#allocation9 + $0x340] sm:$0xff]
    %v4093 = vld [vmem:[#allocation9 + $0x348] sm:$0xff]
    %v4094 = vld [vmem:[#allocation9 + $0x350] sm:$0xff]
    %v4095 = vld [vmem:[#allocation9 + $0x358] sm:$0xff]
    %v4096 = vld [vmem:[#allocation9 + $0x360] sm:$0xff]
    %v4097 = vld [vmem:[#allocation9 + $0x368] sm:$0xff]
    %v4098 = vld [vmem:[#allocation9 + $0x370] sm:$0xff]
    %v4099 = vld [vmem:[#allocation9 + $0x378] sm:$0xff]
    %v4100 = vld [vmem:[#allocation9 + $0x380] sm:$0xff]
    %v4101 = vld [vmem:[#allocation9 + $0x388] sm:$0xff]
    %v4102 = vld [vmem:[#allocation9 + $0x390] sm:$0xff]
    %v4103 = vld [vmem:[#allocation9 + $0x398] sm:$0xff]
    %v4104 = vld [vmem:[#allocation9 + $0x3a0] sm:$0xff]
    %v4105 = vld [vmem:[#allocation9 + $0x3a8] sm:$0xff]
    %v4106 = vld [vmem:[#allocation9 + $0x3b0] sm:$0xff]
    %v4107 = vld [vmem:[#allocation9 + $0x3b8] sm:$0xff]
    %v4108 = vld [vmem:[#allocation9 + $0x3c0] sm:$0xff]
    %v4109 = vld [vmem:[#allocation9 + $0x3c8] sm:$0xff]
    %v4110 = vld [vmem:[#allocation9 + $0x3d0] sm:$0xff]
    %v4111 = vld [vmem:[#allocation9 + $0x3d8] sm:$0xff]
    %v4112 = vld [vmem:[#allocation9 + $0x3e0] sm:$0xff]
    %v4113 = vld [vmem:[#allocation9 + $0x3e8] sm:$0xff]
    %v4114 = vld [vmem:[#allocation9 + $0x3f0] sm:$0xff]
    %v4115 = vld [vmem:[#allocation9 + $0x3f8] sm:$0xff]
    %v4116 = vld [vmem:[#allocation9 + $0x400] sm:$0xff]
    %v4117 = vld [vmem:[#allocation9 + $0x408] sm:$0xff]
    %v4118 = vld [vmem:[#allocation9 + $0x410] sm:$0xff]
    %v4119 = vld [vmem:[#allocation9 + $0x418] sm:$0xff]
    %v4120 = vld [vmem:[#allocation9 + $0x420] sm:$0xff]
    %v4121 = vld [vmem:[#allocation9 + $0x428] sm:$0xff]
    %v4122 = vld [vmem:[#allocation9 + $0x430] sm:$0xff]
    %v4123 = vld [vmem:[#allocation9 + $0x438] sm:$0xff]
    %v4124 = vld [vmem:[#allocation9 + $0x440] sm:$0xff]
    %v4125 = vld [vmem:[#allocation9 + $0x448] sm:$0xff]
    %v4126 = vld [vmem:[#allocation9 + $0x450] sm:$0xff]
    %v4127 = vld [vmem:[#allocation9 + $0x458] sm:$0xff]
    %v4128 = vld [vmem:[#allocation9 + $0x460] sm:$0xff]
    %v4129 = vld [vmem:[#allocation9 + $0x468] sm:$0xff]
    %v4130 = vld [vmem:[#allocation9 + $0x470] sm:$0xff]
    %v4131 = vld [vmem:[#allocation9 + $0x478] sm:$0xff]
    %4132 = vmatprep.subr.mxu0 0.0
    %4133 = vmatpush1.msra.mxu0 %v4003
    %4134 = vmatprep.subr.mxu0 0.0
    %4135 = vmatpush1.msra.mxu0 %v4002
    %4136 = vmatprep.subr.mxu0 0.0
    %4137 = vmatpush1.msra.mxu0 %v4001
    %4138 = vmatprep.subr.mxu0 0.0
    %4139 = vmatpush1.msra.mxu0 %v4000
    %4140 = vmatprep.subr.mxu0 0.0
    %4141 = vmatpush1.msra.mxu0 %v3999
    %4142 = vmatprep.subr.mxu0 0.0
    %4143 = vmatpush1.msra.mxu0 %v3998
    %4144 = vmatprep.subr.mxu0 0.0
    %4145 = vmatpush1.msra.mxu0 %v3997
    %4146 = vmatprep.subr.mxu0 0.0
    %4147 = vmatpush1.msra.mxu0 %v3996
    %4148 = vmatprep.subr.mxu0 0.0
    %4149 = vmatpush1.msra.mxu0 %v3995
    %4150 = vmatprep.subr.mxu0 0.0
    %4151 = vmatpush1.msra.mxu0 %v3994
    %4152 = vmatprep.subr.mxu0 0.0
    %4153 = vmatpush1.msra.mxu0 %v3993
    %4154 = vmatprep.subr.mxu0 0.0
    %4155 = vmatpush1.msra.mxu0 %v3992
    %4156 = vmatprep.subr.mxu0 0.0
    %4157 = vmatpush1.msra.mxu0 %v3991
    %4158 = vmatprep.subr.mxu0 0.0
    %4159 = vmatpush1.msra.mxu0 %v3990
    %4160 = vmatprep.subr.mxu0 0.0
    %4161 = vmatpush1.msra.mxu0 %v3989
    %4162 = vmatprep.subr.mxu0 0.0
    %4163 = vmatpush1.msra.mxu0 %v3988
    %4164 = vmatprep.subr.mxu0 0.0
    %4165 = vmatpush2.msra.mxu0 %v4019
    %4166 = vmatprep.subr.mxu0 0.0
    %4167 = vmatpush2.msra.mxu0 %v4018
    %4168 = vmatprep.subr.mxu0 0.0
    %4169 = vmatpush2.msra.mxu0 %v4017
    %4170 = vmatprep.subr.mxu0 0.0
    %4171 = vmatpush2.msra.mxu0 %v4016
    %4172 = vmatprep.subr.mxu0 0.0
    %4173 = vmatpush2.msra.mxu0 %v4015
    %4174 = vmatprep.subr.mxu0 0.0
    %4175 = vmatpush2.msra.mxu0 %v4014
    %4176 = vmatprep.subr.mxu0 0.0
    %4177 = vmatpush2.msra.mxu0 %v4013
    %4178 = vmatprep.subr.mxu0 0.0
    %4179 = vmatpush2.msra.mxu0 %v4012
    %4180 = vmatprep.subr.mxu0 0.0
    %4181 = vmatpush2.msra.mxu0 %v4011
    %4182 = vmatprep.subr.mxu0 0.0
    %4183 = vmatpush2.msra.mxu0 %v4010
    %4184 = vmatprep.subr.mxu0 0.0
    %4185 = vmatpush2.msra.mxu0 %v4009
    %4186 = vmatprep.subr.mxu0 0.0
    %4187 = vmatpush2.msra.mxu0 %v4008
    %4188 = vmatprep.subr.mxu0 0.0
    %4189 = vmatpush2.msra.mxu0 %v4007
    %4190 = vmatprep.subr.mxu0 0.0
    %4191 = vmatpush2.msra.mxu0 %v4006
    %4192 = vmatprep.subr.mxu0 0.0
    %4193 = vmatpush2.msra.mxu0 %v4005
    %4194 = vmatprep.subr.mxu0 0.0
    %4195 = vmatpush2.msra.mxu0 %v4004
    %4196 = vmatprep.mubr.f32.mxu0 %v3476
    %4197 = vmatmul.mubr.f32.gmra.mxu0 %v3412
    %v4198 = vpop.f32.mrf.mxu0
    %v4199 = vadd.f32 0.0, %v4198
    %v4200 = vpop.f32.mrf.mxu0
    %4201 = vmatprep.mubr.f32.mxu0 %v3477
    %4202 = vmatmul.mubr.f32.gmra.mxu0 %v3413
    %v4203 = vpop.f32.mrf.mxu0
    %v4204 = vadd.f32 0.0, %v4203
    %v4205 = vpop.f32.mrf.mxu0
    %4206 = vmatprep.mubr.f32.mxu0 %v3478
    %4207 = vmatmul.mubr.f32.gmra.mxu0 %v3414
    %v4208 = vpop.f32.mrf.mxu0
    %v4209 = vadd.f32 0.0, %v4208
    %v4210 = vpop.f32.mrf.mxu0
    %4211 = vmatprep.mubr.f32.mxu0 %v3479
    %4212 = vmatmul.mubr.f32.gmra.mxu0 %v3415
    %v4213 = vpop.f32.mrf.mxu0
    %v4214 = vadd.f32 0.0, %v4213
    %v4215 = vpop.f32.mrf.mxu0
    %4216 = vmatprep.mubr.f32.mxu0 %v3480
    %4217 = vmatmul.mubr.f32.gmra.mxu0 %v3416
    %v4218 = vpop.f32.mrf.mxu0
    %v4219 = vadd.f32 0.0, %v4218
    %v4220 = vpop.f32.mrf.mxu0
    %4221 = vmatprep.mubr.f32.mxu0 %v3481
    %4222 = vmatmul.mubr.f32.gmra.mxu0 %v3417
    %v4223 = vpop.f32.mrf.mxu0
    %v4224 = vadd.f32 0.0, %v4223
    %v4225 = vpop.f32.mrf.mxu0
    %4226 = vmatprep.mubr.f32.mxu0 %v3482
    %4227 = vmatmul.mubr.f32.gmra.mxu0 %v3418
    %v4228 = vpop.f32.mrf.mxu0
    %v4229 = vadd.f32 0.0, %v4228
    %v4230 = vpop.f32.mrf.mxu0
    %4231 = vmatprep.mubr.f32.mxu0 %v3483
    %4232 = vmatmul.mubr.f32.gmra.mxu0 %v3419
    %v4233 = vpop.f32.mrf.mxu0
    %v4234 = vadd.f32 0.0, %v4233
    %v4235 = vpop.f32.mrf.mxu0
    %4236 = vmatprep.mubr.f32.mxu0 %v3484
    %4237 = vmatmul.mubr.f32.gmra.mxu0 %v3420
    %v4238 = vpop.f32.mrf.mxu0
    %v4239 = vadd.f32 0.0, %v4238
    %v4240 = vpop.f32.mrf.mxu0
    %4241 = vmatprep.mubr.f32.mxu0 %v3485
    %4242 = vmatmul.mubr.f32.gmra.mxu0 %v3421
    %v4243 = vpop.f32.mrf.mxu0
    %v4244 = vadd.f32 0.0, %v4243
    %v4245 = vpop.f32.mrf.mxu0
    %4246 = vmatprep.mubr.f32.mxu0 %v3486
    %4247 = vmatmul.mubr.f32.gmra.mxu0 %v3422
    %v4248 = vpop.f32.mrf.mxu0
    %v4249 = vadd.f32 0.0, %v4248
    %v4250 = vpop.f32.mrf.mxu0
    %4251 = vmatprep.mubr.f32.mxu0 %v3487
    %4252 = vmatmul.mubr.f32.gmra.mxu0 %v3423
    %v4253 = vpop.f32.mrf.mxu0
    %v4254 = vadd.f32 0.0, %v4253
    %v4255 = vpop.f32.mrf.mxu0
    %4256 = vmatprep.mubr.f32.mxu0 %v3488
    %4257 = vmatmul.mubr.f32.gmra.mxu0 %v3424
    %v4258 = vpop.f32.mrf.mxu0
    %v4259 = vadd.f32 0.0, %v4258
    %v4260 = vpop.f32.mrf.mxu0
    %4261 = vmatprep.mubr.f32.mxu0 %v3489
    %4262 = vmatmul.mubr.f32.gmra.mxu0 %v3425
    %v4263 = vpop.f32.mrf.mxu0
    %v4264 = vadd.f32 0.0, %v4263
    %v4265 = vpop.f32.mrf.mxu0
    %4266 = vmatprep.mubr.f32.mxu0 %v3490
    %4267 = vmatmul.mubr.f32.gmra.mxu0 %v3426
    %v4268 = vpop.f32.mrf.mxu0
    %v4269 = vadd.f32 0.0, %v4268
    %v4270 = vpop.f32.mrf.mxu0
    %4271 = vmatprep.mubr.f32.mxu0 %v3491
    %4272 = vmatmul.mubr.f32.gmra.mxu0 %v3427
    %v4273 = vpop.f32.mrf.mxu0
    %v4274 = vadd.f32 0.0, %v4273
    %v4275 = vpop.f32.mrf.mxu0
    %4276 = vmatprep.mubr.f32.mxu0 %v3492
    %4277 = vmatmul.mubr.f32.gmra.mxu0 %v3428
    %v4278 = vpop.f32.mrf.mxu0
    %v4279 = vadd.f32 0.0, %v4278
    %v4280 = vpop.f32.mrf.mxu0
    %4281 = vmatprep.mubr.f32.mxu0 %v3493
    %4282 = vmatmul.mubr.f32.gmra.mxu0 %v3429
    %v4283 = vpop.f32.mrf.mxu0
    %v4284 = vadd.f32 0.0, %v4283
    %v4285 = vpop.f32.mrf.mxu0
    %4286 = vmatprep.mubr.f32.mxu0 %v3494
    %4287 = vmatmul.mubr.f32.gmra.mxu0 %v3430
    %v4288 = vpop.f32.mrf.mxu0
    %v4289 = vadd.f32 0.0, %v4288
    %v4290 = vpop.f32.mrf.mxu0
    %4291 = vmatprep.mubr.f32.mxu0 %v3495
    %4292 = vmatmul.mubr.f32.gmra.mxu0 %v3431
    %v4293 = vpop.f32.mrf.mxu0
    %v4294 = vadd.f32 0.0, %v4293
    %v4295 = vpop.f32.mrf.mxu0
    %4296 = vmatprep.mubr.f32.mxu0 %v3496
    %4297 = vmatmul.mubr.f32.gmra.mxu0 %v3432
    %v4298 = vpop.f32.mrf.mxu0
    %v4299 = vadd.f32 0.0, %v4298
    %v4300 = vpop.f32.mrf.mxu0
    %4301 = vmatprep.mubr.f32.mxu0 %v3497
    %4302 = vmatmul.mubr.f32.gmra.mxu0 %v3433
    %v4303 = vpop.f32.mrf.mxu0
    %v4304 = vadd.f32 0.0, %v4303
    %v4305 = vpop.f32.mrf.mxu0
    %4306 = vmatprep.mubr.f32.mxu0 %v3498
    %4307 = vmatmul.mubr.f32.gmra.mxu0 %v3434
    %v4308 = vpop.f32.mrf.mxu0
    %v4309 = vadd.f32 0.0, %v4308
    %v4310 = vpop.f32.mrf.mxu0
    %4311 = vmatprep.mubr.f32.mxu0 %v3499
    %4312 = vmatmul.mubr.f32.gmra.mxu0 %v3435
    %v4313 = vpop.f32.mrf.mxu0
    %v4314 = vadd.f32 0.0, %v4313
    %v4315 = vpop.f32.mrf.mxu0
    %4316 = vmatprep.mubr.f32.mxu0 %v3500
    %4317 = vmatmul.mubr.f32.gmra.mxu0 %v3436
    %v4318 = vpop.f32.mrf.mxu0
    %v4319 = vadd.f32 0.0, %v4318
    %v4320 = vpop.f32.mrf.mxu0
    %4321 = vmatprep.mubr.f32.mxu0 %v3501
    %4322 = vmatmul.mubr.f32.gmra.mxu0 %v3437
    %v4323 = vpop.f32.mrf.mxu0
    %v4324 = vadd.f32 0.0, %v4323
    %v4325 = vpop.f32.mrf.mxu0
    %4326 = vmatprep.mubr.f32.mxu0 %v3502
    %4327 = vmatmul.mubr.f32.gmra.mxu0 %v3438
    %v4328 = vpop.f32.mrf.mxu0
    %v4329 = vadd.f32 0.0, %v4328
    %v4330 = vpop.f32.mrf.mxu0
    %4331 = vmatprep.mubr.f32.mxu0 %v3503
    %4332 = vmatmul.mubr.f32.gmra.mxu0 %v3439
    %v4333 = vpop.f32.mrf.mxu0
    %v4334 = vadd.f32 0.0, %v4333
    %v4335 = vpop.f32.mrf.mxu0
    %4336 = vmatprep.mubr.f32.mxu0 %v3504
    %4337 = vmatmul.mubr.f32.gmra.mxu0 %v3440
    %v4338 = vpop.f32.mrf.mxu0
    %v4339 = vadd.f32 0.0, %v4338
    %v4340 = vpop.f32.mrf.mxu0
    %4341 = vmatprep.mubr.f32.mxu0 %v3505
    %4342 = vmatmul.mubr.f32.gmra.mxu0 %v3441
    %v4343 = vpop.f32.mrf.mxu0
    %v4344 = vadd.f32 0.0, %v4343
    %v4345 = vpop.f32.mrf.mxu0
    %4346 = vmatprep.mubr.f32.mxu0 %v3506
    %4347 = vmatmul.mubr.f32.gmra.mxu0 %v3442
    %v4348 = vpop.f32.mrf.mxu0
    %v4349 = vadd.f32 0.0, %v4348
    %v4350 = vpop.f32.mrf.mxu0
    %4351 = vmatprep.mubr.f32.mxu0 %v3507
    %4352 = vmatmul.mubr.f32.gmra.mxu0 %v3443
    %v4353 = vpop.f32.mrf.mxu0
    %v4354 = vadd.f32 0.0, %v4353
    %v4355 = vpop.f32.mrf.mxu0
    %4356 = vmatprep.mubr.f32.mxu0 %v3508
    %4357 = vmatmul.mubr.f32.gmra.mxu0 %v3444
    %v4358 = vpop.f32.mrf.mxu0
    %v4359 = vadd.f32 0.0, %v4358
    %v4360 = vpop.f32.mrf.mxu0
    %4361 = vmatprep.mubr.f32.mxu0 %v3509
    %4362 = vmatmul.mubr.f32.gmra.mxu0 %v3445
    %v4363 = vpop.f32.mrf.mxu0
    %v4364 = vadd.f32 0.0, %v4363
    %v4365 = vpop.f32.mrf.mxu0
    %4366 = vmatprep.mubr.f32.mxu0 %v3510
    %4367 = vmatmul.mubr.f32.gmra.mxu0 %v3446
    %v4368 = vpop.f32.mrf.mxu0
    %v4369 = vadd.f32 0.0, %v4368
    %v4370 = vpop.f32.mrf.mxu0
    %4371 = vmatprep.mubr.f32.mxu0 %v3511
    %4372 = vmatmul.mubr.f32.gmra.mxu0 %v3447
    %v4373 = vpop.f32.mrf.mxu0
    %v4374 = vadd.f32 0.0, %v4373
    %v4375 = vpop.f32.mrf.mxu0
    %4376 = vmatprep.mubr.f32.mxu0 %v3512
    %4377 = vmatmul.mubr.f32.gmra.mxu0 %v3448
    %v4378 = vpop.f32.mrf.mxu0
    %v4379 = vadd.f32 0.0, %v4378
    %v4380 = vpop.f32.mrf.mxu0
    %4381 = vmatprep.mubr.f32.mxu0 %v3513
    %4382 = vmatmul.mubr.f32.gmra.mxu0 %v3449
    %v4383 = vpop.f32.mrf.mxu0
    %v4384 = vadd.f32 0.0, %v4383
    %v4385 = vpop.f32.mrf.mxu0
    %4386 = vmatprep.mubr.f32.mxu0 %v3514
    %4387 = vmatmul.mubr.f32.gmra.mxu0 %v3450
    %v4388 = vpop.f32.mrf.mxu0
    %v4389 = vadd.f32 0.0, %v4388
    %v4390 = vpop.f32.mrf.mxu0
    %4391 = vmatprep.mubr.f32.mxu0 %v3515
    %4392 = vmatmul.mubr.f32.gmra.mxu0 %v3451
    %v4393 = vpop.f32.mrf.mxu0
    %v4394 = vadd.f32 0.0, %v4393
    %v4395 = vpop.f32.mrf.mxu0
    %4396 = vmatprep.mubr.f32.mxu0 %v3516
    %4397 = vmatmul.mubr.f32.gmra.mxu0 %v3452
    %v4398 = vpop.f32.mrf.mxu0
    %v4399 = vadd.f32 0.0, %v4398
    %v4400 = vpop.f32.mrf.mxu0
    %4401 = vmatprep.mubr.f32.mxu0 %v3517
    %4402 = vmatmul.mubr.f32.gmra.mxu0 %v3453
    %v4403 = vpop.f32.mrf.mxu0
    %v4404 = vadd.f32 0.0, %v4403
    %v4405 = vpop.f32.mrf.mxu0
    %4406 = vmatprep.mubr.f32.mxu0 %v3518
    %4407 = vmatmul.mubr.f32.gmra.mxu0 %v3454
    %v4408 = vpop.f32.mrf.mxu0
    %v4409 = vadd.f32 0.0, %v4408
    %v4410 = vpop.f32.mrf.mxu0
    %4411 = vmatprep.mubr.f32.mxu0 %v3519
    %4412 = vmatmul.mubr.f32.gmra.mxu0 %v3455
    %v4413 = vpop.f32.mrf.mxu0
    %v4414 = vadd.f32 0.0, %v4413
    %v4415 = vpop.f32.mrf.mxu0
    %4416 = vmatprep.mubr.f32.mxu0 %v3520
    %4417 = vmatmul.mubr.f32.gmra.mxu0 %v3456
    %v4418 = vpop.f32.mrf.mxu0
    %v4419 = vadd.f32 0.0, %v4418
    %v4420 = vpop.f32.mrf.mxu0
    %4421 = vmatprep.mubr.f32.mxu0 %v3521
    %4422 = vmatmul.mubr.f32.gmra.mxu0 %v3457
    %v4423 = vpop.f32.mrf.mxu0
    %v4424 = vadd.f32 0.0, %v4423
    %v4425 = vpop.f32.mrf.mxu0
    %4426 = vmatprep.mubr.f32.mxu0 %v3522
    %4427 = vmatmul.mubr.f32.gmra.mxu0 %v3458
    %v4428 = vpop.f32.mrf.mxu0
    %v4429 = vadd.f32 0.0, %v4428
    %v4430 = vpop.f32.mrf.mxu0
    %4431 = vmatprep.mubr.f32.mxu0 %v3523
    %4432 = vmatmul.mubr.f32.gmra.mxu0 %v3459
    %v4433 = vpop.f32.mrf.mxu0
    %v4434 = vadd.f32 0.0, %v4433
    %v4435 = vpop.f32.mrf.mxu0
    %4436 = vmatprep.mubr.f32.mxu0 %v3524
    %4437 = vmatmul.mubr.f32.gmra.mxu0 %v3460
    %v4438 = vpop.f32.mrf.mxu0
    %v4439 = vadd.f32 0.0, %v4438
    %v4440 = vpop.f32.mrf.mxu0
    %4441 = vmatprep.mubr.f32.mxu0 %v3525
    %4442 = vmatmul.mubr.f32.gmra.mxu0 %v3461
    %v4443 = vpop.f32.mrf.mxu0
    %v4444 = vadd.f32 0.0, %v4443
    %v4445 = vpop.f32.mrf.mxu0
    %4446 = vmatprep.mubr.f32.mxu0 %v3526
    %4447 = vmatmul.mubr.f32.gmra.mxu0 %v3462
    %v4448 = vpop.f32.mrf.mxu0
    %v4449 = vadd.f32 0.0, %v4448
    %v4450 = vpop.f32.mrf.mxu0
    %4451 = vmatprep.mubr.f32.mxu0 %v3527
    %4452 = vmatmul.mubr.f32.gmra.mxu0 %v3463
    %v4453 = vpop.f32.mrf.mxu0
    %v4454 = vadd.f32 0.0, %v4453
    %v4455 = vpop.f32.mrf.mxu0
    %4456 = vmatprep.mubr.f32.mxu0 %v3528
    %4457 = vmatmul.mubr.f32.gmra.mxu0 %v3464
    %v4458 = vpop.f32.mrf.mxu0
    %v4459 = vadd.f32 0.0, %v4458
    %v4460 = vpop.f32.mrf.mxu0
    %4461 = vmatprep.mubr.f32.mxu0 %v3529
    %4462 = vmatmul.mubr.f32.gmra.mxu0 %v3465
    %v4463 = vpop.f32.mrf.mxu0
    %v4464 = vadd.f32 0.0, %v4463
    %v4465 = vpop.f32.mrf.mxu0
    %4466 = vmatprep.mubr.f32.mxu0 %v3530
    %4467 = vmatmul.mubr.f32.gmra.mxu0 %v3466
    %v4468 = vpop.f32.mrf.mxu0
    %v4469 = vadd.f32 0.0, %v4468
    %v4470 = vpop.f32.mrf.mxu0
    %4471 = vmatprep.mubr.f32.mxu0 %v3531
    %4472 = vmatmul.mubr.f32.gmra.mxu0 %v3467
    %v4473 = vpop.f32.mrf.mxu0
    %v4474 = vadd.f32 0.0, %v4473
    %v4475 = vpop.f32.mrf.mxu0
    %4476 = vmatprep.mubr.f32.mxu0 %v3532
    %4477 = vmatmul.mubr.f32.gmra.mxu0 %v3468
    %v4478 = vpop.f32.mrf.mxu0
    %v4479 = vadd.f32 0.0, %v4478
    %v4480 = vpop.f32.mrf.mxu0
    %4481 = vmatprep.mubr.f32.mxu0 %v3533
    %4482 = vmatmul.mubr.f32.gmra.mxu0 %v3469
    %v4483 = vpop.f32.mrf.mxu0
    %v4484 = vadd.f32 0.0, %v4483
    %v4485 = vpop.f32.mrf.mxu0
    %4486 = vmatprep.mubr.f32.mxu0 %v3534
    %4487 = vmatmul.mubr.f32.gmra.mxu0 %v3470
    %v4488 = vpop.f32.mrf.mxu0
    %v4489 = vadd.f32 0.0, %v4488
    %v4490 = vpop.f32.mrf.mxu0
    %4491 = vmatprep.mubr.f32.mxu0 %v3535
    %4492 = vmatmul.mubr.f32.gmra.mxu0 %v3471
    %v4493 = vpop.f32.mrf.mxu0
    %v4494 = vadd.f32 0.0, %v4493
    %v4495 = vpop.f32.mrf.mxu0
    %4496 = vmatprep.mubr.f32.mxu0 %v3536
    %4497 = vmatmul.mubr.f32.gmra.mxu0 %v3472
    %v4498 = vpop.f32.mrf.mxu0
    %v4499 = vadd.f32 0.0, %v4498
    %v4500 = vpop.f32.mrf.mxu0
    %4501 = vmatprep.mubr.f32.mxu0 %v3537
    %4502 = vmatmul.mubr.f32.gmra.mxu0 %v3473
    %v4503 = vpop.f32.mrf.mxu0
    %v4504 = vadd.f32 0.0, %v4503
    %v4505 = vpop.f32.mrf.mxu0
    %4506 = vmatprep.mubr.f32.mxu0 %v3538
    %4507 = vmatmul.mubr.f32.gmra.mxu0 %v3474
    %v4508 = vpop.f32.mrf.mxu0
    %v4509 = vadd.f32 0.0, %v4508
    %v4510 = vpop.f32.mrf.mxu0
    %4511 = vmatprep.mubr.f32.mxu0 %v3539
    %4512 = vmatmul.mubr.f32.gmra.mxu0 %v3475
    %v4513 = vpop.f32.mrf.mxu0
    %v4514 = vadd.f32 0.0, %v4513
    %v4515 = vpop.f32.mrf.mxu0
    %4516 = vdwg.mxu0
    %4517 = vmatprep.subr.mxu0 0.0
    %4518 = vmatpush1.msra.mxu0 %v4035
    %4519 = vmatprep.subr.mxu0 0.0
    %4520 = vmatpush1.msra.mxu0 %v4034
    %4521 = vmatprep.subr.mxu0 0.0
    %4522 = vmatpush1.msra.mxu0 %v4033
    %4523 = vmatprep.subr.mxu0 0.0
    %4524 = vmatpush1.msra.mxu0 %v4032
    %4525 = vmatprep.subr.mxu0 0.0
    %4526 = vmatpush1.msra.mxu0 %v4031
    %4527 = vmatprep.subr.mxu0 0.0
    %4528 = vmatpush1.msra.mxu0 %v4030
    %4529 = vmatprep.subr.mxu0 0.0
    %4530 = vmatpush1.msra.mxu0 %v4029
    %4531 = vmatprep.subr.mxu0 0.0
    %4532 = vmatpush1.msra.mxu0 %v4028
    %4533 = vmatprep.subr.mxu0 0.0
    %4534 = vmatpush1.msra.mxu0 %v4027
    %4535 = vmatprep.subr.mxu0 0.0
    %4536 = vmatpush1.msra.mxu0 %v4026
    %4537 = vmatprep.subr.mxu0 0.0
    %4538 = vmatpush1.msra.mxu0 %v4025
    %4539 = vmatprep.subr.mxu0 0.0
    %4540 = vmatpush1.msra.mxu0 %v4024
    %4541 = vmatprep.subr.mxu0 0.0
    %4542 = vmatpush1.msra.mxu0 %v4023
    %4543 = vmatprep.subr.mxu0 0.0
    %4544 = vmatpush1.msra.mxu0 %v4022
    %4545 = vmatprep.subr.mxu0 0.0
    %4546 = vmatpush1.msra.mxu0 %v4021
    %4547 = vmatprep.subr.mxu0 0.0
    %4548 = vmatpush1.msra.mxu0 %v4020
    %4549 = vmatprep.subr.mxu0 0.0
    %4550 = vmatpush2.msra.mxu0 %v4051
    %4551 = vmatprep.subr.mxu0 0.0
    %4552 = vmatpush2.msra.mxu0 %v4050
    %4553 = vmatprep.subr.mxu0 0.0
    %4554 = vmatpush2.msra.mxu0 %v4049
    %4555 = vmatprep.subr.mxu0 0.0
    %4556 = vmatpush2.msra.mxu0 %v4048
    %4557 = vmatprep.subr.mxu0 0.0
    %4558 = vmatpush2.msra.mxu0 %v4047
    %4559 = vmatprep.subr.mxu0 0.0
    %4560 = vmatpush2.msra.mxu0 %v4046
    %4561 = vmatprep.subr.mxu0 0.0
    %4562 = vmatpush2.msra.mxu0 %v4045
    %4563 = vmatprep.subr.mxu0 0.0
    %4564 = vmatpush2.msra.mxu0 %v4044
    %4565 = vmatprep.subr.mxu0 0.0
    %4566 = vmatpush2.msra.mxu0 %v4043
    %4567 = vmatprep.subr.mxu0 0.0
    %4568 = vmatpush2.msra.mxu0 %v4042
    %4569 = vmatprep.subr.mxu0 0.0
    %4570 = vmatpush2.msra.mxu0 %v4041
    %4571 = vmatprep.subr.mxu0 0.0
    %4572 = vmatpush2.msra.mxu0 %v4040
    %4573 = vmatprep.subr.mxu0 0.0
    %4574 = vmatpush2.msra.mxu0 %v4039
    %4575 = vmatprep.subr.mxu0 0.0
    %4576 = vmatpush2.msra.mxu0 %v4038
    %4577 = vmatprep.subr.mxu0 0.0
    %4578 = vmatpush2.msra.mxu0 %v4037
    %4579 = vmatprep.subr.mxu0 0.0
    %4580 = vmatpush2.msra.mxu0 %v4036
    %4581 = vmatprep.mubr.f32.mxu0 %v3604
    %4582 = vmatmul.mubr.f32.gmra.mxu0 %v3540
    %v4583 = vpop.f32.mrf.mxu0
    %v4584 = vadd.f32 %v4199, %v4583
    %v4585 = vpop.f32.mrf.mxu0
    %4586 = vmatprep.mubr.f32.mxu0 %v3605
    %4587 = vmatmul.mubr.f32.gmra.mxu0 %v3541
    %v4588 = vpop.f32.mrf.mxu0
    %v4589 = vadd.f32 %v4204, %v4588
    %v4590 = vpop.f32.mrf.mxu0
    %4591 = vmatprep.mubr.f32.mxu0 %v3606
    %4592 = vmatmul.mubr.f32.gmra.mxu0 %v3542
    %v4593 = vpop.f32.mrf.mxu0
    %v4594 = vadd.f32 %v4209, %v4593
    %v4595 = vpop.f32.mrf.mxu0
    %4596 = vmatprep.mubr.f32.mxu0 %v3607
    %4597 = vmatmul.mubr.f32.gmra.mxu0 %v3543
    %v4598 = vpop.f32.mrf.mxu0
    %v4599 = vadd.f32 %v4214, %v4598
    %v4600 = vpop.f32.mrf.mxu0
    %4601 = vmatprep.mubr.f32.mxu0 %v3608
    %4602 = vmatmul.mubr.f32.gmra.mxu0 %v3544
    %v4603 = vpop.f32.mrf.mxu0
    %v4604 = vadd.f32 %v4219, %v4603
    %v4605 = vpop.f32.mrf.mxu0
    %4606 = vmatprep.mubr.f32.mxu0 %v3609
    %4607 = vmatmul.mubr.f32.gmra.mxu0 %v3545
    %v4608 = vpop.f32.mrf.mxu0
    %v4609 = vadd.f32 %v4224, %v4608
    %v4610 = vpop.f32.mrf.mxu0
    %4611 = vmatprep.mubr.f32.mxu0 %v3610
    %4612 = vmatmul.mubr.f32.gmra.mxu0 %v3546
    %v4613 = vpop.f32.mrf.mxu0
    %v4614 = vadd.f32 %v4229, %v4613
    %v4615 = vpop.f32.mrf.mxu0
    %4616 = vmatprep.mubr.f32.mxu0 %v3611
    %4617 = vmatmul.mubr.f32.gmra.mxu0 %v3547
    %v4618 = vpop.f32.mrf.mxu0
    %v4619 = vadd.f32 %v4234, %v4618
    %v4620 = vpop.f32.mrf.mxu0
    %4621 = vmatprep.mubr.f32.mxu0 %v3612
    %4622 = vmatmul.mubr.f32.gmra.mxu0 %v3548
    %v4623 = vpop.f32.mrf.mxu0
    %v4624 = vadd.f32 %v4239, %v4623
    %v4625 = vpop.f32.mrf.mxu0
    %4626 = vmatprep.mubr.f32.mxu0 %v3613
    %4627 = vmatmul.mubr.f32.gmra.mxu0 %v3549
    %v4628 = vpop.f32.mrf.mxu0
    %v4629 = vadd.f32 %v4244, %v4628
    %v4630 = vpop.f32.mrf.mxu0
    %4631 = vmatprep.mubr.f32.mxu0 %v3614
    %4632 = vmatmul.mubr.f32.gmra.mxu0 %v3550
    %v4633 = vpop.f32.mrf.mxu0
    %v4634 = vadd.f32 %v4249, %v4633
    %v4635 = vpop.f32.mrf.mxu0
    %4636 = vmatprep.mubr.f32.mxu0 %v3615
    %4637 = vmatmul.mubr.f32.gmra.mxu0 %v3551
    %v4638 = vpop.f32.mrf.mxu0
    %v4639 = vadd.f32 %v4254, %v4638
    %v4640 = vpop.f32.mrf.mxu0
    %4641 = vmatprep.mubr.f32.mxu0 %v3616
    %4642 = vmatmul.mubr.f32.gmra.mxu0 %v3552
    %v4643 = vpop.f32.mrf.mxu0
    %v4644 = vadd.f32 %v4259, %v4643
    %v4645 = vpop.f32.mrf.mxu0
    %4646 = vmatprep.mubr.f32.mxu0 %v3617
    %4647 = vmatmul.mubr.f32.gmra.mxu0 %v3553
    %v4648 = vpop.f32.mrf.mxu0
    %v4649 = vadd.f32 %v4264, %v4648
    %v4650 = vpop.f32.mrf.mxu0
    %4651 = vmatprep.mubr.f32.mxu0 %v3618
    %4652 = vmatmul.mubr.f32.gmra.mxu0 %v3554
    %v4653 = vpop.f32.mrf.mxu0
    %v4654 = vadd.f32 %v4269, %v4653
    %v4655 = vpop.f32.mrf.mxu0
    %4656 = vmatprep.mubr.f32.mxu0 %v3619
    %4657 = vmatmul.mubr.f32.gmra.mxu0 %v3555
    %v4658 = vpop.f32.mrf.mxu0
    %v4659 = vadd.f32 %v4274, %v4658
    %v4660 = vpop.f32.mrf.mxu0
    %4661 = vmatprep.mubr.f32.mxu0 %v3620
    %4662 = vmatmul.mubr.f32.gmra.mxu0 %v3556
    %v4663 = vpop.f32.mrf.mxu0
    %v4664 = vadd.f32 %v4279, %v4663
    %v4665 = vpop.f32.mrf.mxu0
    %4666 = vmatprep.mubr.f32.mxu0 %v3621
    %4667 = vmatmul.mubr.f32.gmra.mxu0 %v3557
    %v4668 = vpop.f32.mrf.mxu0
    %v4669 = vadd.f32 %v4284, %v4668
    %v4670 = vpop.f32.mrf.mxu0
    %4671 = vmatprep.mubr.f32.mxu0 %v3622
    %4672 = vmatmul.mubr.f32.gmra.mxu0 %v3558
    %v4673 = vpop.f32.mrf.mxu0
    %v4674 = vadd.f32 %v4289, %v4673
    %v4675 = vpop.f32.mrf.mxu0
    %4676 = vmatprep.mubr.f32.mxu0 %v3623
    %4677 = vmatmul.mubr.f32.gmra.mxu0 %v3559
    %v4678 = vpop.f32.mrf.mxu0
    %v4679 = vadd.f32 %v4294, %v4678
    %v4680 = vpop.f32.mrf.mxu0
    %4681 = vmatprep.mubr.f32.mxu0 %v3624
    %4682 = vmatmul.mubr.f32.gmra.mxu0 %v3560
    %v4683 = vpop.f32.mrf.mxu0
    %v4684 = vadd.f32 %v4299, %v4683
    %v4685 = vpop.f32.mrf.mxu0
    %4686 = vmatprep.mubr.f32.mxu0 %v3625
    %4687 = vmatmul.mubr.f32.gmra.mxu0 %v3561
    %v4688 = vpop.f32.mrf.mxu0
    %v4689 = vadd.f32 %v4304, %v4688
    %v4690 = vpop.f32.mrf.mxu0
    %4691 = vmatprep.mubr.f32.mxu0 %v3626
    %4692 = vmatmul.mubr.f32.gmra.mxu0 %v3562
    %v4693 = vpop.f32.mrf.mxu0
    %v4694 = vadd.f32 %v4309, %v4693
    %v4695 = vpop.f32.mrf.mxu0
    %4696 = vmatprep.mubr.f32.mxu0 %v3627
    %4697 = vmatmul.mubr.f32.gmra.mxu0 %v3563
    %v4698 = vpop.f32.mrf.mxu0
    %v4699 = vadd.f32 %v4314, %v4698
    %v4700 = vpop.f32.mrf.mxu0
    %4701 = vmatprep.mubr.f32.mxu0 %v3628
    %4702 = vmatmul.mubr.f32.gmra.mxu0 %v3564
    %v4703 = vpop.f32.mrf.mxu0
    %v4704 = vadd.f32 %v4319, %v4703
    %v4705 = vpop.f32.mrf.mxu0
    %4706 = vmatprep.mubr.f32.mxu0 %v3629
    %4707 = vmatmul.mubr.f32.gmra.mxu0 %v3565
    %v4708 = vpop.f32.mrf.mxu0
    %v4709 = vadd.f32 %v4324, %v4708
    %v4710 = vpop.f32.mrf.mxu0
    %4711 = vmatprep.mubr.f32.mxu0 %v3630
    %4712 = vmatmul.mubr.f32.gmra.mxu0 %v3566
    %v4713 = vpop.f32.mrf.mxu0
    %v4714 = vadd.f32 %v4329, %v4713
    %v4715 = vpop.f32.mrf.mxu0
    %4716 = vmatprep.mubr.f32.mxu0 %v3631
    %4717 = vmatmul.mubr.f32.gmra.mxu0 %v3567
    %v4718 = vpop.f32.mrf.mxu0
    %v4719 = vadd.f32 %v4334, %v4718
    %v4720 = vpop.f32.mrf.mxu0
    %4721 = vmatprep.mubr.f32.mxu0 %v3632
    %4722 = vmatmul.mubr.f32.gmra.mxu0 %v3568
    %v4723 = vpop.f32.mrf.mxu0
    %v4724 = vadd.f32 %v4339, %v4723
    %v4725 = vpop.f32.mrf.mxu0
    %4726 = vmatprep.mubr.f32.mxu0 %v3633
    %4727 = vmatmul.mubr.f32.gmra.mxu0 %v3569
    %v4728 = vpop.f32.mrf.mxu0
    %v4729 = vadd.f32 %v4344, %v4728
    %v4730 = vpop.f32.mrf.mxu0
    %4731 = vmatprep.mubr.f32.mxu0 %v3634
    %4732 = vmatmul.mubr.f32.gmra.mxu0 %v3570
    %v4733 = vpop.f32.mrf.mxu0
    %v4734 = vadd.f32 %v4349, %v4733
    %v4735 = vpop.f32.mrf.mxu0
    %4736 = vmatprep.mubr.f32.mxu0 %v3635
    %4737 = vmatmul.mubr.f32.gmra.mxu0 %v3571
    %v4738 = vpop.f32.mrf.mxu0
    %v4739 = vadd.f32 %v4354, %v4738
    %v4740 = vpop.f32.mrf.mxu0
    %4741 = vmatprep.mubr.f32.mxu0 %v3636
    %4742 = vmatmul.mubr.f32.gmra.mxu0 %v3572
    %v4743 = vpop.f32.mrf.mxu0
    %v4744 = vadd.f32 %v4359, %v4743
    %v4745 = vpop.f32.mrf.mxu0
    %4746 = vmatprep.mubr.f32.mxu0 %v3637
    %4747 = vmatmul.mubr.f32.gmra.mxu0 %v3573
    %v4748 = vpop.f32.mrf.mxu0
    %v4749 = vadd.f32 %v4364, %v4748
    %v4750 = vpop.f32.mrf.mxu0
    %4751 = vmatprep.mubr.f32.mxu0 %v3638
    %4752 = vmatmul.mubr.f32.gmra.mxu0 %v3574
    %v4753 = vpop.f32.mrf.mxu0
    %v4754 = vadd.f32 %v4369, %v4753
    %v4755 = vpop.f32.mrf.mxu0
    %4756 = vmatprep.mubr.f32.mxu0 %v3639
    %4757 = vmatmul.mubr.f32.gmra.mxu0 %v3575
    %v4758 = vpop.f32.mrf.mxu0
    %v4759 = vadd.f32 %v4374, %v4758
    %v4760 = vpop.f32.mrf.mxu0
    %4761 = vmatprep.mubr.f32.mxu0 %v3640
    %4762 = vmatmul.mubr.f32.gmra.mxu0 %v3576
    %v4763 = vpop.f32.mrf.mxu0
    %v4764 = vadd.f32 %v4379, %v4763
    %v4765 = vpop.f32.mrf.mxu0
    %4766 = vmatprep.mubr.f32.mxu0 %v3641
    %4767 = vmatmul.mubr.f32.gmra.mxu0 %v3577
    %v4768 = vpop.f32.mrf.mxu0
    %v4769 = vadd.f32 %v4384, %v4768
    %v4770 = vpop.f32.mrf.mxu0
    %4771 = vmatprep.mubr.f32.mxu0 %v3642
    %4772 = vmatmul.mubr.f32.gmra.mxu0 %v3578
    %v4773 = vpop.f32.mrf.mxu0
    %v4774 = vadd.f32 %v4389, %v4773
    %v4775 = vpop.f32.mrf.mxu0
    %4776 = vmatprep.mubr.f32.mxu0 %v3643
    %4777 = vmatmul.mubr.f32.gmra.mxu0 %v3579
    %v4778 = vpop.f32.mrf.mxu0
    %v4779 = vadd.f32 %v4394, %v4778
    %v4780 = vpop.f32.mrf.mxu0
    %4781 = vmatprep.mubr.f32.mxu0 %v3644
    %4782 = vmatmul.mubr.f32.gmra.mxu0 %v3580
    %v4783 = vpop.f32.mrf.mxu0
    %v4784 = vadd.f32 %v4399, %v4783
    %v4785 = vpop.f32.mrf.mxu0
    %4786 = vmatprep.mubr.f32.mxu0 %v3645
    %4787 = vmatmul.mubr.f32.gmra.mxu0 %v3581
    %v4788 = vpop.f32.mrf.mxu0
    %v4789 = vadd.f32 %v4404, %v4788
    %v4790 = vpop.f32.mrf.mxu0
    %4791 = vmatprep.mubr.f32.mxu0 %v3646
    %4792 = vmatmul.mubr.f32.gmra.mxu0 %v3582
    %v4793 = vpop.f32.mrf.mxu0
    %v4794 = vadd.f32 %v4409, %v4793
    %v4795 = vpop.f32.mrf.mxu0
    %4796 = vmatprep.mubr.f32.mxu0 %v3647
    %4797 = vmatmul.mubr.f32.gmra.mxu0 %v3583
    %v4798 = vpop.f32.mrf.mxu0
    %v4799 = vadd.f32 %v4414, %v4798
    %v4800 = vpop.f32.mrf.mxu0
    %4801 = vmatprep.mubr.f32.mxu0 %v3648
    %4802 = vmatmul.mubr.f32.gmra.mxu0 %v3584
    %v4803 = vpop.f32.mrf.mxu0
    %v4804 = vadd.f32 %v4419, %v4803
    %v4805 = vpop.f32.mrf.mxu0
    %4806 = vmatprep.mubr.f32.mxu0 %v3649
    %4807 = vmatmul.mubr.f32.gmra.mxu0 %v3585
    %v4808 = vpop.f32.mrf.mxu0
    %v4809 = vadd.f32 %v4424, %v4808
    %v4810 = vpop.f32.mrf.mxu0
    %4811 = vmatprep.mubr.f32.mxu0 %v3650
    %4812 = vmatmul.mubr.f32.gmra.mxu0 %v3586
    %v4813 = vpop.f32.mrf.mxu0
    %v4814 = vadd.f32 %v4429, %v4813
    %v4815 = vpop.f32.mrf.mxu0
    %4816 = vmatprep.mubr.f32.mxu0 %v3651
    %4817 = vmatmul.mubr.f32.gmra.mxu0 %v3587
    %v4818 = vpop.f32.mrf.mxu0
    %v4819 = vadd.f32 %v4434, %v4818
    %v4820 = vpop.f32.mrf.mxu0
    %4821 = vmatprep.mubr.f32.mxu0 %v3652
    %4822 = vmatmul.mubr.f32.gmra.mxu0 %v3588
    %v4823 = vpop.f32.mrf.mxu0
    %v4824 = vadd.f32 %v4439, %v4823
    %v4825 = vpop.f32.mrf.mxu0
    %4826 = vmatprep.mubr.f32.mxu0 %v3653
    %4827 = vmatmul.mubr.f32.gmra.mxu0 %v3589
    %v4828 = vpop.f32.mrf.mxu0
    %v4829 = vadd.f32 %v4444, %v4828
    %v4830 = vpop.f32.mrf.mxu0
    %4831 = vmatprep.mubr.f32.mxu0 %v3654
    %4832 = vmatmul.mubr.f32.gmra.mxu0 %v3590
    %v4833 = vpop.f32.mrf.mxu0
    %v4834 = vadd.f32 %v4449, %v4833
    %v4835 = vpop.f32.mrf.mxu0
    %4836 = vmatprep.mubr.f32.mxu0 %v3655
    %4837 = vmatmul.mubr.f32.gmra.mxu0 %v3591
    %v4838 = vpop.f32.mrf.mxu0
    %v4839 = vadd.f32 %v4454, %v4838
    %v4840 = vpop.f32.mrf.mxu0
    %4841 = vmatprep.mubr.f32.mxu0 %v3656
    %4842 = vmatmul.mubr.f32.gmra.mxu0 %v3592
    %v4843 = vpop.f32.mrf.mxu0
    %v4844 = vadd.f32 %v4459, %v4843
    %v4845 = vpop.f32.mrf.mxu0
    %4846 = vmatprep.mubr.f32.mxu0 %v3657
    %4847 = vmatmul.mubr.f32.gmra.mxu0 %v3593
    %v4848 = vpop.f32.mrf.mxu0
    %v4849 = vadd.f32 %v4464, %v4848
    %v4850 = vpop.f32.mrf.mxu0
    %4851 = vmatprep.mubr.f32.mxu0 %v3658
    %4852 = vmatmul.mubr.f32.gmra.mxu0 %v3594
    %v4853 = vpop.f32.mrf.mxu0
    %v4854 = vadd.f32 %v4469, %v4853
    %v4855 = vpop.f32.mrf.mxu0
    %4856 = vmatprep.mubr.f32.mxu0 %v3659
    %4857 = vmatmul.mubr.f32.gmra.mxu0 %v3595
    %v4858 = vpop.f32.mrf.mxu0
    %v4859 = vadd.f32 %v4474, %v4858
    %v4860 = vpop.f32.mrf.mxu0
    %4861 = vmatprep.mubr.f32.mxu0 %v3660
    %4862 = vmatmul.mubr.f32.gmra.mxu0 %v3596
    %v4863 = vpop.f32.mrf.mxu0
    %v4864 = vadd.f32 %v4479, %v4863
    %v4865 = vpop.f32.mrf.mxu0
    %4866 = vmatprep.mubr.f32.mxu0 %v3661
    %4867 = vmatmul.mubr.f32.gmra.mxu0 %v3597
    %v4868 = vpop.f32.mrf.mxu0
    %v4869 = vadd.f32 %v4484, %v4868
    %v4870 = vpop.f32.mrf.mxu0
    %4871 = vmatprep.mubr.f32.mxu0 %v3662
    %4872 = vmatmul.mubr.f32.gmra.mxu0 %v3598
    %v4873 = vpop.f32.mrf.mxu0
    %v4874 = vadd.f32 %v4489, %v4873
    %v4875 = vpop.f32.mrf.mxu0
    %4876 = vmatprep.mubr.f32.mxu0 %v3663
    %4877 = vmatmul.mubr.f32.gmra.mxu0 %v3599
    %v4878 = vpop.f32.mrf.mxu0
    %v4879 = vadd.f32 %v4494, %v4878
    %v4880 = vpop.f32.mrf.mxu0
    %4881 = vmatprep.mubr.f32.mxu0 %v3664
    %4882 = vmatmul.mubr.f32.gmra.mxu0 %v3600
    %v4883 = vpop.f32.mrf.mxu0
    %v4884 = vadd.f32 %v4499, %v4883
    %v4885 = vpop.f32.mrf.mxu0
    %4886 = vmatprep.mubr.f32.mxu0 %v3665
    %4887 = vmatmul.mubr.f32.gmra.mxu0 %v3601
    %v4888 = vpop.f32.mrf.mxu0
    %v4889 = vadd.f32 %v4504, %v4888
    %v4890 = vpop.f32.mrf.mxu0
    %4891 = vmatprep.mubr.f32.mxu0 %v3666
    %4892 = vmatmul.mubr.f32.gmra.mxu0 %v3602
    %v4893 = vpop.f32.mrf.mxu0
    %v4894 = vadd.f32 %v4509, %v4893
    %v4895 = vpop.f32.mrf.mxu0
    %4896 = vmatprep.mubr.f32.mxu0 %v3667
    %4897 = vmatmul.mubr.f32.gmra.mxu0 %v3603
    %v4898 = vpop.f32.mrf.mxu0
    %v4899 = vadd.f32 %v4514, %v4898
    %v4900 = vpop.f32.mrf.mxu0
    %4901 = vdwg.mxu0
    %4902 = vmatprep.subr.mxu0 0.0
    %4903 = vmatpush1.msra.mxu0 %v4067
    %4904 = vmatprep.subr.mxu0 0.0
    %4905 = vmatpush1.msra.mxu0 %v4066
    %4906 = vmatprep.subr.mxu0 0.0
    %4907 = vmatpush1.msra.mxu0 %v4065
    %4908 = vmatprep.subr.mxu0 0.0
    %4909 = vmatpush1.msra.mxu0 %v4064
    %4910 = vmatprep.subr.mxu0 0.0
    %4911 = vmatpush1.msra.mxu0 %v4063
    %4912 = vmatprep.subr.mxu0 0.0
    %4913 = vmatpush1.msra.mxu0 %v4062
    %4914 = vmatprep.subr.mxu0 0.0
    %4915 = vmatpush1.msra.mxu0 %v4061
    %4916 = vmatprep.subr.mxu0 0.0
    %4917 = vmatpush1.msra.mxu0 %v4060
    %4918 = vmatprep.subr.mxu0 0.0
    %4919 = vmatpush1.msra.mxu0 %v4059
    %4920 = vmatprep.subr.mxu0 0.0
    %4921 = vmatpush1.msra.mxu0 %v4058
    %4922 = vmatprep.subr.mxu0 0.0
    %4923 = vmatpush1.msra.mxu0 %v4057
    %4924 = vmatprep.subr.mxu0 0.0
    %4925 = vmatpush1.msra.mxu0 %v4056
    %4926 = vmatprep.subr.mxu0 0.0
    %4927 = vmatpush1.msra.mxu0 %v4055
    %4928 = vmatprep.subr.mxu0 0.0
    %4929 = vmatpush1.msra.mxu0 %v4054
    %4930 = vmatprep.subr.mxu0 0.0
    %4931 = vmatpush1.msra.mxu0 %v4053
    %4932 = vmatprep.subr.mxu0 0.0
    %4933 = vmatpush1.msra.mxu0 %v4052
    %4934 = vmatprep.subr.mxu0 0.0
    %4935 = vmatpush2.msra.mxu0 %v4083
    %4936 = vmatprep.subr.mxu0 0.0
    %4937 = vmatpush2.msra.mxu0 %v4082
    %4938 = vmatprep.subr.mxu0 0.0
    %4939 = vmatpush2.msra.mxu0 %v4081
    %4940 = vmatprep.subr.mxu0 0.0
    %4941 = vmatpush2.msra.mxu0 %v4080
    %4942 = vmatprep.subr.mxu0 0.0
    %4943 = vmatpush2.msra.mxu0 %v4079
    %4944 = vmatprep.subr.mxu0 0.0
    %4945 = vmatpush2.msra.mxu0 %v4078
    %4946 = vmatprep.subr.mxu0 0.0
    %4947 = vmatpush2.msra.mxu0 %v4077
    %4948 = vmatprep.subr.mxu0 0.0
    %4949 = vmatpush2.msra.mxu0 %v4076
    %4950 = vmatprep.subr.mxu0 0.0
    %4951 = vmatpush2.msra.mxu0 %v4075
    %4952 = vmatprep.subr.mxu0 0.0
    %4953 = vmatpush2.msra.mxu0 %v4074
    %4954 = vmatprep.subr.mxu0 0.0
    %4955 = vmatpush2.msra.mxu0 %v4073
    %4956 = vmatprep.subr.mxu0 0.0
    %4957 = vmatpush2.msra.mxu0 %v4072
    %4958 = vmatprep.subr.mxu0 0.0
    %4959 = vmatpush2.msra.mxu0 %v4071
    %4960 = vmatprep.subr.mxu0 0.0
    %4961 = vmatpush2.msra.mxu0 %v4070
    %4962 = vmatprep.subr.mxu0 0.0
    %4963 = vmatpush2.msra.mxu0 %v4069
    %4964 = vmatprep.subr.mxu0 0.0
    %4965 = vmatpush2.msra.mxu0 %v4068
    %4966 = vmatprep.mubr.f32.mxu0 %v3732
    %4967 = vmatmul.mubr.f32.gmra.mxu0 %v3668
    %v4968 = vpop.f32.mrf.mxu0
    %v4969 = vadd.f32 %v4584, %v4968
    %v4970 = vpop.f32.mrf.mxu0
    %4971 = vmatprep.mubr.f32.mxu0 %v3733
    %4972 = vmatmul.mubr.f32.gmra.mxu0 %v3669
    %v4973 = vpop.f32.mrf.mxu0
    %v4974 = vadd.f32 %v4589, %v4973
    %v4975 = vpop.f32.mrf.mxu0
    %4976 = vmatprep.mubr.f32.mxu0 %v3734
    %4977 = vmatmul.mubr.f32.gmra.mxu0 %v3670
    %v4978 = vpop.f32.mrf.mxu0
    %v4979 = vadd.f32 %v4594, %v4978
    %v4980 = vpop.f32.mrf.mxu0
    %4981 = vmatprep.mubr.f32.mxu0 %v3735
    %4982 = vmatmul.mubr.f32.gmra.mxu0 %v3671
    %v4983 = vpop.f32.mrf.mxu0
    %v4984 = vadd.f32 %v4599, %v4983
    %v4985 = vpop.f32.mrf.mxu0
    %4986 = vmatprep.mubr.f32.mxu0 %v3736
    %4987 = vmatmul.mubr.f32.gmra.mxu0 %v3672
    %v4988 = vpop.f32.mrf.mxu0
    %v4989 = vadd.f32 %v4604, %v4988
    %v4990 = vpop.f32.mrf.mxu0
    %4991 = vmatprep.mubr.f32.mxu0 %v3737
    %4992 = vmatmul.mubr.f32.gmra.mxu0 %v3673
    %v4993 = vpop.f32.mrf.mxu0
    %v4994 = vadd.f32 %v4609, %v4993
    %v4995 = vpop.f32.mrf.mxu0
    %4996 = vmatprep.mubr.f32.mxu0 %v3738
    %4997 = vmatmul.mubr.f32.gmra.mxu0 %v3674
    %v4998 = vpop.f32.mrf.mxu0
    %v4999 = vadd.f32 %v4614, %v4998
    %v5000 = vpop.f32.mrf.mxu0
    %5001 = vmatprep.mubr.f32.mxu0 %v3739
    %5002 = vmatmul.mubr.f32.gmra.mxu0 %v3675
    %v5003 = vpop.f32.mrf.mxu0
    %v5004 = vadd.f32 %v4619, %v5003
    %v5005 = vpop.f32.mrf.mxu0
    %5006 = vmatprep.mubr.f32.mxu0 %v3740
    %5007 = vmatmul.mubr.f32.gmra.mxu0 %v3676
    %v5008 = vpop.f32.mrf.mxu0
    %v5009 = vadd.f32 %v4624, %v5008
    %v5010 = vpop.f32.mrf.mxu0
    %5011 = vmatprep.mubr.f32.mxu0 %v3741
    %5012 = vmatmul.mubr.f32.gmra.mxu0 %v3677
    %v5013 = vpop.f32.mrf.mxu0
    %v5014 = vadd.f32 %v4629, %v5013
    %v5015 = vpop.f32.mrf.mxu0
    %5016 = vmatprep.mubr.f32.mxu0 %v3742
    %5017 = vmatmul.mubr.f32.gmra.mxu0 %v3678
    %v5018 = vpop.f32.mrf.mxu0
    %v5019 = vadd.f32 %v4634, %v5018
    %v5020 = vpop.f32.mrf.mxu0
    %5021 = vmatprep.mubr.f32.mxu0 %v3743
    %5022 = vmatmul.mubr.f32.gmra.mxu0 %v3679
    %v5023 = vpop.f32.mrf.mxu0
    %v5024 = vadd.f32 %v4639, %v5023
    %v5025 = vpop.f32.mrf.mxu0
    %5026 = vmatprep.mubr.f32.mxu0 %v3744
    %5027 = vmatmul.mubr.f32.gmra.mxu0 %v3680
    %v5028 = vpop.f32.mrf.mxu0
    %v5029 = vadd.f32 %v4644, %v5028
    %v5030 = vpop.f32.mrf.mxu0
    %5031 = vmatprep.mubr.f32.mxu0 %v3745
    %5032 = vmatmul.mubr.f32.gmra.mxu0 %v3681
    %v5033 = vpop.f32.mrf.mxu0
    %v5034 = vadd.f32 %v4649, %v5033
    %v5035 = vpop.f32.mrf.mxu0
    %5036 = vmatprep.mubr.f32.mxu0 %v3746
    %5037 = vmatmul.mubr.f32.gmra.mxu0 %v3682
    %v5038 = vpop.f32.mrf.mxu0
    %v5039 = vadd.f32 %v4654, %v5038
    %v5040 = vpop.f32.mrf.mxu0
    %5041 = vmatprep.mubr.f32.mxu0 %v3747
    %5042 = vmatmul.mubr.f32.gmra.mxu0 %v3683
    %v5043 = vpop.f32.mrf.mxu0
    %v5044 = vadd.f32 %v4659, %v5043
    %v5045 = vpop.f32.mrf.mxu0
    %5046 = vmatprep.mubr.f32.mxu0 %v3748
    %5047 = vmatmul.mubr.f32.gmra.mxu0 %v3684
    %v5048 = vpop.f32.mrf.mxu0
    %v5049 = vadd.f32 %v4664, %v5048
    %v5050 = vpop.f32.mrf.mxu0
    %5051 = vmatprep.mubr.f32.mxu0 %v3749
    %5052 = vmatmul.mubr.f32.gmra.mxu0 %v3685
    %v5053 = vpop.f32.mrf.mxu0
    %v5054 = vadd.f32 %v4669, %v5053
    %v5055 = vpop.f32.mrf.mxu0
    %5056 = vmatprep.mubr.f32.mxu0 %v3750
    %5057 = vmatmul.mubr.f32.gmra.mxu0 %v3686
    %v5058 = vpop.f32.mrf.mxu0
    %v5059 = vadd.f32 %v4674, %v5058
    %v5060 = vpop.f32.mrf.mxu0
    %5061 = vmatprep.mubr.f32.mxu0 %v3751
    %5062 = vmatmul.mubr.f32.gmra.mxu0 %v3687
    %v5063 = vpop.f32.mrf.mxu0
    %v5064 = vadd.f32 %v4679, %v5063
    %v5065 = vpop.f32.mrf.mxu0
    %5066 = vmatprep.mubr.f32.mxu0 %v3752
    %5067 = vmatmul.mubr.f32.gmra.mxu0 %v3688
    %v5068 = vpop.f32.mrf.mxu0
    %v5069 = vadd.f32 %v4684, %v5068
    %v5070 = vpop.f32.mrf.mxu0
    %5071 = vmatprep.mubr.f32.mxu0 %v3753
    %5072 = vmatmul.mubr.f32.gmra.mxu0 %v3689
    %v5073 = vpop.f32.mrf.mxu0
    %v5074 = vadd.f32 %v4689, %v5073
    %v5075 = vpop.f32.mrf.mxu0
    %5076 = vmatprep.mubr.f32.mxu0 %v3754
    %5077 = vmatmul.mubr.f32.gmra.mxu0 %v3690
    %v5078 = vpop.f32.mrf.mxu0
    %v5079 = vadd.f32 %v4694, %v5078
    %v5080 = vpop.f32.mrf.mxu0
    %5081 = vmatprep.mubr.f32.mxu0 %v3755
    %5082 = vmatmul.mubr.f32.gmra.mxu0 %v3691
    %v5083 = vpop.f32.mrf.mxu0
    %v5084 = vadd.f32 %v4699, %v5083
    %v5085 = vpop.f32.mrf.mxu0
    %5086 = vmatprep.mubr.f32.mxu0 %v3756
    %5087 = vmatmul.mubr.f32.gmra.mxu0 %v3692
    %v5088 = vpop.f32.mrf.mxu0
    %v5089 = vadd.f32 %v4704, %v5088
    %v5090 = vpop.f32.mrf.mxu0
    %5091 = vmatprep.mubr.f32.mxu0 %v3757
    %5092 = vmatmul.mubr.f32.gmra.mxu0 %v3693
    %v5093 = vpop.f32.mrf.mxu0
    %v5094 = vadd.f32 %v4709, %v5093
    %v5095 = vpop.f32.mrf.mxu0
    %5096 = vmatprep.mubr.f32.mxu0 %v3758
    %5097 = vmatmul.mubr.f32.gmra.mxu0 %v3694
    %v5098 = vpop.f32.mrf.mxu0
    %v5099 = vadd.f32 %v4714, %v5098
    %v5100 = vpop.f32.mrf.mxu0
    %5101 = vmatprep.mubr.f32.mxu0 %v3759
    %5102 = vmatmul.mubr.f32.gmra.mxu0 %v3695
    %v5103 = vpop.f32.mrf.mxu0
    %v5104 = vadd.f32 %v4719, %v5103
    %v5105 = vpop.f32.mrf.mxu0
    %5106 = vmatprep.mubr.f32.mxu0 %v3760
    %5107 = vmatmul.mubr.f32.gmra.mxu0 %v3696
    %v5108 = vpop.f32.mrf.mxu0
    %v5109 = vadd.f32 %v4724, %v5108
    %v5110 = vpop.f32.mrf.mxu0
    %5111 = vmatprep.mubr.f32.mxu0 %v3761
    %5112 = vmatmul.mubr.f32.gmra.mxu0 %v3697
    %v5113 = vpop.f32.mrf.mxu0
    %v5114 = vadd.f32 %v4729, %v5113
    %v5115 = vpop.f32.mrf.mxu0
    %5116 = vmatprep.mubr.f32.mxu0 %v3762
    %5117 = vmatmul.mubr.f32.gmra.mxu0 %v3698
    %v5118 = vpop.f32.mrf.mxu0
    %v5119 = vadd.f32 %v4734, %v5118
    %v5120 = vpop.f32.mrf.mxu0
    %5121 = vmatprep.mubr.f32.mxu0 %v3763
    %5122 = vmatmul.mubr.f32.gmra.mxu0 %v3699
    %v5123 = vpop.f32.mrf.mxu0
    %v5124 = vadd.f32 %v4739, %v5123
    %v5125 = vpop.f32.mrf.mxu0
    %5126 = vmatprep.mubr.f32.mxu0 %v3764
    %5127 = vmatmul.mubr.f32.gmra.mxu0 %v3700
    %v5128 = vpop.f32.mrf.mxu0
    %v5129 = vadd.f32 %v4744, %v5128
    %v5130 = vpop.f32.mrf.mxu0
    %5131 = vmatprep.mubr.f32.mxu0 %v3765
    %5132 = vmatmul.mubr.f32.gmra.mxu0 %v3701
    %v5133 = vpop.f32.mrf.mxu0
    %v5134 = vadd.f32 %v4749, %v5133
    %v5135 = vpop.f32.mrf.mxu0
    %5136 = vmatprep.mubr.f32.mxu0 %v3766
    %5137 = vmatmul.mubr.f32.gmra.mxu0 %v3702
    %v5138 = vpop.f32.mrf.mxu0
    %v5139 = vadd.f32 %v4754, %v5138
    %v5140 = vpop.f32.mrf.mxu0
    %5141 = vmatprep.mubr.f32.mxu0 %v3767
    %5142 = vmatmul.mubr.f32.gmra.mxu0 %v3703
    %v5143 = vpop.f32.mrf.mxu0
    %v5144 = vadd.f32 %v4759, %v5143
    %v5145 = vpop.f32.mrf.mxu0
    %5146 = vmatprep.mubr.f32.mxu0 %v3768
    %5147 = vmatmul.mubr.f32.gmra.mxu0 %v3704
    %v5148 = vpop.f32.mrf.mxu0
    %v5149 = vadd.f32 %v4764, %v5148
    %v5150 = vpop.f32.mrf.mxu0
    %5151 = vmatprep.mubr.f32.mxu0 %v3769
    %5152 = vmatmul.mubr.f32.gmra.mxu0 %v3705
    %v5153 = vpop.f32.mrf.mxu0
    %v5154 = vadd.f32 %v4769, %v5153
    %v5155 = vpop.f32.mrf.mxu0
    %5156 = vmatprep.mubr.f32.mxu0 %v3770
    %5157 = vmatmul.mubr.f32.gmra.mxu0 %v3706
    %v5158 = vpop.f32.mrf.mxu0
    %v5159 = vadd.f32 %v4774, %v5158
    %v5160 = vpop.f32.mrf.mxu0
    %5161 = vmatprep.mubr.f32.mxu0 %v3771
    %5162 = vmatmul.mubr.f32.gmra.mxu0 %v3707
    %v5163 = vpop.f32.mrf.mxu0
    %v5164 = vadd.f32 %v4779, %v5163
    %v5165 = vpop.f32.mrf.mxu0
    %5166 = vmatprep.mubr.f32.mxu0 %v3772
    %5167 = vmatmul.mubr.f32.gmra.mxu0 %v3708
    %v5168 = vpop.f32.mrf.mxu0
    %v5169 = vadd.f32 %v4784, %v5168
    %v5170 = vpop.f32.mrf.mxu0
    %5171 = vmatprep.mubr.f32.mxu0 %v3773
    %5172 = vmatmul.mubr.f32.gmra.mxu0 %v3709
    %v5173 = vpop.f32.mrf.mxu0
    %v5174 = vadd.f32 %v4789, %v5173
    %v5175 = vpop.f32.mrf.mxu0
    %5176 = vmatprep.mubr.f32.mxu0 %v3774
    %5177 = vmatmul.mubr.f32.gmra.mxu0 %v3710
    %v5178 = vpop.f32.mrf.mxu0
    %v5179 = vadd.f32 %v4794, %v5178
    %v5180 = vpop.f32.mrf.mxu0
    %5181 = vmatprep.mubr.f32.mxu0 %v3775
    %5182 = vmatmul.mubr.f32.gmra.mxu0 %v3711
    %v5183 = vpop.f32.mrf.mxu0
    %v5184 = vadd.f32 %v4799, %v5183
    %v5185 = vpop.f32.mrf.mxu0
    %5186 = vmatprep.mubr.f32.mxu0 %v3776
    %5187 = vmatmul.mubr.f32.gmra.mxu0 %v3712
    %v5188 = vpop.f32.mrf.mxu0
    %v5189 = vadd.f32 %v4804, %v5188
    %v5190 = vpop.f32.mrf.mxu0
    %5191 = vmatprep.mubr.f32.mxu0 %v3777
    %5192 = vmatmul.mubr.f32.gmra.mxu0 %v3713
    %v5193 = vpop.f32.mrf.mxu0
    %v5194 = vadd.f32 %v4809, %v5193
    %v5195 = vpop.f32.mrf.mxu0
    %5196 = vmatprep.mubr.f32.mxu0 %v3778
    %5197 = vmatmul.mubr.f32.gmra.mxu0 %v3714
    %v5198 = vpop.f32.mrf.mxu0
    %v5199 = vadd.f32 %v4814, %v5198
    %v5200 = vpop.f32.mrf.mxu0
    %5201 = vmatprep.mubr.f32.mxu0 %v3779
    %5202 = vmatmul.mubr.f32.gmra.mxu0 %v3715
    %v5203 = vpop.f32.mrf.mxu0
    %v5204 = vadd.f32 %v4819, %v5203
    %v5205 = vpop.f32.mrf.mxu0
    %5206 = vmatprep.mubr.f32.mxu0 %v3780
    %5207 = vmatmul.mubr.f32.gmra.mxu0 %v3716
    %v5208 = vpop.f32.mrf.mxu0
    %v5209 = vadd.f32 %v4824, %v5208
    %v5210 = vpop.f32.mrf.mxu0
    %5211 = vmatprep.mubr.f32.mxu0 %v3781
    %5212 = vmatmul.mubr.f32.gmra.mxu0 %v3717
    %v5213 = vpop.f32.mrf.mxu0
    %v5214 = vadd.f32 %v4829, %v5213
    %v5215 = vpop.f32.mrf.mxu0
    %5216 = vmatprep.mubr.f32.mxu0 %v3782
    %5217 = vmatmul.mubr.f32.gmra.mxu0 %v3718
    %v5218 = vpop.f32.mrf.mxu0
    %v5219 = vadd.f32 %v4834, %v5218
    %v5220 = vpop.f32.mrf.mxu0
    %5221 = vmatprep.mubr.f32.mxu0 %v3783
    %5222 = vmatmul.mubr.f32.gmra.mxu0 %v3719
    %v5223 = vpop.f32.mrf.mxu0
    %v5224 = vadd.f32 %v4839, %v5223
    %v5225 = vpop.f32.mrf.mxu0
    %5226 = vmatprep.mubr.f32.mxu0 %v3784
    %5227 = vmatmul.mubr.f32.gmra.mxu0 %v3720
    %v5228 = vpop.f32.mrf.mxu0
    %v5229 = vadd.f32 %v4844, %v5228
    %v5230 = vpop.f32.mrf.mxu0
    %5231 = vmatprep.mubr.f32.mxu0 %v3785
    %5232 = vmatmul.mubr.f32.gmra.mxu0 %v3721
    %v5233 = vpop.f32.mrf.mxu0
    %v5234 = vadd.f32 %v4849, %v5233
    %v5235 = vpop.f32.mrf.mxu0
    %5236 = vmatprep.mubr.f32.mxu0 %v3786
    %5237 = vmatmul.mubr.f32.gmra.mxu0 %v3722
    %v5238 = vpop.f32.mrf.mxu0
    %v5239 = vadd.f32 %v4854, %v5238
    %v5240 = vpop.f32.mrf.mxu0
    %5241 = vmatprep.mubr.f32.mxu0 %v3787
    %5242 = vmatmul.mubr.f32.gmra.mxu0 %v3723
    %v5243 = vpop.f32.mrf.mxu0
    %v5244 = vadd.f32 %v4859, %v5243
    %v5245 = vpop.f32.mrf.mxu0
    %5246 = vmatprep.mubr.f32.mxu0 %v3788
    %5247 = vmatmul.mubr.f32.gmra.mxu0 %v3724
    %v5248 = vpop.f32.mrf.mxu0
    %v5249 = vadd.f32 %v4864, %v5248
    %v5250 = vpop.f32.mrf.mxu0
    %5251 = vmatprep.mubr.f32.mxu0 %v3789
    %5252 = vmatmul.mubr.f32.gmra.mxu0 %v3725
    %v5253 = vpop.f32.mrf.mxu0
    %v5254 = vadd.f32 %v4869, %v5253
    %v5255 = vpop.f32.mrf.mxu0
    %5256 = vmatprep.mubr.f32.mxu0 %v3790
    %5257 = vmatmul.mubr.f32.gmra.mxu0 %v3726
    %v5258 = vpop.f32.mrf.mxu0
    %v5259 = vadd.f32 %v4874, %v5258
    %v5260 = vpop.f32.mrf.mxu0
    %5261 = vmatprep.mubr.f32.mxu0 %v3791
    %5262 = vmatmul.mubr.f32.gmra.mxu0 %v3727
    %v5263 = vpop.f32.mrf.mxu0
    %v5264 = vadd.f32 %v4879, %v5263
    %v5265 = vpop.f32.mrf.mxu0
    %5266 = vmatprep.mubr.f32.mxu0 %v3792
    %5267 = vmatmul.mubr.f32.gmra.mxu0 %v3728
    %v5268 = vpop.f32.mrf.mxu0
    %v5269 = vadd.f32 %v4884, %v5268
    %v5270 = vpop.f32.mrf.mxu0
    %5271 = vmatprep.mubr.f32.mxu0 %v3793
    %5272 = vmatmul.mubr.f32.gmra.mxu0 %v3729
    %v5273 = vpop.f32.mrf.mxu0
    %v5274 = vadd.f32 %v4889, %v5273
    %v5275 = vpop.f32.mrf.mxu0
    %5276 = vmatprep.mubr.f32.mxu0 %v3794
    %5277 = vmatmul.mubr.f32.gmra.mxu0 %v3730
    %v5278 = vpop.f32.mrf.mxu0
    %v5279 = vadd.f32 %v4894, %v5278
    %v5280 = vpop.f32.mrf.mxu0
    %5281 = vmatprep.mubr.f32.mxu0 %v3795
    %5282 = vmatmul.mubr.f32.gmra.mxu0 %v3731
    %v5283 = vpop.f32.mrf.mxu0
    %v5284 = vadd.f32 %v4899, %v5283
    %v5285 = vpop.f32.mrf.mxu0
    %5286 = vdwg.mxu0
    %5287 = vmatprep.subr.mxu0 0.0
    %5288 = vmatpush1.msra.mxu0 %v4099
    %5289 = vmatprep.subr.mxu0 0.0
    %5290 = vmatpush1.msra.mxu0 %v4098
    %5291 = vmatprep.subr.mxu0 0.0
    %5292 = vmatpush1.msra.mxu0 %v4097
    %5293 = vmatprep.subr.mxu0 0.0
    %5294 = vmatpush1.msra.mxu0 %v4096
    %5295 = vmatprep.subr.mxu0 0.0
    %5296 = vmatpush1.msra.mxu0 %v4095
    %5297 = vmatprep.subr.mxu0 0.0
    %5298 = vmatpush1.msra.mxu0 %v4094
    %5299 = vmatprep.subr.mxu0 0.0
    %5300 = vmatpush1.msra.mxu0 %v4093
    %5301 = vmatprep.subr.mxu0 0.0
    %5302 = vmatpush1.msra.mxu0 %v4092
    %5303 = vmatprep.subr.mxu0 0.0
    %5304 = vmatpush1.msra.mxu0 %v4091
    %5305 = vmatprep.subr.mxu0 0.0
    %5306 = vmatpush1.msra.mxu0 %v4090
    %5307 = vmatprep.subr.mxu0 0.0
    %5308 = vmatpush1.msra.mxu0 %v4089
    %5309 = vmatprep.subr.mxu0 0.0
    %5310 = vmatpush1.msra.mxu0 %v4088
    %5311 = vmatprep.subr.mxu0 0.0
    %5312 = vmatpush1.msra.mxu0 %v4087
    %5313 = vmatprep.subr.mxu0 0.0
    %5314 = vmatpush1.msra.mxu0 %v4086
    %5315 = vmatprep.subr.mxu0 0.0
    %5316 = vmatpush1.msra.mxu0 %v4085
    %5317 = vmatprep.subr.mxu0 0.0
    %5318 = vmatpush1.msra.mxu0 %v4084
    %5319 = vmatprep.subr.mxu0 0.0
    %5320 = vmatpush2.msra.mxu0 %v4115
    %5321 = vmatprep.subr.mxu0 0.0
    %5322 = vmatpush2.msra.mxu0 %v4114
    %5323 = vmatprep.subr.mxu0 0.0
    %5324 = vmatpush2.msra.mxu0 %v4113
    %5325 = vmatprep.subr.mxu0 0.0
    %5326 = vmatpush2.msra.mxu0 %v4112
    %5327 = vmatprep.subr.mxu0 0.0
    %5328 = vmatpush2.msra.mxu0 %v4111
    %5329 = vmatprep.subr.mxu0 0.0
    %5330 = vmatpush2.msra.mxu0 %v4110
    %5331 = vmatprep.subr.mxu0 0.0
    %5332 = vmatpush2.msra.mxu0 %v4109
    %5333 = vmatprep.subr.mxu0 0.0
    %5334 = vmatpush2.msra.mxu0 %v4108
    %5335 = vmatprep.subr.mxu0 0.0
    %5336 = vmatpush2.msra.mxu0 %v4107
    %5337 = vmatprep.subr.mxu0 0.0
    %5338 = vmatpush2.msra.mxu0 %v4106
    %5339 = vmatprep.subr.mxu0 0.0
    %5340 = vmatpush2.msra.mxu0 %v4105
    %5341 = vmatprep.subr.mxu0 0.0
    %5342 = vmatpush2.msra.mxu0 %v4104
    %5343 = vmatprep.subr.mxu0 0.0
    %5344 = vmatpush2.msra.mxu0 %v4103
    %5345 = vmatprep.subr.mxu0 0.0
    %5346 = vmatpush2.msra.mxu0 %v4102
    %5347 = vmatprep.subr.mxu0 0.0
    %5348 = vmatpush2.msra.mxu0 %v4101
    %5349 = vmatprep.subr.mxu0 0.0
    %5350 = vmatpush2.msra.mxu0 %v4100
    %5351 = vmatprep.mubr.f32.mxu0 %v3860
    %5352 = vmatmul.mubr.f32.gmra.mxu0 %v3796
    %v5353 = vpop.f32.mrf.mxu0
    %v5354 = vadd.f32 %v4969, %v5353
    %v5355 = vpop.f32.mrf.mxu0
    %5356 = vmatprep.mubr.f32.mxu0 %v3861
    %5357 = vmatmul.mubr.f32.gmra.mxu0 %v3797
    %v5358 = vpop.f32.mrf.mxu0
    %v5359 = vadd.f32 %v4974, %v5358
    %v5360 = vpop.f32.mrf.mxu0
    %5361 = vmatprep.mubr.f32.mxu0 %v3862
    %5362 = vmatmul.mubr.f32.gmra.mxu0 %v3798
    %v5363 = vpop.f32.mrf.mxu0
    %v5364 = vadd.f32 %v4979, %v5363
    %v5365 = vpop.f32.mrf.mxu0
    %5366 = vmatprep.mubr.f32.mxu0 %v3863
    %5367 = vmatmul.mubr.f32.gmra.mxu0 %v3799
    %v5368 = vpop.f32.mrf.mxu0
    %v5369 = vadd.f32 %v4984, %v5368
    %v5370 = vpop.f32.mrf.mxu0
    %5371 = vmatprep.mubr.f32.mxu0 %v3864
    %5372 = vmatmul.mubr.f32.gmra.mxu0 %v3800
    %v5373 = vpop.f32.mrf.mxu0
    %v5374 = vadd.f32 %v4989, %v5373
    %v5375 = vpop.f32.mrf.mxu0
    %5376 = vmatprep.mubr.f32.mxu0 %v3865
    %5377 = vmatmul.mubr.f32.gmra.mxu0 %v3801
    %v5378 = vpop.f32.mrf.mxu0
    %v5379 = vadd.f32 %v4994, %v5378
    %v5380 = vpop.f32.mrf.mxu0
    %5381 = vmatprep.mubr.f32.mxu0 %v3866
    %5382 = vmatmul.mubr.f32.gmra.mxu0 %v3802
    %v5383 = vpop.f32.mrf.mxu0
    %v5384 = vadd.f32 %v4999, %v5383
    %v5385 = vpop.f32.mrf.mxu0
    %5386 = vmatprep.mubr.f32.mxu0 %v3867
    %5387 = vmatmul.mubr.f32.gmra.mxu0 %v3803
    %v5388 = vpop.f32.mrf.mxu0
    %v5389 = vadd.f32 %v5004, %v5388
    %v5390 = vpop.f32.mrf.mxu0
    %5391 = vmatprep.mubr.f32.mxu0 %v3868
    %5392 = vmatmul.mubr.f32.gmra.mxu0 %v3804
    %v5393 = vpop.f32.mrf.mxu0
    %v5394 = vadd.f32 %v5009, %v5393
    %v5395 = vpop.f32.mrf.mxu0
    %5396 = vmatprep.mubr.f32.mxu0 %v3869
    %5397 = vmatmul.mubr.f32.gmra.mxu0 %v3805
    %v5398 = vpop.f32.mrf.mxu0
    %v5399 = vadd.f32 %v5014, %v5398
    %v5400 = vpop.f32.mrf.mxu0
    %5401 = vmatprep.mubr.f32.mxu0 %v3870
    %5402 = vmatmul.mubr.f32.gmra.mxu0 %v3806
    %v5403 = vpop.f32.mrf.mxu0
    %v5404 = vadd.f32 %v5019, %v5403
    %v5405 = vpop.f32.mrf.mxu0
    %5406 = vmatprep.mubr.f32.mxu0 %v3871
    %5407 = vmatmul.mubr.f32.gmra.mxu0 %v3807
    %v5408 = vpop.f32.mrf.mxu0
    %v5409 = vadd.f32 %v5024, %v5408
    %v5410 = vpop.f32.mrf.mxu0
    %5411 = vmatprep.mubr.f32.mxu0 %v3872
    %5412 = vmatmul.mubr.f32.gmra.mxu0 %v3808
    %v5413 = vpop.f32.mrf.mxu0
    %v5414 = vadd.f32 %v5029, %v5413
    %v5415 = vpop.f32.mrf.mxu0
    %5416 = vmatprep.mubr.f32.mxu0 %v3873
    %5417 = vmatmul.mubr.f32.gmra.mxu0 %v3809
    %v5418 = vpop.f32.mrf.mxu0
    %v5419 = vadd.f32 %v5034, %v5418
    %v5420 = vpop.f32.mrf.mxu0
    %5421 = vmatprep.mubr.f32.mxu0 %v3874
    %5422 = vmatmul.mubr.f32.gmra.mxu0 %v3810
    %v5423 = vpop.f32.mrf.mxu0
    %v5424 = vadd.f32 %v5039, %v5423
    %v5425 = vpop.f32.mrf.mxu0
    %5426 = vmatprep.mubr.f32.mxu0 %v3875
    %5427 = vmatmul.mubr.f32.gmra.mxu0 %v3811
    %v5428 = vpop.f32.mrf.mxu0
    %v5429 = vadd.f32 %v5044, %v5428
    %v5430 = vpop.f32.mrf.mxu0
    %5431 = vmatprep.mubr.f32.mxu0 %v3876
    %5432 = vmatmul.mubr.f32.gmra.mxu0 %v3812
    %v5433 = vpop.f32.mrf.mxu0
    %v5434 = vadd.f32 %v5049, %v5433
    %v5435 = vpop.f32.mrf.mxu0
    %5436 = vmatprep.mubr.f32.mxu0 %v3877
    %5437 = vmatmul.mubr.f32.gmra.mxu0 %v3813
    %v5438 = vpop.f32.mrf.mxu0
    %v5439 = vadd.f32 %v5054, %v5438
    %v5440 = vpop.f32.mrf.mxu0
    %5441 = vmatprep.mubr.f32.mxu0 %v3878
    %5442 = vmatmul.mubr.f32.gmra.mxu0 %v3814
    %v5443 = vpop.f32.mrf.mxu0
    %v5444 = vadd.f32 %v5059, %v5443
    %v5445 = vpop.f32.mrf.mxu0
    %5446 = vmatprep.mubr.f32.mxu0 %v3879
    %5447 = vmatmul.mubr.f32.gmra.mxu0 %v3815
    %v5448 = vpop.f32.mrf.mxu0
    %v5449 = vadd.f32 %v5064, %v5448
    %v5450 = vpop.f32.mrf.mxu0
    %5451 = vmatprep.mubr.f32.mxu0 %v3880
    %5452 = vmatmul.mubr.f32.gmra.mxu0 %v3816
    %v5453 = vpop.f32.mrf.mxu0
    %v5454 = vadd.f32 %v5069, %v5453
    %v5455 = vpop.f32.mrf.mxu0
    %5456 = vmatprep.mubr.f32.mxu0 %v3881
    %5457 = vmatmul.mubr.f32.gmra.mxu0 %v3817
    %v5458 = vpop.f32.mrf.mxu0
    %v5459 = vadd.f32 %v5074, %v5458
    %v5460 = vpop.f32.mrf.mxu0
    %5461 = vmatprep.mubr.f32.mxu0 %v3882
    %5462 = vmatmul.mubr.f32.gmra.mxu0 %v3818
    %v5463 = vpop.f32.mrf.mxu0
    %v5464 = vadd.f32 %v5079, %v5463
    %v5465 = vpop.f32.mrf.mxu0
    %5466 = vmatprep.mubr.f32.mxu0 %v3883
    %5467 = vmatmul.mubr.f32.gmra.mxu0 %v3819
    %v5468 = vpop.f32.mrf.mxu0
    %v5469 = vadd.f32 %v5084, %v5468
    %v5470 = vpop.f32.mrf.mxu0
    %5471 = vmatprep.mubr.f32.mxu0 %v3884
    %5472 = vmatmul.mubr.f32.gmra.mxu0 %v3820
    %v5473 = vpop.f32.mrf.mxu0
    %v5474 = vadd.f32 %v5089, %v5473
    %v5475 = vpop.f32.mrf.mxu0
    %5476 = vmatprep.mubr.f32.mxu0 %v3885
    %5477 = vmatmul.mubr.f32.gmra.mxu0 %v3821
    %v5478 = vpop.f32.mrf.mxu0
    %v5479 = vadd.f32 %v5094, %v5478
    %v5480 = vpop.f32.mrf.mxu0
    %5481 = vmatprep.mubr.f32.mxu0 %v3886
    %5482 = vmatmul.mubr.f32.gmra.mxu0 %v3822
    %v5483 = vpop.f32.mrf.mxu0
    %v5484 = vadd.f32 %v5099, %v5483
    %v5485 = vpop.f32.mrf.mxu0
    %5486 = vmatprep.mubr.f32.mxu0 %v3887
    %5487 = vmatmul.mubr.f32.gmra.mxu0 %v3823
    %v5488 = vpop.f32.mrf.mxu0
    %v5489 = vadd.f32 %v5104, %v5488
    %v5490 = vpop.f32.mrf.mxu0
    %5491 = vmatprep.mubr.f32.mxu0 %v3888
    %5492 = vmatmul.mubr.f32.gmra.mxu0 %v3824
    %v5493 = vpop.f32.mrf.mxu0
    %v5494 = vadd.f32 %v5109, %v5493
    %v5495 = vpop.f32.mrf.mxu0
    %5496 = vmatprep.mubr.f32.mxu0 %v3889
    %5497 = vmatmul.mubr.f32.gmra.mxu0 %v3825
    %v5498 = vpop.f32.mrf.mxu0
    %v5499 = vadd.f32 %v5114, %v5498
    %v5500 = vpop.f32.mrf.mxu0
    %5501 = vmatprep.mubr.f32.mxu0 %v3890
    %5502 = vmatmul.mubr.f32.gmra.mxu0 %v3826
    %v5503 = vpop.f32.mrf.mxu0
    %v5504 = vadd.f32 %v5119, %v5503
    %v5505 = vpop.f32.mrf.mxu0
    %5506 = vmatprep.mubr.f32.mxu0 %v3891
    %5507 = vmatmul.mubr.f32.gmra.mxu0 %v3827
    %v5508 = vpop.f32.mrf.mxu0
    %v5509 = vadd.f32 %v5124, %v5508
    %v5510 = vpop.f32.mrf.mxu0
    %5511 = vmatprep.mubr.f32.mxu0 %v3892
    %5512 = vmatmul.mubr.f32.gmra.mxu0 %v3828
    %v5513 = vpop.f32.mrf.mxu0
    %v5514 = vadd.f32 %v5129, %v5513
    %v5515 = vpop.f32.mrf.mxu0
    %5516 = vmatprep.mubr.f32.mxu0 %v3893
    %5517 = vmatmul.mubr.f32.gmra.mxu0 %v3829
    %v5518 = vpop.f32.mrf.mxu0
    %v5519 = vadd.f32 %v5134, %v5518
    %v5520 = vpop.f32.mrf.mxu0
    %5521 = vmatprep.mubr.f32.mxu0 %v3894
    %5522 = vmatmul.mubr.f32.gmra.mxu0 %v3830
    %v5523 = vpop.f32.mrf.mxu0
    %v5524 = vadd.f32 %v5139, %v5523
    %v5525 = vpop.f32.mrf.mxu0
    %5526 = vmatprep.mubr.f32.mxu0 %v3895
    %5527 = vmatmul.mubr.f32.gmra.mxu0 %v3831
    %v5528 = vpop.f32.mrf.mxu0
    %v5529 = vadd.f32 %v5144, %v5528
    %v5530 = vpop.f32.mrf.mxu0
    %5531 = vmatprep.mubr.f32.mxu0 %v3896
    %5532 = vmatmul.mubr.f32.gmra.mxu0 %v3832
    %v5533 = vpop.f32.mrf.mxu0
    %v5534 = vadd.f32 %v5149, %v5533
    %v5535 = vpop.f32.mrf.mxu0
    %5536 = vmatprep.mubr.f32.mxu0 %v3897
    %5537 = vmatmul.mubr.f32.gmra.mxu0 %v3833
    %v5538 = vpop.f32.mrf.mxu0
    %v5539 = vadd.f32 %v5154, %v5538
    %v5540 = vpop.f32.mrf.mxu0
    %5541 = vmatprep.mubr.f32.mxu0 %v3898
    %5542 = vmatmul.mubr.f32.gmra.mxu0 %v3834
    %v5543 = vpop.f32.mrf.mxu0
    %v5544 = vadd.f32 %v5159, %v5543
    %v5545 = vpop.f32.mrf.mxu0
    %5546 = vmatprep.mubr.f32.mxu0 %v3899
    %5547 = vmatmul.mubr.f32.gmra.mxu0 %v3835
    %v5548 = vpop.f32.mrf.mxu0
    %v5549 = vadd.f32 %v5164, %v5548
    %v5550 = vpop.f32.mrf.mxu0
    %5551 = vmatprep.mubr.f32.mxu0 %v3900
    %5552 = vmatmul.mubr.f32.gmra.mxu0 %v3836
    %v5553 = vpop.f32.mrf.mxu0
    %v5554 = vadd.f32 %v5169, %v5553
    %v5555 = vpop.f32.mrf.mxu0
    %5556 = vmatprep.mubr.f32.mxu0 %v3901
    %5557 = vmatmul.mubr.f32.gmra.mxu0 %v3837
    %v5558 = vpop.f32.mrf.mxu0
    %v5559 = vadd.f32 %v5174, %v5558
    %v5560 = vpop.f32.mrf.mxu0
    %5561 = vmatprep.mubr.f32.mxu0 %v3902
    %5562 = vmatmul.mubr.f32.gmra.mxu0 %v3838
    %v5563 = vpop.f32.mrf.mxu0
    %v5564 = vadd.f32 %v5179, %v5563
    %v5565 = vpop.f32.mrf.mxu0
    %5566 = vmatprep.mubr.f32.mxu0 %v3903
    %5567 = vmatmul.mubr.f32.gmra.mxu0 %v3839
    %v5568 = vpop.f32.mrf.mxu0
    %v5569 = vadd.f32 %v5184, %v5568
    %v5570 = vpop.f32.mrf.mxu0
    %5571 = vmatprep.mubr.f32.mxu0 %v3904
    %5572 = vmatmul.mubr.f32.gmra.mxu0 %v3840
    %v5573 = vpop.f32.mrf.mxu0
    %v5574 = vadd.f32 %v5189, %v5573
    %v5575 = vpop.f32.mrf.mxu0
    %5576 = vmatprep.mubr.f32.mxu0 %v3905
    %5577 = vmatmul.mubr.f32.gmra.mxu0 %v3841
    %v5578 = vpop.f32.mrf.mxu0
    %v5579 = vadd.f32 %v5194, %v5578
    %v5580 = vpop.f32.mrf.mxu0
    %5581 = vmatprep.mubr.f32.mxu0 %v3906
    %5582 = vmatmul.mubr.f32.gmra.mxu0 %v3842
    %v5583 = vpop.f32.mrf.mxu0
    %v5584 = vadd.f32 %v5199, %v5583
    %v5585 = vpop.f32.mrf.mxu0
    %5586 = vmatprep.mubr.f32.mxu0 %v3907
    %5587 = vmatmul.mubr.f32.gmra.mxu0 %v3843
    %v5588 = vpop.f32.mrf.mxu0
    %v5589 = vadd.f32 %v5204, %v5588
    %v5590 = vpop.f32.mrf.mxu0
    %5591 = vmatprep.mubr.f32.mxu0 %v3908
    %5592 = vmatmul.mubr.f32.gmra.mxu0 %v3844
    %v5593 = vpop.f32.mrf.mxu0
    %v5594 = vadd.f32 %v5209, %v5593
    %v5595 = vpop.f32.mrf.mxu0
    %5596 = vmatprep.mubr.f32.mxu0 %v3909
    %5597 = vmatmul.mubr.f32.gmra.mxu0 %v3845
    %v5598 = vpop.f32.mrf.mxu0
    %v5599 = vadd.f32 %v5214, %v5598
    %v5600 = vpop.f32.mrf.mxu0
    %5601 = vmatprep.mubr.f32.mxu0 %v3910
    %5602 = vmatmul.mubr.f32.gmra.mxu0 %v3846
    %v5603 = vpop.f32.mrf.mxu0
    %v5604 = vadd.f32 %v5219, %v5603
    %v5605 = vpop.f32.mrf.mxu0
    %5606 = vmatprep.mubr.f32.mxu0 %v3911
    %5607 = vmatmul.mubr.f32.gmra.mxu0 %v3847
    %v5608 = vpop.f32.mrf.mxu0
    %v5609 = vadd.f32 %v5224, %v5608
    %v5610 = vpop.f32.mrf.mxu0
    %5611 = vmatprep.mubr.f32.mxu0 %v3912
    %5612 = vmatmul.mubr.f32.gmra.mxu0 %v3848
    %v5613 = vpop.f32.mrf.mxu0
    %v5614 = vadd.f32 %v5229, %v5613
    %v5615 = vpop.f32.mrf.mxu0
    %5616 = vmatprep.mubr.f32.mxu0 %v3913
    %5617 = vmatmul.mubr.f32.gmra.mxu0 %v3849
    %v5618 = vpop.f32.mrf.mxu0
    %v5619 = vadd.f32 %v5234, %v5618
    %v5620 = vpop.f32.mrf.mxu0
    %5621 = vmatprep.mubr.f32.mxu0 %v3914
    %5622 = vmatmul.mubr.f32.gmra.mxu0 %v3850
    %v5623 = vpop.f32.mrf.mxu0
    %v5624 = vadd.f32 %v5239, %v5623
    %v5625 = vpop.f32.mrf.mxu0
    %5626 = vmatprep.mubr.f32.mxu0 %v3915
    %5627 = vmatmul.mubr.f32.gmra.mxu0 %v3851
    %v5628 = vpop.f32.mrf.mxu0
    %v5629 = vadd.f32 %v5244, %v5628
    %v5630 = vpop.f32.mrf.mxu0
    %5631 = vmatprep.mubr.f32.mxu0 %v3916
    %5632 = vmatmul.mubr.f32.gmra.mxu0 %v3852
    %v5633 = vpop.f32.mrf.mxu0
    %v5634 = vadd.f32 %v5249, %v5633
    %v5635 = vpop.f32.mrf.mxu0
    %5636 = vmatprep.mubr.f32.mxu0 %v3917
    %5637 = vmatmul.mubr.f32.gmra.mxu0 %v3853
    %v5638 = vpop.f32.mrf.mxu0
    %v5639 = vadd.f32 %v5254, %v5638
    %v5640 = vpop.f32.mrf.mxu0
    %5641 = vmatprep.mubr.f32.mxu0 %v3918
    %5642 = vmatmul.mubr.f32.gmra.mxu0 %v3854
    %v5643 = vpop.f32.mrf.mxu0
    %v5644 = vadd.f32 %v5259, %v5643
    %v5645 = vpop.f32.mrf.mxu0
    %5646 = vmatprep.mubr.f32.mxu0 %v3919
    %5647 = vmatmul.mubr.f32.gmra.mxu0 %v3855
    %v5648 = vpop.f32.mrf.mxu0
    %v5649 = vadd.f32 %v5264, %v5648
    %v5650 = vpop.f32.mrf.mxu0
    %5651 = vmatprep.mubr.f32.mxu0 %v3920
    %5652 = vmatmul.mubr.f32.gmra.mxu0 %v3856
    %v5653 = vpop.f32.mrf.mxu0
    %v5654 = vadd.f32 %v5269, %v5653
    %v5655 = vpop.f32.mrf.mxu0
    %5656 = vmatprep.mubr.f32.mxu0 %v3921
    %5657 = vmatmul.mubr.f32.gmra.mxu0 %v3857
    %v5658 = vpop.f32.mrf.mxu0
    %v5659 = vadd.f32 %v5274, %v5658
    %v5660 = vpop.f32.mrf.mxu0
    %5661 = vmatprep.mubr.f32.mxu0 %v3922
    %5662 = vmatmul.mubr.f32.gmra.mxu0 %v3858
    %v5663 = vpop.f32.mrf.mxu0
    %v5664 = vadd.f32 %v5279, %v5663
    %v5665 = vpop.f32.mrf.mxu0
    %5666 = vmatprep.mubr.f32.mxu0 %v3923
    %5667 = vmatmul.mubr.f32.gmra.mxu0 %v3859
    %v5668 = vpop.f32.mrf.mxu0
    %v5669 = vadd.f32 %v5284, %v5668
    %v5670 = vpop.f32.mrf.mxu0
    %5671 = vdwg.mxu0
    %5672 = vmatprep.subr.mxu0 0.0
    %5673 = vmatpush1.msra.mxu0 %v4131
    %5674 = vmatprep.subr.mxu0 0.0
    %5675 = vmatpush1.msra.mxu0 %v4130
    %5676 = vmatprep.subr.mxu0 0.0
    %5677 = vmatpush1.msra.mxu0 %v4129
    %5678 = vmatprep.subr.mxu0 0.0
    %5679 = vmatpush1.msra.mxu0 %v4128
    %5680 = vmatprep.subr.mxu0 0.0
    %5681 = vmatpush1.msra.mxu0 %v4127
    %5682 = vmatprep.subr.mxu0 0.0
    %5683 = vmatpush1.msra.mxu0 %v4126
    %5684 = vmatprep.subr.mxu0 0.0
    %5685 = vmatpush1.msra.mxu0 %v4125
    %5686 = vmatprep.subr.mxu0 0.0
    %5687 = vmatpush1.msra.mxu0 %v4124
    %5688 = vmatprep.subr.mxu0 0.0
    %5689 = vmatpush1.msra.mxu0 %v4123
    %5690 = vmatprep.subr.mxu0 0.0
    %5691 = vmatpush1.msra.mxu0 %v4122
    %5692 = vmatprep.subr.mxu0 0.0
    %5693 = vmatpush1.msra.mxu0 %v4121
    %5694 = vmatprep.subr.mxu0 0.0
    %5695 = vmatpush1.msra.mxu0 %v4120
    %5696 = vmatprep.subr.mxu0 0.0
    %5697 = vmatpush1.msra.mxu0 %v4119
    %5698 = vmatprep.subr.mxu0 0.0
    %5699 = vmatpush1.msra.mxu0 %v4118
    %5700 = vmatprep.subr.mxu0 0.0
    %5701 = vmatpush1.msra.mxu0 %v4117
    %5702 = vmatprep.subr.mxu0 0.0
    %5703 = vmatpush1.msra.mxu0 %v4116
    %5704 = vmatprep.subr.mxu0 0.0
    %5705 = vmatpush2.msra.mxu0 0.0
    %5706 = vmatprep.subr.mxu0 0.0
    %5707 = vmatpush2.msra.mxu0 0.0
    %5708 = vmatprep.subr.mxu0 0.0
    %5709 = vmatpush2.msra.mxu0 0.0
    %5710 = vmatprep.subr.mxu0 0.0
    %5711 = vmatpush2.msra.mxu0 0.0
    %5712 = vmatprep.subr.mxu0 0.0
    %5713 = vmatpush2.msra.mxu0 0.0
    %5714 = vmatprep.subr.mxu0 0.0
    %5715 = vmatpush2.msra.mxu0 0.0
    %5716 = vmatprep.subr.mxu0 0.0
    %5717 = vmatpush2.msra.mxu0 0.0
    %5718 = vmatprep.subr.mxu0 0.0
    %5719 = vmatpush2.msra.mxu0 0.0
    %5720 = vmatprep.subr.mxu0 0.0
    %5721 = vmatpush2.msra.mxu0 0.0
    %5722 = vmatprep.subr.mxu0 0.0
    %5723 = vmatpush2.msra.mxu0 0.0
    %5724 = vmatprep.subr.mxu0 0.0
    %5725 = vmatpush2.msra.mxu0 0.0
    %5726 = vmatprep.subr.mxu0 0.0
    %5727 = vmatpush2.msra.mxu0 0.0
    %5728 = vmatprep.subr.mxu0 0.0
    %5729 = vmatpush2.msra.mxu0 0.0
    %5730 = vmatprep.subr.mxu0 0.0
    %5731 = vmatpush2.msra.mxu0 0.0
    %5732 = vmatprep.subr.mxu0 0.0
    %5733 = vmatpush2.msra.mxu0 0.0
    %5734 = vmatprep.subr.mxu0 0.0
    %5735 = vmatpush2.msra.mxu0 0.0
    %5736 = vmatprep.mubr.f32.mxu0 0.0
    %5737 = vmatmul.mubr.f32.gmra.mxu0 %v3924
    %v5738 = vpop.f32.mrf.mxu0
    %v5739 = vadd.f32 %v5354, %v5738
    %v5740 = vpop.f32.mrf.mxu0
    %5741 = vmatprep.mubr.f32.mxu0 0.0
    %5742 = vmatmul.mubr.f32.gmra.mxu0 %v3925
    %v5743 = vpop.f32.mrf.mxu0
    %v5744 = vadd.f32 %v5359, %v5743
    %v5745 = vpop.f32.mrf.mxu0
    %5746 = vmatprep.mubr.f32.mxu0 0.0
    %5747 = vmatmul.mubr.f32.gmra.mxu0 %v3926
    %v5748 = vpop.f32.mrf.mxu0
    %v5749 = vadd.f32 %v5364, %v5748
    %v5750 = vpop.f32.mrf.mxu0
    %5751 = vmatprep.mubr.f32.mxu0 0.0
    %5752 = vmatmul.mubr.f32.gmra.mxu0 %v3927
    %v5753 = vpop.f32.mrf.mxu0
    %v5754 = vadd.f32 %v5369, %v5753
    %v5755 = vpop.f32.mrf.mxu0
    %5756 = vmatprep.mubr.f32.mxu0 0.0
    %5757 = vmatmul.mubr.f32.gmra.mxu0 %v3928
    %v5758 = vpop.f32.mrf.mxu0
    %v5759 = vadd.f32 %v5374, %v5758
    %v5760 = vpop.f32.mrf.mxu0
    %5761 = vmatprep.mubr.f32.mxu0 0.0
    %5762 = vmatmul.mubr.f32.gmra.mxu0 %v3929
    %v5763 = vpop.f32.mrf.mxu0
    %v5764 = vadd.f32 %v5379, %v5763
    %v5765 = vpop.f32.mrf.mxu0
    %5766 = vmatprep.mubr.f32.mxu0 0.0
    %5767 = vmatmul.mubr.f32.gmra.mxu0 %v3930
    %v5768 = vpop.f32.mrf.mxu0
    %v5769 = vadd.f32 %v5384, %v5768
    %v5770 = vpop.f32.mrf.mxu0
    %5771 = vmatprep.mubr.f32.mxu0 0.0
    %5772 = vmatmul.mubr.f32.gmra.mxu0 %v3931
    %v5773 = vpop.f32.mrf.mxu0
    %v5774 = vadd.f32 %v5389, %v5773
    %v5775 = vpop.f32.mrf.mxu0
    %5776 = vmatprep.mubr.f32.mxu0 0.0
    %5777 = vmatmul.mubr.f32.gmra.mxu0 %v3932
    %v5778 = vpop.f32.mrf.mxu0
    %v5779 = vadd.f32 %v5394, %v5778
    %v5780 = vpop.f32.mrf.mxu0
    %5781 = vmatprep.mubr.f32.mxu0 0.0
    %5782 = vmatmul.mubr.f32.gmra.mxu0 %v3933
    %v5783 = vpop.f32.mrf.mxu0
    %v5784 = vadd.f32 %v5399, %v5783
    %v5785 = vpop.f32.mrf.mxu0
    %5786 = vmatprep.mubr.f32.mxu0 0.0
    %5787 = vmatmul.mubr.f32.gmra.mxu0 %v3934
    %v5788 = vpop.f32.mrf.mxu0
    %v5789 = vadd.f32 %v5404, %v5788
    %v5790 = vpop.f32.mrf.mxu0
    %5791 = vmatprep.mubr.f32.mxu0 0.0
    %5792 = vmatmul.mubr.f32.gmra.mxu0 %v3935
    %v5793 = vpop.f32.mrf.mxu0
    %v5794 = vadd.f32 %v5409, %v5793
    %v5795 = vpop.f32.mrf.mxu0
    %5796 = vmatprep.mubr.f32.mxu0 0.0
    %5797 = vmatmul.mubr.f32.gmra.mxu0 %v3936
    %v5798 = vpop.f32.mrf.mxu0
    %v5799 = vadd.f32 %v5414, %v5798
    %v5800 = vpop.f32.mrf.mxu0
    %5801 = vmatprep.mubr.f32.mxu0 0.0
    %5802 = vmatmul.mubr.f32.gmra.mxu0 %v3937
    %v5803 = vpop.f32.mrf.mxu0
    %v5804 = vadd.f32 %v5419, %v5803
    %v5805 = vpop.f32.mrf.mxu0
    %5806 = vmatprep.mubr.f32.mxu0 0.0
    %5807 = vmatmul.mubr.f32.gmra.mxu0 %v3938
    %v5808 = vpop.f32.mrf.mxu0
    %v5809 = vadd.f32 %v5424, %v5808
    %v5810 = vpop.f32.mrf.mxu0
    %5811 = vmatprep.mubr.f32.mxu0 0.0
    %5812 = vmatmul.mubr.f32.gmra.mxu0 %v3939
    %v5813 = vpop.f32.mrf.mxu0
    %v5814 = vadd.f32 %v5429, %v5813
    %v5815 = vpop.f32.mrf.mxu0
    %5816 = vmatprep.mubr.f32.mxu0 0.0
    %5817 = vmatmul.mubr.f32.gmra.mxu0 %v3940
    %v5818 = vpop.f32.mrf.mxu0
    %v5819 = vadd.f32 %v5434, %v5818
    %v5820 = vpop.f32.mrf.mxu0
    %5821 = vmatprep.mubr.f32.mxu0 0.0
    %5822 = vmatmul.mubr.f32.gmra.mxu0 %v3941
    %v5823 = vpop.f32.mrf.mxu0
    %v5824 = vadd.f32 %v5439, %v5823
    %v5825 = vpop.f32.mrf.mxu0
    %5826 = vmatprep.mubr.f32.mxu0 0.0
    %5827 = vmatmul.mubr.f32.gmra.mxu0 %v3942
    %v5828 = vpop.f32.mrf.mxu0
    %v5829 = vadd.f32 %v5444, %v5828
    %v5830 = vpop.f32.mrf.mxu0
    %5831 = vmatprep.mubr.f32.mxu0 0.0
    %5832 = vmatmul.mubr.f32.gmra.mxu0 %v3943
    %v5833 = vpop.f32.mrf.mxu0
    %v5834 = vadd.f32 %v5449, %v5833
    %v5835 = vpop.f32.mrf.mxu0
    %5836 = vmatprep.mubr.f32.mxu0 0.0
    %5837 = vmatmul.mubr.f32.gmra.mxu0 %v3944
    %v5838 = vpop.f32.mrf.mxu0
    %v5839 = vadd.f32 %v5454, %v5838
    %v5840 = vpop.f32.mrf.mxu0
    %5841 = vmatprep.mubr.f32.mxu0 0.0
    %5842 = vmatmul.mubr.f32.gmra.mxu0 %v3945
    %v5843 = vpop.f32.mrf.mxu0
    %v5844 = vadd.f32 %v5459, %v5843
    %v5845 = vpop.f32.mrf.mxu0
    %5846 = vmatprep.mubr.f32.mxu0 0.0
    %5847 = vmatmul.mubr.f32.gmra.mxu0 %v3946
    %v5848 = vpop.f32.mrf.mxu0
    %v5849 = vadd.f32 %v5464, %v5848
    %v5850 = vpop.f32.mrf.mxu0
    %5851 = vmatprep.mubr.f32.mxu0 0.0
    %5852 = vmatmul.mubr.f32.gmra.mxu0 %v3947
    %v5853 = vpop.f32.mrf.mxu0
    %v5854 = vadd.f32 %v5469, %v5853
    %v5855 = vpop.f32.mrf.mxu0
    %5856 = vmatprep.mubr.f32.mxu0 0.0
    %5857 = vmatmul.mubr.f32.gmra.mxu0 %v3948
    %v5858 = vpop.f32.mrf.mxu0
    %v5859 = vadd.f32 %v5474, %v5858
    %v5860 = vpop.f32.mrf.mxu0
    %5861 = vmatprep.mubr.f32.mxu0 0.0
    %5862 = vmatmul.mubr.f32.gmra.mxu0 %v3949
    %v5863 = vpop.f32.mrf.mxu0
    %v5864 = vadd.f32 %v5479, %v5863
    %v5865 = vpop.f32.mrf.mxu0
    %5866 = vmatprep.mubr.f32.mxu0 0.0
    %5867 = vmatmul.mubr.f32.gmra.mxu0 %v3950
    %v5868 = vpop.f32.mrf.mxu0
    %v5869 = vadd.f32 %v5484, %v5868
    %v5870 = vpop.f32.mrf.mxu0
    %5871 = vmatprep.mubr.f32.mxu0 0.0
    %5872 = vmatmul.mubr.f32.gmra.mxu0 %v3951
    %v5873 = vpop.f32.mrf.mxu0
    %v5874 = vadd.f32 %v5489, %v5873
    %v5875 = vpop.f32.mrf.mxu0
    %5876 = vmatprep.mubr.f32.mxu0 0.0
    %5877 = vmatmul.mubr.f32.gmra.mxu0 %v3952
    %v5878 = vpop.f32.mrf.mxu0
    %v5879 = vadd.f32 %v5494, %v5878
    %v5880 = vpop.f32.mrf.mxu0
    %5881 = vmatprep.mubr.f32.mxu0 0.0
    %5882 = vmatmul.mubr.f32.gmra.mxu0 %v3953
    %v5883 = vpop.f32.mrf.mxu0
    %v5884 = vadd.f32 %v5499, %v5883
    %v5885 = vpop.f32.mrf.mxu0
    %5886 = vmatprep.mubr.f32.mxu0 0.0
    %5887 = vmatmul.mubr.f32.gmra.mxu0 %v3954
    %v5888 = vpop.f32.mrf.mxu0
    %v5889 = vadd.f32 %v5504, %v5888
    %v5890 = vpop.f32.mrf.mxu0
    %5891 = vmatprep.mubr.f32.mxu0 0.0
    %5892 = vmatmul.mubr.f32.gmra.mxu0 %v3955
    %v5893 = vpop.f32.mrf.mxu0
    %v5894 = vadd.f32 %v5509, %v5893
    %v5895 = vpop.f32.mrf.mxu0
    %5896 = vmatprep.mubr.f32.mxu0 0.0
    %5897 = vmatmul.mubr.f32.gmra.mxu0 %v3956
    %v5898 = vpop.f32.mrf.mxu0
    %v5899 = vadd.f32 %v5514, %v5898
    %v5900 = vpop.f32.mrf.mxu0
    %5901 = vmatprep.mubr.f32.mxu0 0.0
    %5902 = vmatmul.mubr.f32.gmra.mxu0 %v3957
    %v5903 = vpop.f32.mrf.mxu0
    %v5904 = vadd.f32 %v5519, %v5903
    %v5905 = vpop.f32.mrf.mxu0
    %5906 = vmatprep.mubr.f32.mxu0 0.0
    %5907 = vmatmul.mubr.f32.gmra.mxu0 %v3958
    %v5908 = vpop.f32.mrf.mxu0
    %v5909 = vadd.f32 %v5524, %v5908
    %v5910 = vpop.f32.mrf.mxu0
    %5911 = vmatprep.mubr.f32.mxu0 0.0
    %5912 = vmatmul.mubr.f32.gmra.mxu0 %v3959
    %v5913 = vpop.f32.mrf.mxu0
    %v5914 = vadd.f32 %v5529, %v5913
    %v5915 = vpop.f32.mrf.mxu0
    %5916 = vmatprep.mubr.f32.mxu0 0.0
    %5917 = vmatmul.mubr.f32.gmra.mxu0 %v3960
    %v5918 = vpop.f32.mrf.mxu0
    %v5919 = vadd.f32 %v5534, %v5918
    %v5920 = vpop.f32.mrf.mxu0
    %5921 = vmatprep.mubr.f32.mxu0 0.0
    %5922 = vmatmul.mubr.f32.gmra.mxu0 %v3961
    %v5923 = vpop.f32.mrf.mxu0
    %v5924 = vadd.f32 %v5539, %v5923
    %v5925 = vpop.f32.mrf.mxu0
    %5926 = vmatprep.mubr.f32.mxu0 0.0
    %5927 = vmatmul.mubr.f32.gmra.mxu0 %v3962
    %v5928 = vpop.f32.mrf.mxu0
    %v5929 = vadd.f32 %v5544, %v5928
    %v5930 = vpop.f32.mrf.mxu0
    %5931 = vmatprep.mubr.f32.mxu0 0.0
    %5932 = vmatmul.mubr.f32.gmra.mxu0 %v3963
    %v5933 = vpop.f32.mrf.mxu0
    %v5934 = vadd.f32 %v5549, %v5933
    %v5935 = vpop.f32.mrf.mxu0
    %5936 = vmatprep.mubr.f32.mxu0 0.0
    %5937 = vmatmul.mubr.f32.gmra.mxu0 %v3964
    %v5938 = vpop.f32.mrf.mxu0
    %v5939 = vadd.f32 %v5554, %v5938
    %v5940 = vpop.f32.mrf.mxu0
    %5941 = vmatprep.mubr.f32.mxu0 0.0
    %5942 = vmatmul.mubr.f32.gmra.mxu0 %v3965
    %v5943 = vpop.f32.mrf.mxu0
    %v5944 = vadd.f32 %v5559, %v5943
    %v5945 = vpop.f32.mrf.mxu0
    %5946 = vmatprep.mubr.f32.mxu0 0.0
    %5947 = vmatmul.mubr.f32.gmra.mxu0 %v3966
    %v5948 = vpop.f32.mrf.mxu0
    %v5949 = vadd.f32 %v5564, %v5948
    %v5950 = vpop.f32.mrf.mxu0
    %5951 = vmatprep.mubr.f32.mxu0 0.0
    %5952 = vmatmul.mubr.f32.gmra.mxu0 %v3967
    %v5953 = vpop.f32.mrf.mxu0
    %v5954 = vadd.f32 %v5569, %v5953
    %v5955 = vpop.f32.mrf.mxu0
    %5956 = vmatprep.mubr.f32.mxu0 0.0
    %5957 = vmatmul.mubr.f32.gmra.mxu0 %v3968
    %v5958 = vpop.f32.mrf.mxu0
    %v5959 = vadd.f32 %v5574, %v5958
    %v5960 = vpop.f32.mrf.mxu0
    %5961 = vmatprep.mubr.f32.mxu0 0.0
    %5962 = vmatmul.mubr.f32.gmra.mxu0 %v3969
    %v5963 = vpop.f32.mrf.mxu0
    %v5964 = vadd.f32 %v5579, %v5963
    %v5965 = vpop.f32.mrf.mxu0
    %5966 = vmatprep.mubr.f32.mxu0 0.0
    %5967 = vmatmul.mubr.f32.gmra.mxu0 %v3970
    %v5968 = vpop.f32.mrf.mxu0
    %v5969 = vadd.f32 %v5584, %v5968
    %v5970 = vpop.f32.mrf.mxu0
    %5971 = vmatprep.mubr.f32.mxu0 0.0
    %5972 = vmatmul.mubr.f32.gmra.mxu0 %v3971
    %v5973 = vpop.f32.mrf.mxu0
    %v5974 = vadd.f32 %v5589, %v5973
    %v5975 = vpop.f32.mrf.mxu0
    %5976 = vmatprep.mubr.f32.mxu0 0.0
    %5977 = vmatmul.mubr.f32.gmra.mxu0 %v3972
    %v5978 = vpop.f32.mrf.mxu0
    %v5979 = vadd.f32 %v5594, %v5978
    %v5980 = vpop.f32.mrf.mxu0
    %5981 = vmatprep.mubr.f32.mxu0 0.0
    %5982 = vmatmul.mubr.f32.gmra.mxu0 %v3973
    %v5983 = vpop.f32.mrf.mxu0
    %v5984 = vadd.f32 %v5599, %v5983
    %v5985 = vpop.f32.mrf.mxu0
    %5986 = vmatprep.mubr.f32.mxu0 0.0
    %5987 = vmatmul.mubr.f32.gmra.mxu0 %v3974
    %v5988 = vpop.f32.mrf.mxu0
    %v5989 = vadd.f32 %v5604, %v5988
    %v5990 = vpop.f32.mrf.mxu0
    %5991 = vmatprep.mubr.f32.mxu0 0.0
    %5992 = vmatmul.mubr.f32.gmra.mxu0 %v3975
    %v5993 = vpop.f32.mrf.mxu0
    %v5994 = vadd.f32 %v5609, %v5993
    %v5995 = vpop.f32.mrf.mxu0
    %5996 = vmatprep.mubr.f32.mxu0 0.0
    %5997 = vmatmul.mubr.f32.gmra.mxu0 %v3976
    %v5998 = vpop.f32.mrf.mxu0
    %v5999 = vadd.f32 %v5614, %v5998
    %v6000 = vpop.f32.mrf.mxu0
    %6001 = vmatprep.mubr.f32.mxu0 0.0
    %6002 = vmatmul.mubr.f32.gmra.mxu0 %v3977
    %v6003 = vpop.f32.mrf.mxu0
    %v6004 = vadd.f32 %v5619, %v6003
    %v6005 = vpop.f32.mrf.mxu0
    %6006 = vmatprep.mubr.f32.mxu0 0.0
    %6007 = vmatmul.mubr.f32.gmra.mxu0 %v3978
    %v6008 = vpop.f32.mrf.mxu0
    %v6009 = vadd.f32 %v5624, %v6008
    %v6010 = vpop.f32.mrf.mxu0
    %6011 = vmatprep.mubr.f32.mxu0 0.0
    %6012 = vmatmul.mubr.f32.gmra.mxu0 %v3979
    %v6013 = vpop.f32.mrf.mxu0
    %v6014 = vadd.f32 %v5629, %v6013
    %v6015 = vpop.f32.mrf.mxu0
    %6016 = vmatprep.mubr.f32.mxu0 0.0
    %6017 = vmatmul.mubr.f32.gmra.mxu0 %v3980
    %v6018 = vpop.f32.mrf.mxu0
    %v6019 = vadd.f32 %v5634, %v6018
    %v6020 = vpop.f32.mrf.mxu0
    %6021 = vmatprep.mubr.f32.mxu0 0.0
    %6022 = vmatmul.mubr.f32.gmra.mxu0 %v3981
    %v6023 = vpop.f32.mrf.mxu0
    %v6024 = vadd.f32 %v5639, %v6023
    %v6025 = vpop.f32.mrf.mxu0
    %6026 = vmatprep.mubr.f32.mxu0 0.0
    %6027 = vmatmul.mubr.f32.gmra.mxu0 %v3982
    %v6028 = vpop.f32.mrf.mxu0
    %v6029 = vadd.f32 %v5644, %v6028
    %v6030 = vpop.f32.mrf.mxu0
    %6031 = vmatprep.mubr.f32.mxu0 0.0
    %6032 = vmatmul.mubr.f32.gmra.mxu0 %v3983
    %v6033 = vpop.f32.mrf.mxu0
    %v6034 = vadd.f32 %v5649, %v6033
    %v6035 = vpop.f32.mrf.mxu0
    %6036 = vmatprep.mubr.f32.mxu0 0.0
    %6037 = vmatmul.mubr.f32.gmra.mxu0 %v3984
    %v6038 = vpop.f32.mrf.mxu0
    %v6039 = vadd.f32 %v5654, %v6038
    %v6040 = vpop.f32.mrf.mxu0
    %6041 = vmatprep.mubr.f32.mxu0 0.0
    %6042 = vmatmul.mubr.f32.gmra.mxu0 %v3985
    %v6043 = vpop.f32.mrf.mxu0
    %v6044 = vadd.f32 %v5659, %v6043
    %v6045 = vpop.f32.mrf.mxu0
    %6046 = vmatprep.mubr.f32.mxu0 0.0
    %6047 = vmatmul.mubr.f32.gmra.mxu0 %v3986
    %v6048 = vpop.f32.mrf.mxu0
    %v6049 = vadd.f32 %v5664, %v6048
    %v6050 = vpop.f32.mrf.mxu0
    %6051 = vmatprep.mubr.f32.mxu0 0.0
    %6052 = vmatmul.mubr.f32.gmra.mxu0 %v3987
    %v6053 = vpop.f32.mrf.mxu0
    %v6054 = vadd.f32 %v5669, %v6053
    %v6055 = vpop.f32.mrf.mxu0
    %6056 = vdwg.mxu0
    %v6057 = vld [vmem:[%s5] sm:$0x1]
    %v6058 = vld [vmem:[%s6] sm:$0x1]
    %v6059 = vadd.f32 %v5739, %v5744
    %v6060 = vadd.f32 %v6059, %v5749
    %v6061 = vadd.f32 %v6060, %v5754
    %v6062 = vadd.f32 %v6061, %v5759
    %v6063 = vadd.f32 %v6062, %v5764
    %v6064 = vadd.f32 %v6063, %v5769
    %v6065 = vadd.f32 %v6064, %v5774
    %v6066 = vadd.f32 %v6065, %v5779
    %v6067 = vadd.f32 %v6066, %v5784
    %v6068 = vadd.f32 %v6067, %v5789
    %v6069 = vadd.f32 %v6068, %v5794
    %v6070 = vadd.f32 %v6069, %v5799
    %v6071 = vadd.f32 %v6070, %v5804
    %v6072 = vadd.f32 %v6071, %v5809
    %v6073 = vadd.f32 %v6072, %v5814
    %v6074 = vadd.f32 %v6073, %v5819
    %v6075 = vadd.f32 %v6074, %v5824
    %v6076 = vadd.f32 %v6075, %v5829
    %v6077 = vadd.f32 %v6076, %v5834
    %v6078 = vadd.f32 %v6077, %v5839
    %v6079 = vadd.f32 %v6078, %v5844
    %v6080 = vadd.f32 %v6079, %v5849
    %v6081 = vadd.f32 %v6080, %v5854
    %v6082 = vadd.f32 %v6081, %v5859
    %v6083 = vadd.f32 %v6082, %v5864
    %v6084 = vadd.f32 %v6083, %v5869
    %v6085 = vadd.f32 %v6084, %v5874
    %v6086 = vadd.f32 %v6085, %v5879
    %v6087 = vadd.f32 %v6086, %v5884
    %v6088 = vadd.f32 %v6087, %v5889
    %v6089 = vadd.f32 %v6088, %v5894
    %v6090 = vadd.f32 %v6089, %v5899
    %v6091 = vadd.f32 %v6090, %v5904
    %v6092 = vadd.f32 %v6091, %v5909
    %v6093 = vadd.f32 %v6092, %v5914
    %v6094 = vadd.f32 %v6093, %v5919
    %v6095 = vadd.f32 %v6094, %v5924
    %v6096 = vadd.f32 %v6095, %v5929
    %v6097 = vadd.f32 %v6096, %v5934
    %v6098 = vadd.f32 %v6097, %v5939
    %v6099 = vadd.f32 %v6098, %v5944
    %v6100 = vadd.f32 %v6099, %v5949
    %v6101 = vadd.f32 %v6100, %v5954
    %v6102 = vadd.f32 %v6101, %v5959
    %v6103 = vadd.f32 %v6102, %v5964
    %v6104 = vadd.f32 %v6103, %v5969
    %v6105 = vadd.f32 %v6104, %v5974
    %v6106 = vadd.f32 %v6105, %v5979
    %v6107 = vadd.f32 %v6106, %v5984
    %v6108 = vadd.f32 %v6107, %v5989
    %v6109 = vadd.f32 %v6108, %v5994
    %v6110 = vadd.f32 %v6109, %v5999
    %v6111 = vadd.f32 %v6110, %v6004
    %v6112 = vadd.f32 %v6111, %v6009
    %v6113 = vadd.f32 %v6112, %v6014
    %v6114 = vadd.f32 %v6113, %v6019
    %v6115 = vadd.f32 %v6114, %v6024
    %v6116 = vadd.f32 %v6115, %v6029
    %v6117 = vadd.f32 %v6116, %v6034
    %v6118 = vadd.f32 %v6117, %v6039
    %v6119 = vadd.f32 %v6118, %v6044
    %v6120 = vadd.f32 %v6119, %v6049
    %v6121 = vadd.f32 %v6120, %v6054
    %v6122 = vrot.slane %v6121, 4
    %v6123 = vadd.f32 %v6121, %v6122
    %v6124 = vrot.slane %v6123, 2
    %v6125 = vadd.f32 %v6123, %v6124
    %v6126 = vrot.slane %v6125, 1
    %v6127 = vadd.f32 %v6125, %v6126
    %v6128 = vmul.f32 %v5739, %v5739
    %v6129 = vmul.f32 %v5744, %v5744
    %v6130 = vmul.f32 %v5749, %v5749
    %v6131 = vmul.f32 %v5754, %v5754
    %v6132 = vmul.f32 %v5759, %v5759
    %v6133 = vmul.f32 %v5764, %v5764
    %v6134 = vmul.f32 %v5769, %v5769
    %v6135 = vmul.f32 %v5774, %v5774
    %v6136 = vmul.f32 %v5779, %v5779
    %v6137 = vmul.f32 %v5784, %v5784
    %v6138 = vmul.f32 %v5789, %v5789
    %v6139 = vmul.f32 %v5794, %v5794
    %v6140 = vmul.f32 %v5799, %v5799
    %v6141 = vmul.f32 %v5804, %v5804
    %v6142 = vmul.f32 %v5809, %v5809
    %v6143 = vmul.f32 %v5814, %v5814
    %v6144 = vmul.f32 %v5819, %v5819
    %v6145 = vmul.f32 %v5824, %v5824
    %v6146 = vmul.f32 %v5829, %v5829
    %v6147 = vmul.f32 %v5834, %v5834
    %v6148 = vmul.f32 %v5839, %v5839
    %v6149 = vmul.f32 %v5844, %v5844
    %v6150 = vmul.f32 %v5849, %v5849
    %v6151 = vmul.f32 %v5854, %v5854
    %v6152 = vmul.f32 %v5859, %v5859
    %v6153 = vmul.f32 %v5864, %v5864
    %v6154 = vmul.f32 %v5869, %v5869
    %v6155 = vmul.f32 %v5874, %v5874
    %v6156 = vmul.f32 %v5879, %v5879
    %v6157 = vmul.f32 %v5884, %v5884
    %v6158 = vmul.f32 %v5889, %v5889
    %v6159 = vmul.f32 %v5894, %v5894
    %v6160 = vmul.f32 %v5899, %v5899
    %v6161 = vmul.f32 %v5904, %v5904
    %v6162 = vmul.f32 %v5909, %v5909
    %v6163 = vmul.f32 %v5914, %v5914
    %v6164 = vmul.f32 %v5919, %v5919
    %v6165 = vmul.f32 %v5924, %v5924
    %v6166 = vmul.f32 %v5929, %v5929
    %v6167 = vmul.f32 %v5934, %v5934
    %v6168 = vmul.f32 %v5939, %v5939
    %v6169 = vmul.f32 %v5944, %v5944
    %v6170 = vmul.f32 %v5949, %v5949
    %v6171 = vmul.f32 %v5954, %v5954
    %v6172 = vmul.f32 %v5959, %v5959
    %v6173 = vmul.f32 %v5964, %v5964
    %v6174 = vmul.f32 %v5969, %v5969
    %v6175 = vmul.f32 %v5974, %v5974
    %v6176 = vmul.f32 %v5979, %v5979
    %v6177 = vmul.f32 %v5984, %v5984
    %v6178 = vmul.f32 %v5989, %v5989
    %v6179 = vmul.f32 %v5994, %v5994
    %v6180 = vmul.f32 %v5999, %v5999
    %v6181 = vmul.f32 %v6004, %v6004
    %v6182 = vmul.f32 %v6009, %v6009
    %v6183 = vmul.f32 %v6014, %v6014
    %v6184 = vmul.f32 %v6019, %v6019
    %v6185 = vmul.f32 %v6024, %v6024
    %v6186 = vmul.f32 %v6029, %v6029
    %v6187 = vmul.f32 %v6034, %v6034
    %v6188 = vmul.f32 %v6039, %v6039
    %v6189 = vmul.f32 %v6044, %v6044
    %v6190 = vmul.f32 %v6049, %v6049
    %v6191 = vmul.f32 %v6054, %v6054
    %v6192 = vadd.f32 %v6128, %v6129
    %v6193 = vadd.f32 %v6192, %v6130
    %v6194 = vadd.f32 %v6193, %v6131
    %v6195 = vadd.f32 %v6194, %v6132
    %v6196 = vadd.f32 %v6195, %v6133
    %v6197 = vadd.f32 %v6196, %v6134
    %v6198 = vadd.f32 %v6197, %v6135
    %v6199 = vadd.f32 %v6198, %v6136
    %v6200 = vadd.f32 %v6199, %v6137
    %v6201 = vadd.f32 %v6200, %v6138
    %v6202 = vadd.f32 %v6201, %v6139
    %v6203 = vadd.f32 %v6202, %v6140
    %v6204 = vadd.f32 %v6203, %v6141
    %v6205 = vadd.f32 %v6204, %v6142
    %v6206 = vadd.f32 %v6205, %v6143
    %v6207 = vadd.f32 %v6206, %v6144
    %v6208 = vadd.f32 %v6207, %v6145
    %v6209 = vadd.f32 %v6208, %v6146
    %v6210 = vadd.f32 %v6209, %v6147
    %v6211 = vadd.f32 %v6210, %v6148
    %v6212 = vadd.f32 %v6211, %v6149
    %v6213 = vadd.f32 %v6212, %v6150
    %v6214 = vadd.f32 %v6213, %v6151
    %v6215 = vadd.f32 %v6214, %v6152
    %v6216 = vadd.f32 %v6215, %v6153
    %v6217 = vadd.f32 %v6216, %v6154
    %v6218 = vadd.f32 %v6217, %v6155
    %v6219 = vadd.f32 %v6218, %v6156
    %v6220 = vadd.f32 %v6219, %v6157
    %v6221 = vadd.f32 %v6220, %v6158
    %v6222 = vadd.f32 %v6221, %v6159
    %v6223 = vadd.f32 %v6222, %v6160
    %v6224 = vadd.f32 %v6223, %v6161
    %v6225 = vadd.f32 %v6224, %v6162
    %v6226 = vadd.f32 %v6225, %v6163
    %v6227 = vadd.f32 %v6226, %v6164
    %v6228 = vadd.f32 %v6227, %v6165
    %v6229 = vadd.f32 %v6228, %v6166
    %v6230 = vadd.f32 %v6229, %v6167
    %v6231 = vadd.f32 %v6230, %v6168
    %v6232 = vadd.f32 %v6231, %v6169
    %v6233 = vadd.f32 %v6232, %v6170
    %v6234 = vadd.f32 %v6233, %v6171
    %v6235 = vadd.f32 %v6234, %v6172
    %v6236 = vadd.f32 %v6235, %v6173
    %v6237 = vadd.f32 %v6236, %v6174
    %v6238 = vadd.f32 %v6237, %v6175
    %v6239 = vadd.f32 %v6238, %v6176
    %v6240 = vadd.f32 %v6239, %v6177
    %v6241 = vadd.f32 %v6240, %v6178
    %v6242 = vadd.f32 %v6241, %v6179
    %v6243 = vadd.f32 %v6242, %v6180
    %v6244 = vadd.f32 %v6243, %v6181
    %v6245 = vadd.f32 %v6244, %v6182
    %v6246 = vadd.f32 %v6245, %v6183
    %v6247 = vadd.f32 %v6246, %v6184
    %v6248 = vadd.f32 %v6247, %v6185
    %v6249 = vadd.f32 %v6248, %v6186
    %v6250 = vadd.f32 %v6249, %v6187
    %v6251 = vadd.f32 %v6250, %v6188
    %v6252 = vadd.f32 %v6251, %v6189
    %v6253 = vadd.f32 %v6252, %v6190
    %v6254 = vadd.f32 %v6253, %v6191
    %v6255 = vrot.slane %v6254, 4
    %v6256 = vadd.f32 %v6254, %v6255
    %v6257 = vrot.slane %v6256, 2
    %v6258 = vadd.f32 %v6256, %v6257
    %v6259 = vrot.slane %v6258, 1
    %v6260 = vadd.f32 %v6258, %v6259
    %v6261 = vmul.f32 %v6127, 0.001953125
    %v6262 = vmul.f32 %v6260, 0.001953125
    %v6263 = vmul.f32 %v6261, %v6261
    %v6264 = vsub.f32 %v6262, %v6263
    %v6265 = vadd.f32 %v6264, 1e-05
    %v6266 = vrsqrt.pop %v6265
    %v6267 = vmul.f32 %v6057, %v6266
    %v6268 = vmul.f32 %v6261, %v6267
    %v6269 = vsub.f32 %v6058, %v6268
    %v6271 = vlaneseq
    %v6272 = vshrl.u32 %v6271, 7
    %v6273 = vsub.s32 0, %v6272
    %v6274 = vrot.slane %v6267, %v6273
    %v6276 = vmul.f32 %v5739, %v6274
    %v6277 = vmul.f32 %v5744, %v6274
    %v6278 = vmul.f32 %v5749, %v6274
    %v6279 = vmul.f32 %v5754, %v6274
    %v6280 = vmul.f32 %v5759, %v6274
    %v6281 = vmul.f32 %v5764, %v6274
    %v6282 = vmul.f32 %v5769, %v6274
    %v6283 = vmul.f32 %v5774, %v6274
    %v6284 = vmul.f32 %v5779, %v6274
    %v6285 = vmul.f32 %v5784, %v6274
    %v6286 = vmul.f32 %v5789, %v6274
    %v6287 = vmul.f32 %v5794, %v6274
    %v6288 = vmul.f32 %v5799, %v6274
    %v6289 = vmul.f32 %v5804, %v6274
    %v6290 = vmul.f32 %v5809, %v6274
    %v6291 = vmul.f32 %v5814, %v6274
    %v6292 = vmul.f32 %v5819, %v6274
    %v6293 = vmul.f32 %v5824, %v6274
    %v6294 = vmul.f32 %v5829, %v6274
    %v6295 = vmul.f32 %v5834, %v6274
    %v6296 = vmul.f32 %v5839, %v6274
    %v6297 = vmul.f32 %v5844, %v6274
    %v6298 = vmul.f32 %v5849, %v6274
    %v6299 = vmul.f32 %v5854, %v6274
    %v6300 = vmul.f32 %v5859, %v6274
    %v6301 = vmul.f32 %v5864, %v6274
    %v6302 = vmul.f32 %v5869, %v6274
    %v6303 = vmul.f32 %v5874, %v6274
    %v6304 = vmul.f32 %v5879, %v6274
    %v6305 = vmul.f32 %v5884, %v6274
    %v6306 = vmul.f32 %v5889, %v6274
    %v6307 = vmul.f32 %v5894, %v6274
    %v6308 = vmul.f32 %v5899, %v6274
    %v6309 = vmul.f32 %v5904, %v6274
    %v6310 = vmul.f32 %v5909, %v6274
    %v6311 = vmul.f32 %v5914, %v6274
    %v6312 = vmul.f32 %v5919, %v6274
    %v6313 = vmul.f32 %v5924, %v6274
    %v6314 = vmul.f32 %v5929, %v6274
    %v6315 = vmul.f32 %v5934, %v6274
    %v6316 = vmul.f32 %v5939, %v6274
    %v6317 = vmul.f32 %v5944, %v6274
    %v6318 = vmul.f32 %v5949, %v6274
    %v6319 = vmul.f32 %v5954, %v6274
    %v6320 = vmul.f32 %v5959, %v6274
    %v6321 = vmul.f32 %v5964, %v6274
    %v6322 = vmul.f32 %v5969, %v6274
    %v6323 = vmul.f32 %v5974, %v6274
    %v6324 = vmul.f32 %v5979, %v6274
    %v6325 = vmul.f32 %v5984, %v6274
    %v6326 = vmul.f32 %v5989, %v6274
    %v6327 = vmul.f32 %v5994, %v6274
    %v6328 = vmul.f32 %v5999, %v6274
    %v6329 = vmul.f32 %v6004, %v6274
    %v6330 = vmul.f32 %v6009, %v6274
    %v6331 = vmul.f32 %v6014, %v6274
    %v6332 = vmul.f32 %v6019, %v6274
    %v6333 = vmul.f32 %v6024, %v6274
    %v6334 = vmul.f32 %v6029, %v6274
    %v6335 = vmul.f32 %v6034, %v6274
    %v6336 = vmul.f32 %v6039, %v6274
    %v6337 = vmul.f32 %v6044, %v6274
    %v6338 = vmul.f32 %v6049, %v6274
    %v6339 = vmul.f32 %v6054, %v6274
    %v6341 = vlaneseq
    %v6342 = vshrl.u32 %v6341, 7
    %v6343 = vsub.s32 0, %v6342
    %v6344 = vrot.slane %v6269, %v6343
    %v6346 = vadd.f32 %v6276, %v6344
    %v6347 = vadd.f32 %v6277, %v6344
    %v6348 = vadd.f32 %v6278, %v6344
    %v6349 = vadd.f32 %v6279, %v6344
    %v6350 = vadd.f32 %v6280, %v6344
    %v6351 = vadd.f32 %v6281, %v6344
    %v6352 = vadd.f32 %v6282, %v6344
    %v6353 = vadd.f32 %v6283, %v6344
    %v6354 = vadd.f32 %v6284, %v6344
    %v6355 = vadd.f32 %v6285, %v6344
    %v6356 = vadd.f32 %v6286, %v6344
    %v6357 = vadd.f32 %v6287, %v6344
    %v6358 = vadd.f32 %v6288, %v6344
    %v6359 = vadd.f32 %v6289, %v6344
    %v6360 = vadd.f32 %v6290, %v6344
    %v6361 = vadd.f32 %v6291, %v6344
    %v6362 = vadd.f32 %v6292, %v6344
    %v6363 = vadd.f32 %v6293, %v6344
    %v6364 = vadd.f32 %v6294, %v6344
    %v6365 = vadd.f32 %v6295, %v6344
    %v6366 = vadd.f32 %v6296, %v6344
    %v6367 = vadd.f32 %v6297, %v6344
    %v6368 = vadd.f32 %v6298, %v6344
    %v6369 = vadd.f32 %v6299, %v6344
    %v6370 = vadd.f32 %v6300, %v6344
    %v6371 = vadd.f32 %v6301, %v6344
    %v6372 = vadd.f32 %v6302, %v6344
    %v6373 = vadd.f32 %v6303, %v6344
    %v6374 = vadd.f32 %v6304, %v6344
    %v6375 = vadd.f32 %v6305, %v6344
    %v6376 = vadd.f32 %v6306, %v6344
    %v6377 = vadd.f32 %v6307, %v6344
    %v6378 = vadd.f32 %v6308, %v6344
    %v6379 = vadd.f32 %v6309, %v6344
    %v6380 = vadd.f32 %v6310, %v6344
    %v6381 = vadd.f32 %v6311, %v6344
    %v6382 = vadd.f32 %v6312, %v6344
    %v6383 = vadd.f32 %v6313, %v6344
    %v6384 = vadd.f32 %v6314, %v6344
    %v6385 = vadd.f32 %v6315, %v6344
    %v6386 = vadd.f32 %v6316, %v6344
    %v6387 = vadd.f32 %v6317, %v6344
    %v6388 = vadd.f32 %v6318, %v6344
    %v6389 = vadd.f32 %v6319, %v6344
    %v6390 = vadd.f32 %v6320, %v6344
    %v6391 = vadd.f32 %v6321, %v6344
    %v6392 = vadd.f32 %v6322, %v6344
    %v6393 = vadd.f32 %v6323, %v6344
    %v6394 = vadd.f32 %v6324, %v6344
    %v6395 = vadd.f32 %v6325, %v6344
    %v6396 = vadd.f32 %v6326, %v6344
    %v6397 = vadd.f32 %v6327, %v6344
    %v6398 = vadd.f32 %v6328, %v6344
    %v6399 = vadd.f32 %v6329, %v6344
    %v6400 = vadd.f32 %v6330, %v6344
    %v6401 = vadd.f32 %v6331, %v6344
    %v6402 = vadd.f32 %v6332, %v6344
    %v6403 = vadd.f32 %v6333, %v6344
    %v6404 = vadd.f32 %v6334, %v6344
    %v6405 = vadd.f32 %v6335, %v6344
    %v6406 = vadd.f32 %v6336, %v6344
    %v6407 = vadd.f32 %v6337, %v6344
    %v6408 = vadd.f32 %v6338, %v6344
    %v6409 = vadd.f32 %v6339, %v6344
    %v6410 = vmax.f32 %v6346, 0.0
    %v6411 = vmax.f32 %v6347, 0.0
    %v6412 = vmax.f32 %v6348, 0.0
    %v6413 = vmax.f32 %v6349, 0.0
    %v6414 = vmax.f32 %v6350, 0.0
    %v6415 = vmax.f32 %v6351, 0.0
    %v6416 = vmax.f32 %v6352, 0.0
    %v6417 = vmax.f32 %v6353, 0.0
    %v6418 = vmax.f32 %v6354, 0.0
    %v6419 = vmax.f32 %v6355, 0.0
    %v6420 = vmax.f32 %v6356, 0.0
    %v6421 = vmax.f32 %v6357, 0.0
    %v6422 = vmax.f32 %v6358, 0.0
    %v6423 = vmax.f32 %v6359, 0.0
    %v6424 = vmax.f32 %v6360, 0.0
    %v6425 = vmax.f32 %v6361, 0.0
    %v6426 = vmax.f32 %v6362, 0.0
    %v6427 = vmax.f32 %v6363, 0.0
    %v6428 = vmax.f32 %v6364, 0.0
    %v6429 = vmax.f32 %v6365, 0.0
    %v6430 = vmax.f32 %v6366, 0.0
    %v6431 = vmax.f32 %v6367, 0.0
    %v6432 = vmax.f32 %v6368, 0.0
    %v6433 = vmax.f32 %v6369, 0.0
    %v6434 = vmax.f32 %v6370, 0.0
    %v6435 = vmax.f32 %v6371, 0.0
    %v6436 = vmax.f32 %v6372, 0.0
    %v6437 = vmax.f32 %v6373, 0.0
    %v6438 = vmax.f32 %v6374, 0.0
    %v6439 = vmax.f32 %v6375, 0.0
    %v6440 = vmax.f32 %v6376, 0.0
    %v6441 = vmax.f32 %v6377, 0.0
    %v6442 = vmax.f32 %v6378, 0.0
    %v6443 = vmax.f32 %v6379, 0.0
    %v6444 = vmax.f32 %v6380, 0.0
    %v6445 = vmax.f32 %v6381, 0.0
    %v6446 = vmax.f32 %v6382, 0.0
    %v6447 = vmax.f32 %v6383, 0.0
    %v6448 = vmax.f32 %v6384, 0.0
    %v6449 = vmax.f32 %v6385, 0.0
    %v6450 = vmax.f32 %v6386, 0.0
    %v6451 = vmax.f32 %v6387, 0.0
    %v6452 = vmax.f32 %v6388, 0.0
    %v6453 = vmax.f32 %v6389, 0.0
    %v6454 = vmax.f32 %v6390, 0.0
    %v6455 = vmax.f32 %v6391, 0.0
    %v6456 = vmax.f32 %v6392, 0.0
    %v6457 = vmax.f32 %v6393, 0.0
    %v6458 = vmax.f32 %v6394, 0.0
    %v6459 = vmax.f32 %v6395, 0.0
    %v6460 = vmax.f32 %v6396, 0.0
    %v6461 = vmax.f32 %v6397, 0.0
    %v6462 = vmax.f32 %v6398, 0.0
    %v6463 = vmax.f32 %v6399, 0.0
    %v6464 = vmax.f32 %v6400, 0.0
    %v6465 = vmax.f32 %v6401, 0.0
    %v6466 = vmax.f32 %v6402, 0.0
    %v6467 = vmax.f32 %v6403, 0.0
    %v6468 = vmax.f32 %v6404, 0.0
    %v6469 = vmax.f32 %v6405, 0.0
    %v6470 = vmax.f32 %v6406, 0.0
    %v6471 = vmax.f32 %v6407, 0.0
    %v6472 = vmax.f32 %v6408, 0.0
    %v6473 = vmax.f32 %v6409, 0.0
    %6474 = vst [vmem:[#allocation10] sm:$0xff] %v6410
    %6475 = vst [vmem:[#allocation10 + $0x8] sm:$0xff] %v6411
    %6476 = vst [vmem:[#allocation10 + $0x10] sm:$0xff] %v6412
    %6477 = vst [vmem:[#allocation10 + $0x18] sm:$0xff] %v6413
    %6478 = vst [vmem:[#allocation10 + $0x20] sm:$0xff] %v6414
    %6479 = vst [vmem:[#allocation10 + $0x28] sm:$0xff] %v6415
    %6480 = vst [vmem:[#allocation10 + $0x30] sm:$0xff] %v6416
    %6481 = vst [vmem:[#allocation10 + $0x38] sm:$0xff] %v6417
    %6482 = vst [vmem:[#allocation10 + $0x40] sm:$0xff] %v6418
    %6483 = vst [vmem:[#allocation10 + $0x48] sm:$0xff] %v6419
    %6484 = vst [vmem:[#allocation10 + $0x50] sm:$0xff] %v6420
    %6485 = vst [vmem:[#allocation10 + $0x58] sm:$0xff] %v6421
    %6486 = vst [vmem:[#allocation10 + $0x60] sm:$0xff] %v6422
    %6487 = vst [vmem:[#allocation10 + $0x68] sm:$0xff] %v6423
    %6488 = vst [vmem:[#allocation10 + $0x70] sm:$0xff] %v6424
    %6489 = vst [vmem:[#allocation10 + $0x78] sm:$0xff] %v6425
    %6490 = vst [vmem:[#allocation10 + $0x80] sm:$0xff] %v6426
    %6491 = vst [vmem:[#allocation10 + $0x88] sm:$0xff] %v6427
    %6492 = vst [vmem:[#allocation10 + $0x90] sm:$0xff] %v6428
    %6493 = vst [vmem:[#allocation10 + $0x98] sm:$0xff] %v6429
    %6494 = vst [vmem:[#allocation10 + $0xa0] sm:$0xff] %v6430
    %6495 = vst [vmem:[#allocation10 + $0xa8] sm:$0xff] %v6431
    %6496 = vst [vmem:[#allocation10 + $0xb0] sm:$0xff] %v6432
    %6497 = vst [vmem:[#allocation10 + $0xb8] sm:$0xff] %v6433
    %6498 = vst [vmem:[#allocation10 + $0xc0] sm:$0xff] %v6434
    %6499 = vst [vmem:[#allocation10 + $0xc8] sm:$0xff] %v6435
    %6500 = vst [vmem:[#allocation10 + $0xd0] sm:$0xff] %v6436
    %6501 = vst [vmem:[#allocation10 + $0xd8] sm:$0xff] %v6437
    %6502 = vst [vmem:[#allocation10 + $0xe0] sm:$0xff] %v6438
    %6503 = vst [vmem:[#allocation10 + $0xe8] sm:$0xff] %v6439
    %6504 = vst [vmem:[#allocation10 + $0xf0] sm:$0xff] %v6440
    %6505 = vst [vmem:[#allocation10 + $0xf8] sm:$0xff] %v6441
    %6506 = vst [vmem:[#allocation10 + $0x100] sm:$0xff] %v6442
    %6507 = vst [vmem:[#allocation10 + $0x108] sm:$0xff] %v6443
    %6508 = vst [vmem:[#allocation10 + $0x110] sm:$0xff] %v6444
    %6509 = vst [vmem:[#allocation10 + $0x118] sm:$0xff] %v6445
    %6510 = vst [vmem:[#allocation10 + $0x120] sm:$0xff] %v6446
    %6511 = vst [vmem:[#allocation10 + $0x128] sm:$0xff] %v6447
    %6512 = vst [vmem:[#allocation10 + $0x130] sm:$0xff] %v6448
    %6513 = vst [vmem:[#allocation10 + $0x138] sm:$0xff] %v6449
    %6514 = vst [vmem:[#allocation10 + $0x140] sm:$0xff] %v6450
    %6515 = vst [vmem:[#allocation10 + $0x148] sm:$0xff] %v6451
    %6516 = vst [vmem:[#allocation10 + $0x150] sm:$0xff] %v6452
    %6517 = vst [vmem:[#allocation10 + $0x158] sm:$0xff] %v6453
    %6518 = vst [vmem:[#allocation10 + $0x160] sm:$0xff] %v6454
    %6519 = vst [vmem:[#allocation10 + $0x168] sm:$0xff] %v6455
    %6520 = vst [vmem:[#allocation10 + $0x170] sm:$0xff] %v6456
    %6521 = vst [vmem:[#allocation10 + $0x178] sm:$0xff] %v6457
    %6522 = vst [vmem:[#allocation10 + $0x180] sm:$0xff] %v6458
    %6523 = vst [vmem:[#allocation10 + $0x188] sm:$0xff] %v6459
    %6524 = vst [vmem:[#allocation10 + $0x190] sm:$0xff] %v6460
    %6525 = vst [vmem:[#allocation10 + $0x198] sm:$0xff] %v6461
    %6526 = vst [vmem:[#allocation10 + $0x1a0] sm:$0xff] %v6462
    %6527 = vst [vmem:[#allocation10 + $0x1a8] sm:$0xff] %v6463
    %6528 = vst [vmem:[#allocation10 + $0x1b0] sm:$0xff] %v6464
    %6529 = vst [vmem:[#allocation10 + $0x1b8] sm:$0xff] %v6465
    %6530 = vst [vmem:[#allocation10 + $0x1c0] sm:$0xff] %v6466
    %6531 = vst [vmem:[#allocation10 + $0x1c8] sm:$0xff] %v6467
    %6532 = vst [vmem:[#allocation10 + $0x1d0] sm:$0xff] %v6468
    %6533 = vst [vmem:[#allocation10 + $0x1d8] sm:$0xff] %v6469
    %6534 = vst [vmem:[#allocation10 + $0x1e0] sm:$0xff] %v6470
    %6535 = vst [vmem:[#allocation10 + $0x1e8] sm:$0xff] %v6471
    %6536 = vst [vmem:[#allocation10 + $0x1f0] sm:$0xff] %v6472
    %6537 = vst [vmem:[#allocation10 + $0x1f8] sm:$0xff] %v6473
    %v6538 = vld [vmem:[#allocation10] sm:$0xff]
    %v6539 = vld [vmem:[#allocation10 + $0x8] sm:$0xff]
    %v6540 = vld [vmem:[#allocation10 + $0x20] sm:$0xff]
    %v6541 = vld [vmem:[#allocation10 + $0x28] sm:$0xff]
    %v6542 = vld [vmem:[#allocation10 + $0x40] sm:$0xff]
    %v6543 = vld [vmem:[#allocation10 + $0x48] sm:$0xff]
    %v6544 = vld [vmem:[#allocation10 + $0x60] sm:$0xff]
    %v6545 = vld [vmem:[#allocation10 + $0x68] sm:$0xff]
    %v6546 = vld [vmem:[#allocation10 + $0x80] sm:$0xff]
    %v6547 = vld [vmem:[#allocation10 + $0x88] sm:$0xff]
    %v6548 = vld [vmem:[#allocation10 + $0xa0] sm:$0xff]
    %v6549 = vld [vmem:[#allocation10 + $0xa8] sm:$0xff]
    %v6550 = vld [vmem:[#allocation10 + $0xc0] sm:$0xff]
    %v6551 = vld [vmem:[#allocation10 + $0xc8] sm:$0xff]
    %v6552 = vld [vmem:[#allocation10 + $0xe0] sm:$0xff]
    %v6553 = vld [vmem:[#allocation10 + $0xe8] sm:$0xff]
    %v6554 = vld [vmem:[#allocation10 + $0x100] sm:$0xff]
    %v6555 = vld [vmem:[#allocation10 + $0x108] sm:$0xff]
    %v6556 = vld [vmem:[#allocation10 + $0x120] sm:$0xff]
    %v6557 = vld [vmem:[#allocation10 + $0x128] sm:$0xff]
    %v6558 = vld [vmem:[#allocation10 + $0x140] sm:$0xff]
    %v6559 = vld [vmem:[#allocation10 + $0x148] sm:$0xff]
    %v6560 = vld [vmem:[#allocation10 + $0x160] sm:$0xff]
    %v6561 = vld [vmem:[#allocation10 + $0x168] sm:$0xff]
    %v6562 = vld [vmem:[#allocation10 + $0x180] sm:$0xff]
    %v6563 = vld [vmem:[#allocation10 + $0x188] sm:$0xff]
    %v6564 = vld [vmem:[#allocation10 + $0x1a0] sm:$0xff]
    %v6565 = vld [vmem:[#allocation10 + $0x1a8] sm:$0xff]
    %v6566 = vld [vmem:[#allocation10 + $0x1c0] sm:$0xff]
    %v6567 = vld [vmem:[#allocation10 + $0x1c8] sm:$0xff]
    %v6568 = vld [vmem:[#allocation10 + $0x1e0] sm:$0xff]
    %v6569 = vld [vmem:[#allocation10 + $0x1e8] sm:$0xff]
    %s6570 = scalar_lea.vmem [#allocation10], 16
    %v6571 = vld [vmem:[%s6570] sm:$0xff]
    %v6572 = vld [vmem:[%s6570 + $0x8] sm:$0xff]
    %v6573 = vld [vmem:[%s6570 + $0x20] sm:$0xff]
    %v6574 = vld [vmem:[%s6570 + $0x28] sm:$0xff]
    %v6575 = vld [vmem:[%s6570 + $0x40] sm:$0xff]
    %v6576 = vld [vmem:[%s6570 + $0x48] sm:$0xff]
    %v6577 = vld [vmem:[%s6570 + $0x60] sm:$0xff]
    %v6578 = vld [vmem:[%s6570 + $0x68] sm:$0xff]
    %v6579 = vld [vmem:[%s6570 + $0x80] sm:$0xff]
    %v6580 = vld [vmem:[%s6570 + $0x88] sm:$0xff]
    %v6581 = vld [vmem:[%s6570 + $0xa0] sm:$0xff]
    %v6582 = vld [vmem:[%s6570 + $0xa8] sm:$0xff]
    %v6583 = vld [vmem:[%s6570 + $0xc0] sm:$0xff]
    %v6584 = vld [vmem:[%s6570 + $0xc8] sm:$0xff]
    %v6585 = vld [vmem:[%s6570 + $0xe0] sm:$0xff]
    %v6586 = vld [vmem:[%s6570 + $0xe8] sm:$0xff]
    %v6587 = vld [vmem:[%s6570 + $0x100] sm:$0xff]
    %v6588 = vld [vmem:[%s6570 + $0x108] sm:$0xff]
    %v6589 = vld [vmem:[%s6570 + $0x120] sm:$0xff]
    %v6590 = vld [vmem:[%s6570 + $0x128] sm:$0xff]
    %v6591 = vld [vmem:[%s6570 + $0x140] sm:$0xff]
    %v6592 = vld [vmem:[%s6570 + $0x148] sm:$0xff]
    %v6593 = vld [vmem:[%s6570 + $0x160] sm:$0xff]
    %v6594 = vld [vmem:[%s6570 + $0x168] sm:$0xff]
    %v6595 = vld [vmem:[%s6570 + $0x180] sm:$0xff]
    %v6596 = vld [vmem:[%s6570 + $0x188] sm:$0xff]
    %v6597 = vld [vmem:[%s6570 + $0x1a0] sm:$0xff]
    %v6598 = vld [vmem:[%s6570 + $0x1a8] sm:$0xff]
    %v6599 = vld [vmem:[%s6570 + $0x1c0] sm:$0xff]
    %v6600 = vld [vmem:[%s6570 + $0x1c8] sm:$0xff]
    %v6601 = vld [vmem:[%s6570 + $0x1e0] sm:$0xff]
    %v6602 = vld [vmem:[%s6570 + $0x1e8] sm:$0xff]
    %v6603 = vmax.f32 %v6538, %v6571
    %v6604 = vmax.f32 %v6539, %v6572
    %v6605 = vmax.f32 %v6540, %v6573
    %v6606 = vmax.f32 %v6541, %v6574
    %v6607 = vmax.f32 %v6542, %v6575
    %v6608 = vmax.f32 %v6543, %v6576
    %v6609 = vmax.f32 %v6544, %v6577
    %v6610 = vmax.f32 %v6545, %v6578
    %v6611 = vmax.f32 %v6546, %v6579
    %v6612 = vmax.f32 %v6547, %v6580
    %v6613 = vmax.f32 %v6548, %v6581
    %v6614 = vmax.f32 %v6549, %v6582
    %v6615 = vmax.f32 %v6550, %v6583
    %v6616 = vmax.f32 %v6551, %v6584
    %v6617 = vmax.f32 %v6552, %v6585
    %v6618 = vmax.f32 %v6553, %v6586
    %v6619 = vmax.f32 %v6554, %v6587
    %v6620 = vmax.f32 %v6555, %v6588
    %v6621 = vmax.f32 %v6556, %v6589
    %v6622 = vmax.f32 %v6557, %v6590
    %v6623 = vmax.f32 %v6558, %v6591
    %v6624 = vmax.f32 %v6559, %v6592
    %v6625 = vmax.f32 %v6560, %v6593
    %v6626 = vmax.f32 %v6561, %v6594
    %v6627 = vmax.f32 %v6562, %v6595
    %v6628 = vmax.f32 %v6563, %v6596
    %v6629 = vmax.f32 %v6564, %v6597
    %v6630 = vmax.f32 %v6565, %v6598
    %v6631 = vmax.f32 %v6566, %v6599
    %v6632 = vmax.f32 %v6567, %v6600
    %v6633 = vmax.f32 %v6568, %v6601
    %v6634 = vmax.f32 %v6569, %v6602
    %6635 = vst [vmem:[#allocation3] sm:$0xff] %v6603
    %6636 = vst [vmem:[#allocation3 + $0x8] sm:$0xff] %v6604
    %6637 = vst [vmem:[#allocation3 + $0x10] sm:$0xff] %v6605
    %6638 = vst [vmem:[#allocation3 + $0x18] sm:$0xff] %v6606
    %6639 = vst [vmem:[#allocation3 + $0x20] sm:$0xff] %v6607
    %6640 = vst [vmem:[#allocation3 + $0x28] sm:$0xff] %v6608
    %6641 = vst [vmem:[#allocation3 + $0x30] sm:$0xff] %v6609
    %6642 = vst [vmem:[#allocation3 + $0x38] sm:$0xff] %v6610
    %6643 = vst [vmem:[#allocation3 + $0x40] sm:$0xff] %v6611
    %6644 = vst [vmem:[#allocation3 + $0x48] sm:$0xff] %v6612
    %6645 = vst [vmem:[#allocation3 + $0x50] sm:$0xff] %v6613
    %6646 = vst [vmem:[#allocation3 + $0x58] sm:$0xff] %v6614
    %6647 = vst [vmem:[#allocation3 + $0x60] sm:$0xff] %v6615
    %6648 = vst [vmem:[#allocation3 + $0x68] sm:$0xff] %v6616
    %6649 = vst [vmem:[#allocation3 + $0x70] sm:$0xff] %v6617
    %6650 = vst [vmem:[#allocation3 + $0x78] sm:$0xff] %v6618
    %6651 = vst [vmem:[#allocation3 + $0x80] sm:$0xff] %v6619
    %6652 = vst [vmem:[#allocation3 + $0x88] sm:$0xff] %v6620
    %6653 = vst [vmem:[#allocation3 + $0x90] sm:$0xff] %v6621
    %6654 = vst [vmem:[#allocation3 + $0x98] sm:$0xff] %v6622
    %6655 = vst [vmem:[#allocation3 + $0xa0] sm:$0xff] %v6623
    %6656 = vst [vmem:[#allocation3 + $0xa8] sm:$0xff] %v6624
    %6657 = vst [vmem:[#allocation3 + $0xb0] sm:$0xff] %v6625
    %6658 = vst [vmem:[#allocation3 + $0xb8] sm:$0xff] %v6626
    %6659 = vst [vmem:[#allocation3 + $0xc0] sm:$0xff] %v6627
    %6660 = vst [vmem:[#allocation3 + $0xc8] sm:$0xff] %v6628
    %6661 = vst [vmem:[#allocation3 + $0xd0] sm:$0xff] %v6629
    %6662 = vst [vmem:[#allocation3 + $0xd8] sm:$0xff] %v6630
    %6663 = vst [vmem:[#allocation3 + $0xe0] sm:$0xff] %v6631
    %6664 = vst [vmem:[#allocation3 + $0xe8] sm:$0xff] %v6632
    %6665 = vst [vmem:[#allocation3 + $0xf0] sm:$0xff] %v6633
    %6666 = vst [vmem:[#allocation3 + $0xf8] sm:$0xff] %v6634
    %v6667 = vld [vmem:[#allocation3] ss:$2 sm:$0xff]
    %s6668 = scalar_lea.vmem [#allocation3], 16
    %v6669 = vld [vmem:[%s6668] ss:$2 sm:$0xff]
    %s6670 = scalar_lea.vmem [#allocation3], 32
    %v6671 = vld [vmem:[%s6670] ss:$2 sm:$0xff]
    %s6672 = scalar_lea.vmem [#allocation3], 48
    %v6673 = vld [vmem:[%s6672] ss:$2 sm:$0xff]
    %s6674 = scalar_lea.vmem [#allocation3], 64
    %v6675 = vld [vmem:[%s6674] ss:$2 sm:$0xff]
    %s6676 = scalar_lea.vmem [#allocation3], 80
    %v6677 = vld [vmem:[%s6676] ss:$2 sm:$0xff]
    %s6678 = scalar_lea.vmem [#allocation3], 96
    %v6679 = vld [vmem:[%s6678] ss:$2 sm:$0xff]
    %s6680 = scalar_lea.vmem [#allocation3], 112
    %v6681 = vld [vmem:[%s6680] ss:$2 sm:$0xff]
    %s6682 = scalar_lea.vmem [#allocation3], 128
    %v6683 = vld [vmem:[%s6682] ss:$2 sm:$0xff]
    %s6684 = scalar_lea.vmem [#allocation3], 144
    %v6685 = vld [vmem:[%s6684] ss:$2 sm:$0xff]
    %s6686 = scalar_lea.vmem [#allocation3], 160
    %v6687 = vld [vmem:[%s6686] ss:$2 sm:$0xff]
    %s6688 = scalar_lea.vmem [#allocation3], 176
    %v6689 = vld [vmem:[%s6688] ss:$2 sm:$0xff]
    %s6690 = scalar_lea.vmem [#allocation3], 192
    %v6691 = vld [vmem:[%s6690] ss:$2 sm:$0xff]
    %s6692 = scalar_lea.vmem [#allocation3], 208
    %v6693 = vld [vmem:[%s6692] ss:$2 sm:$0xff]
    %s6694 = scalar_lea.vmem [#allocation3], 224
    %v6695 = vld [vmem:[%s6694] ss:$2 sm:$0xff]
    %s6696 = scalar_lea.vmem [#allocation3], 240
    %v6697 = vld [vmem:[%s6696] ss:$2 sm:$0xff]
    %s6698 = scalar_lea.vmem [#allocation3], 1
    %v6699 = vld [vmem:[%s6698] ss:$2 sm:$0xff]
    %s6700 = scalar_lea.vmem [#allocation3], 17
    %v6701 = vld [vmem:[%s6700] ss:$2 sm:$0xff]
    %s6702 = scalar_lea.vmem [#allocation3], 33
    %v6703 = vld [vmem:[%s6702] ss:$2 sm:$0xff]
    %s6704 = scalar_lea.vmem [#allocation3], 49
    %v6705 = vld [vmem:[%s6704] ss:$2 sm:$0xff]
    %s6706 = scalar_lea.vmem [#allocation3], 65
    %v6707 = vld [vmem:[%s6706] ss:$2 sm:$0xff]
    %s6708 = scalar_lea.vmem [#allocation3], 81
    %v6709 = vld [vmem:[%s6708] ss:$2 sm:$0xff]
    %s6710 = scalar_lea.vmem [#allocation3], 97
    %v6711 = vld [vmem:[%s6710] ss:$2 sm:$0xff]
    %s6712 = scalar_lea.vmem [#allocation3], 113
    %v6713 = vld [vmem:[%s6712] ss:$2 sm:$0xff]
    %s6714 = scalar_lea.vmem [#allocation3], 129
    %v6715 = vld [vmem:[%s6714] ss:$2 sm:$0xff]
    %s6716 = scalar_lea.vmem [#allocation3], 145
    %v6717 = vld [vmem:[%s6716] ss:$2 sm:$0xff]
    %s6718 = scalar_lea.vmem [#allocation3], 161
    %v6719 = vld [vmem:[%s6718] ss:$2 sm:$0xff]
    %s6720 = scalar_lea.vmem [#allocation3], 177
    %v6721 = vld [vmem:[%s6720] ss:$2 sm:$0xff]
    %s6722 = scalar_lea.vmem [#allocation3], 193
    %v6723 = vld [vmem:[%s6722] ss:$2 sm:$0xff]
    %s6724 = scalar_lea.vmem [#allocation3], 209
    %v6725 = vld [vmem:[%s6724] ss:$2 sm:$0xff]
    %s6726 = scalar_lea.vmem [#allocation3], 225
    %v6727 = vld [vmem:[%s6726] ss:$2 sm:$0xff]
    %s6728 = scalar_lea.vmem [#allocation3], 241
    %v6729 = vld [vmem:[%s6728] ss:$2 sm:$0xff]
    %v6730 = vmax.f32 %v6667, %v6699
    %v6731 = vmax.f32 %v6669, %v6701
    %v6732 = vmax.f32 %v6671, %v6703
    %v6733 = vmax.f32 %v6673, %v6705
    %v6734 = vmax.f32 %v6675, %v6707
    %v6735 = vmax.f32 %v6677, %v6709
    %v6736 = vmax.f32 %v6679, %v6711
    %v6737 = vmax.f32 %v6681, %v6713
    %v6738 = vmax.f32 %v6683, %v6715
    %v6739 = vmax.f32 %v6685, %v6717
    %v6740 = vmax.f32 %v6687, %v6719
    %v6741 = vmax.f32 %v6689, %v6721
    %v6742 = vmax.f32 %v6691, %v6723
    %v6743 = vmax.f32 %v6693, %v6725
    %v6744 = vmax.f32 %v6695, %v6727
    %v6745 = vmax.f32 %v6697, %v6729
    %6746 = vst [vmem:[#allocation11] sm:$0xff] %v6730
    %6747 = vst [vmem:[#allocation11 + $0x8] sm:$0xff] %v6731
    %6748 = vst [vmem:[#allocation11 + $0x10] sm:$0xff] %v6732
    %6749 = vst [vmem:[#allocation11 + $0x18] sm:$0xff] %v6733
    %6750 = vst [vmem:[#allocation11 + $0x20] sm:$0xff] %v6734
    %6751 = vst [vmem:[#allocation11 + $0x28] sm:$0xff] %v6735
    %6752 = vst [vmem:[#allocation11 + $0x30] sm:$0xff] %v6736
    %6753 = vst [vmem:[#allocation11 + $0x38] sm:$0xff] %v6737
    %6754 = vst [vmem:[#allocation11 + $0x40] sm:$0xff] %v6738
    %6755 = vst [vmem:[#allocation11 + $0x48] sm:$0xff] %v6739
    %6756 = vst [vmem:[#allocation11 + $0x50] sm:$0xff] %v6740
    %6757 = vst [vmem:[#allocation11 + $0x58] sm:$0xff] %v6741
    %6758 = vst [vmem:[#allocation11 + $0x60] sm:$0xff] %v6742
    %6759 = vst [vmem:[#allocation11 + $0x68] sm:$0xff] %v6743
    %6760 = vst [vmem:[#allocation11 + $0x70] sm:$0xff] %v6744
    %6761 = vst [vmem:[#allocation11 + $0x78] sm:$0xff] %v6745
    // Predicated region
    $region42: #{tpu_custom_call.1} parent=1 // pred_check
      _
    $region43: #{tpu_custom_call.1} parent=1 // pred_check_branch
      %6763 = sbr.rel (0) target = $region45
    $region44: #{tpu_custom_call.1} parent=1 // pred_region
      %s6765 = ssub.s32 8192, 8192
      %6766 = vsyncadd [#allocation6], %s6765
      %s6767 = sshll.u32 [#allocation10], 4
      %s6768 = int_to_ptr.vmem [resolvable:$true] %s6767
      %6773 = dma.vmem_to_hbm [thread:$0]  %s6768, 8192, %s7, [#allocation6], 128, 128, 8
    $region45: #{tpu_custom_call.1} parent=1 // pred_fallthru
      _
    // Predicated region
    $region46: #{tpu_custom_call.1} parent=1 // pred_check
      _
    $region47: #{tpu_custom_call.1} parent=1 // pred_check_branch
      %6775 = sbr.rel (0) target = $region49
    $region48: #{tpu_custom_call.1} parent=1 // pred_region
      %s6777 = ssub.s32 2048, 2048
      %6778 = vsyncadd [#allocation12], %s6777
      %s6779 = sshll.u32 [#allocation11], 4
      %s6780 = int_to_ptr.vmem [resolvable:$true] %s6779
      %6785 = dma.vmem_to_hbm [thread:$0]  %s6780, 2048, %s8, [#allocation12], 128, 128, 8
    $region49: #{tpu_custom_call.1} parent=1 // pred_fallthru
      _
    // Predicated region
    $region50: #{tpu_custom_call.1} parent=1 // pred_check
      _
    $region51: #{tpu_custom_call.1} parent=1 // pred_check_branch
      %6787 = sbr.rel (0) target = $region53
    $region52: #{tpu_custom_call.1} parent=1 // pred_region
      %6788 = dma.done [#allocation6], 8192
    $region53: #{tpu_custom_call.1} parent=1 // pred_fallthru
      _
    // Predicated region
    $region54: #{tpu_custom_call.1} parent=1 // pred_check
      _
    $region55: #{tpu_custom_call.1} parent=1 // pred_check_branch
      %6790 = sbr.rel (0) target = $region57
    $region56: #{tpu_custom_call.1} parent=1 // pred_region
      %6791 = dma.done [#allocation12], 2048
    $region57: #{tpu_custom_call.1} parent=1 // pred_fallthru
      _
    %6792 = vsyncpa [#allocation5], 1
    %6793 = vsyncpa [#allocation8], 1
    %6794 = vsyncpa [#allocation6], 1
    %6795 = vsyncpa [#allocation12], 1

</llo_original>
